<compile_context>
chip_gen: v6e
topology: v6e:2x2x1
jax: 0.10.0
libtpu: 0.0.40
codegen_flags: <defaults>
</compile_context>

<pallas_src>
import jax
import jax.numpy as jnp
from jax.experimental import pallas as pl
from jax.experimental.pallas import tpu as pltpu


def _round_up(x, m):
    return (x + m - 1) // m * m


def _largest_tile(total, max_tile, unit):
    """Largest divisor of `total` that is a multiple of `unit` and <= max_tile."""
    if total <= max_tile:
        return total
    best = unit
    d = unit
    while d <= max_tile:
        if total % d == 0:
            best = d
        d += unit
    return best


# ---------------------------------------------------------------------------
# Pallas kernel: single-shot GEMM tile (bf16 x bf16 -> f32 MXU accumulation)
# with fused per-output-channel shift (bias / folded BN beta) + LeakyReLU(0.1).
# Grid = (M tiles, N tiles); the full contraction K lives in one block, so no
# accumulator scratch / init / finalize is needed.
# ---------------------------------------------------------------------------
def _gemm_bias_lrelu_kernel(a_ref, b_ref, shift_ref, o_ref):
    y = jnp.dot(a_ref[...], b_ref[...], preferred_element_type=jnp.float32)
    y = y + shift_ref[...]
    o_ref[...] = jnp.maximum(y, 0.1 * y).astype(o_ref.dtype)


def fused_gemm_bias_lrelu(a, b, shift, *, n_valid, out_dtype=jnp.float32,
                          tm_max=128, tn_max=512):
    """leaky_relu(a @ b + shift, 0.1)[:, :n_valid].

    a:     (M, K)  activations / im2col patches (cast to bf16 here)
    b:     (K, Np) pre-folded bf16 weights, Np a multiple of 128
    shift: (1, Np) f32 per-channel shift
    Returns (M, n_valid) in `out_dtype`.
    """
    M, K = a.shape
    Kb, Np = b.shape
    assert K == Kb, (K, Kb)
    assert Np % 128 == 0, Np

    # N tiles: lane-dense (multiple of 128).  Cap at 512 so (a) the dominant
    # 128->1024 layer gets a (1, 2) grid whose two "parallel" j tiles land on
    # both v7x TensorCores, and (b) the double-buffered weight stream
    # (2 * K * tn * 2B ~= 12.9 MB at K=6272) fits scoped VMEM everywhere.
    tn = _largest_tile(Np, tn_max, 128)

    # M tiles: adaptive; never pad a tiny-M GEMM (layer 3 has M = batch) up to
    # 128 rows.  Multiple of 16 keeps bf16 sublane packing happy.
    tm = min(tm_max, _round_up(M, 16))
    Mp = _round_up(M, tm)

    a_p = a.astype(jnp.bfloat16)
    if Mp != M:
        a_p = jnp.pad(a_p, ((0, Mp - M), (0, 0)))

    grid = (Mp // tm, Np // tn)
    out = pl.pallas_call(
        _gemm_bias_lrelu_kernel,
        out_shape=jax.ShapeDtypeStruct((Mp, Np), out_dtype),
        grid_spec=pltpu.PrefetchScalarGridSpec(
            num_scalar_prefetch=0,
            grid=grid,
            in_specs=[
                pl.BlockSpec((tm, K), lambda i, j: (i, 0)),
                pl.BlockSpec((K, tn), lambda i, j: (0, j)),
                pl.BlockSpec((1, tn), lambda i, j: (0, j)),
            ],
            out_specs=pl.BlockSpec((tm, tn), lambda i, j: (i, j)),
        ),
        compiler_params=pltpu.CompilerParams(
            dimension_semantics=("parallel", "parallel"),
            # Layer 3's double-buffered weight tile stream is ~13 MB: raise the
            # scoped-VMEM limit above v5e's 16 MiB default while staying well
            # under v7x's 64 MiB physical VMEM.
            vmem_limit_bytes=28 * 1024 * 1024),
    )(a_p, b, shift)

    if Mp != M or Np != n_valid:
        out = out[:M, :n_valid]
    return out


# ---------------------------------------------------------------------------
# JAX glue: NHWC im2col + layout plumbing (activations stay channel-last bf16).
# ---------------------------------------------------------------------------
def _im2col_nhwc(x, kh, kw, stride, pad):
    """x: (N, H, W, C) -> patches (N*Ho*Wo, kh*kw*C); column order = (kh, kw, C)."""
    n, h, w, c = x.shape
    ho = (h + 2 * pad - kh) // stride + 1
    wo = (w + 2 * pad - kw) // stride + 1
    if kh == h and kw == w and pad == 0 and stride == 1:
        # Kernel covers the whole spatial extent: im2col is a pure reshape.
        return x.reshape(n, kh * kw * c), ho, wo
    xp = jnp.pad(x, ((0, 0), (pad, pad), (pad, pad), (0, 0)))
    cols = []
    for i in range(kh):
        for j in range(kw):
            cols.append(xp[:, i:i + stride * ho:stride, j:j + stride * wo:stride, :])
    patches = jnp.stack(cols, axis=3)              # (N, Ho, Wo, kh*kw, C)
    return patches.reshape(n * ho * wo, kh * kw * c), ho, wo


def _conv_layer_nhwc(x, w_mat, shift, *, cout, kh, kw, stride, pad, out_dtype):
    """Conv (im2col GEMM) + per-channel shift + LeakyReLU(0.1).  NHWC in/out.

    w_mat: pre-folded (kh*kw*cin, Np) bf16 weights; shift: (1, Np) f32.
    """
    n = x.shape[0]
    patches, ho, wo = _im2col_nhwc(x, kh, kw, stride, pad)
    y = fused_gemm_bias_lrelu(patches, w_mat, shift, n_valid=cout,
                              out_dtype=out_dtype)
    return y.reshape(n, ho, wo, cout)


# ---------------------------------------------------------------------------
# Parameters (deterministic), one-time BN folding / weight prep, forward pass
# ---------------------------------------------------------------------------
def init_params(key):
    ks = jax.random.split(key, 8)
    p = {}
    # conv1: Conv2d(1, 64, 4, 2, 1) with bias
    p["w1"] = jax.random.normal(ks[0], (64, 1, 4, 4), jnp.float32) * 0.05
    p["b1"] = jax.random.normal(ks[1], (64,), jnp.float32) * 0.05
    # conv2: Conv2d(64, 128, 4, 2, 1, bias=False) + BatchNorm2d(128)
    p["w2"] = jax.random.normal(ks[2], (128, 64, 4, 4), jnp.float32) * 0.02
    p["bn2_gamma"] = 1.0 + 0.01 * jax.random.normal(ks[3], (128,), jnp.float32)
    p["bn2_beta"] = 0.01 * jax.random.normal(ks[4], (128,), jnp.float32)
    p["bn2_mean"] = jnp.zeros((128,), jnp.float32)
    p["bn2_var"] = jnp.ones((128,), jnp.float32)
    # conv3: Conv2d(128, 1024, 7, bias=False) + BatchNorm2d(1024)
    p["w3"] = jax.random.normal(ks[5], (1024, 128, 7, 7), jnp.float32) * 0.01
    p["bn3_gamma"] = 1.0 + 0.01 * jax.random.normal(ks[6], (1024,), jnp.float32)
    p["bn3_beta"] = 0.01 * jax.random.normal(ks[7], (1024,), jnp.float32)
    p["bn3_mean"] = jnp.zeros((1024,), jnp.float32)
    p["bn3_var"] = jnp.ones((1024,), jnp.float32)
    return p


def _fold_bn(gamma, beta, mean, var, eps=1e-5):
    scale = gamma / jnp.sqrt(var + eps)
    shift = beta - mean * scale
    return scale, shift


def _prepare_conv(w, scale, shift):
    """PyTorch (Cout, Cin, kh, kw) conv weight -> pre-folded GEMM operands."""
    cout, cin, kh, kw = w.shape
    wmat = w.transpose(2, 3, 1, 0).reshape(kh * kw * cin, cout)   # (K, Cout)
    wmat = wmat * scale.reshape(1, cout)          # fold BN scale in f32, once
    npad = _round_up(cout, 128)                   # lane-dense output channels
    wmat = jnp.pad(wmat, ((0, 0), (0, npad - cout))).astype(jnp.bfloat16)
    shift_p = jnp.pad(shift, (0, npad - cout)).astype(jnp.float32).reshape(1, npad)
    return wmat, shift_p


def prepare_params(params):
    """One-time weight folding / layout / dtype prep (hoisted out of forward)."""
    s1 = jnp.ones((64,), jnp.float32)
    w1, sh1 = _prepare_conv(params["w1"], s1, params["b1"])
    s2, b2 = _fold_bn(params["bn2_gamma"], params["bn2_beta"],
                      params["bn2_mean"], params["bn2_var"])
    w2, sh2 = _prepare_conv(params["w2"], s2, b2)
    s3, b3 = _fold_bn(params["bn3_gamma"], params["bn3_beta"],
                      params["bn3_mean"], params["bn3_var"])
    w3, sh3 = _prepare_conv(params["w3"], s3, b3)
    return {"w1": w1, "sh1": sh1, "w2": w2, "sh2": sh2, "w3": w3, "sh3": sh3}


@jax.jit
def discriminator_forward(prepared, x):
    """x: (N, 1, 28, 28) f32 NCHW -> (N, 1024, 1, 1) f32 (eval-mode BN)."""
    x = jnp.transpose(x, (0, 2, 3, 1)).astype(jnp.bfloat16)    # NCHW -> NHWC once
    # layer 1: conv(1->64, k4 s2 p1) + bias + leaky_relu(0.1)
    x = _conv_layer_nhwc(x, prepared["w1"], prepared["sh1"], cout=64,
                         kh=4, kw=4, stride=2, pad=1, out_dtype=jnp.bfloat16)
    # layer 2: conv(64->128, k4 s2 p1) + BN(eval) + leaky_relu(0.1)
    x = _conv_layer_nhwc(x, prepared["w2"], prepared["sh2"], cout=128,
                         kh=4, kw=4, stride=2, pad=1, out_dtype=jnp.bfloat16)
    # layer 3: conv(128->1024, k7) + BN(eval) + leaky_relu(0.1)
    x = _conv_layer_nhwc(x, prepared["w3"], prepared["sh3"], cout=1024,
                         kh=7, kw=7, stride=1, pad=0, out_dtype=jnp.float32)
    return jnp.transpose(x, (0, 3, 1, 2))                       # NHWC -> NCHW once


def _reference_forward(params, x):
    """Pure-JAX f32 reference (lax.conv) for a loose numerical cross-check."""
    def conv(y, w, stride, pad):
        return jax.lax.conv_general_dilated(
            y, w, window_strides=(stride, stride),
            padding=((pad, pad), (pad, pad)),
            dimension_numbers=("NCHW", "OIHW", "NCHW"))

    def lrelu(y):
        return jnp.where(y > 0, y, 0.1 * y)

    y = conv(x, params["w1"], 2, 1) + params["b1"].reshape(1, -1, 1, 1)
    y = lrelu(y)
    s2, sh2 = _fold_bn(params["bn2_gamma"], params["bn2_beta"],
                       params["bn2_mean"], params["bn2_var"])
    y = conv(y, params["w2"], 2, 1) * s2.reshape(1, -1, 1, 1) + sh2.reshape(1, -1, 1, 1)
    y = lrelu(y)
    s3, sh3 = _fold_bn(params["bn3_gamma"], params["bn3_beta"],
                       params["bn3_mean"], params["bn3_var"])
    y = conv(y, params["w3"], 1, 0) * s3.reshape(1, -1, 1, 1) + sh3.reshape(1, -1, 1, 1)
    y = lrelu(y)
    return y


if __name__ == "__main__":
    key = jax.random.PRNGKey(0)
    pkey, xkey = jax.random.split(key)
    params = init_params(pkey)
    prepared = prepare_params(params)          # one-time weight fold / cast / pad
    # MNIST-shaped input (conv3's k=7 requires 28x28 through the stack).
    x = jax.random.normal(xkey, (2, 1, 28, 28), jnp.float32)

    out = jax.block_until_ready(discriminator_forward(prepared, x))
    assert out.shape == (2, 1024, 1, 1), out.shape
    assert out.dtype == jnp.float32
    assert bool(jnp.all(jnp.isfinite(out)))

    # Cross-check against the f32 reference (bf16 MXU operands -> loose tol).
    ref = _reference_forward(params, x)
    err = float(jnp.max(jnp.abs(out - ref)))
    assert err < 5e-2, err

    print("KERNEL_OK")
</pallas_src>

<mosaic_0001>
module attributes {stable_mosaic.version = 11 : i64} {
  func.func @_gemm_bias_lrelu_kernel(%arg0: i32, %arg1: i32, %arg2: memref<128x16xbf16, #tpu.memory_space<vmem>>, %arg3: memref<16x128xbf16, #tpu.memory_space<vmem>>, %arg4: memref<1x128xf32, #tpu.memory_space<vmem>>, %arg5: memref<128x128xbf16, #tpu.memory_space<vmem>>) attributes {dimension_semantics = [#tpu.dimension_semantics<parallel>, #tpu.dimension_semantics<parallel>], iteration_bounds = array<i64: 4, 1>, scalar_prefetch = 0 : i64, scratch_operands = 0 : i64, tpu.core_type = #tpu.core_type<tc>, window_params = [{transform_indices = @transform_0, window_bounds = array<i64: 128, 16>}, {transform_indices = @transform_1, window_bounds = array<i64: 16, 128>}, {transform_indices = @transform_2, window_bounds = array<i64: 1, 128>}, {transform_indices = @transform_3, window_bounds = array<i64: 128, 128>}]} {
    %c0 = arith.constant 0 : index
    %c0_0 = arith.constant 0 : index
    %0 = vector.load %arg2[%c0, %c0_0] : memref<128x16xbf16, #tpu.memory_space<vmem>>, vector<128x16xbf16>
    %c0_1 = arith.constant 0 : index
    %c0_2 = arith.constant 0 : index
    %1 = vector.load %arg3[%c0_1, %c0_2] : memref<16x128xbf16, #tpu.memory_space<vmem>>, vector<16x128xbf16>
    %cst = arith.constant dense<0.000000e+00> : vector<128x128xf32>
    %2 = tpu.matmul %0, %1, %cst {dimension_numbers = #tpu.dot_dimension_numbers<[1], [0], [0], [1], [0, 0, 1, 1], [], []>} : vector<128x16xbf16>, vector<16x128xbf16>, vector<128x128xf32> -> vector<128x128xf32>
    %c0_3 = arith.constant 0 : index
    %c0_4 = arith.constant 0 : index
    %3 = vector.load %arg4[%c0_3, %c0_4] : memref<1x128xf32, #tpu.memory_space<vmem>>, vector<1x128xf32>
    %4 = vector.broadcast %3 : vector<1x128xf32> to vector<128x128xf32>
    %5 = arith.addf %2, %4 : vector<128x128xf32>
    %cst_5 = arith.constant 1.000000e-01 : f32
    %6 = vector.broadcast %cst_5 : f32 to vector<128x128xf32>
    %7 = arith.mulf %6, %5 : vector<128x128xf32>
    %8 = arith.maximumf %5, %7 : vector<128x128xf32>
    %9 = arith.truncf %8 : vector<128x128xf32> to vector<128x128xbf16>
    %c0_6 = arith.constant 0 : index
    %c0_7 = arith.constant 0 : index
    %10 = vector.load %arg5[%c0_6, %c0_7] : memref<128x128xbf16, #tpu.memory_space<vmem>>, vector<128x128xbf16>
    tpu.vector_store %arg5[%c0_6, %c0_7], %9 {strides = array<i32>} : memref<128x128xbf16, #tpu.memory_space<vmem>>, vector<128x128xbf16>,
    return
  }
  func.func @transform_0(%arg0: i32, %arg1: i32) -> (i32, i32) {
    %c0_i32 = arith.constant 0 : i32
    %c0_i32_0 = arith.constant 0 : i32
    return %arg0, %c0_i32 : i32, i32
  }
  func.func @transform_1(%arg0: i32, %arg1: i32) -> (i32, i32) {
    %c0_i32 = arith.constant 0 : i32
    %c0_i32_0 = arith.constant 0 : i32
    return %c0_i32, %arg1 : i32, i32
  }
  func.func @transform_2(%arg0: i32, %arg1: i32) -> (i32, i32) {
    %c0_i32 = arith.constant 0 : i32
    %c0_i32_0 = arith.constant 0 : i32
    return %c0_i32, %arg1 : i32, i32
  }
  func.func @transform_3(%arg0: i32, %arg1: i32) -> (i32, i32) {
    %c0_i32 = arith.constant 0 : i32
    return %arg0, %arg1 : i32, i32
  }
}

module attributes {stable_mosaic.version = 11 : i64} {
  func.func @_gemm_bias_lrelu_kernel(%arg0: i32, %arg1: i32, %arg2: memref<112x1024xbf16, #tpu.memory_space<vmem>>, %arg3: memref<1024x128xbf16, #tpu.memory_space<vmem>>, %arg4: memref<1x128xf32, #tpu.memory_space<vmem>>, %arg5: memref<112x128xbf16, #tpu.memory_space<vmem>>) attributes {dimension_semantics = [#tpu.dimension_semantics<parallel>, #tpu.dimension_semantics<parallel>], iteration_bounds = array<i64: 1, 1>, scalar_prefetch = 0 : i64, scratch_operands = 0 : i64, tpu.core_type = #tpu.core_type<tc>, window_params = [{transform_indices = @transform_0, window_bounds = array<i64: 112, 1024>}, {transform_indices = @transform_1, window_bounds = array<i64: 1024, 128>}, {transform_indices = @transform_2, window_bounds = array<i64: 1, 128>}, {transform_indices = @transform_3, window_bounds = array<i64: 112, 128>}]} {
    %c0 = arith.constant 0 : index
    %c0_0 = arith.constant 0 : index
    %0 = vector.load %arg2[%c0, %c0_0] : memref<112x1024xbf16, #tpu.memory_space<vmem>>, vector<112x1024xbf16>
    %c0_1 = arith.constant 0 : index
    %c0_2 = arith.constant 0 : index
    %1 = vector.load %arg3[%c0_1, %c0_2] : memref<1024x128xbf16, #tpu.memory_space<vmem>>, vector<1024x128xbf16>
    %cst = arith.constant dense<0.000000e+00> : vector<112x128xf32>
    %2 = tpu.matmul %0, %1, %cst {dimension_numbers = #tpu.dot_dimension_numbers<[1], [0], [0], [1], [0, 0, 1, 1], [], []>} : vector<112x1024xbf16>, vector<1024x128xbf16>, vector<112x128xf32> -> vector<112x128xf32>
    %c0_3 = arith.constant 0 : index
    %c0_4 = arith.constant 0 : index
    %3 = vector.load %arg4[%c0_3, %c0_4] : memref<1x128xf32, #tpu.memory_space<vmem>>, vector<1x128xf32>
    %4 = vector.broadcast %3 : vector<1x128xf32> to vector<112x128xf32>
    %5 = arith.addf %2, %4 : vector<112x128xf32>
    %cst_5 = arith.constant 1.000000e-01 : f32
    %6 = vector.broadcast %cst_5 : f32 to vector<112x128xf32>
    %7 = arith.mulf %6, %5 : vector<112x128xf32>
    %8 = arith.maximumf %5, %7 : vector<112x128xf32>
    %9 = arith.truncf %8 : vector<112x128xf32> to vector<112x128xbf16>
    %c0_6 = arith.constant 0 : index
    %c0_7 = arith.constant 0 : index
    %10 = vector.load %arg5[%c0_6, %c0_7] : memref<112x128xbf16, #tpu.memory_space<vmem>>, vector<112x128xbf16>
    tpu.vector_store %arg5[%c0_6, %c0_7], %9 {strides = array<i32>} : memref<112x128xbf16, #tpu.memory_space<vmem>>, vector<112x128xbf16>,
    return
  }
  func.func @transform_0(%arg0: i32, %arg1: i32) -> (i32, i32) {
    %c0_i32 = arith.constant 0 : i32
    %c0_i32_0 = arith.constant 0 : i32
    return %arg0, %c0_i32 : i32, i32
  }
  func.func @transform_1(%arg0: i32, %arg1: i32) -> (i32, i32) {
    %c0_i32 = arith.constant 0 : i32
    %c0_i32_0 = arith.constant 0 : i32
    return %c0_i32, %arg1 : i32, i32
  }
  func.func @transform_2(%arg0: i32, %arg1: i32) -> (i32, i32) {
    %c0_i32 = arith.constant 0 : i32
    %c0_i32_0 = arith.constant 0 : i32
    return %c0_i32, %arg1 : i32, i32
  }
  func.func @transform_3(%arg0: i32, %arg1: i32) -> (i32, i32) {
    %c0_i32 = arith.constant 0 : i32
    return %arg0, %arg1 : i32, i32
  }
}

module attributes {stable_mosaic.version = 11 : i64} {
  func.func @_gemm_bias_lrelu_kernel(%arg0: i32, %arg1: i32, %arg2: memref<16x6272xbf16, #tpu.memory_space<vmem>>, %arg3: memref<6272x512xbf16, #tpu.memory_space<vmem>>, %arg4: memref<1x512xf32, #tpu.memory_space<vmem>>, %arg5: memref<16x512xf32, #tpu.memory_space<vmem>>) attributes {dimension_semantics = [#tpu.dimension_semantics<parallel>, #tpu.dimension_semantics<parallel>], iteration_bounds = array<i64: 1, 2>, scalar_prefetch = 0 : i64, scratch_operands = 0 : i64, tpu.core_type = #tpu.core_type<tc>, window_params = [{transform_indices = @transform_0, window_bounds = array<i64: 16, 6272>}, {transform_indices = @transform_1, window_bounds = array<i64: 6272, 512>}, {transform_indices = @transform_2, window_bounds = array<i64: 1, 512>}, {transform_indices = @transform_3, window_bounds = array<i64: 16, 512>}]} {
    %c0 = arith.constant 0 : index
    %c0_0 = arith.constant 0 : index
    %0 = vector.load %arg2[%c0, %c0_0] : memref<16x6272xbf16, #tpu.memory_space<vmem>>, vector<16x6272xbf16>
    %c0_1 = arith.constant 0 : index
    %c0_2 = arith.constant 0 : index
    %1 = vector.load %arg3[%c0_1, %c0_2] : memref<6272x512xbf16, #tpu.memory_space<vmem>>, vector<6272x512xbf16>
    %cst = arith.constant dense<0.000000e+00> : vector<16x512xf32>
    %2 = tpu.matmul %0, %1, %cst {dimension_numbers = #tpu.dot_dimension_numbers<[1], [0], [0], [1], [0, 0, 1, 1], [], []>} : vector<16x6272xbf16>, vector<6272x512xbf16>, vector<16x512xf32> -> vector<16x512xf32>
    %c0_3 = arith.constant 0 : index
    %c0_4 = arith.constant 0 : index
    %3 = vector.load %arg4[%c0_3, %c0_4] : memref<1x512xf32, #tpu.memory_space<vmem>>, vector<1x512xf32>
    %4 = vector.broadcast %3 : vector<1x512xf32> to vector<16x512xf32>
    %5 = arith.addf %2, %4 : vector<16x512xf32>
    %cst_5 = arith.constant 1.000000e-01 : f32
    %6 = vector.broadcast %cst_5 : f32 to vector<16x512xf32>
    %7 = arith.mulf %6, %5 : vector<16x512xf32>
    %8 = arith.maximumf %5, %7 : vector<16x512xf32>
    %c0_6 = arith.constant 0 : index
    %c0_7 = arith.constant 0 : index
    %9 = vector.load %arg5[%c0_6, %c0_7] : memref<16x512xf32, #tpu.memory_space<vmem>>, vector<16x512xf32>
    tpu.vector_store %arg5[%c0_6, %c0_7], %8 {strides = array<i32>} : memref<16x512xf32, #tpu.memory_space<vmem>>, vector<16x512xf32>,
    return
  }
  func.func @transform_0(%arg0: i32, %arg1: i32) -> (i32, i32) {
    %c0_i32 = arith.constant 0 : i32
    %c0_i32_0 = arith.constant 0 : i32
    return %arg0, %c0_i32 : i32, i32
  }
  func.func @transform_1(%arg0: i32, %arg1: i32) -> (i32, i32) {
    %c0_i32 = arith.constant 0 : i32
    %c0_i32_0 = arith.constant 0 : i32
    return %c0_i32, %arg1 : i32, i32
  }
  func.func @transform_2(%arg0: i32, %arg1: i32) -> (i32, i32) {
    %c0_i32 = arith.constant 0 : i32
    %c0_i32_0 = arith.constant 0 : i32
    return %c0_i32, %arg1 : i32, i32
  }
  func.func @transform_3(%arg0: i32, %arg1: i32) -> (i32, i32) {
    %c0_i32 = arith.constant 0 : i32
    return %arg0, %arg1 : i32, i32
  }
}

</mosaic_0001>

<llo_original>
// kernel: discriminator_forward.3
$region0: #{discriminator_forward.3}
  #allocation0 [shape = 'u32[]', space=smem, size = 0x4, offset = 0x4, fixed_abs, tag = 'smem constant byte address 0x4 - core index']
  #allocation1 [shape = 'u32[144,128]{1,0:T(1,128)}', space=vmem, size = 0x12000, scoped, tag = 'internal scratch']
  %s0 = inlined_call_operand.vmem [shape: bf16[512,16], index: 0, kind: input, shape index: {}]
  %s1 = inlined_call_operand.hbm [shape: bf16[16,128], index: 1, kind: input, shape index: {}]
  %s2 = inlined_call_operand.hbm [shape: f32[1,128], index: 2, kind: input, shape index: {}]
  %s3 = inlined_call_operand.vmem [shape: bf16[512,128], index: 3, kind: output, shape index: {}]
  %s4 = sld [smem:[#allocation0]]
  $region53: #{discriminator_forward.3} parent=0
    _
  %s6 = ssub.s32 1, %s4
  %s7 = scalar_select 0, %s6, %s4
  $region1: #{discriminator_forward.3} parent=0
    #allocation2 [shape = 'u8[4096]{0}', space=vmem, size = 0x1000, scoped, tag = 'input window, operand 1, single buffered']
    #allocation3 [shape = 's32[2]{0}', space=sflag, size = 0x8, scoped, tag = 'scoped memory for discriminator_forward.3']
    #allocation4 [shape = 'u8[512]{0}', space=vmem, size = 0x400, scoped, tag = 'input window, operand 2, single buffered']
    #allocation5 [shape = 's32[1]{0}', space=sflag, size = 0x4, scoped, tag = 'scoped memory for discriminator_forward.3']
    %8 = vsyncpa [#allocation3], 0
    %9 = vsyncpa [#allocation5], 0
    loop: start=0, step=1, limit=6
    $region2: #{discriminator_forward.3} parent=1 // loop_pre_header
      _
    $region3: #{discriminator_forward.3} parent=1 // loop_header
      %s11 = sphi 0, %s15
      %p12 = scmp.ge.s32.totalorder %s11, 6
      %s18 = sphi 0, %s30
      %s19 = sphi 0, %s26
      %s20 = sphi 0, %s18
      %s21 = sphi 0, %s19
      %s22 = sphi 0, %s20
      %s23 = sphi 0, %s21
      %s33 = sphi 0, %s35
      %s36 = sphi 0, %s33
      %s37 = sphi 0, %s36
      %s53 = sphi 0, %s37
      %s59 = sphi 0, %s61
      %s62 = sphi 0, %s59
      %s63 = sphi 0, %s62
      %s79 = sphi 0, %s63
      %s85 = sphi 0, %s87
      %s88 = sphi 0, %s85
      %s89 = sphi 0, %s88
      %s105 = sphi 0, %s89
      %s113 = sphi 0, %s115
      %s116 = sphi 0, %s113
      %s117 = sphi 0, %s116
      %s133 = sphi 0, %s117
    $region4: #{discriminator_forward.3} parent=1 // loop_header_branch
      %14 = sbr.rel (%p12) target = $region8
    $region5: #{discriminator_forward.3} parent=1 // loop_body
      %s16 = ssub.s32 %s11, 1
      %s17 = ssub.s32 %s11, 2
      %s24 = sadd.s32 1, %s19
      %p25 = scmp.ge.s32.totalorder %s24, 1
      %s26 = scalar_select %p25, 0, %s24
      %s27 = sadd.s32 1, %s18
      %s28 = scalar_select %p25, %s27, %s18
      %p29 = scmp.ge.s32.totalorder %s28, 4
      %s30 = scalar_select %p29, 0, %s28
      %s31 = ssub.s32 %s18, %s30
      %p32 = scmp.eq.s32.totalorder %s31, 0
      %s34 = sadd.s32 %s33, 1
      %s35 = scalar_select %p32, %s33, %s34
      %p38 = pneg %p32
      %p39 = scmp.eq.s32.totalorder %s11, 3
      %p40 = por %p38, %p39
      %p41 = scmp.ne.s32.totalorder %s33, %s36
      %p42 = scmp.eq.s32.totalorder %s11, 0
      %p43 = por %p41, %p42
      %p44 = scmp.ne.s32.totalorder %s33, %s36
      %p45 = scmp.eq.s32.totalorder %s16, 3
      %p46 = por %p44, %p45
      %p47 = scmp.ne.s32.totalorder %s36, %s37
      %p48 = scmp.eq.s32.totalorder %s16, 0
      %p49 = por %p47, %p48
      %p50 = scmp.ne.s32.totalorder %s36, %s37
      %p51 = scmp.eq.s32.totalorder %s17, 3
      %p52 = por %p50, %p51
      %p54 = scmp.ne.s32.totalorder %s37, %s53
      %p55 = scmp.eq.s32.totalorder %s17, 0
      %p56 = por %p54, %p55
      %s57 = ssub.s32 %s19, %s26
      %p58 = scmp.eq.s32.totalorder %s57, 0
      %s60 = sadd.s32 %s59, 1
      %s61 = scalar_select %p58, %s59, %s60
      %p64 = pneg %p58
      %p65 = scmp.eq.s32.totalorder %s11, 3
      %p66 = por %p64, %p65
      %p67 = scmp.ne.s32.totalorder %s59, %s62
      %p68 = scmp.eq.s32.totalorder %s11, 0
      %p69 = por %p67, %p68
      %p70 = scmp.ne.s32.totalorder %s59, %s62
      %p71 = scmp.eq.s32.totalorder %s16, 3
      %p72 = por %p70, %p71
      %p73 = scmp.ne.s32.totalorder %s62, %s63
      %p74 = scmp.eq.s32.totalorder %s16, 0
      %p75 = por %p73, %p74
      %p76 = scmp.ne.s32.totalorder %s62, %s63
      %p77 = scmp.eq.s32.totalorder %s17, 3
      %p78 = por %p76, %p77
      %p80 = scmp.ne.s32.totalorder %s63, %s79
      %p81 = scmp.eq.s32.totalorder %s17, 0
      %p82 = por %p80, %p81
      %s83 = ssub.s32 %s19, %s26
      %p84 = scmp.eq.s32.totalorder %s83, 0
      %s86 = sadd.s32 %s85, 1
      %s87 = scalar_select %p84, %s85, %s86
      %p90 = pneg %p84
      %p91 = scmp.eq.s32.totalorder %s11, 3
      %p92 = por %p90, %p91
      %p93 = scmp.ne.s32.totalorder %s85, %s88
      %p94 = scmp.eq.s32.totalorder %s11, 0
      %p95 = por %p93, %p94
      %p96 = scmp.ne.s32.totalorder %s85, %s88
      %p97 = scmp.eq.s32.totalorder %s16, 3
      %p98 = por %p96, %p97
      %p99 = scmp.ne.s32.totalorder %s88, %s89
      %p100 = scmp.eq.s32.totalorder %s16, 0
      %p101 = por %p99, %p100
      %p102 = scmp.ne.s32.totalorder %s88, %s89
      %p103 = scmp.eq.s32.totalorder %s17, 3
      %p104 = por %p102, %p103
      %p106 = scmp.ne.s32.totalorder %s89, %s105
      %p107 = scmp.eq.s32.totalorder %s17, 0
      %p108 = por %p106, %p107
      %s109 = ssub.s32 %s18, %s30
      %s110 = ssub.s32 %s19, %s26
      %s111 = sor.u32 %s109, %s110
      %p112 = scmp.eq.s32.totalorder %s111, 0
      %s114 = sadd.s32 %s113, 1
      %s115 = scalar_select %p112, %s113, %s114
      %p118 = pneg %p112
      %p119 = scmp.eq.s32.totalorder %s11, 3
      %p120 = por %p118, %p119
      %p121 = scmp.ne.s32.totalorder %s113, %s116
      %p122 = scmp.eq.s32.totalorder %s11, 0
      %p123 = por %p121, %p122
      %p124 = scmp.ne.s32.totalorder %s113, %s116
      %p125 = scmp.eq.s32.totalorder %s16, 3
      %p126 = por %p124, %p125
      %p127 = scmp.ne.s32.totalorder %s116, %s117
      %p128 = scmp.eq.s32.totalorder %s16, 0
      %p129 = por %p127, %p128
      %p130 = scmp.ne.s32.totalorder %s116, %s117
      %p131 = scmp.eq.s32.totalorder %s17, 3
      %p132 = por %p130, %p131
      %p134 = scmp.ne.s32.totalorder %s117, %s133
      %p135 = scmp.eq.s32.totalorder %s17, 0
      %p136 = por %p134, %p135
      %p137 = scmp.le.s32.totalorder 1, %s11
      %p138 = scmp.lt.s32.totalorder %s11, 5
      %p139 = pnand %p137, %p138
      %p140 = pneg %p139
      // Predicated region
      $region9: #{discriminator_forward.3} parent=5 // pred_check
        _
      $region10: #{discriminator_forward.3} parent=5 // pred_check_branch
        %142 = sbr.rel (%p139) target = $region12
      $region11: #{discriminator_forward.3} parent=5 // pred_region
        %s143 = ssub.s32 %s11, 1
        // Predicated region
        $region13: #{discriminator_forward.3} parent=11 // pred_check
          %p144 = pneg %p75
        $region14: #{discriminator_forward.3} parent=11 // pred_check_branch
          %146 = sbr.rel (%p144) target = $region16
        $region15: #{discriminator_forward.3} parent=11 // pred_region
          %s148 = ssub.s32 128, 128
          %149 = vsyncadd [#allocation3], %s148
          %s150 = smul.addr %s21, 64
          %s151 = scalar_lea.hbm %s1, %s150
          %s152 = sshll.u32 [#allocation2], 4
          %s153 = int_to_ptr.vmem [resolvable:$true] %s152
          %158 = dma.hbm_to_vmem [thread:$0]  %s151, 128, %s153, [#allocation3], 64, 64, 4
        $region16: #{discriminator_forward.3} parent=11 // pred_fallthru
          _
        // Predicated region
        $region17: #{discriminator_forward.3} parent=11 // pred_check
          %p159 = pneg %p101
        $region18: #{discriminator_forward.3} parent=11 // pred_check_branch
          %161 = sbr.rel (%p159) target = $region20
        $region19: #{discriminator_forward.3} parent=11 // pred_region
          %s163 = ssub.s32 16, 16
          %164 = vsyncadd [#allocation5], %s163
          %s165 = smul.addr %s21, 16
          %s166 = scalar_lea.hbm %s2, %s165
          %s168 = sshll.u32 [#allocation4], 4
          %s169 = int_to_ptr.vmem [resolvable:$true] %s168
          %171 = dma.hbm_to_vmem [thread:$0]  %s166, 16, %s169, [#allocation5]
        $region20: #{discriminator_forward.3} parent=11 // pred_fallthru
          _
      $region12: #{discriminator_forward.3} parent=5 // pred_fallthru
        _
      %p172 = scmp.lt.s32.totalorder %s11, 4
      // Predicated region
      $region21: #{discriminator_forward.3} parent=5 // pred_check
        %p173 = pneg %p172
      $region22: #{discriminator_forward.3} parent=5 // pred_check_branch
        %175 = sbr.rel (%p173) target = $region24
      $region23: #{discriminator_forward.3} parent=5 // pred_region
        // Predicated region
        $region25: #{discriminator_forward.3} parent=23 // pred_check
          %p176 = pneg %p43
        $region26: #{discriminator_forward.3} parent=23 // pred_check_branch
          %178 = sbr.rel (%p176) target = $region28
        $region27: #{discriminator_forward.3} parent=23 // pred_region
          %s179 = smul.u32 16, %s18
          %p180 = scmp.lt.s32.totalorder %s179, 63
          %s181 = scalar_select %p180, %s179, 63
          %s182 = smul.addr %s181, 4
          %s183 = scalar_lea.vmem %s0, %s182
          %s184 = smul.u32 16, %s18
        $region28: #{discriminator_forward.3} parent=23 // pred_fallthru
          _
      $region24: #{discriminator_forward.3} parent=5 // pred_fallthru
        _
      %p185 = scmp.le.s32.totalorder 1, %s11
      %p186 = scmp.lt.s32.totalorder %s11, 5
      %p187 = pnand %p185, %p186
      %p188 = pneg %p187
      // Predicated region
      $region29: #{discriminator_forward.3} parent=5 // pred_check
        _
      $region30: #{discriminator_forward.3} parent=5 // pred_check_branch
        %190 = sbr.rel (%p187) target = $region32
      $region31: #{discriminator_forward.3} parent=5 // pred_region
        %s191 = ssub.s32 %s11, 1
        // Predicated region
        $region33: #{discriminator_forward.3} parent=31 // pred_check
          %p192 = pneg %p75
        $region34: #{discriminator_forward.3} parent=31 // pred_check_branch
          %194 = sbr.rel (%p192) target = $region36
        $region35: #{discriminator_forward.3} parent=31 // pred_region
          %195 = dma.done [#allocation3], 128
        $region36: #{discriminator_forward.3} parent=31 // pred_fallthru
          _
        // Predicated region
        $region37: #{discriminator_forward.3} parent=31 // pred_check
          %p196 = pneg %p101
        $region38: #{discriminator_forward.3} parent=31 // pred_check_branch
          %198 = sbr.rel (%p196) target = $region40
        $region39: #{discriminator_forward.3} parent=31 // pred_region
          %199 = dma.done [#allocation5], 16
        $region40: #{discriminator_forward.3} parent=31 // pred_fallthru
          _
        %s200 = smul.u32 16, %s20
        %p201 = scmp.lt.s32.totalorder %s200, 63
        %s202 = scalar_select %p201, %s200, 63
        %s203 = smul.addr %s202, 4
        %s204 = scalar_lea.vmem %s0, %s203
        %p205 = pneg %p49
        %p206 = pneg %p46
        %p207 = pneg %p75
        %p208 = pneg %p72
        %p209 = pneg %p101
        %p210 = pneg %p98
        %p211 = pneg %p129
        %p212 = pneg %p126
        %s213 = smul.u32 16, %s20
        %p214 = scmp.lt.s32.totalorder %s213, 63
        %s215 = scalar_select %p214, %s213, 63
        %p216 = scmp.lt.s32.totalorder %s21, 0
        %s217 = scalar_select %p216, %s21, 0
        %s218 = sadd.s32 %s217, %s215
        %s219 = smul.addr %s218, 4
        %s220 = scalar_lea.vmem %s3, %s219
        %s221 = smul.u32 16, %s20
        %p222 = scmp.lt.s32.totalorder %s221, 63
        %s223 = scalar_select %p222, %s221, 63
        %s224 = smul.addr %s223, 4
        %s225 = scalar_lea.vmem %s0, %s224
        %s226 = smul.u32 16, %s20
        %s227 = smul.u32 16, %s20
        %p228 = scmp.lt.s32.totalorder %s227, 63
        %s229 = scalar_select %p228, %s227, 63
        %p230 = scmp.lt.s32.totalorder %s21, 0
        %s231 = scalar_select %p230, %s21, 0
        %s232 = sadd.s32 %s231, %s229
        %s233 = smul.addr %s232, 4
        %s234 = scalar_lea.vmem %s3, %s233
        %s235 = smul.u32 16, %s20
        %v237 = vld [vmem:[%s225] sm:$0xf]
        %v238 = vld [vmem:[%s225 + $0x4] sm:$0xf]
        %v239 = vld [vmem:[%s225 + $0x8] sm:$0xf]
        %v240 = vld [vmem:[%s225 + $0xc] sm:$0xf]
        %v241 = vld [vmem:[%s225 + $0x10] sm:$0xf]
        %v242 = vld [vmem:[%s225 + $0x14] sm:$0xf]
        %v243 = vld [vmem:[%s225 + $0x18] sm:$0xf]
        %v244 = vld [vmem:[%s225 + $0x1c] sm:$0xf]
        %v245 = vld [vmem:[%s225 + $0x20] sm:$0xf]
        %v246 = vld [vmem:[%s225 + $0x24] sm:$0xf]
        %v247 = vld [vmem:[%s225 + $0x28] sm:$0xf]
        %v248 = vld [vmem:[%s225 + $0x2c] sm:$0xf]
        %v249 = vld [vmem:[%s225 + $0x30] sm:$0xf]
        %v250 = vld [vmem:[%s225 + $0x34] sm:$0xf]
        %v251 = vld [vmem:[%s225 + $0x38] sm:$0xf]
        %v252 = vld [vmem:[%s225 + $0x3c] sm:$0xf]
        %v253 = vld [vmem:[#allocation2] sm:$0xf]
        %v254 = vld [vmem:[#allocation2 + $0x4] sm:$0xf]
        %v255 = vld [vmem:[#allocation4] sm:$0x1]
        %v257 = vlaneseq
        %v258 = vshrl.u32 %v257, 7
        %v259 = vsub.s32 0, %v258
        %v260 = vrot.slane %v255, %v259
        %v278 = vunpack.c.l.b16 %v237
        %v279 = vunpack.c.l.b16 %v238
        %v280 = vunpack.c.l.b16 %v239
        %v281 = vunpack.c.l.b16 %v240
        %v282 = vunpack.c.l.b16 %v241
        %v283 = vunpack.c.l.b16 %v242
        %v284 = vunpack.c.l.b16 %v243
        %v285 = vunpack.c.l.b16 %v244
        %v286 = vunpack.c.l.b16 %v245
        %v287 = vunpack.c.l.b16 %v246
        %v288 = vunpack.c.l.b16 %v247
        %v289 = vunpack.c.l.b16 %v248
        %v290 = vunpack.c.l.b16 %v249
        %v291 = vunpack.c.l.b16 %v250
        %v292 = vunpack.c.l.b16 %v251
        %v293 = vunpack.c.l.b16 %v252
        %v294 = vpack.c.b16 %v279, %v278
        %v295 = vpack.c.b16 %v281, %v280
        %v296 = vpack.c.b16 %v283, %v282
        %v297 = vpack.c.b16 %v285, %v284
        %v298 = vpack.c.b16 %v287, %v286
        %v299 = vpack.c.b16 %v289, %v288
        %v300 = vpack.c.b16 %v291, %v290
        %v301 = vpack.c.b16 %v293, %v292
        %v304 = vunpack.c.l.b16 %v253
        %v305 = vunpack.c.l.b16 %v254
        %v306 = vpack.c.b16 %v305, %v304
        %vm308 = vcmask 130048
        %v310 = vsel %vm308, %v294, 0
        %v313 = vsel %vm308, %v295, 0
        %v316 = vsel %vm308, %v296, 0
        %v319 = vsel %vm308, %v297, 0
        %v322 = vsel %vm308, %v298, 0
        %v325 = vsel %vm308, %v299, 0
        %v328 = vsel %vm308, %v300, 0
        %v331 = vsel %vm308, %v301, 0
        %333 = vmatprep.subr.bf16.mxu0 0
        %334 = vmatpush1.bf16.msra.mxu0 0
        %335 = vmatprep.subr.bf16.mxu0 0
        %336 = vmatpush1.bf16.msra.mxu0 0
        %337 = vmatprep.subr.bf16.mxu0 0
        %338 = vmatpush1.bf16.msra.mxu0 0
        %339 = vmatprep.subr.bf16.mxu0 0
        %340 = vmatpush1.bf16.msra.mxu0 0
        %341 = vmatprep.subr.bf16.mxu0 0
        %342 = vmatpush1.bf16.msra.mxu0 0
        %343 = vmatprep.subr.bf16.mxu0 0
        %344 = vmatpush1.bf16.msra.mxu0 0
        %345 = vmatprep.subr.bf16.mxu0 0
        %346 = vmatpush1.bf16.msra.mxu0 0
        %347 = vmatprep.subr.bf16.mxu0 0
        %348 = vmatpush1.bf16.msra.mxu0 %v306
        %349 = vmatprep.subr.bf16.mxu0 0
        %350 = vmatpush2.bf16.msra.mxu0 0
        %351 = vmatprep.subr.bf16.mxu0 0
        %352 = vmatpush2.bf16.msra.mxu0 0
        %353 = vmatprep.subr.bf16.mxu0 0
        %354 = vmatpush2.bf16.msra.mxu0 0
        %355 = vmatprep.subr.bf16.mxu0 0
        %356 = vmatpush2.bf16.msra.mxu0 0
        %357 = vmatprep.subr.bf16.mxu0 0
        %358 = vmatpush2.bf16.msra.mxu0 0
        %359 = vmatprep.subr.bf16.mxu0 0
        %360 = vmatpush2.bf16.msra.mxu0 0
        %361 = vmatprep.subr.bf16.mxu0 0
        %362 = vmatpush2.bf16.msra.mxu0 0
        %363 = vmatprep.subr.bf16.mxu0 0
        %364 = vmatpush2.bf16.msra.mxu0 0
        %365 = vmatprep.mubr.bf16.mxu0 0
        %366 = vmatmul.mubr.bf16.gmra.mxu0 %v310
        %v367 = vpop.f32.mrf.mxu0
        %v368 = vadd.f32 %v260, %v367
        %v369 = vpop.f32.mrf.mxu0
        %v370 = vpop.f32.mrf.mxu0
        %v371 = vadd.f32 %v260, %v370
        %v372 = vpop.f32.mrf.mxu0
        %373 = vmatprep.mubr.bf16.mxu0 0
        %374 = vmatmul.mubr.bf16.gmra.mxu0 %v313
        %v375 = vpop.f32.mrf.mxu0
        %v376 = vadd.f32 %v260, %v375
        %v377 = vpop.f32.mrf.mxu0
        %v378 = vpop.f32.mrf.mxu0
        %v379 = vadd.f32 %v260, %v378
        %v380 = vpop.f32.mrf.mxu0
        %381 = vmatprep.mubr.bf16.mxu0 0
        %382 = vmatmul.mubr.bf16.gmra.mxu0 %v316
        %v383 = vpop.f32.mrf.mxu0
        %v384 = vadd.f32 %v260, %v383
        %v385 = vpop.f32.mrf.mxu0
        %v386 = vpop.f32.mrf.mxu0
        %v387 = vadd.f32 %v260, %v386
        %v388 = vpop.f32.mrf.mxu0
        %389 = vmatprep.mubr.bf16.mxu0 0
        %390 = vmatmul.mubr.bf16.gmra.mxu0 %v319
        %v391 = vpop.f32.mrf.mxu0
        %v392 = vadd.f32 %v260, %v391
        %v393 = vpop.f32.mrf.mxu0
        %v394 = vpop.f32.mrf.mxu0
        %v395 = vadd.f32 %v260, %v394
        %v396 = vpop.f32.mrf.mxu0
        %397 = vmatprep.mubr.bf16.mxu0 0
        %398 = vmatmul.mubr.bf16.gmra.mxu0 %v322
        %v399 = vpop.f32.mrf.mxu0
        %v400 = vadd.f32 %v260, %v399
        %v401 = vpop.f32.mrf.mxu0
        %v402 = vpop.f32.mrf.mxu0
        %v403 = vadd.f32 %v260, %v402
        %v404 = vpop.f32.mrf.mxu0
        %405 = vmatprep.mubr.bf16.mxu0 0
        %406 = vmatmul.mubr.bf16.gmra.mxu0 %v325
        %v407 = vpop.f32.mrf.mxu0
        %v408 = vadd.f32 %v260, %v407
        %v409 = vpop.f32.mrf.mxu0
        %v410 = vpop.f32.mrf.mxu0
        %v411 = vadd.f32 %v260, %v410
        %v412 = vpop.f32.mrf.mxu0
        %413 = vmatprep.mubr.bf16.mxu0 0
        %414 = vmatmul.mubr.bf16.gmra.mxu0 %v328
        %v415 = vpop.f32.mrf.mxu0
        %v416 = vadd.f32 %v260, %v415
        %v417 = vpop.f32.mrf.mxu0
        %v418 = vpop.f32.mrf.mxu0
        %v419 = vadd.f32 %v260, %v418
        %v420 = vpop.f32.mrf.mxu0
        %421 = vmatprep.mubr.bf16.mxu0 0
        %422 = vmatmul.mubr.bf16.gmra.mxu0 %v331
        %v423 = vpop.f32.mrf.mxu0
        %v424 = vadd.f32 %v260, %v423
        %v425 = vpop.f32.mrf.mxu0
        %v426 = vpop.f32.mrf.mxu0
        %v427 = vadd.f32 %v260, %v426
        %v428 = vpop.f32.mrf.mxu0
        %429 = vdwg.mxu0
        %v430 = vmul.f32 %v368, 0.1
        %v431 = vmul.f32 %v371, 0.1
        %v432 = vmul.f32 %v376, 0.1
        %v433 = vmul.f32 %v379, 0.1
        %v434 = vmul.f32 %v384, 0.1
        %v435 = vmul.f32 %v387, 0.1
        %v436 = vmul.f32 %v392, 0.1
        %v437 = vmul.f32 %v395, 0.1
        %v438 = vmul.f32 %v400, 0.1
        %v439 = vmul.f32 %v403, 0.1
        %v440 = vmul.f32 %v408, 0.1
        %v441 = vmul.f32 %v411, 0.1
        %v442 = vmul.f32 %v416, 0.1
        %v443 = vmul.f32 %v419, 0.1
        %v444 = vmul.f32 %v424, 0.1
        %v445 = vmul.f32 %v427, 0.1
        %v446 = vmax.f32 %v368, %v430
        %v447 = vmax.f32 %v371, %v431
        %v448 = vmax.f32 %v376, %v432
        %v449 = vmax.f32 %v379, %v433
        %v450 = vmax.f32 %v384, %v434
        %v451 = vmax.f32 %v387, %v435
        %v452 = vmax.f32 %v392, %v436
        %v453 = vmax.f32 %v395, %v437
        %v454 = vmax.f32 %v400, %v438
        %v455 = vmax.f32 %v403, %v439
        %v456 = vmax.f32 %v408, %v440
        %v457 = vmax.f32 %v411, %v441
        %v458 = vmax.f32 %v416, %v442
        %v459 = vmax.f32 %v419, %v443
        %v460 = vmax.f32 %v424, %v444
        %v461 = vmax.f32 %v427, %v445
        %v462 = vpack.c.bf16 %v447, %v446
        %v463 = vpack.c.bf16 %v449, %v448
        %v464 = vpack.c.bf16 %v451, %v450
        %v465 = vpack.c.bf16 %v453, %v452
        %v466 = vpack.c.bf16 %v455, %v454
        %v467 = vpack.c.bf16 %v457, %v456
        %v468 = vpack.c.bf16 %v459, %v458
        %v469 = vpack.c.bf16 %v461, %v460
        %v478 = vunpack.c.l.b16 %v462
        %v479 = vunpack.c.h.b16 %v462
        %v480 = vunpack.c.l.b16 %v463
        %v481 = vunpack.c.h.b16 %v463
        %v482 = vunpack.c.l.b16 %v464
        %v483 = vunpack.c.h.b16 %v464
        %v484 = vunpack.c.l.b16 %v465
        %v485 = vunpack.c.h.b16 %v465
        %v486 = vunpack.c.l.b16 %v466
        %v487 = vunpack.c.h.b16 %v466
        %v488 = vunpack.c.l.b16 %v467
        %v489 = vunpack.c.h.b16 %v467
        %v490 = vunpack.c.l.b16 %v468
        %v491 = vunpack.c.h.b16 %v468
        %v492 = vunpack.c.l.b16 %v469
        %v493 = vunpack.c.h.b16 %v469
        %v494 = vpack.c.b16 %v478, %v478
        %v495 = vpack.c.b16 %v479, %v479
        %v496 = vpack.c.b16 %v480, %v480
        %v497 = vpack.c.b16 %v481, %v481
        %v498 = vpack.c.b16 %v482, %v482
        %v499 = vpack.c.b16 %v483, %v483
        %v500 = vpack.c.b16 %v484, %v484
        %v501 = vpack.c.b16 %v485, %v485
        %v502 = vpack.c.b16 %v486, %v486
        %v503 = vpack.c.b16 %v487, %v487
        %v504 = vpack.c.b16 %v488, %v488
        %v505 = vpack.c.b16 %v489, %v489
        %v506 = vpack.c.b16 %v490, %v490
        %v507 = vpack.c.b16 %v491, %v491
        %v508 = vpack.c.b16 %v492, %v492
        %v509 = vpack.c.b16 %v493, %v493
        %526 = vst [vmem:[%s234] sm:$0xf] %v494
        %527 = vst [vmem:[%s234 + $0x4] sm:$0xf] %v495
        %528 = vst [vmem:[%s234 + $0x8] sm:$0xf] %v496
        %529 = vst [vmem:[%s234 + $0xc] sm:$0xf] %v497
        %530 = vst [vmem:[%s234 + $0x10] sm:$0xf] %v498
        %531 = vst [vmem:[%s234 + $0x14] sm:$0xf] %v499
        %532 = vst [vmem:[%s234 + $0x18] sm:$0xf] %v500
        %533 = vst [vmem:[%s234 + $0x1c] sm:$0xf] %v501
        %534 = vst [vmem:[%s234 + $0x20] sm:$0xf] %v502
        %535 = vst [vmem:[%s234 + $0x24] sm:$0xf] %v503
        %536 = vst [vmem:[%s234 + $0x28] sm:$0xf] %v504
        %537 = vst [vmem:[%s234 + $0x2c] sm:$0xf] %v505
        %538 = vst [vmem:[%s234 + $0x30] sm:$0xf] %v506
        %539 = vst [vmem:[%s234 + $0x34] sm:$0xf] %v507
        %540 = vst [vmem:[%s234 + $0x38] sm:$0xf] %v508
        %541 = vst [vmem:[%s234 + $0x3c] sm:$0xf] %v509
        %s542 = smul.u32 16, %s20
        %p543 = scmp.lt.s32.totalorder %s542, 63
        %s544 = scalar_select %p543, %s542, 63
        %p545 = scmp.lt.s32.totalorder %s21, 0
        %s546 = scalar_select %p545, %s21, 0
        %s547 = sadd.s32 %s546, %s544
        %s548 = smul.addr %s547, 4
        %s549 = scalar_lea.vmem %s3, %s548
        // Predicated region
        $region41: #{discriminator_forward.3} parent=31 // pred_check
          %p550 = pneg %p126
        $region42: #{discriminator_forward.3} parent=31 // pred_check_branch
          %552 = sbr.rel (%p550) target = $region44
        $region43: #{discriminator_forward.3} parent=31 // pred_region
          %s553 = smul.u32 16, %s20
        $region44: #{discriminator_forward.3} parent=31 // pred_fallthru
          _
      $region32: #{discriminator_forward.3} parent=5 // pred_fallthru
        _
      %p554 = scmp.le.s32.totalorder 2, %s11
      // Predicated region
      $region45: #{discriminator_forward.3} parent=5 // pred_check
        %p555 = pneg %p554
      $region46: #{discriminator_forward.3} parent=5 // pred_check_branch
        %557 = sbr.rel (%p555) target = $region48
      $region47: #{discriminator_forward.3} parent=5 // pred_region
        %s558 = ssub.s32 %s11, 2
        // Predicated region
        $region49: #{discriminator_forward.3} parent=47 // pred_check
          %p559 = pneg %p132
        $region50: #{discriminator_forward.3} parent=47 // pred_check_branch
          %561 = sbr.rel (%p559) target = $region52
        $region51: #{discriminator_forward.3} parent=47 // pred_region
          %s562 = smul.u32 16, %s22
          %p563 = scmp.lt.s32.totalorder %s562, 63
          %s564 = scalar_select %p563, %s562, 63
          %p565 = scmp.lt.s32.totalorder %s23, 0
          %s566 = scalar_select %p565, %s23, 0
          %s567 = sadd.s32 %s566, %s564
          %s568 = smul.addr %s567, 4
          %s569 = scalar_lea.vmem %s3, %s568
        $region52: #{discriminator_forward.3} parent=47 // pred_fallthru
          _
      $region48: #{discriminator_forward.3} parent=5 // pred_fallthru
        _
    $region6: #{discriminator_forward.3} parent=1 // loop_footer
      %s15 = sadd.s32 1, %s11
    $region7: #{discriminator_forward.3} parent=1 // loop_footer_branch
      %10 = sbr.rel target = $region3
    $region8: #{discriminator_forward.3} parent=1 // loop_exit
      _
    %570 = vsyncpa [#allocation3], 1
    %s571 = scalar_lea.sflag [#allocation3], 1
    %572 = vsyncpa %s571, 1
    %573 = vsyncpa [#allocation5], 1

// kernel: discriminator_forward.4
$region0: #{discriminator_forward.4}
  #allocation0 [shape = 'u32[]', space=smem, size = 0x4, offset = 0x4, fixed_abs, tag = 'smem constant byte address 0x4 - core index']
  #allocation1 [shape = 'u32[144,128]{1,0:T(1,128)}', space=vmem, size = 0x12000, scoped, tag = 'internal scratch']
  %s0 = inlined_call_operand.vmem [shape: bf16[112,1024], index: 0, kind: input, shape index: {}]
  %s1 = inlined_call_operand.hbm [shape: bf16[1024,128], index: 1, kind: input, shape index: {}]
  %s2 = inlined_call_operand.hbm [shape: f32[1,128], index: 2, kind: input, shape index: {}]
  %s3 = inlined_call_operand.vmem [shape: bf16[112,128], index: 3, kind: output, shape index: {}]
  %s4 = sld [smem:[#allocation0]]
  $region30: #{discriminator_forward.4} parent=0
    _
  %s6 = ssub.s32 1, %s4
  %s7 = scalar_select 0, %s6, %s4
  $region1: #{discriminator_forward.4} parent=0
    #allocation2 [shape = 'u8[262144]{0}', space=vmem, size = 0x40000, scoped, tag = 'input window, operand 1, single buffered']
    #allocation3 [shape = 's32[1]{0}', space=sflag, size = 0x4, scoped, tag = 'scoped memory for discriminator_forward.4']
    #allocation4 [shape = 'u8[512]{0}', space=vmem, size = 0x400, scoped, tag = 'input window, operand 2, single buffered']
    #allocation5 [shape = 's32[1]{0}', space=sflag, size = 0x4, scoped, tag = 'scoped memory for discriminator_forward.4']
    %8 = vsyncpa [#allocation3], 0
    %9 = vsyncpa [#allocation5], 0
    // Predicated region
    $region2: #{discriminator_forward.4} parent=1 // pred_check
      _
    $region3: #{discriminator_forward.4} parent=1 // pred_check_branch
      %11 = sbr.rel (0) target = $region5
    $region4: #{discriminator_forward.4} parent=1 // pred_region
      _
    $region5: #{discriminator_forward.4} parent=1 // pred_fallthru
      _
    // Predicated region
    $region6: #{discriminator_forward.4} parent=1 // pred_check
      _
    $region7: #{discriminator_forward.4} parent=1 // pred_check_branch
      %13 = sbr.rel (0) target = $region9
    $region8: #{discriminator_forward.4} parent=1 // pred_region
      %s15 = ssub.s32 8192, 8192
      %16 = vsyncadd [#allocation3], %s15
      %s17 = sshll.u32 [#allocation2], 4
      %s18 = int_to_ptr.vmem [resolvable:$true] %s17
      %23 = dma.hbm_to_vmem [thread:$0]  %s1, 8192, %s18, [#allocation3], 64, 64, 4
    $region9: #{discriminator_forward.4} parent=1 // pred_fallthru
      _
    // Predicated region
    $region10: #{discriminator_forward.4} parent=1 // pred_check
      _
    $region11: #{discriminator_forward.4} parent=1 // pred_check_branch
      %25 = sbr.rel (0) target = $region13
    $region12: #{discriminator_forward.4} parent=1 // pred_region
      %s27 = ssub.s32 16, 16
      %28 = vsyncadd [#allocation5], %s27
      %s30 = sshll.u32 [#allocation4], 4
      %s31 = int_to_ptr.vmem [resolvable:$true] %s30
      %33 = dma.hbm_to_vmem [thread:$0]  %s2, 16, %s31, [#allocation5]
    $region13: #{discriminator_forward.4} parent=1 // pred_fallthru
      _
    // Predicated region
    $region14: #{discriminator_forward.4} parent=1 // pred_check
      _
    $region15: #{discriminator_forward.4} parent=1 // pred_check_branch
      %35 = sbr.rel (0) target = $region17
    $region16: #{discriminator_forward.4} parent=1 // pred_region
      %36 = dma.done [#allocation3], 8192
    $region17: #{discriminator_forward.4} parent=1 // pred_fallthru
      _
    // Predicated region
    $region18: #{discriminator_forward.4} parent=1 // pred_check
      _
    $region19: #{discriminator_forward.4} parent=1 // pred_check_branch
      %38 = sbr.rel (0) target = $region21
    $region20: #{discriminator_forward.4} parent=1 // pred_region
      %39 = dma.done [#allocation5], 16
    $region21: #{discriminator_forward.4} parent=1 // pred_fallthru
      _
    %v41 = vld [vmem:[%s0] sm:$0xff]
    %v42 = vld [vmem:[%s0 + $0x8] sm:$0xff]
    %v43 = vld [vmem:[%s0 + $0x10] sm:$0xff]
    %v44 = vld [vmem:[%s0 + $0x18] sm:$0xff]
    %v45 = vld [vmem:[%s0 + $0x20] sm:$0xff]
    %v46 = vld [vmem:[%s0 + $0x28] sm:$0xff]
    %v47 = vld [vmem:[%s0 + $0x30] sm:$0xff]
    %v48 = vld [vmem:[%s0 + $0x38] sm:$0xff]
    %v49 = vld [vmem:[%s0 + $0x40] sm:$0xff]
    %v50 = vld [vmem:[%s0 + $0x48] sm:$0xff]
    %v51 = vld [vmem:[%s0 + $0x50] sm:$0xff]
    %v52 = vld [vmem:[%s0 + $0x58] sm:$0xff]
    %v53 = vld [vmem:[%s0 + $0x60] sm:$0xff]
    %v54 = vld [vmem:[%s0 + $0x68] sm:$0xff]
    %v55 = vld [vmem:[%s0 + $0x70] sm:$0xff]
    %v56 = vld [vmem:[%s0 + $0x78] sm:$0xff]
    %v57 = vld [vmem:[%s0 + $0x80] sm:$0xff]
    %v58 = vld [vmem:[%s0 + $0x88] sm:$0xff]
    %v59 = vld [vmem:[%s0 + $0x90] sm:$0xff]
    %v60 = vld [vmem:[%s0 + $0x98] sm:$0xff]
    %v61 = vld [vmem:[%s0 + $0xa0] sm:$0xff]
    %v62 = vld [vmem:[%s0 + $0xa8] sm:$0xff]
    %v63 = vld [vmem:[%s0 + $0xb0] sm:$0xff]
    %v64 = vld [vmem:[%s0 + $0xb8] sm:$0xff]
    %v65 = vld [vmem:[%s0 + $0xc0] sm:$0xff]
    %v66 = vld [vmem:[%s0 + $0xc8] sm:$0xff]
    %v67 = vld [vmem:[%s0 + $0xd0] sm:$0xff]
    %v68 = vld [vmem:[%s0 + $0xd8] sm:$0xff]
    %v69 = vld [vmem:[%s0 + $0xe0] sm:$0xff]
    %v70 = vld [vmem:[%s0 + $0xe8] sm:$0xff]
    %v71 = vld [vmem:[%s0 + $0xf0] sm:$0xff]
    %v72 = vld [vmem:[%s0 + $0xf8] sm:$0xff]
    %v73 = vld [vmem:[%s0 + $0x100] sm:$0xff]
    %v74 = vld [vmem:[%s0 + $0x108] sm:$0xff]
    %v75 = vld [vmem:[%s0 + $0x110] sm:$0xff]
    %v76 = vld [vmem:[%s0 + $0x118] sm:$0xff]
    %v77 = vld [vmem:[%s0 + $0x120] sm:$0xff]
    %v78 = vld [vmem:[%s0 + $0x128] sm:$0xff]
    %v79 = vld [vmem:[%s0 + $0x130] sm:$0xff]
    %v80 = vld [vmem:[%s0 + $0x138] sm:$0xff]
    %v81 = vld [vmem:[%s0 + $0x140] sm:$0xff]
    %v82 = vld [vmem:[%s0 + $0x148] sm:$0xff]
    %v83 = vld [vmem:[%s0 + $0x150] sm:$0xff]
    %v84 = vld [vmem:[%s0 + $0x158] sm:$0xff]
    %v85 = vld [vmem:[%s0 + $0x160] sm:$0xff]
    %v86 = vld [vmem:[%s0 + $0x168] sm:$0xff]
    %v87 = vld [vmem:[%s0 + $0x170] sm:$0xff]
    %v88 = vld [vmem:[%s0 + $0x178] sm:$0xff]
    %v89 = vld [vmem:[%s0 + $0x180] sm:$0xff]
    %v90 = vld [vmem:[%s0 + $0x188] sm:$0xff]
    %v91 = vld [vmem:[%s0 + $0x190] sm:$0xff]
    %v92 = vld [vmem:[%s0 + $0x198] sm:$0xff]
    %v93 = vld [vmem:[%s0 + $0x1a0] sm:$0xff]
    %v94 = vld [vmem:[%s0 + $0x1a8] sm:$0xff]
    %v95 = vld [vmem:[%s0 + $0x1b0] sm:$0xff]
    %v96 = vld [vmem:[%s0 + $0x1b8] sm:$0xff]
    %v97 = vld [vmem:[#allocation2] sm:$0xf]
    %v98 = vld [vmem:[#allocation2 + $0x4] sm:$0xf]
    %v99 = vld [vmem:[#allocation2 + $0x8] sm:$0xf]
    %v100 = vld [vmem:[#allocation2 + $0xc] sm:$0xf]
    %v101 = vld [vmem:[#allocation2 + $0x10] sm:$0xf]
    %v102 = vld [vmem:[#allocation2 + $0x14] sm:$0xf]
    %v103 = vld [vmem:[#allocation2 + $0x18] sm:$0xf]
    %v104 = vld [vmem:[#allocation2 + $0x1c] sm:$0xf]
    %v105 = vld [vmem:[#allocation2 + $0x20] sm:$0xf]
    %v106 = vld [vmem:[#allocation2 + $0x24] sm:$0xf]
    %v107 = vld [vmem:[#allocation2 + $0x28] sm:$0xf]
    %v108 = vld [vmem:[#allocation2 + $0x2c] sm:$0xf]
    %v109 = vld [vmem:[#allocation2 + $0x30] sm:$0xf]
    %v110 = vld [vmem:[#allocation2 + $0x34] sm:$0xf]
    %v111 = vld [vmem:[#allocation2 + $0x38] sm:$0xf]
    %v112 = vld [vmem:[#allocation2 + $0x3c] sm:$0xf]
    %v113 = vld [vmem:[#allocation2 + $0x40] sm:$0xf]
    %v114 = vld [vmem:[#allocation2 + $0x44] sm:$0xf]
    %v115 = vld [vmem:[#allocation2 + $0x48] sm:$0xf]
    %v116 = vld [vmem:[#allocation2 + $0x4c] sm:$0xf]
    %v117 = vld [vmem:[#allocation2 + $0x50] sm:$0xf]
    %v118 = vld [vmem:[#allocation2 + $0x54] sm:$0xf]
    %v119 = vld [vmem:[#allocation2 + $0x58] sm:$0xf]
    %v120 = vld [vmem:[#allocation2 + $0x5c] sm:$0xf]
    %v121 = vld [vmem:[#allocation2 + $0x60] sm:$0xf]
    %v122 = vld [vmem:[#allocation2 + $0x64] sm:$0xf]
    %v123 = vld [vmem:[#allocation2 + $0x68] sm:$0xf]
    %v124 = vld [vmem:[#allocation2 + $0x6c] sm:$0xf]
    %v125 = vld [vmem:[#allocation2 + $0x70] sm:$0xf]
    %v126 = vld [vmem:[#allocation2 + $0x74] sm:$0xf]
    %v127 = vld [vmem:[#allocation2 + $0x78] sm:$0xf]
    %v128 = vld [vmem:[#allocation2 + $0x7c] sm:$0xf]
    %v129 = vld [vmem:[#allocation2 + $0x80] sm:$0xf]
    %v130 = vld [vmem:[#allocation2 + $0x84] sm:$0xf]
    %v131 = vld [vmem:[#allocation2 + $0x88] sm:$0xf]
    %v132 = vld [vmem:[#allocation2 + $0x8c] sm:$0xf]
    %v133 = vld [vmem:[#allocation2 + $0x90] sm:$0xf]
    %v134 = vld [vmem:[#allocation2 + $0x94] sm:$0xf]
    %v135 = vld [vmem:[#allocation2 + $0x98] sm:$0xf]
    %v136 = vld [vmem:[#allocation2 + $0x9c] sm:$0xf]
    %v137 = vld [vmem:[#allocation2 + $0xa0] sm:$0xf]
    %v138 = vld [vmem:[#allocation2 + $0xa4] sm:$0xf]
    %v139 = vld [vmem:[#allocation2 + $0xa8] sm:$0xf]
    %v140 = vld [vmem:[#allocation2 + $0xac] sm:$0xf]
    %v141 = vld [vmem:[#allocation2 + $0xb0] sm:$0xf]
    %v142 = vld [vmem:[#allocation2 + $0xb4] sm:$0xf]
    %v143 = vld [vmem:[#allocation2 + $0xb8] sm:$0xf]
    %v144 = vld [vmem:[#allocation2 + $0xbc] sm:$0xf]
    %v145 = vld [vmem:[#allocation2 + $0xc0] sm:$0xf]
    %v146 = vld [vmem:[#allocation2 + $0xc4] sm:$0xf]
    %v147 = vld [vmem:[#allocation2 + $0xc8] sm:$0xf]
    %v148 = vld [vmem:[#allocation2 + $0xcc] sm:$0xf]
    %v149 = vld [vmem:[#allocation2 + $0xd0] sm:$0xf]
    %v150 = vld [vmem:[#allocation2 + $0xd4] sm:$0xf]
    %v151 = vld [vmem:[#allocation2 + $0xd8] sm:$0xf]
    %v152 = vld [vmem:[#allocation2 + $0xdc] sm:$0xf]
    %v153 = vld [vmem:[#allocation2 + $0xe0] sm:$0xf]
    %v154 = vld [vmem:[#allocation2 + $0xe4] sm:$0xf]
    %v155 = vld [vmem:[#allocation2 + $0xe8] sm:$0xf]
    %v156 = vld [vmem:[#allocation2 + $0xec] sm:$0xf]
    %v157 = vld [vmem:[#allocation2 + $0xf0] sm:$0xf]
    %v158 = vld [vmem:[#allocation2 + $0xf4] sm:$0xf]
    %v159 = vld [vmem:[#allocation2 + $0xf8] sm:$0xf]
    %v160 = vld [vmem:[#allocation2 + $0xfc] sm:$0xf]
    %v161 = vld [vmem:[#allocation2 + $0x100] sm:$0xf]
    %v162 = vld [vmem:[#allocation2 + $0x104] sm:$0xf]
    %v163 = vld [vmem:[#allocation2 + $0x108] sm:$0xf]
    %v164 = vld [vmem:[#allocation2 + $0x10c] sm:$0xf]
    %v165 = vld [vmem:[#allocation2 + $0x110] sm:$0xf]
    %v166 = vld [vmem:[#allocation2 + $0x114] sm:$0xf]
    %v167 = vld [vmem:[#allocation2 + $0x118] sm:$0xf]
    %v168 = vld [vmem:[#allocation2 + $0x11c] sm:$0xf]
    %v169 = vld [vmem:[#allocation2 + $0x120] sm:$0xf]
    %v170 = vld [vmem:[#allocation2 + $0x124] sm:$0xf]
    %v171 = vld [vmem:[#allocation2 + $0x128] sm:$0xf]
    %v172 = vld [vmem:[#allocation2 + $0x12c] sm:$0xf]
    %v173 = vld [vmem:[#allocation2 + $0x130] sm:$0xf]
    %v174 = vld [vmem:[#allocation2 + $0x134] sm:$0xf]
    %v175 = vld [vmem:[#allocation2 + $0x138] sm:$0xf]
    %v176 = vld [vmem:[#allocation2 + $0x13c] sm:$0xf]
    %v177 = vld [vmem:[#allocation2 + $0x140] sm:$0xf]
    %v178 = vld [vmem:[#allocation2 + $0x144] sm:$0xf]
    %v179 = vld [vmem:[#allocation2 + $0x148] sm:$0xf]
    %v180 = vld [vmem:[#allocation2 + $0x14c] sm:$0xf]
    %v181 = vld [vmem:[#allocation2 + $0x150] sm:$0xf]
    %v182 = vld [vmem:[#allocation2 + $0x154] sm:$0xf]
    %v183 = vld [vmem:[#allocation2 + $0x158] sm:$0xf]
    %v184 = vld [vmem:[#allocation2 + $0x15c] sm:$0xf]
    %v185 = vld [vmem:[#allocation2 + $0x160] sm:$0xf]
    %v186 = vld [vmem:[#allocation2 + $0x164] sm:$0xf]
    %v187 = vld [vmem:[#allocation2 + $0x168] sm:$0xf]
    %v188 = vld [vmem:[#allocation2 + $0x16c] sm:$0xf]
    %v189 = vld [vmem:[#allocation2 + $0x170] sm:$0xf]
    %v190 = vld [vmem:[#allocation2 + $0x174] sm:$0xf]
    %v191 = vld [vmem:[#allocation2 + $0x178] sm:$0xf]
    %v192 = vld [vmem:[#allocation2 + $0x17c] sm:$0xf]
    %v193 = vld [vmem:[#allocation2 + $0x180] sm:$0xf]
    %v194 = vld [vmem:[#allocation2 + $0x184] sm:$0xf]
    %v195 = vld [vmem:[#allocation2 + $0x188] sm:$0xf]
    %v196 = vld [vmem:[#allocation2 + $0x18c] sm:$0xf]
    %v197 = vld [vmem:[#allocation2 + $0x190] sm:$0xf]
    %v198 = vld [vmem:[#allocation2 + $0x194] sm:$0xf]
    %v199 = vld [vmem:[#allocation2 + $0x198] sm:$0xf]
    %v200 = vld [vmem:[#allocation2 + $0x19c] sm:$0xf]
    %v201 = vld [vmem:[#allocation2 + $0x1a0] sm:$0xf]
    %v202 = vld [vmem:[#allocation2 + $0x1a4] sm:$0xf]
    %v203 = vld [vmem:[#allocation2 + $0x1a8] sm:$0xf]
    %v204 = vld [vmem:[#allocation2 + $0x1ac] sm:$0xf]
    %v205 = vld [vmem:[#allocation2 + $0x1b0] sm:$0xf]
    %v206 = vld [vmem:[#allocation2 + $0x1b4] sm:$0xf]
    %v207 = vld [vmem:[#allocation2 + $0x1b8] sm:$0xf]
    %v208 = vld [vmem:[#allocation2 + $0x1bc] sm:$0xf]
    %v209 = vld [vmem:[#allocation2 + $0x1c0] sm:$0xf]
    %v210 = vld [vmem:[#allocation2 + $0x1c4] sm:$0xf]
    %v211 = vld [vmem:[#allocation2 + $0x1c8] sm:$0xf]
    %v212 = vld [vmem:[#allocation2 + $0x1cc] sm:$0xf]
    %v213 = vld [vmem:[#allocation2 + $0x1d0] sm:$0xf]
    %v214 = vld [vmem:[#allocation2 + $0x1d4] sm:$0xf]
    %v215 = vld [vmem:[#allocation2 + $0x1d8] sm:$0xf]
    %v216 = vld [vmem:[#allocation2 + $0x1dc] sm:$0xf]
    %v217 = vld [vmem:[#allocation2 + $0x1e0] sm:$0xf]
    %v218 = vld [vmem:[#allocation2 + $0x1e4] sm:$0xf]
    %v219 = vld [vmem:[#allocation2 + $0x1e8] sm:$0xf]
    %v220 = vld [vmem:[#allocation2 + $0x1ec] sm:$0xf]
    %v221 = vld [vmem:[#allocation2 + $0x1f0] sm:$0xf]
    %v222 = vld [vmem:[#allocation2 + $0x1f4] sm:$0xf]
    %v223 = vld [vmem:[#allocation2 + $0x1f8] sm:$0xf]
    %v224 = vld [vmem:[#allocation2 + $0x1fc] sm:$0xf]
    %v225 = vld [vmem:[#allocation4] sm:$0x1]
    %v227 = vlaneseq
    %v228 = vshrl.u32 %v227, 7
    %v229 = vsub.s32 0, %v228
    %v230 = vrot.slane %v225, %v229
    %v288 = vunpack.c.l.b16 %v41
    %v289 = vunpack.c.h.b16 %v41
    %v290 = vunpack.c.l.b16 %v42
    %v291 = vunpack.c.h.b16 %v42
    %v292 = vunpack.c.l.b16 %v43
    %v293 = vunpack.c.h.b16 %v43
    %v294 = vunpack.c.l.b16 %v44
    %v295 = vunpack.c.h.b16 %v44
    %v296 = vunpack.c.l.b16 %v45
    %v297 = vunpack.c.h.b16 %v45
    %v298 = vunpack.c.l.b16 %v46
    %v299 = vunpack.c.h.b16 %v46
    %v300 = vunpack.c.l.b16 %v47
    %v301 = vunpack.c.h.b16 %v47
    %v302 = vunpack.c.l.b16 %v48
    %v303 = vunpack.c.h.b16 %v48
    %v304 = vunpack.c.l.b16 %v49
    %v305 = vunpack.c.h.b16 %v49
    %v306 = vunpack.c.l.b16 %v50
    %v307 = vunpack.c.h.b16 %v50
    %v308 = vunpack.c.l.b16 %v51
    %v309 = vunpack.c.h.b16 %v51
    %v310 = vunpack.c.l.b16 %v52
    %v311 = vunpack.c.h.b16 %v52
    %v312 = vunpack.c.l.b16 %v53
    %v313 = vunpack.c.h.b16 %v53
    %v314 = vunpack.c.l.b16 %v54
    %v315 = vunpack.c.h.b16 %v54
    %v316 = vunpack.c.l.b16 %v55
    %v317 = vunpack.c.h.b16 %v55
    %v318 = vunpack.c.l.b16 %v56
    %v319 = vunpack.c.h.b16 %v56
    %v320 = vunpack.c.l.b16 %v57
    %v321 = vunpack.c.h.b16 %v57
    %v322 = vunpack.c.l.b16 %v58
    %v323 = vunpack.c.h.b16 %v58
    %v324 = vunpack.c.l.b16 %v59
    %v325 = vunpack.c.h.b16 %v59
    %v326 = vunpack.c.l.b16 %v60
    %v327 = vunpack.c.h.b16 %v60
    %v328 = vunpack.c.l.b16 %v61
    %v329 = vunpack.c.h.b16 %v61
    %v330 = vunpack.c.l.b16 %v62
    %v331 = vunpack.c.h.b16 %v62
    %v332 = vunpack.c.l.b16 %v63
    %v333 = vunpack.c.h.b16 %v63
    %v334 = vunpack.c.l.b16 %v64
    %v335 = vunpack.c.h.b16 %v64
    %v336 = vunpack.c.l.b16 %v65
    %v337 = vunpack.c.h.b16 %v65
    %v338 = vunpack.c.l.b16 %v66
    %v339 = vunpack.c.h.b16 %v66
    %v340 = vunpack.c.l.b16 %v67
    %v341 = vunpack.c.h.b16 %v67
    %v342 = vunpack.c.l.b16 %v68
    %v343 = vunpack.c.h.b16 %v68
    %v344 = vunpack.c.l.b16 %v69
    %v345 = vunpack.c.h.b16 %v69
    %v346 = vunpack.c.l.b16 %v70
    %v347 = vunpack.c.h.b16 %v70
    %v348 = vunpack.c.l.b16 %v71
    %v349 = vunpack.c.h.b16 %v71
    %v350 = vunpack.c.l.b16 %v72
    %v351 = vunpack.c.h.b16 %v72
    %v352 = vunpack.c.l.b16 %v73
    %v353 = vunpack.c.h.b16 %v73
    %v354 = vunpack.c.l.b16 %v74
    %v355 = vunpack.c.h.b16 %v74
    %v356 = vunpack.c.l.b16 %v75
    %v357 = vunpack.c.h.b16 %v75
    %v358 = vunpack.c.l.b16 %v76
    %v359 = vunpack.c.h.b16 %v76
    %v360 = vunpack.c.l.b16 %v77
    %v361 = vunpack.c.h.b16 %v77
    %v362 = vunpack.c.l.b16 %v78
    %v363 = vunpack.c.h.b16 %v78
    %v364 = vunpack.c.l.b16 %v79
    %v365 = vunpack.c.h.b16 %v79
    %v366 = vunpack.c.l.b16 %v80
    %v367 = vunpack.c.h.b16 %v80
    %v368 = vunpack.c.l.b16 %v81
    %v369 = vunpack.c.h.b16 %v81
    %v370 = vunpack.c.l.b16 %v82
    %v371 = vunpack.c.h.b16 %v82
    %v372 = vunpack.c.l.b16 %v83
    %v373 = vunpack.c.h.b16 %v83
    %v374 = vunpack.c.l.b16 %v84
    %v375 = vunpack.c.h.b16 %v84
    %v376 = vunpack.c.l.b16 %v85
    %v377 = vunpack.c.h.b16 %v85
    %v378 = vunpack.c.l.b16 %v86
    %v379 = vunpack.c.h.b16 %v86
    %v380 = vunpack.c.l.b16 %v87
    %v381 = vunpack.c.h.b16 %v87
    %v382 = vunpack.c.l.b16 %v88
    %v383 = vunpack.c.h.b16 %v88
    %v384 = vunpack.c.l.b16 %v89
    %v385 = vunpack.c.h.b16 %v89
    %v386 = vunpack.c.l.b16 %v90
    %v387 = vunpack.c.h.b16 %v90
    %v388 = vunpack.c.l.b16 %v91
    %v389 = vunpack.c.h.b16 %v91
    %v390 = vunpack.c.l.b16 %v92
    %v391 = vunpack.c.h.b16 %v92
    %v392 = vunpack.c.l.b16 %v93
    %v393 = vunpack.c.h.b16 %v93
    %v394 = vunpack.c.l.b16 %v94
    %v395 = vunpack.c.h.b16 %v94
    %v396 = vunpack.c.l.b16 %v95
    %v397 = vunpack.c.h.b16 %v95
    %v398 = vunpack.c.l.b16 %v96
    %v399 = vunpack.c.h.b16 %v96
    %v400 = vpack.c.b16 %v296, %v288
    %v401 = vpack.c.b16 %v297, %v289
    %v402 = vpack.c.b16 %v298, %v290
    %v403 = vpack.c.b16 %v299, %v291
    %v404 = vpack.c.b16 %v300, %v292
    %v405 = vpack.c.b16 %v301, %v293
    %v406 = vpack.c.b16 %v302, %v294
    %v407 = vpack.c.b16 %v303, %v295
    %v408 = vpack.c.b16 %v312, %v304
    %v409 = vpack.c.b16 %v313, %v305
    %v410 = vpack.c.b16 %v314, %v306
    %v411 = vpack.c.b16 %v315, %v307
    %v412 = vpack.c.b16 %v316, %v308
    %v413 = vpack.c.b16 %v317, %v309
    %v414 = vpack.c.b16 %v318, %v310
    %v415 = vpack.c.b16 %v319, %v311
    %v416 = vpack.c.b16 %v328, %v320
    %v417 = vpack.c.b16 %v329, %v321
    %v418 = vpack.c.b16 %v330, %v322
    %v419 = vpack.c.b16 %v331, %v323
    %v420 = vpack.c.b16 %v332, %v324
    %v421 = vpack.c.b16 %v333, %v325
    %v422 = vpack.c.b16 %v334, %v326
    %v423 = vpack.c.b16 %v335, %v327
    %v424 = vpack.c.b16 %v344, %v336
    %v425 = vpack.c.b16 %v345, %v337
    %v426 = vpack.c.b16 %v346, %v338
    %v427 = vpack.c.b16 %v347, %v339
    %v428 = vpack.c.b16 %v348, %v340
    %v429 = vpack.c.b16 %v349, %v341
    %v430 = vpack.c.b16 %v350, %v342
    %v431 = vpack.c.b16 %v351, %v343
    %v432 = vpack.c.b16 %v360, %v352
    %v433 = vpack.c.b16 %v361, %v353
    %v434 = vpack.c.b16 %v362, %v354
    %v435 = vpack.c.b16 %v363, %v355
    %v436 = vpack.c.b16 %v364, %v356
    %v437 = vpack.c.b16 %v365, %v357
    %v438 = vpack.c.b16 %v366, %v358
    %v439 = vpack.c.b16 %v367, %v359
    %v440 = vpack.c.b16 %v376, %v368
    %v441 = vpack.c.b16 %v377, %v369
    %v442 = vpack.c.b16 %v378, %v370
    %v443 = vpack.c.b16 %v379, %v371
    %v444 = vpack.c.b16 %v380, %v372
    %v445 = vpack.c.b16 %v381, %v373
    %v446 = vpack.c.b16 %v382, %v374
    %v447 = vpack.c.b16 %v383, %v375
    %v448 = vpack.c.b16 %v392, %v384
    %v449 = vpack.c.b16 %v393, %v385
    %v450 = vpack.c.b16 %v394, %v386
    %v451 = vpack.c.b16 %v395, %v387
    %v452 = vpack.c.b16 %v396, %v388
    %v453 = vpack.c.b16 %v397, %v389
    %v454 = vpack.c.b16 %v398, %v390
    %v455 = vpack.c.b16 %v399, %v391
    %v640 = vunpack.c.l.b16 %v97
    %v641 = vunpack.c.l.b16 %v98
    %v642 = vunpack.c.l.b16 %v99
    %v643 = vunpack.c.l.b16 %v100
    %v644 = vunpack.c.l.b16 %v101
    %v645 = vunpack.c.l.b16 %v102
    %v646 = vunpack.c.l.b16 %v103
    %v647 = vunpack.c.l.b16 %v104
    %v648 = vunpack.c.l.b16 %v105
    %v649 = vunpack.c.l.b16 %v106
    %v650 = vunpack.c.l.b16 %v107
    %v651 = vunpack.c.l.b16 %v108
    %v652 = vunpack.c.l.b16 %v109
    %v653 = vunpack.c.l.b16 %v110
    %v654 = vunpack.c.l.b16 %v111
    %v655 = vunpack.c.l.b16 %v112
    %v656 = vunpack.c.l.b16 %v113
    %v657 = vunpack.c.l.b16 %v114
    %v658 = vunpack.c.l.b16 %v115
    %v659 = vunpack.c.l.b16 %v116
    %v660 = vunpack.c.l.b16 %v117
    %v661 = vunpack.c.l.b16 %v118
    %v662 = vunpack.c.l.b16 %v119
    %v663 = vunpack.c.l.b16 %v120
    %v664 = vunpack.c.l.b16 %v121
    %v665 = vunpack.c.l.b16 %v122
    %v666 = vunpack.c.l.b16 %v123
    %v667 = vunpack.c.l.b16 %v124
    %v668 = vunpack.c.l.b16 %v125
    %v669 = vunpack.c.l.b16 %v126
    %v670 = vunpack.c.l.b16 %v127
    %v671 = vunpack.c.l.b16 %v128
    %v672 = vunpack.c.l.b16 %v129
    %v673 = vunpack.c.l.b16 %v130
    %v674 = vunpack.c.l.b16 %v131
    %v675 = vunpack.c.l.b16 %v132
    %v676 = vunpack.c.l.b16 %v133
    %v677 = vunpack.c.l.b16 %v134
    %v678 = vunpack.c.l.b16 %v135
    %v679 = vunpack.c.l.b16 %v136
    %v680 = vunpack.c.l.b16 %v137
    %v681 = vunpack.c.l.b16 %v138
    %v682 = vunpack.c.l.b16 %v139
    %v683 = vunpack.c.l.b16 %v140
    %v684 = vunpack.c.l.b16 %v141
    %v685 = vunpack.c.l.b16 %v142
    %v686 = vunpack.c.l.b16 %v143
    %v687 = vunpack.c.l.b16 %v144
    %v688 = vunpack.c.l.b16 %v145
    %v689 = vunpack.c.l.b16 %v146
    %v690 = vunpack.c.l.b16 %v147
    %v691 = vunpack.c.l.b16 %v148
    %v692 = vunpack.c.l.b16 %v149
    %v693 = vunpack.c.l.b16 %v150
    %v694 = vunpack.c.l.b16 %v151
    %v695 = vunpack.c.l.b16 %v152
    %v696 = vunpack.c.l.b16 %v153
    %v697 = vunpack.c.l.b16 %v154
    %v698 = vunpack.c.l.b16 %v155
    %v699 = vunpack.c.l.b16 %v156
    %v700 = vunpack.c.l.b16 %v157
    %v701 = vunpack.c.l.b16 %v158
    %v702 = vunpack.c.l.b16 %v159
    %v703 = vunpack.c.l.b16 %v160
    %v704 = vunpack.c.l.b16 %v161
    %v705 = vunpack.c.l.b16 %v162
    %v706 = vunpack.c.l.b16 %v163
    %v707 = vunpack.c.l.b16 %v164
    %v708 = vunpack.c.l.b16 %v165
    %v709 = vunpack.c.l.b16 %v166
    %v710 = vunpack.c.l.b16 %v167
    %v711 = vunpack.c.l.b16 %v168
    %v712 = vunpack.c.l.b16 %v169
    %v713 = vunpack.c.l.b16 %v170
    %v714 = vunpack.c.l.b16 %v171
    %v715 = vunpack.c.l.b16 %v172
    %v716 = vunpack.c.l.b16 %v173
    %v717 = vunpack.c.l.b16 %v174
    %v718 = vunpack.c.l.b16 %v175
    %v719 = vunpack.c.l.b16 %v176
    %v720 = vunpack.c.l.b16 %v177
    %v721 = vunpack.c.l.b16 %v178
    %v722 = vunpack.c.l.b16 %v179
    %v723 = vunpack.c.l.b16 %v180
    %v724 = vunpack.c.l.b16 %v181
    %v725 = vunpack.c.l.b16 %v182
    %v726 = vunpack.c.l.b16 %v183
    %v727 = vunpack.c.l.b16 %v184
    %v728 = vunpack.c.l.b16 %v185
    %v729 = vunpack.c.l.b16 %v186
    %v730 = vunpack.c.l.b16 %v187
    %v731 = vunpack.c.l.b16 %v188
    %v732 = vunpack.c.l.b16 %v189
    %v733 = vunpack.c.l.b16 %v190
    %v734 = vunpack.c.l.b16 %v191
    %v735 = vunpack.c.l.b16 %v192
    %v736 = vunpack.c.l.b16 %v193
    %v737 = vunpack.c.l.b16 %v194
    %v738 = vunpack.c.l.b16 %v195
    %v739 = vunpack.c.l.b16 %v196
    %v740 = vunpack.c.l.b16 %v197
    %v741 = vunpack.c.l.b16 %v198
    %v742 = vunpack.c.l.b16 %v199
    %v743 = vunpack.c.l.b16 %v200
    %v744 = vunpack.c.l.b16 %v201
    %v745 = vunpack.c.l.b16 %v202
    %v746 = vunpack.c.l.b16 %v203
    %v747 = vunpack.c.l.b16 %v204
    %v748 = vunpack.c.l.b16 %v205
    %v749 = vunpack.c.l.b16 %v206
    %v750 = vunpack.c.l.b16 %v207
    %v751 = vunpack.c.l.b16 %v208
    %v752 = vunpack.c.l.b16 %v209
    %v753 = vunpack.c.l.b16 %v210
    %v754 = vunpack.c.l.b16 %v211
    %v755 = vunpack.c.l.b16 %v212
    %v756 = vunpack.c.l.b16 %v213
    %v757 = vunpack.c.l.b16 %v214
    %v758 = vunpack.c.l.b16 %v215
    %v759 = vunpack.c.l.b16 %v216
    %v760 = vunpack.c.l.b16 %v217
    %v761 = vunpack.c.l.b16 %v218
    %v762 = vunpack.c.l.b16 %v219
    %v763 = vunpack.c.l.b16 %v220
    %v764 = vunpack.c.l.b16 %v221
    %v765 = vunpack.c.l.b16 %v222
    %v766 = vunpack.c.l.b16 %v223
    %v767 = vunpack.c.l.b16 %v224
    %v768 = vpack.c.b16 %v641, %v640
    %v769 = vpack.c.b16 %v643, %v642
    %v770 = vpack.c.b16 %v645, %v644
    %v771 = vpack.c.b16 %v647, %v646
    %v772 = vpack.c.b16 %v649, %v648
    %v773 = vpack.c.b16 %v651, %v650
    %v774 = vpack.c.b16 %v653, %v652
    %v775 = vpack.c.b16 %v655, %v654
    %v776 = vpack.c.b16 %v657, %v656
    %v777 = vpack.c.b16 %v659, %v658
    %v778 = vpack.c.b16 %v661, %v660
    %v779 = vpack.c.b16 %v663, %v662
    %v780 = vpack.c.b16 %v665, %v664
    %v781 = vpack.c.b16 %v667, %v666
    %v782 = vpack.c.b16 %v669, %v668
    %v783 = vpack.c.b16 %v671, %v670
    %v784 = vpack.c.b16 %v673, %v672
    %v785 = vpack.c.b16 %v675, %v674
    %v786 = vpack.c.b16 %v677, %v676
    %v787 = vpack.c.b16 %v679, %v678
    %v788 = vpack.c.b16 %v681, %v680
    %v789 = vpack.c.b16 %v683, %v682
    %v790 = vpack.c.b16 %v685, %v684
    %v791 = vpack.c.b16 %v687, %v686
    %v792 = vpack.c.b16 %v689, %v688
    %v793 = vpack.c.b16 %v691, %v690
    %v794 = vpack.c.b16 %v693, %v692
    %v795 = vpack.c.b16 %v695, %v694
    %v796 = vpack.c.b16 %v697, %v696
    %v797 = vpack.c.b16 %v699, %v698
    %v798 = vpack.c.b16 %v701, %v700
    %v799 = vpack.c.b16 %v703, %v702
    %v800 = vpack.c.b16 %v705, %v704
    %v801 = vpack.c.b16 %v707, %v706
    %v802 = vpack.c.b16 %v709, %v708
    %v803 = vpack.c.b16 %v711, %v710
    %v804 = vpack.c.b16 %v713, %v712
    %v805 = vpack.c.b16 %v715, %v714
    %v806 = vpack.c.b16 %v717, %v716
    %v807 = vpack.c.b16 %v719, %v718
    %v808 = vpack.c.b16 %v721, %v720
    %v809 = vpack.c.b16 %v723, %v722
    %v810 = vpack.c.b16 %v725, %v724
    %v811 = vpack.c.b16 %v727, %v726
    %v812 = vpack.c.b16 %v729, %v728
    %v813 = vpack.c.b16 %v731, %v730
    %v814 = vpack.c.b16 %v733, %v732
    %v815 = vpack.c.b16 %v735, %v734
    %v816 = vpack.c.b16 %v737, %v736
    %v817 = vpack.c.b16 %v739, %v738
    %v818 = vpack.c.b16 %v741, %v740
    %v819 = vpack.c.b16 %v743, %v742
    %v820 = vpack.c.b16 %v745, %v744
    %v821 = vpack.c.b16 %v747, %v746
    %v822 = vpack.c.b16 %v749, %v748
    %v823 = vpack.c.b16 %v751, %v750
    %v824 = vpack.c.b16 %v753, %v752
    %v825 = vpack.c.b16 %v755, %v754
    %v826 = vpack.c.b16 %v757, %v756
    %v827 = vpack.c.b16 %v759, %v758
    %v828 = vpack.c.b16 %v761, %v760
    %v829 = vpack.c.b16 %v763, %v762
    %v830 = vpack.c.b16 %v765, %v764
    %v831 = vpack.c.b16 %v767, %v766
    %896 = vmatprep.subr.bf16.mxu0 0
    %897 = vmatpush1.bf16.msra.mxu0 %v775
    %898 = vmatprep.subr.bf16.mxu0 0
    %899 = vmatpush1.bf16.msra.mxu0 %v774
    %900 = vmatprep.subr.bf16.mxu0 0
    %901 = vmatpush1.bf16.msra.mxu0 %v773
    %902 = vmatprep.subr.bf16.mxu0 0
    %903 = vmatpush1.bf16.msra.mxu0 %v772
    %904 = vmatprep.subr.bf16.mxu0 0
    %905 = vmatpush1.bf16.msra.mxu0 %v771
    %906 = vmatprep.subr.bf16.mxu0 0
    %907 = vmatpush1.bf16.msra.mxu0 %v770
    %908 = vmatprep.subr.bf16.mxu0 0
    %909 = vmatpush1.bf16.msra.mxu0 %v769
    %910 = vmatprep.subr.bf16.mxu0 0
    %911 = vmatpush1.bf16.msra.mxu0 %v768
    %912 = vmatprep.subr.bf16.mxu0 0
    %913 = vmatpush2.bf16.msra.mxu0 %v783
    %914 = vmatprep.subr.bf16.mxu0 0
    %915 = vmatpush2.bf16.msra.mxu0 %v782
    %916 = vmatprep.subr.bf16.mxu0 0
    %917 = vmatpush2.bf16.msra.mxu0 %v781
    %918 = vmatprep.subr.bf16.mxu0 0
    %919 = vmatpush2.bf16.msra.mxu0 %v780
    %920 = vmatprep.subr.bf16.mxu0 0
    %921 = vmatpush2.bf16.msra.mxu0 %v779
    %922 = vmatprep.subr.bf16.mxu0 0
    %923 = vmatpush2.bf16.msra.mxu0 %v778
    %924 = vmatprep.subr.bf16.mxu0 0
    %925 = vmatpush2.bf16.msra.mxu0 %v777
    %926 = vmatprep.subr.bf16.mxu0 0
    %927 = vmatpush2.bf16.msra.mxu0 %v776
    %928 = vmatprep.mubr.bf16.mxu0 %v401
    %929 = vmatmul.mubr.bf16.gmra.mxu0 %v400
    %v930 = vpop.f32.mrf.mxu0
    %v931 = vadd.f32 %v230, %v930
    %v932 = vpop.f32.mrf.mxu0
    %v933 = vpop.f32.mrf.mxu0
    %v934 = vadd.f32 %v230, %v933
    %v935 = vpop.f32.mrf.mxu0
    %936 = vmatprep.mubr.bf16.mxu0 %v409
    %937 = vmatmul.mubr.bf16.gmra.mxu0 %v408
    %v938 = vpop.f32.mrf.mxu0
    %v939 = vadd.f32 %v230, %v938
    %v940 = vpop.f32.mrf.mxu0
    %v941 = vpop.f32.mrf.mxu0
    %v942 = vadd.f32 %v230, %v941
    %v943 = vpop.f32.mrf.mxu0
    %944 = vmatprep.mubr.bf16.mxu0 %v417
    %945 = vmatmul.mubr.bf16.gmra.mxu0 %v416
    %v946 = vpop.f32.mrf.mxu0
    %v947 = vadd.f32 %v230, %v946
    %v948 = vpop.f32.mrf.mxu0
    %v949 = vpop.f32.mrf.mxu0
    %v950 = vadd.f32 %v230, %v949
    %v951 = vpop.f32.mrf.mxu0
    %952 = vmatprep.mubr.bf16.mxu0 %v425
    %953 = vmatmul.mubr.bf16.gmra.mxu0 %v424
    %v954 = vpop.f32.mrf.mxu0
    %v955 = vadd.f32 %v230, %v954
    %v956 = vpop.f32.mrf.mxu0
    %v957 = vpop.f32.mrf.mxu0
    %v958 = vadd.f32 %v230, %v957
    %v959 = vpop.f32.mrf.mxu0
    %960 = vmatprep.mubr.bf16.mxu0 %v433
    %961 = vmatmul.mubr.bf16.gmra.mxu0 %v432
    %v962 = vpop.f32.mrf.mxu0
    %v963 = vadd.f32 %v230, %v962
    %v964 = vpop.f32.mrf.mxu0
    %v965 = vpop.f32.mrf.mxu0
    %v966 = vadd.f32 %v230, %v965
    %v967 = vpop.f32.mrf.mxu0
    %968 = vmatprep.mubr.bf16.mxu0 %v441
    %969 = vmatmul.mubr.bf16.gmra.mxu0 %v440
    %v970 = vpop.f32.mrf.mxu0
    %v971 = vadd.f32 %v230, %v970
    %v972 = vpop.f32.mrf.mxu0
    %v973 = vpop.f32.mrf.mxu0
    %v974 = vadd.f32 %v230, %v973
    %v975 = vpop.f32.mrf.mxu0
    %976 = vmatprep.mubr.bf16.mxu0 %v449
    %977 = vmatmul.mubr.bf16.gmra.mxu0 %v448
    %v978 = vpop.f32.mrf.mxu0
    %v979 = vadd.f32 %v230, %v978
    %v980 = vpop.f32.mrf.mxu0
    %v981 = vpop.f32.mrf.mxu0
    %v982 = vadd.f32 %v230, %v981
    %v983 = vpop.f32.mrf.mxu0
    %984 = vdwg.mxu0
    %985 = vmatprep.subr.bf16.mxu0 0
    %986 = vmatpush1.bf16.msra.mxu0 %v791
    %987 = vmatprep.subr.bf16.mxu0 0
    %988 = vmatpush1.bf16.msra.mxu0 %v790
    %989 = vmatprep.subr.bf16.mxu0 0
    %990 = vmatpush1.bf16.msra.mxu0 %v789
    %991 = vmatprep.subr.bf16.mxu0 0
    %992 = vmatpush1.bf16.msra.mxu0 %v788
    %993 = vmatprep.subr.bf16.mxu0 0
    %994 = vmatpush1.bf16.msra.mxu0 %v787
    %995 = vmatprep.subr.bf16.mxu0 0
    %996 = vmatpush1.bf16.msra.mxu0 %v786
    %997 = vmatprep.subr.bf16.mxu0 0
    %998 = vmatpush1.bf16.msra.mxu0 %v785
    %999 = vmatprep.subr.bf16.mxu0 0
    %1000 = vmatpush1.bf16.msra.mxu0 %v784
    %1001 = vmatprep.subr.bf16.mxu0 0
    %1002 = vmatpush2.bf16.msra.mxu0 %v799
    %1003 = vmatprep.subr.bf16.mxu0 0
    %1004 = vmatpush2.bf16.msra.mxu0 %v798
    %1005 = vmatprep.subr.bf16.mxu0 0
    %1006 = vmatpush2.bf16.msra.mxu0 %v797
    %1007 = vmatprep.subr.bf16.mxu0 0
    %1008 = vmatpush2.bf16.msra.mxu0 %v796
    %1009 = vmatprep.subr.bf16.mxu0 0
    %1010 = vmatpush2.bf16.msra.mxu0 %v795
    %1011 = vmatprep.subr.bf16.mxu0 0
    %1012 = vmatpush2.bf16.msra.mxu0 %v794
    %1013 = vmatprep.subr.bf16.mxu0 0
    %1014 = vmatpush2.bf16.msra.mxu0 %v793
    %1015 = vmatprep.subr.bf16.mxu0 0
    %1016 = vmatpush2.bf16.msra.mxu0 %v792
    %1017 = vmatprep.mubr.bf16.mxu0 %v403
    %1018 = vmatmul.mubr.bf16.gmra.mxu0 %v402
    %v1019 = vpop.f32.mrf.mxu0
    %v1020 = vadd.f32 %v931, %v1019
    %v1021 = vpop.f32.mrf.mxu0
    %v1022 = vpop.f32.mrf.mxu0
    %v1023 = vadd.f32 %v934, %v1022
    %v1024 = vpop.f32.mrf.mxu0
    %1025 = vmatprep.mubr.bf16.mxu0 %v411
    %1026 = vmatmul.mubr.bf16.gmra.mxu0 %v410
    %v1027 = vpop.f32.mrf.mxu0
    %v1028 = vadd.f32 %v939, %v1027
    %v1029 = vpop.f32.mrf.mxu0
    %v1030 = vpop.f32.mrf.mxu0
    %v1031 = vadd.f32 %v942, %v1030
    %v1032 = vpop.f32.mrf.mxu0
    %1033 = vmatprep.mubr.bf16.mxu0 %v419
    %1034 = vmatmul.mubr.bf16.gmra.mxu0 %v418
    %v1035 = vpop.f32.mrf.mxu0
    %v1036 = vadd.f32 %v947, %v1035
    %v1037 = vpop.f32.mrf.mxu0
    %v1038 = vpop.f32.mrf.mxu0
    %v1039 = vadd.f32 %v950, %v1038
    %v1040 = vpop.f32.mrf.mxu0
    %1041 = vmatprep.mubr.bf16.mxu0 %v427
    %1042 = vmatmul.mubr.bf16.gmra.mxu0 %v426
    %v1043 = vpop.f32.mrf.mxu0
    %v1044 = vadd.f32 %v955, %v1043
    %v1045 = vpop.f32.mrf.mxu0
    %v1046 = vpop.f32.mrf.mxu0
    %v1047 = vadd.f32 %v958, %v1046
    %v1048 = vpop.f32.mrf.mxu0
    %1049 = vmatprep.mubr.bf16.mxu0 %v435
    %1050 = vmatmul.mubr.bf16.gmra.mxu0 %v434
    %v1051 = vpop.f32.mrf.mxu0
    %v1052 = vadd.f32 %v963, %v1051
    %v1053 = vpop.f32.mrf.mxu0
    %v1054 = vpop.f32.mrf.mxu0
    %v1055 = vadd.f32 %v966, %v1054
    %v1056 = vpop.f32.mrf.mxu0
    %1057 = vmatprep.mubr.bf16.mxu0 %v443
    %1058 = vmatmul.mubr.bf16.gmra.mxu0 %v442
    %v1059 = vpop.f32.mrf.mxu0
    %v1060 = vadd.f32 %v971, %v1059
    %v1061 = vpop.f32.mrf.mxu0
    %v1062 = vpop.f32.mrf.mxu0
    %v1063 = vadd.f32 %v974, %v1062
    %v1064 = vpop.f32.mrf.mxu0
    %1065 = vmatprep.mubr.bf16.mxu0 %v451
    %1066 = vmatmul.mubr.bf16.gmra.mxu0 %v450
    %v1067 = vpop.f32.mrf.mxu0
    %v1068 = vadd.f32 %v979, %v1067
    %v1069 = vpop.f32.mrf.mxu0
    %v1070 = vpop.f32.mrf.mxu0
    %v1071 = vadd.f32 %v982, %v1070
    %v1072 = vpop.f32.mrf.mxu0
    %1073 = vdwg.mxu0
    %1074 = vmatprep.subr.bf16.mxu0 0
    %1075 = vmatpush1.bf16.msra.mxu0 %v807
    %1076 = vmatprep.subr.bf16.mxu0 0
    %1077 = vmatpush1.bf16.msra.mxu0 %v806
    %1078 = vmatprep.subr.bf16.mxu0 0
    %1079 = vmatpush1.bf16.msra.mxu0 %v805
    %1080 = vmatprep.subr.bf16.mxu0 0
    %1081 = vmatpush1.bf16.msra.mxu0 %v804
    %1082 = vmatprep.subr.bf16.mxu0 0
    %1083 = vmatpush1.bf16.msra.mxu0 %v803
    %1084 = vmatprep.subr.bf16.mxu0 0
    %1085 = vmatpush1.bf16.msra.mxu0 %v802
    %1086 = vmatprep.subr.bf16.mxu0 0
    %1087 = vmatpush1.bf16.msra.mxu0 %v801
    %1088 = vmatprep.subr.bf16.mxu0 0
    %1089 = vmatpush1.bf16.msra.mxu0 %v800
    %1090 = vmatprep.subr.bf16.mxu0 0
    %1091 = vmatpush2.bf16.msra.mxu0 %v815
    %1092 = vmatprep.subr.bf16.mxu0 0
    %1093 = vmatpush2.bf16.msra.mxu0 %v814
    %1094 = vmatprep.subr.bf16.mxu0 0
    %1095 = vmatpush2.bf16.msra.mxu0 %v813
    %1096 = vmatprep.subr.bf16.mxu0 0
    %1097 = vmatpush2.bf16.msra.mxu0 %v812
    %1098 = vmatprep.subr.bf16.mxu0 0
    %1099 = vmatpush2.bf16.msra.mxu0 %v811
    %1100 = vmatprep.subr.bf16.mxu0 0
    %1101 = vmatpush2.bf16.msra.mxu0 %v810
    %1102 = vmatprep.subr.bf16.mxu0 0
    %1103 = vmatpush2.bf16.msra.mxu0 %v809
    %1104 = vmatprep.subr.bf16.mxu0 0
    %1105 = vmatpush2.bf16.msra.mxu0 %v808
    %1106 = vmatprep.mubr.bf16.mxu0 %v405
    %1107 = vmatmul.mubr.bf16.gmra.mxu0 %v404
    %v1108 = vpop.f32.mrf.mxu0
    %v1109 = vadd.f32 %v1020, %v1108
    %v1110 = vpop.f32.mrf.mxu0
    %v1111 = vpop.f32.mrf.mxu0
    %v1112 = vadd.f32 %v1023, %v1111
    %v1113 = vpop.f32.mrf.mxu0
    %1114 = vmatprep.mubr.bf16.mxu0 %v413
    %1115 = vmatmul.mubr.bf16.gmra.mxu0 %v412
    %v1116 = vpop.f32.mrf.mxu0
    %v1117 = vadd.f32 %v1028, %v1116
    %v1118 = vpop.f32.mrf.mxu0
    %v1119 = vpop.f32.mrf.mxu0
    %v1120 = vadd.f32 %v1031, %v1119
    %v1121 = vpop.f32.mrf.mxu0
    %1122 = vmatprep.mubr.bf16.mxu0 %v421
    %1123 = vmatmul.mubr.bf16.gmra.mxu0 %v420
    %v1124 = vpop.f32.mrf.mxu0
    %v1125 = vadd.f32 %v1036, %v1124
    %v1126 = vpop.f32.mrf.mxu0
    %v1127 = vpop.f32.mrf.mxu0
    %v1128 = vadd.f32 %v1039, %v1127
    %v1129 = vpop.f32.mrf.mxu0
    %1130 = vmatprep.mubr.bf16.mxu0 %v429
    %1131 = vmatmul.mubr.bf16.gmra.mxu0 %v428
    %v1132 = vpop.f32.mrf.mxu0
    %v1133 = vadd.f32 %v1044, %v1132
    %v1134 = vpop.f32.mrf.mxu0
    %v1135 = vpop.f32.mrf.mxu0
    %v1136 = vadd.f32 %v1047, %v1135
    %v1137 = vpop.f32.mrf.mxu0
    %1138 = vmatprep.mubr.bf16.mxu0 %v437
    %1139 = vmatmul.mubr.bf16.gmra.mxu0 %v436
    %v1140 = vpop.f32.mrf.mxu0
    %v1141 = vadd.f32 %v1052, %v1140
    %v1142 = vpop.f32.mrf.mxu0
    %v1143 = vpop.f32.mrf.mxu0
    %v1144 = vadd.f32 %v1055, %v1143
    %v1145 = vpop.f32.mrf.mxu0
    %1146 = vmatprep.mubr.bf16.mxu0 %v445
    %1147 = vmatmul.mubr.bf16.gmra.mxu0 %v444
    %v1148 = vpop.f32.mrf.mxu0
    %v1149 = vadd.f32 %v1060, %v1148
    %v1150 = vpop.f32.mrf.mxu0
    %v1151 = vpop.f32.mrf.mxu0
    %v1152 = vadd.f32 %v1063, %v1151
    %v1153 = vpop.f32.mrf.mxu0
    %1154 = vmatprep.mubr.bf16.mxu0 %v453
    %1155 = vmatmul.mubr.bf16.gmra.mxu0 %v452
    %v1156 = vpop.f32.mrf.mxu0
    %v1157 = vadd.f32 %v1068, %v1156
    %v1158 = vpop.f32.mrf.mxu0
    %v1159 = vpop.f32.mrf.mxu0
    %v1160 = vadd.f32 %v1071, %v1159
    %v1161 = vpop.f32.mrf.mxu0
    %1162 = vdwg.mxu0
    %1163 = vmatprep.subr.bf16.mxu0 0
    %1164 = vmatpush1.bf16.msra.mxu0 %v823
    %1165 = vmatprep.subr.bf16.mxu0 0
    %1166 = vmatpush1.bf16.msra.mxu0 %v822
    %1167 = vmatprep.subr.bf16.mxu0 0
    %1168 = vmatpush1.bf16.msra.mxu0 %v821
    %1169 = vmatprep.subr.bf16.mxu0 0
    %1170 = vmatpush1.bf16.msra.mxu0 %v820
    %1171 = vmatprep.subr.bf16.mxu0 0
    %1172 = vmatpush1.bf16.msra.mxu0 %v819
    %1173 = vmatprep.subr.bf16.mxu0 0
    %1174 = vmatpush1.bf16.msra.mxu0 %v818
    %1175 = vmatprep.subr.bf16.mxu0 0
    %1176 = vmatpush1.bf16.msra.mxu0 %v817
    %1177 = vmatprep.subr.bf16.mxu0 0
    %1178 = vmatpush1.bf16.msra.mxu0 %v816
    %1179 = vmatprep.subr.bf16.mxu0 0
    %1180 = vmatpush2.bf16.msra.mxu0 %v831
    %1181 = vmatprep.subr.bf16.mxu0 0
    %1182 = vmatpush2.bf16.msra.mxu0 %v830
    %1183 = vmatprep.subr.bf16.mxu0 0
    %1184 = vmatpush2.bf16.msra.mxu0 %v829
    %1185 = vmatprep.subr.bf16.mxu0 0
    %1186 = vmatpush2.bf16.msra.mxu0 %v828
    %1187 = vmatprep.subr.bf16.mxu0 0
    %1188 = vmatpush2.bf16.msra.mxu0 %v827
    %1189 = vmatprep.subr.bf16.mxu0 0
    %1190 = vmatpush2.bf16.msra.mxu0 %v826
    %1191 = vmatprep.subr.bf16.mxu0 0
    %1192 = vmatpush2.bf16.msra.mxu0 %v825
    %1193 = vmatprep.subr.bf16.mxu0 0
    %1194 = vmatpush2.bf16.msra.mxu0 %v824
    %1195 = vmatprep.mubr.bf16.mxu0 %v407
    %1196 = vmatmul.mubr.bf16.gmra.mxu0 %v406
    %v1197 = vpop.f32.mrf.mxu0
    %v1198 = vadd.f32 %v1109, %v1197
    %v1199 = vpop.f32.mrf.mxu0
    %v1200 = vpop.f32.mrf.mxu0
    %v1201 = vadd.f32 %v1112, %v1200
    %v1202 = vpop.f32.mrf.mxu0
    %1203 = vmatprep.mubr.bf16.mxu0 %v415
    %1204 = vmatmul.mubr.bf16.gmra.mxu0 %v414
    %v1205 = vpop.f32.mrf.mxu0
    %v1206 = vadd.f32 %v1117, %v1205
    %v1207 = vpop.f32.mrf.mxu0
    %v1208 = vpop.f32.mrf.mxu0
    %v1209 = vadd.f32 %v1120, %v1208
    %v1210 = vpop.f32.mrf.mxu0
    %1211 = vmatprep.mubr.bf16.mxu0 %v423
    %1212 = vmatmul.mubr.bf16.gmra.mxu0 %v422
    %v1213 = vpop.f32.mrf.mxu0
    %v1214 = vadd.f32 %v1125, %v1213
    %v1215 = vpop.f32.mrf.mxu0
    %v1216 = vpop.f32.mrf.mxu0
    %v1217 = vadd.f32 %v1128, %v1216
    %v1218 = vpop.f32.mrf.mxu0
    %1219 = vmatprep.mubr.bf16.mxu0 %v431
    %1220 = vmatmul.mubr.bf16.gmra.mxu0 %v430
    %v1221 = vpop.f32.mrf.mxu0
    %v1222 = vadd.f32 %v1133, %v1221
    %v1223 = vpop.f32.mrf.mxu0
    %v1224 = vpop.f32.mrf.mxu0
    %v1225 = vadd.f32 %v1136, %v1224
    %v1226 = vpop.f32.mrf.mxu0
    %1227 = vmatprep.mubr.bf16.mxu0 %v439
    %1228 = vmatmul.mubr.bf16.gmra.mxu0 %v438
    %v1229 = vpop.f32.mrf.mxu0
    %v1230 = vadd.f32 %v1141, %v1229
    %v1231 = vpop.f32.mrf.mxu0
    %v1232 = vpop.f32.mrf.mxu0
    %v1233 = vadd.f32 %v1144, %v1232
    %v1234 = vpop.f32.mrf.mxu0
    %1235 = vmatprep.mubr.bf16.mxu0 %v447
    %1236 = vmatmul.mubr.bf16.gmra.mxu0 %v446
    %v1237 = vpop.f32.mrf.mxu0
    %v1238 = vadd.f32 %v1149, %v1237
    %v1239 = vpop.f32.mrf.mxu0
    %v1240 = vpop.f32.mrf.mxu0
    %v1241 = vadd.f32 %v1152, %v1240
    %v1242 = vpop.f32.mrf.mxu0
    %1243 = vmatprep.mubr.bf16.mxu0 %v455
    %1244 = vmatmul.mubr.bf16.gmra.mxu0 %v454
    %v1245 = vpop.f32.mrf.mxu0
    %v1246 = vadd.f32 %v1157, %v1245
    %v1247 = vpop.f32.mrf.mxu0
    %v1248 = vpop.f32.mrf.mxu0
    %v1249 = vadd.f32 %v1160, %v1248
    %v1250 = vpop.f32.mrf.mxu0
    %1251 = vdwg.mxu0
    %v1252 = vmul.f32 %v1198, 0.1
    %v1253 = vmul.f32 %v1201, 0.1
    %v1254 = vmul.f32 %v1206, 0.1
    %v1255 = vmul.f32 %v1209, 0.1
    %v1256 = vmul.f32 %v1214, 0.1
    %v1257 = vmul.f32 %v1217, 0.1
    %v1258 = vmul.f32 %v1222, 0.1
    %v1259 = vmul.f32 %v1225, 0.1
    %v1260 = vmul.f32 %v1230, 0.1
    %v1261 = vmul.f32 %v1233, 0.1
    %v1262 = vmul.f32 %v1238, 0.1
    %v1263 = vmul.f32 %v1241, 0.1
    %v1264 = vmul.f32 %v1246, 0.1
    %v1265 = vmul.f32 %v1249, 0.1
    %v1266 = vmax.f32 %v1198, %v1252
    %v1267 = vmax.f32 %v1201, %v1253
    %v1268 = vmax.f32 %v1206, %v1254
    %v1269 = vmax.f32 %v1209, %v1255
    %v1270 = vmax.f32 %v1214, %v1256
    %v1271 = vmax.f32 %v1217, %v1257
    %v1272 = vmax.f32 %v1222, %v1258
    %v1273 = vmax.f32 %v1225, %v1259
    %v1274 = vmax.f32 %v1230, %v1260
    %v1275 = vmax.f32 %v1233, %v1261
    %v1276 = vmax.f32 %v1238, %v1262
    %v1277 = vmax.f32 %v1241, %v1263
    %v1278 = vmax.f32 %v1246, %v1264
    %v1279 = vmax.f32 %v1249, %v1265
    %v1280 = vpack.c.bf16 %v1267, %v1266
    %v1281 = vpack.c.bf16 %v1269, %v1268
    %v1282 = vpack.c.bf16 %v1271, %v1270
    %v1283 = vpack.c.bf16 %v1273, %v1272
    %v1284 = vpack.c.bf16 %v1275, %v1274
    %v1285 = vpack.c.bf16 %v1277, %v1276
    %v1286 = vpack.c.bf16 %v1279, %v1278
    %v1294 = vunpack.c.l.b16 %v1280
    %v1295 = vunpack.c.h.b16 %v1280
    %v1296 = vunpack.c.l.b16 %v1281
    %v1297 = vunpack.c.h.b16 %v1281
    %v1298 = vunpack.c.l.b16 %v1282
    %v1299 = vunpack.c.h.b16 %v1282
    %v1300 = vunpack.c.l.b16 %v1283
    %v1301 = vunpack.c.h.b16 %v1283
    %v1302 = vunpack.c.l.b16 %v1284
    %v1303 = vunpack.c.h.b16 %v1284
    %v1304 = vunpack.c.l.b16 %v1285
    %v1305 = vunpack.c.h.b16 %v1285
    %v1306 = vunpack.c.l.b16 %v1286
    %v1307 = vunpack.c.h.b16 %v1286
    %v1308 = vpack.c.b16 %v1294, %v1294
    %v1309 = vpack.c.b16 %v1295, %v1295
    %v1310 = vpack.c.b16 %v1296, %v1296
    %v1311 = vpack.c.b16 %v1297, %v1297
    %v1312 = vpack.c.b16 %v1298, %v1298
    %v1313 = vpack.c.b16 %v1299, %v1299
    %v1314 = vpack.c.b16 %v1300, %v1300
    %v1315 = vpack.c.b16 %v1301, %v1301
    %v1316 = vpack.c.b16 %v1302, %v1302
    %v1317 = vpack.c.b16 %v1303, %v1303
    %v1318 = vpack.c.b16 %v1304, %v1304
    %v1319 = vpack.c.b16 %v1305, %v1305
    %v1320 = vpack.c.b16 %v1306, %v1306
    %v1321 = vpack.c.b16 %v1307, %v1307
    %1336 = vst [vmem:[%s3] sm:$0xf] %v1308
    %1337 = vst [vmem:[%s3 + $0x4] sm:$0xf] %v1309
    %1338 = vst [vmem:[%s3 + $0x8] sm:$0xf] %v1310
    %1339 = vst [vmem:[%s3 + $0xc] sm:$0xf] %v1311
    %1340 = vst [vmem:[%s3 + $0x10] sm:$0xf] %v1312
    %1341 = vst [vmem:[%s3 + $0x14] sm:$0xf] %v1313
    %1342 = vst [vmem:[%s3 + $0x18] sm:$0xf] %v1314
    %1343 = vst [vmem:[%s3 + $0x1c] sm:$0xf] %v1315
    %1344 = vst [vmem:[%s3 + $0x20] sm:$0xf] %v1316
    %1345 = vst [vmem:[%s3 + $0x24] sm:$0xf] %v1317
    %1346 = vst [vmem:[%s3 + $0x28] sm:$0xf] %v1318
    %1347 = vst [vmem:[%s3 + $0x2c] sm:$0xf] %v1319
    %1348 = vst [vmem:[%s3 + $0x30] sm:$0xf] %v1320
    %1349 = vst [vmem:[%s3 + $0x34] sm:$0xf] %v1321
    // Predicated region
    $region22: #{discriminator_forward.4} parent=1 // pred_check
      _
    $region23: #{discriminator_forward.4} parent=1 // pred_check_branch
      %1351 = sbr.rel (0) target = $region25
    $region24: #{discriminator_forward.4} parent=1 // pred_region
      _
    $region25: #{discriminator_forward.4} parent=1 // pred_fallthru
      _
    // Predicated region
    $region26: #{discriminator_forward.4} parent=1 // pred_check
      _
    $region27: #{discriminator_forward.4} parent=1 // pred_check_branch
      %1353 = sbr.rel (0) target = $region29
    $region28: #{discriminator_forward.4} parent=1 // pred_region
      _
    $region29: #{discriminator_forward.4} parent=1 // pred_fallthru
      _
    %1354 = vsyncpa [#allocation3], 1
    %1355 = vsyncpa [#allocation5], 1

// kernel: discriminator_forward.5
$region0: #{discriminator_forward.5}
  #allocation0 [shape = 'u32[]', space=smem, size = 0x4, offset = 0x4, fixed_abs, tag = 'smem constant byte address 0x4 - core index']
  #allocation1 [shape = 'u32[144,128]{1,0:T(1,128)}', space=vmem, size = 0x12000, scoped, tag = 'internal scratch']
  %s0 = inlined_call_operand.vmem [shape: bf16[16,6272], index: 0, kind: input, shape index: {}]
  %s1 = inlined_call_operand.hbm [shape: bf16[6272,1024], index: 1, kind: input, shape index: {}]
  %s2 = inlined_call_operand.hbm [shape: f32[1,1024], index: 2, kind: input, shape index: {}]
  %s3 = inlined_call_operand.vmem [shape: f32[16,1024], index: 3, kind: output, shape index: {}]
  %s4 = sld [smem:[#allocation0]]
  $region72: #{discriminator_forward.5} parent=0
    _
  %s6 = ssub.s32 1, %s4
  %s7 = scalar_select 0, %s6, %s4
  $region1: #{discriminator_forward.5} parent=0
    #allocation2 [shape = 'u8[12845056]{0}', space=vmem, size = 0xc40000, scoped, tag = 'input window, operand 1']
    #allocation3 [shape = 's32[2]{0}', space=sflag, size = 0x8, scoped, tag = 'scoped memory for discriminator_forward.5']
    #allocation4 [shape = 'u8[4096]{0}', space=vmem, size = 0x1000, scoped, tag = 'input window, operand 2']
    #allocation5 [shape = 's32[2]{0}', space=sflag, size = 0x8, scoped, tag = 'scoped memory for discriminator_forward.5']
    #allocation6 [shape = 'u8[65536]{0}', space=vmem, size = 0x10000, scoped, tag = 'output window, operand 0']
    %8 = vsyncpa [#allocation3], 0
    %s9 = scalar_lea.sflag [#allocation3], 1
    %10 = vsyncpa %s9, 0
    %11 = vsyncpa [#allocation5], 0
    %s12 = scalar_lea.sflag [#allocation5], 1
    %13 = vsyncpa %s12, 0
    loop: start=0, step=1, limit=4
    $region2: #{discriminator_forward.5} parent=1 // loop_pre_header
      _
    $region3: #{discriminator_forward.5} parent=1 // loop_header
      %s15 = sphi 0, %s19
      %p16 = scmp.ge.s32.totalorder %s15, 4
      %s22 = sphi 0, %s34
      %s23 = sphi 0, %s30
      %s24 = sphi 0, %s22
      %s25 = sphi 0, %s23
      %s26 = sphi 0, %s24
      %s27 = sphi 0, %s25
      %s37 = sphi 0, %s39
      %s40 = sphi 0, %s37
      %s41 = sphi 0, %s40
      %s57 = sphi 0, %s41
      %s63 = sphi 0, %s65
      %s66 = sphi 0, %s63
      %s67 = sphi 0, %s66
      %s83 = sphi 0, %s67
      %s89 = sphi 0, %s91
      %s92 = sphi 0, %s89
      %s93 = sphi 0, %s92
      %s109 = sphi 0, %s93
      %s117 = sphi 0, %s119
      %s120 = sphi 0, %s117
      %s121 = sphi 0, %s120
      %s137 = sphi 0, %s121
    $region4: #{discriminator_forward.5} parent=1 // loop_header_branch
      %18 = sbr.rel (%p16) target = $region8
    $region5: #{discriminator_forward.5} parent=1 // loop_body
      %s20 = ssub.s32 %s15, 1
      %s21 = ssub.s32 %s15, 2
      %s28 = sadd.s32 1, %s23
      %p29 = scmp.ge.s32.totalorder %s28, 2
      %s30 = scalar_select %p29, 0, %s28
      %s31 = sadd.s32 1, %s22
      %s32 = scalar_select %p29, %s31, %s22
      %p33 = scmp.ge.s32.totalorder %s32, 1
      %s34 = scalar_select %p33, 0, %s32
      %s35 = ssub.s32 %s22, %s34
      %p36 = scmp.eq.s32.totalorder %s35, 0
      %s38 = sadd.s32 %s37, 1
      %s39 = scalar_select %p36, %s37, %s38
      %p42 = pneg %p36
      %p43 = scmp.eq.s32.totalorder %s15, 1
      %p44 = por %p42, %p43
      %p45 = scmp.ne.s32.totalorder %s37, %s40
      %p46 = scmp.eq.s32.totalorder %s15, 0
      %p47 = por %p45, %p46
      %p48 = scmp.ne.s32.totalorder %s37, %s40
      %p49 = scmp.eq.s32.totalorder %s20, 1
      %p50 = por %p48, %p49
      %p51 = scmp.ne.s32.totalorder %s40, %s41
      %p52 = scmp.eq.s32.totalorder %s20, 0
      %p53 = por %p51, %p52
      %p54 = scmp.ne.s32.totalorder %s40, %s41
      %p55 = scmp.eq.s32.totalorder %s21, 1
      %p56 = por %p54, %p55
      %p58 = scmp.ne.s32.totalorder %s41, %s57
      %p59 = scmp.eq.s32.totalorder %s21, 0
      %p60 = por %p58, %p59
      %s61 = ssub.s32 %s23, %s30
      %p62 = scmp.eq.s32.totalorder %s61, 0
      %s64 = sadd.s32 %s63, 1
      %s65 = scalar_select %p62, %s63, %s64
      %p68 = pneg %p62
      %p69 = scmp.eq.s32.totalorder %s15, 1
      %p70 = por %p68, %p69
      %p71 = scmp.ne.s32.totalorder %s63, %s66
      %p72 = scmp.eq.s32.totalorder %s15, 0
      %p73 = por %p71, %p72
      %p74 = scmp.ne.s32.totalorder %s63, %s66
      %p75 = scmp.eq.s32.totalorder %s20, 1
      %p76 = por %p74, %p75
      %p77 = scmp.ne.s32.totalorder %s66, %s67
      %p78 = scmp.eq.s32.totalorder %s20, 0
      %p79 = por %p77, %p78
      %p80 = scmp.ne.s32.totalorder %s66, %s67
      %p81 = scmp.eq.s32.totalorder %s21, 1
      %p82 = por %p80, %p81
      %p84 = scmp.ne.s32.totalorder %s67, %s83
      %p85 = scmp.eq.s32.totalorder %s21, 0
      %p86 = por %p84, %p85
      %s87 = ssub.s32 %s23, %s30
      %p88 = scmp.eq.s32.totalorder %s87, 0
      %s90 = sadd.s32 %s89, 1
      %s91 = scalar_select %p88, %s89, %s90
      %p94 = pneg %p88
      %p95 = scmp.eq.s32.totalorder %s15, 1
      %p96 = por %p94, %p95
      %p97 = scmp.ne.s32.totalorder %s89, %s92
      %p98 = scmp.eq.s32.totalorder %s15, 0
      %p99 = por %p97, %p98
      %p100 = scmp.ne.s32.totalorder %s89, %s92
      %p101 = scmp.eq.s32.totalorder %s20, 1
      %p102 = por %p100, %p101
      %p103 = scmp.ne.s32.totalorder %s92, %s93
      %p104 = scmp.eq.s32.totalorder %s20, 0
      %p105 = por %p103, %p104
      %p106 = scmp.ne.s32.totalorder %s92, %s93
      %p107 = scmp.eq.s32.totalorder %s21, 1
      %p108 = por %p106, %p107
      %p110 = scmp.ne.s32.totalorder %s93, %s109
      %p111 = scmp.eq.s32.totalorder %s21, 0
      %p112 = por %p110, %p111
      %s113 = ssub.s32 %s22, %s34
      %s114 = ssub.s32 %s23, %s30
      %s115 = sor.u32 %s113, %s114
      %p116 = scmp.eq.s32.totalorder %s115, 0
      %s118 = sadd.s32 %s117, 1
      %s119 = scalar_select %p116, %s117, %s118
      %p122 = pneg %p116
      %p123 = scmp.eq.s32.totalorder %s15, 1
      %p124 = por %p122, %p123
      %p125 = scmp.ne.s32.totalorder %s117, %s120
      %p126 = scmp.eq.s32.totalorder %s15, 0
      %p127 = por %p125, %p126
      %p128 = scmp.ne.s32.totalorder %s117, %s120
      %p129 = scmp.eq.s32.totalorder %s20, 1
      %p130 = por %p128, %p129
      %p131 = scmp.ne.s32.totalorder %s120, %s121
      %p132 = scmp.eq.s32.totalorder %s20, 0
      %p133 = por %p131, %p132
      %p134 = scmp.ne.s32.totalorder %s120, %s121
      %p135 = scmp.eq.s32.totalorder %s21, 1
      %p136 = por %p134, %p135
      %p138 = scmp.ne.s32.totalorder %s121, %s137
      %p139 = scmp.eq.s32.totalorder %s21, 0
      %p140 = por %p138, %p139
      %p141 = scmp.le.s32.totalorder 1, %s15
      %p142 = scmp.lt.s32.totalorder %s15, 3
      %p143 = pnand %p141, %p142
      %p144 = pneg %p143
      // Predicated region
      $region9: #{discriminator_forward.5} parent=5 // pred_check
        _
      $region10: #{discriminator_forward.5} parent=5 // pred_check_branch
        %146 = sbr.rel (%p143) target = $region12
      $region11: #{discriminator_forward.5} parent=5 // pred_region
        %s147 = ssub.s32 %s15, 1
        // Predicated region
        $region13: #{discriminator_forward.5} parent=11 // pred_check
          %p148 = pneg %p53
        $region14: #{discriminator_forward.5} parent=11 // pred_check_branch
          %150 = sbr.rel (%p148) target = $region16
        $region15: #{discriminator_forward.5} parent=11 // pred_region
          %s151 = smul.u32 2, %s24
          %p152 = scmp.lt.s32.totalorder %s151, 1
          %s153 = scalar_select %p152, %s151, 1
          %s154 = smul.addr %s153, 49
          %s155 = smul.addr %s154, 4
          %s156 = scalar_lea.vmem %s0, %s155
          %s157 = smul.u32 2, %s24
        $region16: #{discriminator_forward.5} parent=11 // pred_fallthru
          _
      $region12: #{discriminator_forward.5} parent=5 // pred_fallthru
        _
      %p158 = scmp.lt.s32.totalorder %s15, 2
      // Predicated region
      $region17: #{discriminator_forward.5} parent=5 // pred_check
        %p159 = pneg %p158
      $region18: #{discriminator_forward.5} parent=5 // pred_check_branch
        %161 = sbr.rel (%p159) target = $region20
      $region19: #{discriminator_forward.5} parent=5 // pred_region
        // Predicated region
        $region21: #{discriminator_forward.5} parent=19 // pred_check
          %p162 = pneg %p73
        $region22: #{discriminator_forward.5} parent=19 // pred_check_branch
          %164 = sbr.rel (%p162) target = $region24
        $region23: #{discriminator_forward.5} parent=19 // pred_region
          %s165 = sand.u32 %s63, 1
          %s166 = scalar_lea.sflag [#allocation3], %s165
          %s167 = sand.u32 %s63, 1
          %s168 = smul.addr %s167, 12544
          %s169 = scalar_lea.vmem [#allocation2], %s168
          %s170 = smul.u32 4, %s23
          %s172 = ssub.s32 200704, 200704
          %173 = vsyncadd %s166, %s172
          %s174 = smul.addr %s170, 64
          %s175 = scalar_lea.hbm %s1, %s174
          %s176 = sshll.u32 %s169, 4
          %s177 = int_to_ptr.vmem [resolvable:$true] %s176
          %182 = dma.hbm_to_vmem [thread:$0]  %s175, 200704, %s177, %s166, 512, 256, 16
        $region24: #{discriminator_forward.5} parent=19 // pred_fallthru
          _
        // Predicated region
        $region25: #{discriminator_forward.5} parent=19 // pred_check
          %p183 = pneg %p99
        $region26: #{discriminator_forward.5} parent=19 // pred_check_branch
          %185 = sbr.rel (%p183) target = $region28
        $region27: #{discriminator_forward.5} parent=19 // pred_region
          %s186 = sand.u32 %s89, 1
          %s187 = scalar_lea.sflag [#allocation5], %s186
          %s188 = sand.u32 %s89, 1
          %s189 = smul.addr %s188, 4
          %s190 = scalar_lea.vmem [#allocation4], %s189
          %s191 = smul.u32 4, %s23
          %s193 = ssub.s32 64, 64
          %194 = vsyncadd %s187, %s193
          %s195 = smul.addr %s191, 16
          %s196 = scalar_lea.hbm %s2, %s195
          %s198 = sshll.u32 %s190, 4
          %s199 = int_to_ptr.vmem [resolvable:$true] %s198
          %201 = dma.hbm_to_vmem [thread:$0]  %s196, 64, %s199, %s187
        $region28: #{discriminator_forward.5} parent=19 // pred_fallthru
          _
      $region20: #{discriminator_forward.5} parent=5 // pred_fallthru
        _
      %p202 = scmp.le.s32.totalorder 1, %s15
      %p203 = scmp.lt.s32.totalorder %s15, 3
      %p204 = pnand %p202, %p203
      %p205 = pneg %p204
      // Predicated region
      $region29: #{discriminator_forward.5} parent=5 // pred_check
        _
      $region30: #{discriminator_forward.5} parent=5 // pred_check_branch
        %207 = sbr.rel (%p204) target = $region32
      $region31: #{discriminator_forward.5} parent=5 // pred_region
        %s208 = ssub.s32 %s15, 1
        %s209 = sand.u32 %s66, 1
        %s210 = scalar_lea.sflag [#allocation3], %s209
        %s211 = sand.u32 %s66, 1
        %s212 = smul.addr %s211, 12544
        %s213 = scalar_lea.vmem [#allocation2], %s212
        // Predicated region
        $region33: #{discriminator_forward.5} parent=31 // pred_check
          %p214 = pneg %p79
        $region34: #{discriminator_forward.5} parent=31 // pred_check_branch
          %216 = sbr.rel (%p214) target = $region36
        $region35: #{discriminator_forward.5} parent=31 // pred_region
          %217 = dma.done %s210, 200704
        $region36: #{discriminator_forward.5} parent=31 // pred_fallthru
          _
        %s218 = sand.u32 %s92, 1
        %s219 = scalar_lea.sflag [#allocation5], %s218
        %s220 = sand.u32 %s92, 1
        %s221 = smul.addr %s220, 4
        %s222 = scalar_lea.vmem [#allocation4], %s221
        // Predicated region
        $region37: #{discriminator_forward.5} parent=31 // pred_check
          %p223 = pneg %p105
        $region38: #{discriminator_forward.5} parent=31 // pred_check_branch
          %225 = sbr.rel (%p223) target = $region40
        $region39: #{discriminator_forward.5} parent=31 // pred_region
          %226 = dma.done %s219, 64
        $region40: #{discriminator_forward.5} parent=31 // pred_fallthru
          _
        %s227 = smul.u32 2, %s24
        %p228 = scmp.lt.s32.totalorder %s227, 1
        %s229 = scalar_select %p228, %s227, 1
        %s230 = smul.addr %s229, 49
        %s231 = smul.addr %s230, 4
        %s232 = scalar_lea.vmem %s0, %s231
        %p233 = pneg %p53
        %p234 = pneg %p50
        %s235 = sand.u32 %s66, 1
        %s236 = scalar_lea.sflag [#allocation3], %s235
        %s237 = sand.u32 %s66, 1
        %s238 = smul.addr %s237, 12544
        %s239 = scalar_lea.vmem [#allocation2], %s238
        %p240 = pneg %p79
        %p241 = pneg %p76
        %s242 = sand.u32 %s92, 1
        %s243 = scalar_lea.sflag [#allocation5], %s242
        %s244 = sand.u32 %s92, 1
        %s245 = smul.addr %s244, 4
        %s246 = scalar_lea.vmem [#allocation4], %s245
        %p247 = pneg %p105
        %p248 = pneg %p102
        %p249 = pneg %p133
        %p250 = pneg %p130
        %s251 = sand.u32 %s120, 1
        %s252 = sand.u32 %s120, 1
        %s253 = smul.addr %s252, 64
        %s254 = scalar_lea.vmem [#allocation6], %s253
        %s255 = smul.u32 2, %s24
        %p256 = scmp.lt.s32.totalorder %s255, 1
        %s257 = scalar_select %p256, %s255, 1
        %s258 = smul.addr %s257, 49
        %s259 = smul.addr %s258, 4
        %s260 = scalar_lea.vmem %s0, %s259
        %s261 = smul.u32 2, %s24
        %s262 = smul.u32 4, %s25
        %s263 = smul.u32 4, %s25
        %s264 = smul.u32 2, %s24
        %s265 = smul.u32 4, %s25
        %v267 = vld [vmem:[%s260] sm:$0xff]
        %v268 = vld [vmem:[%s260 + $0x8] sm:$0xff]
        %v269 = vld [vmem:[%s260 + $0x10] sm:$0xff]
        %v270 = vld [vmem:[%s260 + $0x18] sm:$0xff]
        %v271 = vld [vmem:[%s260 + $0x20] sm:$0xff]
        %v272 = vld [vmem:[%s260 + $0x28] sm:$0xff]
        %v273 = vld [vmem:[%s260 + $0x30] sm:$0xff]
        %v274 = vld [vmem:[%s260 + $0x38] sm:$0xff]
        %v275 = vld [vmem:[%s260 + $0x40] sm:$0xff]
        %v276 = vld [vmem:[%s260 + $0x48] sm:$0xff]
        %v277 = vld [vmem:[%s260 + $0x50] sm:$0xff]
        %v278 = vld [vmem:[%s260 + $0x58] sm:$0xff]
        %v279 = vld [vmem:[%s260 + $0x60] sm:$0xff]
        %v280 = vld [vmem:[%s260 + $0x68] sm:$0xff]
        %v281 = vld [vmem:[%s260 + $0x70] sm:$0xff]
        %v282 = vld [vmem:[%s260 + $0x78] sm:$0xff]
        %v283 = vld [vmem:[%s260 + $0x80] sm:$0xff]
        %v284 = vld [vmem:[%s260 + $0x88] sm:$0xff]
        %v285 = vld [vmem:[%s260 + $0x90] sm:$0xff]
        %v286 = vld [vmem:[%s260 + $0x98] sm:$0xff]
        %v287 = vld [vmem:[%s260 + $0xa0] sm:$0xff]
        %v288 = vld [vmem:[%s260 + $0xa8] sm:$0xff]
        %v289 = vld [vmem:[%s260 + $0xb0] sm:$0xff]
        %v290 = vld [vmem:[%s260 + $0xb8] sm:$0xff]
        %v291 = vld [vmem:[%s260 + $0xc0] sm:$0xf]
        %v292 = vld [vmem:[%s260 + $0xc4] sm:$0xff]
        %v293 = vld [vmem:[%s260 + $0xcc] sm:$0xff]
        %v294 = vld [vmem:[%s260 + $0xd4] sm:$0xff]
        %v295 = vld [vmem:[%s260 + $0xdc] sm:$0xff]
        %v296 = vld [vmem:[%s260 + $0xe4] sm:$0xff]
        %v297 = vld [vmem:[%s260 + $0xec] sm:$0xff]
        %v298 = vld [vmem:[%s260 + $0xf4] sm:$0xff]
        %v299 = vld [vmem:[%s260 + $0xfc] sm:$0xff]
        %v300 = vld [vmem:[%s260 + $0x104] sm:$0xff]
        %v301 = vld [vmem:[%s260 + $0x10c] sm:$0xff]
        %v302 = vld [vmem:[%s260 + $0x114] sm:$0xff]
        %v303 = vld [vmem:[%s260 + $0x11c] sm:$0xff]
        %v304 = vld [vmem:[%s260 + $0x124] sm:$0xff]
        %v305 = vld [vmem:[%s260 + $0x12c] sm:$0xff]
        %v306 = vld [vmem:[%s260 + $0x134] sm:$0xff]
        %v307 = vld [vmem:[%s260 + $0x13c] sm:$0xff]
        %v308 = vld [vmem:[%s260 + $0x144] sm:$0xff]
        %v309 = vld [vmem:[%s260 + $0x14c] sm:$0xff]
        %v310 = vld [vmem:[%s260 + $0x154] sm:$0xff]
        %v311 = vld [vmem:[%s260 + $0x15c] sm:$0xff]
        %v312 = vld [vmem:[%s260 + $0x164] sm:$0xff]
        %v313 = vld [vmem:[%s260 + $0x16c] sm:$0xff]
        %v314 = vld [vmem:[%s260 + $0x174] sm:$0xff]
        %v315 = vld [vmem:[%s260 + $0x17c] sm:$0xff]
        %v316 = vld [vmem:[%s260 + $0x184] sm:$0xf]
        %v317 = vld [vmem:[%s213] sm:$0xff]
        %v318 = vld [vmem:[%s213 + $0x8] sm:$0xff]
        %v319 = vld [vmem:[%s213 + $0x10] sm:$0xff]
        %v320 = vld [vmem:[%s213 + $0x18] sm:$0xff]
        %v321 = vld [vmem:[%s213 + $0x20] sm:$0xff]
        %v322 = vld [vmem:[%s213 + $0x28] sm:$0xff]
        %v323 = vld [vmem:[%s213 + $0x30] sm:$0xff]
        %v324 = vld [vmem:[%s213 + $0x38] sm:$0xff]
        %v325 = vld [vmem:[%s213 + $0x40] sm:$0xff]
        %v326 = vld [vmem:[%s213 + $0x48] sm:$0xff]
        %v327 = vld [vmem:[%s213 + $0x50] sm:$0xff]
        %v328 = vld [vmem:[%s213 + $0x58] sm:$0xff]
        %v329 = vld [vmem:[%s213 + $0x60] sm:$0xff]
        %v330 = vld [vmem:[%s213 + $0x68] sm:$0xff]
        %v331 = vld [vmem:[%s213 + $0x70] sm:$0xff]
        %v332 = vld [vmem:[%s213 + $0x78] sm:$0xff]
        %v333 = vld [vmem:[%s213 + $0x80] sm:$0xff]
        %v334 = vld [vmem:[%s213 + $0x88] sm:$0xff]
        %v335 = vld [vmem:[%s213 + $0x90] sm:$0xff]
        %v336 = vld [vmem:[%s213 + $0x98] sm:$0xff]
        %v337 = vld [vmem:[%s213 + $0xa0] sm:$0xff]
        %v338 = vld [vmem:[%s213 + $0xa8] sm:$0xff]
        %v339 = vld [vmem:[%s213 + $0xb0] sm:$0xff]
        %v340 = vld [vmem:[%s213 + $0xb8] sm:$0xff]
        %v341 = vld [vmem:[%s213 + $0xc0] sm:$0xff]
        %v342 = vld [vmem:[%s213 + $0xc8] sm:$0xff]
        %v343 = vld [vmem:[%s213 + $0xd0] sm:$0xff]
        %v344 = vld [vmem:[%s213 + $0xd8] sm:$0xff]
        %v345 = vld [vmem:[%s213 + $0xe0] sm:$0xff]
        %v346 = vld [vmem:[%s213 + $0xe8] sm:$0xff]
        %v347 = vld [vmem:[%s213 + $0xf0] sm:$0xff]
        %v348 = vld [vmem:[%s213 + $0xf8] sm:$0xff]
        %v349 = vld [vmem:[%s213 + $0x100] sm:$0xff]
        %v350 = vld [vmem:[%s213 + $0x108] sm:$0xff]
        %v351 = vld [vmem:[%s213 + $0x110] sm:$0xff]
        %v352 = vld [vmem:[%s213 + $0x118] sm:$0xff]
        %v353 = vld [vmem:[%s213 + $0x120] sm:$0xff]
        %v354 = vld [vmem:[%s213 + $0x128] sm:$0xff]
        %v355 = vld [vmem:[%s213 + $0x130] sm:$0xff]
        %v356 = vld [vmem:[%s213 + $0x138] sm:$0xff]
        %v357 = vld [vmem:[%s213 + $0x140] sm:$0xff]
        %v358 = vld [vmem:[%s213 + $0x148] sm:$0xff]
        %v359 = vld [vmem:[%s213 + $0x150] sm:$0xff]
        %v360 = vld [vmem:[%s213 + $0x158] sm:$0xff]
        %v361 = vld [vmem:[%s213 + $0x160] sm:$0xff]
        %v362 = vld [vmem:[%s213 + $0x168] sm:$0xff]
        %v363 = vld [vmem:[%s213 + $0x170] sm:$0xff]
        %v364 = vld [vmem:[%s213 + $0x178] sm:$0xff]
        %v365 = vld [vmem:[%s213 + $0x180] sm:$0xff]
        %v366 = vld [vmem:[%s213 + $0x188] sm:$0xff]
        %v367 = vld [vmem:[%s213 + $0x190] sm:$0xff]
        %v368 = vld [vmem:[%s213 + $0x198] sm:$0xff]
        %v369 = vld [vmem:[%s213 + $0x1a0] sm:$0xff]
        %v370 = vld [vmem:[%s213 + $0x1a8] sm:$0xff]
        %v371 = vld [vmem:[%s213 + $0x1b0] sm:$0xff]
        %v372 = vld [vmem:[%s213 + $0x1b8] sm:$0xff]
        %v373 = vld [vmem:[%s213 + $0x1c0] sm:$0xff]
        %v374 = vld [vmem:[%s213 + $0x1c8] sm:$0xff]
        %v375 = vld [vmem:[%s213 + $0x1d0] sm:$0xff]
        %v376 = vld [vmem:[%s213 + $0x1d8] sm:$0xff]
        %v377 = vld [vmem:[%s213 + $0x1e0] sm:$0xff]
        %v378 = vld [vmem:[%s213 + $0x1e8] sm:$0xff]
        %v379 = vld [vmem:[%s213 + $0x1f0] sm:$0xff]
        %v380 = vld [vmem:[%s213 + $0x1f8] sm:$0xff]
        %v381 = vld [vmem:[%s213 + $0x200] sm:$0xff]
        %v382 = vld [vmem:[%s213 + $0x208] sm:$0xff]
        %v383 = vld [vmem:[%s213 + $0x210] sm:$0xff]
        %v384 = vld [vmem:[%s213 + $0x218] sm:$0xff]
        %v385 = vld [vmem:[%s213 + $0x220] sm:$0xff]
        %v386 = vld [vmem:[%s213 + $0x228] sm:$0xff]
        %v387 = vld [vmem:[%s213 + $0x230] sm:$0xff]
        %v388 = vld [vmem:[%s213 + $0x238] sm:$0xff]
        %v389 = vld [vmem:[%s213 + $0x240] sm:$0xff]
        %v390 = vld [vmem:[%s213 + $0x248] sm:$0xff]
        %v391 = vld [vmem:[%s213 + $0x250] sm:$0xff]
        %v392 = vld [vmem:[%s213 + $0x258] sm:$0xff]
        %v393 = vld [vmem:[%s213 + $0x260] sm:$0xff]
        %v394 = vld [vmem:[%s213 + $0x268] sm:$0xff]
        %v395 = vld [vmem:[%s213 + $0x270] sm:$0xff]
        %v396 = vld [vmem:[%s213 + $0x278] sm:$0xff]
        %v397 = vld [vmem:[%s213 + $0x280] sm:$0xff]
        %v398 = vld [vmem:[%s213 + $0x288] sm:$0xff]
        %v399 = vld [vmem:[%s213 + $0x290] sm:$0xff]
        %v400 = vld [vmem:[%s213 + $0x298] sm:$0xff]
        %v401 = vld [vmem:[%s213 + $0x2a0] sm:$0xff]
        %v402 = vld [vmem:[%s213 + $0x2a8] sm:$0xff]
        %v403 = vld [vmem:[%s213 + $0x2b0] sm:$0xff]
        %v404 = vld [vmem:[%s213 + $0x2b8] sm:$0xff]
        %v405 = vld [vmem:[%s213 + $0x2c0] sm:$0xff]
        %v406 = vld [vmem:[%s213 + $0x2c8] sm:$0xff]
        %v407 = vld [vmem:[%s213 + $0x2d0] sm:$0xff]
        %v408 = vld [vmem:[%s213 + $0x2d8] sm:$0xff]
        %v409 = vld [vmem:[%s213 + $0x2e0] sm:$0xff]
        %v410 = vld [vmem:[%s213 + $0x2e8] sm:$0xff]
        %v411 = vld [vmem:[%s213 + $0x2f0] sm:$0xff]
        %v412 = vld [vmem:[%s213 + $0x2f8] sm:$0xff]
        %v413 = vld [vmem:[%s213 + $0x300] sm:$0xff]
        %v414 = vld [vmem:[%s213 + $0x308] sm:$0xff]
        %v415 = vld [vmem:[%s213 + $0x310] sm:$0xff]
        %v416 = vld [vmem:[%s213 + $0x318] sm:$0xff]
        %v417 = vld [vmem:[%s213 + $0x320] sm:$0xff]
        %v418 = vld [vmem:[%s213 + $0x328] sm:$0xff]
        %v419 = vld [vmem:[%s213 + $0x330] sm:$0xff]
        %v420 = vld [vmem:[%s213 + $0x338] sm:$0xff]
        %v421 = vld [vmem:[%s213 + $0x340] sm:$0xff]
        %v422 = vld [vmem:[%s213 + $0x348] sm:$0xff]
        %v423 = vld [vmem:[%s213 + $0x350] sm:$0xff]
        %v424 = vld [vmem:[%s213 + $0x358] sm:$0xff]
        %v425 = vld [vmem:[%s213 + $0x360] sm:$0xff]
        %v426 = vld [vmem:[%s213 + $0x368] sm:$0xff]
        %v427 = vld [vmem:[%s213 + $0x370] sm:$0xff]
        %v428 = vld [vmem:[%s213 + $0x378] sm:$0xff]
        %v429 = vld [vmem:[%s213 + $0x380] sm:$0xff]
        %v430 = vld [vmem:[%s213 + $0x388] sm:$0xff]
        %v431 = vld [vmem:[%s213 + $0x390] sm:$0xff]
        %v432 = vld [vmem:[%s213 + $0x398] sm:$0xff]
        %v433 = vld [vmem:[%s213 + $0x3a0] sm:$0xff]
        %v434 = vld [vmem:[%s213 + $0x3a8] sm:$0xff]
        %v435 = vld [vmem:[%s213 + $0x3b0] sm:$0xff]
        %v436 = vld [vmem:[%s213 + $0x3b8] sm:$0xff]
        %v437 = vld [vmem:[%s213 + $0x3c0] sm:$0xff]
        %v438 = vld [vmem:[%s213 + $0x3c8] sm:$0xff]
        %v439 = vld [vmem:[%s213 + $0x3d0] sm:$0xff]
        %v440 = vld [vmem:[%s213 + $0x3d8] sm:$0xff]
        %v441 = vld [vmem:[%s213 + $0x3e0] sm:$0xff]
        %v442 = vld [vmem:[%s213 + $0x3e8] sm:$0xff]
        %v443 = vld [vmem:[%s213 + $0x3f0] sm:$0xff]
        %v444 = vld [vmem:[%s213 + $0x3f8] sm:$0xff]
        %v445 = vld [vmem:[%s213 + $0x400] sm:$0xff]
        %v446 = vld [vmem:[%s213 + $0x408] sm:$0xff]
        %v447 = vld [vmem:[%s213 + $0x410] sm:$0xff]
        %v448 = vld [vmem:[%s213 + $0x418] sm:$0xff]
        %v449 = vld [vmem:[%s213 + $0x420] sm:$0xff]
        %v450 = vld [vmem:[%s213 + $0x428] sm:$0xff]
        %v451 = vld [vmem:[%s213 + $0x430] sm:$0xff]
        %v452 = vld [vmem:[%s213 + $0x438] sm:$0xff]
        %v453 = vld [vmem:[%s213 + $0x440] sm:$0xff]
        %v454 = vld [vmem:[%s213 + $0x448] sm:$0xff]
        %v455 = vld [vmem:[%s213 + $0x450] sm:$0xff]
        %v456 = vld [vmem:[%s213 + $0x458] sm:$0xff]
        %v457 = vld [vmem:[%s213 + $0x460] sm:$0xff]
        %v458 = vld [vmem:[%s213 + $0x468] sm:$0xff]
        %v459 = vld [vmem:[%s213 + $0x470] sm:$0xff]
        %v460 = vld [vmem:[%s213 + $0x478] sm:$0xff]
        %v461 = vld [vmem:[%s213 + $0x480] sm:$0xff]
        %v462 = vld [vmem:[%s213 + $0x488] sm:$0xff]
        %v463 = vld [vmem:[%s213 + $0x490] sm:$0xff]
        %v464 = vld [vmem:[%s213 + $0x498] sm:$0xff]
        %v465 = vld [vmem:[%s213 + $0x4a0] sm:$0xff]
        %v466 = vld [vmem:[%s213 + $0x4a8] sm:$0xff]
        %v467 = vld [vmem:[%s213 + $0x4b0] sm:$0xff]
        %v468 = vld [vmem:[%s213 + $0x4b8] sm:$0xff]
        %v469 = vld [vmem:[%s213 + $0x4c0] sm:$0xff]
        %v470 = vld [vmem:[%s213 + $0x4c8] sm:$0xff]
        %v471 = vld [vmem:[%s213 + $0x4d0] sm:$0xff]
        %v472 = vld [vmem:[%s213 + $0x4d8] sm:$0xff]
        %v473 = vld [vmem:[%s213 + $0x4e0] sm:$0xff]
        %v474 = vld [vmem:[%s213 + $0x4e8] sm:$0xff]
        %v475 = vld [vmem:[%s213 + $0x4f0] sm:$0xff]
        %v476 = vld [vmem:[%s213 + $0x4f8] sm:$0xff]
        %v477 = vld [vmem:[%s213 + $0x500] sm:$0xff]
        %v478 = vld [vmem:[%s213 + $0x508] sm:$0xff]
        %v479 = vld [vmem:[%s213 + $0x510] sm:$0xff]
        %v480 = vld [vmem:[%s213 + $0x518] sm:$0xff]
        %v481 = vld [vmem:[%s213 + $0x520] sm:$0xff]
        %v482 = vld [vmem:[%s213 + $0x528] sm:$0xff]
        %v483 = vld [vmem:[%s213 + $0x530] sm:$0xff]
        %v484 = vld [vmem:[%s213 + $0x538] sm:$0xff]
        %v485 = vld [vmem:[%s213 + $0x540] sm:$0xff]
        %v486 = vld [vmem:[%s213 + $0x548] sm:$0xff]
        %v487 = vld [vmem:[%s213 + $0x550] sm:$0xff]
        %v488 = vld [vmem:[%s213 + $0x558] sm:$0xff]
        %v489 = vld [vmem:[%s213 + $0x560] sm:$0xff]
        %v490 = vld [vmem:[%s213 + $0x568] sm:$0xff]
        %v491 = vld [vmem:[%s213 + $0x570] sm:$0xff]
        %v492 = vld [vmem:[%s213 + $0x578] sm:$0xff]
        %v493 = vld [vmem:[%s213 + $0x580] sm:$0xff]
        %v494 = vld [vmem:[%s213 + $0x588] sm:$0xff]
        %v495 = vld [vmem:[%s213 + $0x590] sm:$0xff]
        %v496 = vld [vmem:[%s213 + $0x598] sm:$0xff]
        %v497 = vld [vmem:[%s213 + $0x5a0] sm:$0xff]
        %v498 = vld [vmem:[%s213 + $0x5a8] sm:$0xff]
        %v499 = vld [vmem:[%s213 + $0x5b0] sm:$0xff]
        %v500 = vld [vmem:[%s213 + $0x5b8] sm:$0xff]
        %v501 = vld [vmem:[%s213 + $0x5c0] sm:$0xff]
        %v502 = vld [vmem:[%s213 + $0x5c8] sm:$0xff]
        %v503 = vld [vmem:[%s213 + $0x5d0] sm:$0xff]
        %v504 = vld [vmem:[%s213 + $0x5d8] sm:$0xff]
        %v505 = vld [vmem:[%s213 + $0x5e0] sm:$0xff]
        %v506 = vld [vmem:[%s213 + $0x5e8] sm:$0xff]
        %v507 = vld [vmem:[%s213 + $0x5f0] sm:$0xff]
        %v508 = vld [vmem:[%s213 + $0x5f8] sm:$0xff]
        %v509 = vld [vmem:[%s213 + $0x600] sm:$0xff]
        %v510 = vld [vmem:[%s213 + $0x608] sm:$0xff]
        %v511 = vld [vmem:[%s213 + $0x610] sm:$0xff]
        %v512 = vld [vmem:[%s213 + $0x618] sm:$0xff]
        %v513 = vld [vmem:[%s213 + $0x620] sm:$0xff]
        %v514 = vld [vmem:[%s213 + $0x628] sm:$0xff]
        %v515 = vld [vmem:[%s213 + $0x630] sm:$0xff]
        %v516 = vld [vmem:[%s213 + $0x638] sm:$0xff]
        %v517 = vld [vmem:[%s213 + $0x640] sm:$0xff]
        %v518 = vld [vmem:[%s213 + $0x648] sm:$0xff]
        %v519 = vld [vmem:[%s213 + $0x650] sm:$0xff]
        %v520 = vld [vmem:[%s213 + $0x658] sm:$0xff]
        %v521 = vld [vmem:[%s213 + $0x660] sm:$0xff]
        %v522 = vld [vmem:[%s213 + $0x668] sm:$0xff]
        %v523 = vld [vmem:[%s213 + $0x670] sm:$0xff]
        %v524 = vld [vmem:[%s213 + $0x678] sm:$0xff]
        %v525 = vld [vmem:[%s213 + $0x680] sm:$0xff]
        %v526 = vld [vmem:[%s213 + $0x688] sm:$0xff]
        %v527 = vld [vmem:[%s213 + $0x690] sm:$0xff]
        %v528 = vld [vmem:[%s213 + $0x698] sm:$0xff]
        %v529 = vld [vmem:[%s213 + $0x6a0] sm:$0xff]
        %v530 = vld [vmem:[%s213 + $0x6a8] sm:$0xff]
        %v531 = vld [vmem:[%s213 + $0x6b0] sm:$0xff]
        %v532 = vld [vmem:[%s213 + $0x6b8] sm:$0xff]
        %v533 = vld [vmem:[%s213 + $0x6c0] sm:$0xff]
        %v534 = vld [vmem:[%s213 + $0x6c8] sm:$0xff]
        %v535 = vld [vmem:[%s213 + $0x6d0] sm:$0xff]
        %v536 = vld [vmem:[%s213 + $0x6d8] sm:$0xff]
        %v537 = vld [vmem:[%s213 + $0x6e0] sm:$0xff]
        %v538 = vld [vmem:[%s213 + $0x6e8] sm:$0xff]
        %v539 = vld [vmem:[%s213 + $0x6f0] sm:$0xff]
        %v540 = vld [vmem:[%s213 + $0x6f8] sm:$0xff]
        %v541 = vld [vmem:[%s213 + $0x700] sm:$0xff]
        %v542 = vld [vmem:[%s213 + $0x708] sm:$0xff]
        %v543 = vld [vmem:[%s213 + $0x710] sm:$0xff]
        %v544 = vld [vmem:[%s213 + $0x718] sm:$0xff]
        %v545 = vld [vmem:[%s213 + $0x720] sm:$0xff]
        %v546 = vld [vmem:[%s213 + $0x728] sm:$0xff]
        %v547 = vld [vmem:[%s213 + $0x730] sm:$0xff]
        %v548 = vld [vmem:[%s213 + $0x738] sm:$0xff]
        %v549 = vld [vmem:[%s213 + $0x740] sm:$0xff]
        %v550 = vld [vmem:[%s213 + $0x748] sm:$0xff]
        %v551 = vld [vmem:[%s213 + $0x750] sm:$0xff]
        %v552 = vld [vmem:[%s213 + $0x758] sm:$0xff]
        %v553 = vld [vmem:[%s213 + $0x760] sm:$0xff]
        %v554 = vld [vmem:[%s213 + $0x768] sm:$0xff]
        %v555 = vld [vmem:[%s213 + $0x770] sm:$0xff]
        %v556 = vld [vmem:[%s213 + $0x778] sm:$0xff]
        %v557 = vld [vmem:[%s213 + $0x780] sm:$0xff]
        %v558 = vld [vmem:[%s213 + $0x788] sm:$0xff]
        %v559 = vld [vmem:[%s213 + $0x790] sm:$0xff]
        %v560 = vld [vmem:[%s213 + $0x798] sm:$0xff]
        %v561 = vld [vmem:[%s213 + $0x7a0] sm:$0xff]
        %v562 = vld [vmem:[%s213 + $0x7a8] sm:$0xff]
        %v563 = vld [vmem:[%s213 + $0x7b0] sm:$0xff]
        %v564 = vld [vmem:[%s213 + $0x7b8] sm:$0xff]
        %v565 = vld [vmem:[%s213 + $0x7c0] sm:$0xff]
        %v566 = vld [vmem:[%s213 + $0x7c8] sm:$0xff]
        %v567 = vld [vmem:[%s213 + $0x7d0] sm:$0xff]
        %v568 = vld [vmem:[%s213 + $0x7d8] sm:$0xff]
        %v569 = vld [vmem:[%s213 + $0x7e0] sm:$0xff]
        %v570 = vld [vmem:[%s213 + $0x7e8] sm:$0xff]
        %v571 = vld [vmem:[%s213 + $0x7f0] sm:$0xff]
        %v572 = vld [vmem:[%s213 + $0x7f8] sm:$0xff]
        %v573 = vld [vmem:[%s213 + $0x800] sm:$0xff]
        %v574 = vld [vmem:[%s213 + $0x808] sm:$0xff]
        %v575 = vld [vmem:[%s213 + $0x810] sm:$0xff]
        %v576 = vld [vmem:[%s213 + $0x818] sm:$0xff]
        %v577 = vld [vmem:[%s213 + $0x820] sm:$0xff]
        %v578 = vld [vmem:[%s213 + $0x828] sm:$0xff]
        %v579 = vld [vmem:[%s213 + $0x830] sm:$0xff]
        %v580 = vld [vmem:[%s213 + $0x838] sm:$0xff]
        %v581 = vld [vmem:[%s213 + $0x840] sm:$0xff]
        %v582 = vld [vmem:[%s213 + $0x848] sm:$0xff]
        %v583 = vld [vmem:[%s213 + $0x850] sm:$0xff]
        %v584 = vld [vmem:[%s213 + $0x858] sm:$0xff]
        %v585 = vld [vmem:[%s213 + $0x860] sm:$0xff]
        %v586 = vld [vmem:[%s213 + $0x868] sm:$0xff]
        %v587 = vld [vmem:[%s213 + $0x870] sm:$0xff]
        %v588 = vld [vmem:[%s213 + $0x878] sm:$0xff]
        %v589 = vld [vmem:[%s213 + $0x880] sm:$0xff]
        %v590 = vld [vmem:[%s213 + $0x888] sm:$0xff]
        %v591 = vld [vmem:[%s213 + $0x890] sm:$0xff]
        %v592 = vld [vmem:[%s213 + $0x898] sm:$0xff]
        %v593 = vld [vmem:[%s213 + $0x8a0] sm:$0xff]
        %v594 = vld [vmem:[%s213 + $0x8a8] sm:$0xff]
        %v595 = vld [vmem:[%s213 + $0x8b0] sm:$0xff]
        %v596 = vld [vmem:[%s213 + $0x8b8] sm:$0xff]
        %v597 = vld [vmem:[%s213 + $0x8c0] sm:$0xff]
        %v598 = vld [vmem:[%s213 + $0x8c8] sm:$0xff]
        %v599 = vld [vmem:[%s213 + $0x8d0] sm:$0xff]
        %v600 = vld [vmem:[%s213 + $0x8d8] sm:$0xff]
        %v601 = vld [vmem:[%s213 + $0x8e0] sm:$0xff]
        %v602 = vld [vmem:[%s213 + $0x8e8] sm:$0xff]
        %v603 = vld [vmem:[%s213 + $0x8f0] sm:$0xff]
        %v604 = vld [vmem:[%s213 + $0x8f8] sm:$0xff]
        %v605 = vld [vmem:[%s213 + $0x900] sm:$0xff]
        %v606 = vld [vmem:[%s213 + $0x908] sm:$0xff]
        %v607 = vld [vmem:[%s213 + $0x910] sm:$0xff]
        %v608 = vld [vmem:[%s213 + $0x918] sm:$0xff]
        %v609 = vld [vmem:[%s213 + $0x920] sm:$0xff]
        %v610 = vld [vmem:[%s213 + $0x928] sm:$0xff]
        %v611 = vld [vmem:[%s213 + $0x930] sm:$0xff]
        %v612 = vld [vmem:[%s213 + $0x938] sm:$0xff]
        %v613 = vld [vmem:[%s213 + $0x940] sm:$0xff]
        %v614 = vld [vmem:[%s213 + $0x948] sm:$0xff]
        %v615 = vld [vmem:[%s213 + $0x950] sm:$0xff]
        %v616 = vld [vmem:[%s213 + $0x958] sm:$0xff]
        %v617 = vld [vmem:[%s213 + $0x960] sm:$0xff]
        %v618 = vld [vmem:[%s213 + $0x968] sm:$0xff]
        %v619 = vld [vmem:[%s213 + $0x970] sm:$0xff]
        %v620 = vld [vmem:[%s213 + $0x978] sm:$0xff]
        %v621 = vld [vmem:[%s213 + $0x980] sm:$0xff]
        %v622 = vld [vmem:[%s213 + $0x988] sm:$0xff]
        %v623 = vld [vmem:[%s213 + $0x990] sm:$0xff]
        %v624 = vld [vmem:[%s213 + $0x998] sm:$0xff]
        %v625 = vld [vmem:[%s213 + $0x9a0] sm:$0xff]
        %v626 = vld [vmem:[%s213 + $0x9a8] sm:$0xff]
        %v627 = vld [vmem:[%s213 + $0x9b0] sm:$0xff]
        %v628 = vld [vmem:[%s213 + $0x9b8] sm:$0xff]
        %v629 = vld [vmem:[%s213 + $0x9c0] sm:$0xff]
        %v630 = vld [vmem:[%s213 + $0x9c8] sm:$0xff]
        %v631 = vld [vmem:[%s213 + $0x9d0] sm:$0xff]
        %v632 = vld [vmem:[%s213 + $0x9d8] sm:$0xff]
        %v633 = vld [vmem:[%s213 + $0x9e0] sm:$0xff]
        %v634 = vld [vmem:[%s213 + $0x9e8] sm:$0xff]
        %v635 = vld [vmem:[%s213 + $0x9f0] sm:$0xff]
        %v636 = vld [vmem:[%s213 + $0x9f8] sm:$0xff]
        %v637 = vld [vmem:[%s213 + $0xa00] sm:$0xff]
        %v638 = vld [vmem:[%s213 + $0xa08] sm:$0xff]
        %v639 = vld [vmem:[%s213 + $0xa10] sm:$0xff]
        %v640 = vld [vmem:[%s213 + $0xa18] sm:$0xff]
        %v641 = vld [vmem:[%s213 + $0xa20] sm:$0xff]
        %v642 = vld [vmem:[%s213 + $0xa28] sm:$0xff]
        %v643 = vld [vmem:[%s213 + $0xa30] sm:$0xff]
        %v644 = vld [vmem:[%s213 + $0xa38] sm:$0xff]
        %v645 = vld [vmem:[%s213 + $0xa40] sm:$0xff]
        %v646 = vld [vmem:[%s213 + $0xa48] sm:$0xff]
        %v647 = vld [vmem:[%s213 + $0xa50] sm:$0xff]
        %v648 = vld [vmem:[%s213 + $0xa58] sm:$0xff]
        %v649 = vld [vmem:[%s213 + $0xa60] sm:$0xff]
        %v650 = vld [vmem:[%s213 + $0xa68] sm:$0xff]
        %v651 = vld [vmem:[%s213 + $0xa70] sm:$0xff]
        %v652 = vld [vmem:[%s213 + $0xa78] sm:$0xff]
        %v653 = vld [vmem:[%s213 + $0xa80] sm:$0xff]
        %v654 = vld [vmem:[%s213 + $0xa88] sm:$0xff]
        %v655 = vld [vmem:[%s213 + $0xa90] sm:$0xff]
        %v656 = vld [vmem:[%s213 + $0xa98] sm:$0xff]
        %v657 = vld [vmem:[%s213 + $0xaa0] sm:$0xff]
        %v658 = vld [vmem:[%s213 + $0xaa8] sm:$0xff]
        %v659 = vld [vmem:[%s213 + $0xab0] sm:$0xff]
        %v660 = vld [vmem:[%s213 + $0xab8] sm:$0xff]
        %v661 = vld [vmem:[%s213 + $0xac0] sm:$0xff]
        %v662 = vld [vmem:[%s213 + $0xac8] sm:$0xff]
        %v663 = vld [vmem:[%s213 + $0xad0] sm:$0xff]
        %v664 = vld [vmem:[%s213 + $0xad8] sm:$0xff]
        %v665 = vld [vmem:[%s213 + $0xae0] sm:$0xff]
        %v666 = vld [vmem:[%s213 + $0xae8] sm:$0xff]
        %v667 = vld [vmem:[%s213 + $0xaf0] sm:$0xff]
        %v668 = vld [vmem:[%s213 + $0xaf8] sm:$0xff]
        %v669 = vld [vmem:[%s213 + $0xb00] sm:$0xff]
        %v670 = vld [vmem:[%s213 + $0xb08] sm:$0xff]
        %v671 = vld [vmem:[%s213 + $0xb10] sm:$0xff]
        %v672 = vld [vmem:[%s213 + $0xb18] sm:$0xff]
        %v673 = vld [vmem:[%s213 + $0xb20] sm:$0xff]
        %v674 = vld [vmem:[%s213 + $0xb28] sm:$0xff]
        %v675 = vld [vmem:[%s213 + $0xb30] sm:$0xff]
        %v676 = vld [vmem:[%s213 + $0xb38] sm:$0xff]
        %v677 = vld [vmem:[%s213 + $0xb40] sm:$0xff]
        %v678 = vld [vmem:[%s213 + $0xb48] sm:$0xff]
        %v679 = vld [vmem:[%s213 + $0xb50] sm:$0xff]
        %v680 = vld [vmem:[%s213 + $0xb58] sm:$0xff]
        %v681 = vld [vmem:[%s213 + $0xb60] sm:$0xff]
        %v682 = vld [vmem:[%s213 + $0xb68] sm:$0xff]
        %v683 = vld [vmem:[%s213 + $0xb70] sm:$0xff]
        %v684 = vld [vmem:[%s213 + $0xb78] sm:$0xff]
        %v685 = vld [vmem:[%s213 + $0xb80] sm:$0xff]
        %v686 = vld [vmem:[%s213 + $0xb88] sm:$0xff]
        %v687 = vld [vmem:[%s213 + $0xb90] sm:$0xff]
        %v688 = vld [vmem:[%s213 + $0xb98] sm:$0xff]
        %v689 = vld [vmem:[%s213 + $0xba0] sm:$0xff]
        %v690 = vld [vmem:[%s213 + $0xba8] sm:$0xff]
        %v691 = vld [vmem:[%s213 + $0xbb0] sm:$0xff]
        %v692 = vld [vmem:[%s213 + $0xbb8] sm:$0xff]
        %v693 = vld [vmem:[%s213 + $0xbc0] sm:$0xff]
        %v694 = vld [vmem:[%s213 + $0xbc8] sm:$0xff]
        %v695 = vld [vmem:[%s213 + $0xbd0] sm:$0xff]
        %v696 = vld [vmem:[%s213 + $0xbd8] sm:$0xff]
        %v697 = vld [vmem:[%s213 + $0xbe0] sm:$0xff]
        %v698 = vld [vmem:[%s213 + $0xbe8] sm:$0xff]
        %v699 = vld [vmem:[%s213 + $0xbf0] sm:$0xff]
        %v700 = vld [vmem:[%s213 + $0xbf8] sm:$0xff]
        %v701 = vld [vmem:[%s213 + $0xc00] sm:$0xff]
        %v702 = vld [vmem:[%s213 + $0xc08] sm:$0xff]
        %v703 = vld [vmem:[%s213 + $0xc10] sm:$0xff]
        %v704 = vld [vmem:[%s213 + $0xc18] sm:$0xff]
        %v705 = vld [vmem:[%s213 + $0xc20] sm:$0xff]
        %v706 = vld [vmem:[%s213 + $0xc28] sm:$0xff]
        %v707 = vld [vmem:[%s213 + $0xc30] sm:$0xff]
        %v708 = vld [vmem:[%s213 + $0xc38] sm:$0xff]
        %v709 = vld [vmem:[%s213 + $0xc40] sm:$0xff]
        %v710 = vld [vmem:[%s213 + $0xc48] sm:$0xff]
        %v711 = vld [vmem:[%s213 + $0xc50] sm:$0xff]
        %v712 = vld [vmem:[%s213 + $0xc58] sm:$0xff]
        %v713 = vld [vmem:[%s213 + $0xc60] sm:$0xff]
        %v714 = vld [vmem:[%s213 + $0xc68] sm:$0xff]
        %v715 = vld [vmem:[%s213 + $0xc70] sm:$0xff]
        %v716 = vld [vmem:[%s213 + $0xc78] sm:$0xff]
        %v717 = vld [vmem:[%s213 + $0xc80] sm:$0xff]
        %v718 = vld [vmem:[%s213 + $0xc88] sm:$0xff]
        %v719 = vld [vmem:[%s213 + $0xc90] sm:$0xff]
        %v720 = vld [vmem:[%s213 + $0xc98] sm:$0xff]
        %v721 = vld [vmem:[%s213 + $0xca0] sm:$0xff]
        %v722 = vld [vmem:[%s213 + $0xca8] sm:$0xff]
        %v723 = vld [vmem:[%s213 + $0xcb0] sm:$0xff]
        %v724 = vld [vmem:[%s213 + $0xcb8] sm:$0xff]
        %v725 = vld [vmem:[%s213 + $0xcc0] sm:$0xff]
        %v726 = vld [vmem:[%s213 + $0xcc8] sm:$0xff]
        %v727 = vld [vmem:[%s213 + $0xcd0] sm:$0xff]
        %v728 = vld [vmem:[%s213 + $0xcd8] sm:$0xff]
        %v729 = vld [vmem:[%s213 + $0xce0] sm:$0xff]
        %v730 = vld [vmem:[%s213 + $0xce8] sm:$0xff]
        %v731 = vld [vmem:[%s213 + $0xcf0] sm:$0xff]
        %v732 = vld [vmem:[%s213 + $0xcf8] sm:$0xff]
        %v733 = vld [vmem:[%s213 + $0xd00] sm:$0xff]
        %v734 = vld [vmem:[%s213 + $0xd08] sm:$0xff]
        %v735 = vld [vmem:[%s213 + $0xd10] sm:$0xff]
        %v736 = vld [vmem:[%s213 + $0xd18] sm:$0xff]
        %v737 = vld [vmem:[%s213 + $0xd20] sm:$0xff]
        %v738 = vld [vmem:[%s213 + $0xd28] sm:$0xff]
        %v739 = vld [vmem:[%s213 + $0xd30] sm:$0xff]
        %v740 = vld [vmem:[%s213 + $0xd38] sm:$0xff]
        %v741 = vld [vmem:[%s213 + $0xd40] sm:$0xff]
        %v742 = vld [vmem:[%s213 + $0xd48] sm:$0xff]
        %v743 = vld [vmem:[%s213 + $0xd50] sm:$0xff]
        %v744 = vld [vmem:[%s213 + $0xd58] sm:$0xff]
        %v745 = vld [vmem:[%s213 + $0xd60] sm:$0xff]
        %v746 = vld [vmem:[%s213 + $0xd68] sm:$0xff]
        %v747 = vld [vmem:[%s213 + $0xd70] sm:$0xff]
        %v748 = vld [vmem:[%s213 + $0xd78] sm:$0xff]
        %v749 = vld [vmem:[%s213 + $0xd80] sm:$0xff]
        %v750 = vld [vmem:[%s213 + $0xd88] sm:$0xff]
        %v751 = vld [vmem:[%s213 + $0xd90] sm:$0xff]
        %v752 = vld [vmem:[%s213 + $0xd98] sm:$0xff]
        %v753 = vld [vmem:[%s213 + $0xda0] sm:$0xff]
        %v754 = vld [vmem:[%s213 + $0xda8] sm:$0xff]
        %v755 = vld [vmem:[%s213 + $0xdb0] sm:$0xff]
        %v756 = vld [vmem:[%s213 + $0xdb8] sm:$0xff]
        %v757 = vld [vmem:[%s213 + $0xdc0] sm:$0xff]
        %v758 = vld [vmem:[%s213 + $0xdc8] sm:$0xff]
        %v759 = vld [vmem:[%s213 + $0xdd0] sm:$0xff]
        %v760 = vld [vmem:[%s213 + $0xdd8] sm:$0xff]
        %v761 = vld [vmem:[%s213 + $0xde0] sm:$0xff]
        %v762 = vld [vmem:[%s213 + $0xde8] sm:$0xff]
        %v763 = vld [vmem:[%s213 + $0xdf0] sm:$0xff]
        %v764 = vld [vmem:[%s213 + $0xdf8] sm:$0xff]
        %v765 = vld [vmem:[%s213 + $0xe00] sm:$0xff]
        %v766 = vld [vmem:[%s213 + $0xe08] sm:$0xff]
        %v767 = vld [vmem:[%s213 + $0xe10] sm:$0xff]
        %v768 = vld [vmem:[%s213 + $0xe18] sm:$0xff]
        %v769 = vld [vmem:[%s213 + $0xe20] sm:$0xff]
        %v770 = vld [vmem:[%s213 + $0xe28] sm:$0xff]
        %v771 = vld [vmem:[%s213 + $0xe30] sm:$0xff]
        %v772 = vld [vmem:[%s213 + $0xe38] sm:$0xff]
        %v773 = vld [vmem:[%s213 + $0xe40] sm:$0xff]
        %v774 = vld [vmem:[%s213 + $0xe48] sm:$0xff]
        %v775 = vld [vmem:[%s213 + $0xe50] sm:$0xff]
        %v776 = vld [vmem:[%s213 + $0xe58] sm:$0xff]
        %v777 = vld [vmem:[%s213 + $0xe60] sm:$0xff]
        %v778 = vld [vmem:[%s213 + $0xe68] sm:$0xff]
        %v779 = vld [vmem:[%s213 + $0xe70] sm:$0xff]
        %v780 = vld [vmem:[%s213 + $0xe78] sm:$0xff]
        %v781 = vld [vmem:[%s213 + $0xe80] sm:$0xff]
        %v782 = vld [vmem:[%s213 + $0xe88] sm:$0xff]
        %v783 = vld [vmem:[%s213 + $0xe90] sm:$0xff]
        %v784 = vld [vmem:[%s213 + $0xe98] sm:$0xff]
        %v785 = vld [vmem:[%s213 + $0xea0] sm:$0xff]
        %v786 = vld [vmem:[%s213 + $0xea8] sm:$0xff]
        %v787 = vld [vmem:[%s213 + $0xeb0] sm:$0xff]
        %v788 = vld [vmem:[%s213 + $0xeb8] sm:$0xff]
        %v789 = vld [vmem:[%s213 + $0xec0] sm:$0xff]
        %v790 = vld [vmem:[%s213 + $0xec8] sm:$0xff]
        %v791 = vld [vmem:[%s213 + $0xed0] sm:$0xff]
        %v792 = vld [vmem:[%s213 + $0xed8] sm:$0xff]
        %v793 = vld [vmem:[%s213 + $0xee0] sm:$0xff]
        %v794 = vld [vmem:[%s213 + $0xee8] sm:$0xff]
        %v795 = vld [vmem:[%s213 + $0xef0] sm:$0xff]
        %v796 = vld [vmem:[%s213 + $0xef8] sm:$0xff]
        %v797 = vld [vmem:[%s213 + $0xf00] sm:$0xff]
        %v798 = vld [vmem:[%s213 + $0xf08] sm:$0xff]
        %v799 = vld [vmem:[%s213 + $0xf10] sm:$0xff]
        %v800 = vld [vmem:[%s213 + $0xf18] sm:$0xff]
        %v801 = vld [vmem:[%s213 + $0xf20] sm:$0xff]
        %v802 = vld [vmem:[%s213 + $0xf28] sm:$0xff]
        %v803 = vld [vmem:[%s213 + $0xf30] sm:$0xff]
        %v804 = vld [vmem:[%s213 + $0xf38] sm:$0xff]
        %v805 = vld [vmem:[%s213 + $0xf40] sm:$0xff]
        %v806 = vld [vmem:[%s213 + $0xf48] sm:$0xff]
        %v807 = vld [vmem:[%s213 + $0xf50] sm:$0xff]
        %v808 = vld [vmem:[%s213 + $0xf58] sm:$0xff]
        %v809 = vld [vmem:[%s213 + $0xf60] sm:$0xff]
        %v810 = vld [vmem:[%s213 + $0xf68] sm:$0xff]
        %v811 = vld [vmem:[%s213 + $0xf70] sm:$0xff]
        %v812 = vld [vmem:[%s213 + $0xf78] sm:$0xff]
        %v813 = vld [vmem:[%s213 + $0xf80] sm:$0xff]
        %v814 = vld [vmem:[%s213 + $0xf88] sm:$0xff]
        %v815 = vld [vmem:[%s213 + $0xf90] sm:$0xff]
        %v816 = vld [vmem:[%s213 + $0xf98] sm:$0xff]
        %v817 = vld [vmem:[%s213 + $0xfa0] sm:$0xff]
        %v818 = vld [vmem:[%s213 + $0xfa8] sm:$0xff]
        %v819 = vld [vmem:[%s213 + $0xfb0] sm:$0xff]
        %v820 = vld [vmem:[%s213 + $0xfb8] sm:$0xff]
        %v821 = vld [vmem:[%s213 + $0xfc0] sm:$0xff]
        %v822 = vld [vmem:[%s213 + $0xfc8] sm:$0xff]
        %v823 = vld [vmem:[%s213 + $0xfd0] sm:$0xff]
        %v824 = vld [vmem:[%s213 + $0xfd8] sm:$0xff]
        %v825 = vld [vmem:[%s213 + $0xfe0] sm:$0xff]
        %v826 = vld [vmem:[%s213 + $0xfe8] sm:$0xff]
        %v827 = vld [vmem:[%s213 + $0xff0] sm:$0xff]
        %v828 = vld [vmem:[%s213 + $0xff8] sm:$0xff]
        %v829 = vld [vmem:[%s213 + $0x1000] sm:$0xff]
        %v830 = vld [vmem:[%s213 + $0x1008] sm:$0xff]
        %v831 = vld [vmem:[%s213 + $0x1010] sm:$0xff]
        %v832 = vld [vmem:[%s213 + $0x1018] sm:$0xff]
        %v833 = vld [vmem:[%s213 + $0x1020] sm:$0xff]
        %v834 = vld [vmem:[%s213 + $0x1028] sm:$0xff]
        %v835 = vld [vmem:[%s213 + $0x1030] sm:$0xff]
        %v836 = vld [vmem:[%s213 + $0x1038] sm:$0xff]
        %v837 = vld [vmem:[%s213 + $0x1040] sm:$0xff]
        %v838 = vld [vmem:[%s213 + $0x1048] sm:$0xff]
        %v839 = vld [vmem:[%s213 + $0x1050] sm:$0xff]
        %v840 = vld [vmem:[%s213 + $0x1058] sm:$0xff]
        %v841 = vld [vmem:[%s213 + $0x1060] sm:$0xff]
        %v842 = vld [vmem:[%s213 + $0x1068] sm:$0xff]
        %v843 = vld [vmem:[%s213 + $0x1070] sm:$0xff]
        %v844 = vld [vmem:[%s213 + $0x1078] sm:$0xff]
        %v845 = vld [vmem:[%s213 + $0x1080] sm:$0xff]
        %v846 = vld [vmem:[%s213 + $0x1088] sm:$0xff]
        %v847 = vld [vmem:[%s213 + $0x1090] sm:$0xff]
        %v848 = vld [vmem:[%s213 + $0x1098] sm:$0xff]
        %v849 = vld [vmem:[%s213 + $0x10a0] sm:$0xff]
        %v850 = vld [vmem:[%s213 + $0x10a8] sm:$0xff]
        %v851 = vld [vmem:[%s213 + $0x10b0] sm:$0xff]
        %v852 = vld [vmem:[%s213 + $0x10b8] sm:$0xff]
        %v853 = vld [vmem:[%s213 + $0x10c0] sm:$0xff]
        %v854 = vld [vmem:[%s213 + $0x10c8] sm:$0xff]
        %v855 = vld [vmem:[%s213 + $0x10d0] sm:$0xff]
        %v856 = vld [vmem:[%s213 + $0x10d8] sm:$0xff]
        %v857 = vld [vmem:[%s213 + $0x10e0] sm:$0xff]
        %v858 = vld [vmem:[%s213 + $0x10e8] sm:$0xff]
        %v859 = vld [vmem:[%s213 + $0x10f0] sm:$0xff]
        %v860 = vld [vmem:[%s213 + $0x10f8] sm:$0xff]
        %v861 = vld [vmem:[%s213 + $0x1100] sm:$0xff]
        %v862 = vld [vmem:[%s213 + $0x1108] sm:$0xff]
        %v863 = vld [vmem:[%s213 + $0x1110] sm:$0xff]
        %v864 = vld [vmem:[%s213 + $0x1118] sm:$0xff]
        %v865 = vld [vmem:[%s213 + $0x1120] sm:$0xff]
        %v866 = vld [vmem:[%s213 + $0x1128] sm:$0xff]
        %v867 = vld [vmem:[%s213 + $0x1130] sm:$0xff]
        %v868 = vld [vmem:[%s213 + $0x1138] sm:$0xff]
        %v869 = vld [vmem:[%s213 + $0x1140] sm:$0xff]
        %v870 = vld [vmem:[%s213 + $0x1148] sm:$0xff]
        %v871 = vld [vmem:[%s213 + $0x1150] sm:$0xff]
        %v872 = vld [vmem:[%s213 + $0x1158] sm:$0xff]
        %v873 = vld [vmem:[%s213 + $0x1160] sm:$0xff]
        %v874 = vld [vmem:[%s213 + $0x1168] sm:$0xff]
        %v875 = vld [vmem:[%s213 + $0x1170] sm:$0xff]
        %v876 = vld [vmem:[%s213 + $0x1178] sm:$0xff]
        %v877 = vld [vmem:[%s213 + $0x1180] sm:$0xff]
        %v878 = vld [vmem:[%s213 + $0x1188] sm:$0xff]
        %v879 = vld [vmem:[%s213 + $0x1190] sm:$0xff]
        %v880 = vld [vmem:[%s213 + $0x1198] sm:$0xff]
        %v881 = vld [vmem:[%s213 + $0x11a0] sm:$0xff]
        %v882 = vld [vmem:[%s213 + $0x11a8] sm:$0xff]
        %v883 = vld [vmem:[%s213 + $0x11b0] sm:$0xff]
        %v884 = vld [vmem:[%s213 + $0x11b8] sm:$0xff]
        %v885 = vld [vmem:[%s213 + $0x11c0] sm:$0xff]
        %v886 = vld [vmem:[%s213 + $0x11c8] sm:$0xff]
        %v887 = vld [vmem:[%s213 + $0x11d0] sm:$0xff]
        %v888 = vld [vmem:[%s213 + $0x11d8] sm:$0xff]
        %v889 = vld [vmem:[%s213 + $0x11e0] sm:$0xff]
        %v890 = vld [vmem:[%s213 + $0x11e8] sm:$0xff]
        %v891 = vld [vmem:[%s213 + $0x11f0] sm:$0xff]
        %v892 = vld [vmem:[%s213 + $0x11f8] sm:$0xff]
        %v893 = vld [vmem:[%s213 + $0x1200] sm:$0xff]
        %v894 = vld [vmem:[%s213 + $0x1208] sm:$0xff]
        %v895 = vld [vmem:[%s213 + $0x1210] sm:$0xff]
        %v896 = vld [vmem:[%s213 + $0x1218] sm:$0xff]
        %v897 = vld [vmem:[%s213 + $0x1220] sm:$0xff]
        %v898 = vld [vmem:[%s213 + $0x1228] sm:$0xff]
        %v899 = vld [vmem:[%s213 + $0x1230] sm:$0xff]
        %v900 = vld [vmem:[%s213 + $0x1238] sm:$0xff]
        %v901 = vld [vmem:[%s213 + $0x1240] sm:$0xff]
        %v902 = vld [vmem:[%s213 + $0x1248] sm:$0xff]
        %v903 = vld [vmem:[%s213 + $0x1250] sm:$0xff]
        %v904 = vld [vmem:[%s213 + $0x1258] sm:$0xff]
        %v905 = vld [vmem:[%s213 + $0x1260] sm:$0xff]
        %v906 = vld [vmem:[%s213 + $0x1268] sm:$0xff]
        %v907 = vld [vmem:[%s213 + $0x1270] sm:$0xff]
        %v908 = vld [vmem:[%s213 + $0x1278] sm:$0xff]
        %v909 = vld [vmem:[%s213 + $0x1280] sm:$0xff]
        %v910 = vld [vmem:[%s213 + $0x1288] sm:$0xff]
        %v911 = vld [vmem:[%s213 + $0x1290] sm:$0xff]
        %v912 = vld [vmem:[%s213 + $0x1298] sm:$0xff]
        %v913 = vld [vmem:[%s213 + $0x12a0] sm:$0xff]
        %v914 = vld [vmem:[%s213 + $0x12a8] sm:$0xff]
        %v915 = vld [vmem:[%s213 + $0x12b0] sm:$0xff]
        %v916 = vld [vmem:[%s213 + $0x12b8] sm:$0xff]
        %v917 = vld [vmem:[%s213 + $0x12c0] sm:$0xff]
        %v918 = vld [vmem:[%s213 + $0x12c8] sm:$0xff]
        %v919 = vld [vmem:[%s213 + $0x12d0] sm:$0xff]
        %v920 = vld [vmem:[%s213 + $0x12d8] sm:$0xff]
        %v921 = vld [vmem:[%s213 + $0x12e0] sm:$0xff]
        %v922 = vld [vmem:[%s213 + $0x12e8] sm:$0xff]
        %v923 = vld [vmem:[%s213 + $0x12f0] sm:$0xff]
        %v924 = vld [vmem:[%s213 + $0x12f8] sm:$0xff]
        %v925 = vld [vmem:[%s213 + $0x1300] sm:$0xff]
        %v926 = vld [vmem:[%s213 + $0x1308] sm:$0xff]
        %v927 = vld [vmem:[%s213 + $0x1310] sm:$0xff]
        %v928 = vld [vmem:[%s213 + $0x1318] sm:$0xff]
        %v929 = vld [vmem:[%s213 + $0x1320] sm:$0xff]
        %v930 = vld [vmem:[%s213 + $0x1328] sm:$0xff]
        %v931 = vld [vmem:[%s213 + $0x1330] sm:$0xff]
        %v932 = vld [vmem:[%s213 + $0x1338] sm:$0xff]
        %v933 = vld [vmem:[%s213 + $0x1340] sm:$0xff]
        %v934 = vld [vmem:[%s213 + $0x1348] sm:$0xff]
        %v935 = vld [vmem:[%s213 + $0x1350] sm:$0xff]
        %v936 = vld [vmem:[%s213 + $0x1358] sm:$0xff]
        %v937 = vld [vmem:[%s213 + $0x1360] sm:$0xff]
        %v938 = vld [vmem:[%s213 + $0x1368] sm:$0xff]
        %v939 = vld [vmem:[%s213 + $0x1370] sm:$0xff]
        %v940 = vld [vmem:[%s213 + $0x1378] sm:$0xff]
        %v941 = vld [vmem:[%s213 + $0x1380] sm:$0xff]
        %v942 = vld [vmem:[%s213 + $0x1388] sm:$0xff]
        %v943 = vld [vmem:[%s213 + $0x1390] sm:$0xff]
        %v944 = vld [vmem:[%s213 + $0x1398] sm:$0xff]
        %v945 = vld [vmem:[%s213 + $0x13a0] sm:$0xff]
        %v946 = vld [vmem:[%s213 + $0x13a8] sm:$0xff]
        %v947 = vld [vmem:[%s213 + $0x13b0] sm:$0xff]
        %v948 = vld [vmem:[%s213 + $0x13b8] sm:$0xff]
        %v949 = vld [vmem:[%s213 + $0x13c0] sm:$0xff]
        %v950 = vld [vmem:[%s213 + $0x13c8] sm:$0xff]
        %v951 = vld [vmem:[%s213 + $0x13d0] sm:$0xff]
        %v952 = vld [vmem:[%s213 + $0x13d8] sm:$0xff]
        %v953 = vld [vmem:[%s213 + $0x13e0] sm:$0xff]
        %v954 = vld [vmem:[%s213 + $0x13e8] sm:$0xff]
        %v955 = vld [vmem:[%s213 + $0x13f0] sm:$0xff]
        %v956 = vld [vmem:[%s213 + $0x13f8] sm:$0xff]
        %v957 = vld [vmem:[%s213 + $0x1400] sm:$0xff]
        %v958 = vld [vmem:[%s213 + $0x1408] sm:$0xff]
        %v959 = vld [vmem:[%s213 + $0x1410] sm:$0xff]
        %v960 = vld [vmem:[%s213 + $0x1418] sm:$0xff]
        %v961 = vld [vmem:[%s213 + $0x1420] sm:$0xff]
        %v962 = vld [vmem:[%s213 + $0x1428] sm:$0xff]
        %v963 = vld [vmem:[%s213 + $0x1430] sm:$0xff]
        %v964 = vld [vmem:[%s213 + $0x1438] sm:$0xff]
        %v965 = vld [vmem:[%s213 + $0x1440] sm:$0xff]
        %v966 = vld [vmem:[%s213 + $0x1448] sm:$0xff]
        %v967 = vld [vmem:[%s213 + $0x1450] sm:$0xff]
        %v968 = vld [vmem:[%s213 + $0x1458] sm:$0xff]
        %v969 = vld [vmem:[%s213 + $0x1460] sm:$0xff]
        %v970 = vld [vmem:[%s213 + $0x1468] sm:$0xff]
        %v971 = vld [vmem:[%s213 + $0x1470] sm:$0xff]
        %v972 = vld [vmem:[%s213 + $0x1478] sm:$0xff]
        %v973 = vld [vmem:[%s213 + $0x1480] sm:$0xff]
        %v974 = vld [vmem:[%s213 + $0x1488] sm:$0xff]
        %v975 = vld [vmem:[%s213 + $0x1490] sm:$0xff]
        %v976 = vld [vmem:[%s213 + $0x1498] sm:$0xff]
        %v977 = vld [vmem:[%s213 + $0x14a0] sm:$0xff]
        %v978 = vld [vmem:[%s213 + $0x14a8] sm:$0xff]
        %v979 = vld [vmem:[%s213 + $0x14b0] sm:$0xff]
        %v980 = vld [vmem:[%s213 + $0x14b8] sm:$0xff]
        %v981 = vld [vmem:[%s213 + $0x14c0] sm:$0xff]
        %v982 = vld [vmem:[%s213 + $0x14c8] sm:$0xff]
        %v983 = vld [vmem:[%s213 + $0x14d0] sm:$0xff]
        %v984 = vld [vmem:[%s213 + $0x14d8] sm:$0xff]
        %v985 = vld [vmem:[%s213 + $0x14e0] sm:$0xff]
        %v986 = vld [vmem:[%s213 + $0x14e8] sm:$0xff]
        %v987 = vld [vmem:[%s213 + $0x14f0] sm:$0xff]
        %v988 = vld [vmem:[%s213 + $0x14f8] sm:$0xff]
        %v989 = vld [vmem:[%s213 + $0x1500] sm:$0xff]
        %v990 = vld [vmem:[%s213 + $0x1508] sm:$0xff]
        %v991 = vld [vmem:[%s213 + $0x1510] sm:$0xff]
        %v992 = vld [vmem:[%s213 + $0x1518] sm:$0xff]
        %v993 = vld [vmem:[%s213 + $0x1520] sm:$0xff]
        %v994 = vld [vmem:[%s213 + $0x1528] sm:$0xff]
        %v995 = vld [vmem:[%s213 + $0x1530] sm:$0xff]
        %v996 = vld [vmem:[%s213 + $0x1538] sm:$0xff]
        %v997 = vld [vmem:[%s213 + $0x1540] sm:$0xff]
        %v998 = vld [vmem:[%s213 + $0x1548] sm:$0xff]
        %v999 = vld [vmem:[%s213 + $0x1550] sm:$0xff]
        %v1000 = vld [vmem:[%s213 + $0x1558] sm:$0xff]
        %v1001 = vld [vmem:[%s213 + $0x1560] sm:$0xff]
        %v1002 = vld [vmem:[%s213 + $0x1568] sm:$0xff]
        %v1003 = vld [vmem:[%s213 + $0x1570] sm:$0xff]
        %v1004 = vld [vmem:[%s213 + $0x1578] sm:$0xff]
        %v1005 = vld [vmem:[%s213 + $0x1580] sm:$0xff]
        %v1006 = vld [vmem:[%s213 + $0x1588] sm:$0xff]
        %v1007 = vld [vmem:[%s213 + $0x1590] sm:$0xff]
        %v1008 = vld [vmem:[%s213 + $0x1598] sm:$0xff]
        %v1009 = vld [vmem:[%s213 + $0x15a0] sm:$0xff]
        %v1010 = vld [vmem:[%s213 + $0x15a8] sm:$0xff]
        %v1011 = vld [vmem:[%s213 + $0x15b0] sm:$0xff]
        %v1012 = vld [vmem:[%s213 + $0x15b8] sm:$0xff]
        %v1013 = vld [vmem:[%s213 + $0x15c0] sm:$0xff]
        %v1014 = vld [vmem:[%s213 + $0x15c8] sm:$0xff]
        %v1015 = vld [vmem:[%s213 + $0x15d0] sm:$0xff]
        %v1016 = vld [vmem:[%s213 + $0x15d8] sm:$0xff]
        %v1017 = vld [vmem:[%s213 + $0x15e0] sm:$0xff]
        %v1018 = vld [vmem:[%s213 + $0x15e8] sm:$0xff]
        %v1019 = vld [vmem:[%s213 + $0x15f0] sm:$0xff]
        %v1020 = vld [vmem:[%s213 + $0x15f8] sm:$0xff]
        %v1021 = vld [vmem:[%s213 + $0x1600] sm:$0xff]
        %v1022 = vld [vmem:[%s213 + $0x1608] sm:$0xff]
        %v1023 = vld [vmem:[%s213 + $0x1610] sm:$0xff]
        %v1024 = vld [vmem:[%s213 + $0x1618] sm:$0xff]
        %v1025 = vld [vmem:[%s213 + $0x1620] sm:$0xff]
        %v1026 = vld [vmem:[%s213 + $0x1628] sm:$0xff]
        %v1027 = vld [vmem:[%s213 + $0x1630] sm:$0xff]
        %v1028 = vld [vmem:[%s213 + $0x1638] sm:$0xff]
        %v1029 = vld [vmem:[%s213 + $0x1640] sm:$0xff]
        %v1030 = vld [vmem:[%s213 + $0x1648] sm:$0xff]
        %v1031 = vld [vmem:[%s213 + $0x1650] sm:$0xff]
        %v1032 = vld [vmem:[%s213 + $0x1658] sm:$0xff]
        %v1033 = vld [vmem:[%s213 + $0x1660] sm:$0xff]
        %v1034 = vld [vmem:[%s213 + $0x1668] sm:$0xff]
        %v1035 = vld [vmem:[%s213 + $0x1670] sm:$0xff]
        %v1036 = vld [vmem:[%s213 + $0x1678] sm:$0xff]
        %v1037 = vld [vmem:[%s213 + $0x1680] sm:$0xff]
        %v1038 = vld [vmem:[%s213 + $0x1688] sm:$0xff]
        %v1039 = vld [vmem:[%s213 + $0x1690] sm:$0xff]
        %v1040 = vld [vmem:[%s213 + $0x1698] sm:$0xff]
        %v1041 = vld [vmem:[%s213 + $0x16a0] sm:$0xff]
        %v1042 = vld [vmem:[%s213 + $0x16a8] sm:$0xff]
        %v1043 = vld [vmem:[%s213 + $0x16b0] sm:$0xff]
        %v1044 = vld [vmem:[%s213 + $0x16b8] sm:$0xff]
        %v1045 = vld [vmem:[%s213 + $0x16c0] sm:$0xff]
        %v1046 = vld [vmem:[%s213 + $0x16c8] sm:$0xff]
        %v1047 = vld [vmem:[%s213 + $0x16d0] sm:$0xff]
        %v1048 = vld [vmem:[%s213 + $0x16d8] sm:$0xff]
        %v1049 = vld [vmem:[%s213 + $0x16e0] sm:$0xff]
        %v1050 = vld [vmem:[%s213 + $0x16e8] sm:$0xff]
        %v1051 = vld [vmem:[%s213 + $0x16f0] sm:$0xff]
        %v1052 = vld [vmem:[%s213 + $0x16f8] sm:$0xff]
        %v1053 = vld [vmem:[%s213 + $0x1700] sm:$0xff]
        %v1054 = vld [vmem:[%s213 + $0x1708] sm:$0xff]
        %v1055 = vld [vmem:[%s213 + $0x1710] sm:$0xff]
        %v1056 = vld [vmem:[%s213 + $0x1718] sm:$0xff]
        %v1057 = vld [vmem:[%s213 + $0x1720] sm:$0xff]
        %v1058 = vld [vmem:[%s213 + $0x1728] sm:$0xff]
        %v1059 = vld [vmem:[%s213 + $0x1730] sm:$0xff]
        %v1060 = vld [vmem:[%s213 + $0x1738] sm:$0xff]
        %v1061 = vld [vmem:[%s213 + $0x1740] sm:$0xff]
        %v1062 = vld [vmem:[%s213 + $0x1748] sm:$0xff]
        %v1063 = vld [vmem:[%s213 + $0x1750] sm:$0xff]
        %v1064 = vld [vmem:[%s213 + $0x1758] sm:$0xff]
        %v1065 = vld [vmem:[%s213 + $0x1760] sm:$0xff]
        %v1066 = vld [vmem:[%s213 + $0x1768] sm:$0xff]
        %v1067 = vld [vmem:[%s213 + $0x1770] sm:$0xff]
        %v1068 = vld [vmem:[%s213 + $0x1778] sm:$0xff]
        %v1069 = vld [vmem:[%s213 + $0x1780] sm:$0xff]
        %v1070 = vld [vmem:[%s213 + $0x1788] sm:$0xff]
        %v1071 = vld [vmem:[%s213 + $0x1790] sm:$0xff]
        %v1072 = vld [vmem:[%s213 + $0x1798] sm:$0xff]
        %v1073 = vld [vmem:[%s213 + $0x17a0] sm:$0xff]
        %v1074 = vld [vmem:[%s213 + $0x17a8] sm:$0xff]
        %v1075 = vld [vmem:[%s213 + $0x17b0] sm:$0xff]
        %v1076 = vld [vmem:[%s213 + $0x17b8] sm:$0xff]
        %v1077 = vld [vmem:[%s213 + $0x17c0] sm:$0xff]
        %v1078 = vld [vmem:[%s213 + $0x17c8] sm:$0xff]
        %v1079 = vld [vmem:[%s213 + $0x17d0] sm:$0xff]
        %v1080 = vld [vmem:[%s213 + $0x17d8] sm:$0xff]
        %v1081 = vld [vmem:[%s213 + $0x17e0] sm:$0xff]
        %v1082 = vld [vmem:[%s213 + $0x17e8] sm:$0xff]
        %v1083 = vld [vmem:[%s213 + $0x17f0] sm:$0xff]
        %v1084 = vld [vmem:[%s213 + $0x17f8] sm:$0xff]
        %v1085 = vld [vmem:[%s213 + $0x1800] sm:$0xff]
        %v1086 = vld [vmem:[%s213 + $0x1808] sm:$0xff]
        %v1087 = vld [vmem:[%s213 + $0x1810] sm:$0xff]
        %v1088 = vld [vmem:[%s213 + $0x1818] sm:$0xff]
        %v1089 = vld [vmem:[%s213 + $0x1820] sm:$0xff]
        %v1090 = vld [vmem:[%s213 + $0x1828] sm:$0xff]
        %v1091 = vld [vmem:[%s213 + $0x1830] sm:$0xff]
        %v1092 = vld [vmem:[%s213 + $0x1838] sm:$0xff]
        %v1093 = vld [vmem:[%s213 + $0x1840] sm:$0xff]
        %v1094 = vld [vmem:[%s213 + $0x1848] sm:$0xff]
        %v1095 = vld [vmem:[%s213 + $0x1850] sm:$0xff]
        %v1096 = vld [vmem:[%s213 + $0x1858] sm:$0xff]
        %v1097 = vld [vmem:[%s213 + $0x1860] sm:$0xff]
        %v1098 = vld [vmem:[%s213 + $0x1868] sm:$0xff]
        %v1099 = vld [vmem:[%s213 + $0x1870] sm:$0xff]
        %v1100 = vld [vmem:[%s213 + $0x1878] sm:$0xff]
        %v1101 = vld [vmem:[%s213 + $0x1880] sm:$0xff]
        %v1102 = vld [vmem:[%s213 + $0x1888] sm:$0xff]
        %v1103 = vld [vmem:[%s213 + $0x1890] sm:$0xff]
        %v1104 = vld [vmem:[%s213 + $0x1898] sm:$0xff]
        %v1105 = vld [vmem:[%s213 + $0x18a0] sm:$0xff]
        %v1106 = vld [vmem:[%s213 + $0x18a8] sm:$0xff]
        %v1107 = vld [vmem:[%s213 + $0x18b0] sm:$0xff]
        %v1108 = vld [vmem:[%s213 + $0x18b8] sm:$0xff]
        %v1109 = vld [vmem:[%s213 + $0x18c0] sm:$0xff]
        %v1110 = vld [vmem:[%s213 + $0x18c8] sm:$0xff]
        %v1111 = vld [vmem:[%s213 + $0x18d0] sm:$0xff]
        %v1112 = vld [vmem:[%s213 + $0x18d8] sm:$0xff]
        %v1113 = vld [vmem:[%s213 + $0x18e0] sm:$0xff]
        %v1114 = vld [vmem:[%s213 + $0x18e8] sm:$0xff]
        %v1115 = vld [vmem:[%s213 + $0x18f0] sm:$0xff]
        %v1116 = vld [vmem:[%s213 + $0x18f8] sm:$0xff]
        %v1117 = vld [vmem:[%s213 + $0x1900] sm:$0xff]
        %v1118 = vld [vmem:[%s213 + $0x1908] sm:$0xff]
        %v1119 = vld [vmem:[%s213 + $0x1910] sm:$0xff]
        %v1120 = vld [vmem:[%s213 + $0x1918] sm:$0xff]
        %v1121 = vld [vmem:[%s213 + $0x1920] sm:$0xff]
        %v1122 = vld [vmem:[%s213 + $0x1928] sm:$0xff]
        %v1123 = vld [vmem:[%s213 + $0x1930] sm:$0xff]
        %v1124 = vld [vmem:[%s213 + $0x1938] sm:$0xff]
        %v1125 = vld [vmem:[%s213 + $0x1940] sm:$0xff]
        %v1126 = vld [vmem:[%s213 + $0x1948] sm:$0xff]
        %v1127 = vld [vmem:[%s213 + $0x1950] sm:$0xff]
        %v1128 = vld [vmem:[%s213 + $0x1958] sm:$0xff]
        %v1129 = vld [vmem:[%s213 + $0x1960] sm:$0xff]
        %v1130 = vld [vmem:[%s213 + $0x1968] sm:$0xff]
        %v1131 = vld [vmem:[%s213 + $0x1970] sm:$0xff]
        %v1132 = vld [vmem:[%s213 + $0x1978] sm:$0xff]
        %v1133 = vld [vmem:[%s213 + $0x1980] sm:$0xff]
        %v1134 = vld [vmem:[%s213 + $0x1988] sm:$0xff]
        %v1135 = vld [vmem:[%s213 + $0x1990] sm:$0xff]
        %v1136 = vld [vmem:[%s213 + $0x1998] sm:$0xff]
        %v1137 = vld [vmem:[%s213 + $0x19a0] sm:$0xff]
        %v1138 = vld [vmem:[%s213 + $0x19a8] sm:$0xff]
        %v1139 = vld [vmem:[%s213 + $0x19b0] sm:$0xff]
        %v1140 = vld [vmem:[%s213 + $0x19b8] sm:$0xff]
        %v1141 = vld [vmem:[%s213 + $0x19c0] sm:$0xff]
        %v1142 = vld [vmem:[%s213 + $0x19c8] sm:$0xff]
        %v1143 = vld [vmem:[%s213 + $0x19d0] sm:$0xff]
        %v1144 = vld [vmem:[%s213 + $0x19d8] sm:$0xff]
        %v1145 = vld [vmem:[%s213 + $0x19e0] sm:$0xff]
        %v1146 = vld [vmem:[%s213 + $0x19e8] sm:$0xff]
        %v1147 = vld [vmem:[%s213 + $0x19f0] sm:$0xff]
        %v1148 = vld [vmem:[%s213 + $0x19f8] sm:$0xff]
        %v1149 = vld [vmem:[%s213 + $0x1a00] sm:$0xff]
        %v1150 = vld [vmem:[%s213 + $0x1a08] sm:$0xff]
        %v1151 = vld [vmem:[%s213 + $0x1a10] sm:$0xff]
        %v1152 = vld [vmem:[%s213 + $0x1a18] sm:$0xff]
        %v1153 = vld [vmem:[%s213 + $0x1a20] sm:$0xff]
        %v1154 = vld [vmem:[%s213 + $0x1a28] sm:$0xff]
        %v1155 = vld [vmem:[%s213 + $0x1a30] sm:$0xff]
        %v1156 = vld [vmem:[%s213 + $0x1a38] sm:$0xff]
        %v1157 = vld [vmem:[%s213 + $0x1a40] sm:$0xff]
        %v1158 = vld [vmem:[%s213 + $0x1a48] sm:$0xff]
        %v1159 = vld [vmem:[%s213 + $0x1a50] sm:$0xff]
        %v1160 = vld [vmem:[%s213 + $0x1a58] sm:$0xff]
        %v1161 = vld [vmem:[%s213 + $0x1a60] sm:$0xff]
        %v1162 = vld [vmem:[%s213 + $0x1a68] sm:$0xff]
        %v1163 = vld [vmem:[%s213 + $0x1a70] sm:$0xff]
        %v1164 = vld [vmem:[%s213 + $0x1a78] sm:$0xff]
        %v1165 = vld [vmem:[%s213 + $0x1a80] sm:$0xff]
        %v1166 = vld [vmem:[%s213 + $0x1a88] sm:$0xff]
        %v1167 = vld [vmem:[%s213 + $0x1a90] sm:$0xff]
        %v1168 = vld [vmem:[%s213 + $0x1a98] sm:$0xff]
        %v1169 = vld [vmem:[%s213 + $0x1aa0] sm:$0xff]
        %v1170 = vld [vmem:[%s213 + $0x1aa8] sm:$0xff]
        %v1171 = vld [vmem:[%s213 + $0x1ab0] sm:$0xff]
        %v1172 = vld [vmem:[%s213 + $0x1ab8] sm:$0xff]
        %v1173 = vld [vmem:[%s213 + $0x1ac0] sm:$0xff]
        %v1174 = vld [vmem:[%s213 + $0x1ac8] sm:$0xff]
        %v1175 = vld [vmem:[%s213 + $0x1ad0] sm:$0xff]
        %v1176 = vld [vmem:[%s213 + $0x1ad8] sm:$0xff]
        %v1177 = vld [vmem:[%s213 + $0x1ae0] sm:$0xff]
        %v1178 = vld [vmem:[%s213 + $0x1ae8] sm:$0xff]
        %v1179 = vld [vmem:[%s213 + $0x1af0] sm:$0xff]
        %v1180 = vld [vmem:[%s213 + $0x1af8] sm:$0xff]
        %v1181 = vld [vmem:[%s213 + $0x1b00] sm:$0xff]
        %v1182 = vld [vmem:[%s213 + $0x1b08] sm:$0xff]
        %v1183 = vld [vmem:[%s213 + $0x1b10] sm:$0xff]
        %v1184 = vld [vmem:[%s213 + $0x1b18] sm:$0xff]
        %v1185 = vld [vmem:[%s213 + $0x1b20] sm:$0xff]
        %v1186 = vld [vmem:[%s213 + $0x1b28] sm:$0xff]
        %v1187 = vld [vmem:[%s213 + $0x1b30] sm:$0xff]
        %v1188 = vld [vmem:[%s213 + $0x1b38] sm:$0xff]
        %v1189 = vld [vmem:[%s213 + $0x1b40] sm:$0xff]
        %v1190 = vld [vmem:[%s213 + $0x1b48] sm:$0xff]
        %v1191 = vld [vmem:[%s213 + $0x1b50] sm:$0xff]
        %v1192 = vld [vmem:[%s213 + $0x1b58] sm:$0xff]
        %v1193 = vld [vmem:[%s213 + $0x1b60] sm:$0xff]
        %v1194 = vld [vmem:[%s213 + $0x1b68] sm:$0xff]
        %v1195 = vld [vmem:[%s213 + $0x1b70] sm:$0xff]
        %v1196 = vld [vmem:[%s213 + $0x1b78] sm:$0xff]
        %v1197 = vld [vmem:[%s213 + $0x1b80] sm:$0xff]
        %v1198 = vld [vmem:[%s213 + $0x1b88] sm:$0xff]
        %v1199 = vld [vmem:[%s213 + $0x1b90] sm:$0xff]
        %v1200 = vld [vmem:[%s213 + $0x1b98] sm:$0xff]
        %v1201 = vld [vmem:[%s213 + $0x1ba0] sm:$0xff]
        %v1202 = vld [vmem:[%s213 + $0x1ba8] sm:$0xff]
        %v1203 = vld [vmem:[%s213 + $0x1bb0] sm:$0xff]
        %v1204 = vld [vmem:[%s213 + $0x1bb8] sm:$0xff]
        %v1205 = vld [vmem:[%s213 + $0x1bc0] sm:$0xff]
        %v1206 = vld [vmem:[%s213 + $0x1bc8] sm:$0xff]
        %v1207 = vld [vmem:[%s213 + $0x1bd0] sm:$0xff]
        %v1208 = vld [vmem:[%s213 + $0x1bd8] sm:$0xff]
        %v1209 = vld [vmem:[%s213 + $0x1be0] sm:$0xff]
        %v1210 = vld [vmem:[%s213 + $0x1be8] sm:$0xff]
        %v1211 = vld [vmem:[%s213 + $0x1bf0] sm:$0xff]
        %v1212 = vld [vmem:[%s213 + $0x1bf8] sm:$0xff]
        %v1213 = vld [vmem:[%s213 + $0x1c00] sm:$0xff]
        %v1214 = vld [vmem:[%s213 + $0x1c08] sm:$0xff]
        %v1215 = vld [vmem:[%s213 + $0x1c10] sm:$0xff]
        %v1216 = vld [vmem:[%s213 + $0x1c18] sm:$0xff]
        %v1217 = vld [vmem:[%s213 + $0x1c20] sm:$0xff]
        %v1218 = vld [vmem:[%s213 + $0x1c28] sm:$0xff]
        %v1219 = vld [vmem:[%s213 + $0x1c30] sm:$0xff]
        %v1220 = vld [vmem:[%s213 + $0x1c38] sm:$0xff]
        %v1221 = vld [vmem:[%s213 + $0x1c40] sm:$0xff]
        %v1222 = vld [vmem:[%s213 + $0x1c48] sm:$0xff]
        %v1223 = vld [vmem:[%s213 + $0x1c50] sm:$0xff]
        %v1224 = vld [vmem:[%s213 + $0x1c58] sm:$0xff]
        %v1225 = vld [vmem:[%s213 + $0x1c60] sm:$0xff]
        %v1226 = vld [vmem:[%s213 + $0x1c68] sm:$0xff]
        %v1227 = vld [vmem:[%s213 + $0x1c70] sm:$0xff]
        %v1228 = vld [vmem:[%s213 + $0x1c78] sm:$0xff]
        %v1229 = vld [vmem:[%s213 + $0x1c80] sm:$0xff]
        %v1230 = vld [vmem:[%s213 + $0x1c88] sm:$0xff]
        %v1231 = vld [vmem:[%s213 + $0x1c90] sm:$0xff]
        %v1232 = vld [vmem:[%s213 + $0x1c98] sm:$0xff]
        %v1233 = vld [vmem:[%s213 + $0x1ca0] sm:$0xff]
        %v1234 = vld [vmem:[%s213 + $0x1ca8] sm:$0xff]
        %v1235 = vld [vmem:[%s213 + $0x1cb0] sm:$0xff]
        %v1236 = vld [vmem:[%s213 + $0x1cb8] sm:$0xff]
        %v1237 = vld [vmem:[%s213 + $0x1cc0] sm:$0xff]
        %v1238 = vld [vmem:[%s213 + $0x1cc8] sm:$0xff]
        %v1239 = vld [vmem:[%s213 + $0x1cd0] sm:$0xff]
        %v1240 = vld [vmem:[%s213 + $0x1cd8] sm:$0xff]
        %v1241 = vld [vmem:[%s213 + $0x1ce0] sm:$0xff]
        %v1242 = vld [vmem:[%s213 + $0x1ce8] sm:$0xff]
        %v1243 = vld [vmem:[%s213 + $0x1cf0] sm:$0xff]
        %v1244 = vld [vmem:[%s213 + $0x1cf8] sm:$0xff]
        %v1245 = vld [vmem:[%s213 + $0x1d00] sm:$0xff]
        %v1246 = vld [vmem:[%s213 + $0x1d08] sm:$0xff]
        %v1247 = vld [vmem:[%s213 + $0x1d10] sm:$0xff]
        %v1248 = vld [vmem:[%s213 + $0x1d18] sm:$0xff]
        %v1249 = vld [vmem:[%s213 + $0x1d20] sm:$0xff]
        %v1250 = vld [vmem:[%s213 + $0x1d28] sm:$0xff]
        %v1251 = vld [vmem:[%s213 + $0x1d30] sm:$0xff]
        %v1252 = vld [vmem:[%s213 + $0x1d38] sm:$0xff]
        %v1253 = vld [vmem:[%s213 + $0x1d40] sm:$0xff]
        %v1254 = vld [vmem:[%s213 + $0x1d48] sm:$0xff]
        %v1255 = vld [vmem:[%s213 + $0x1d50] sm:$0xff]
        %v1256 = vld [vmem:[%s213 + $0x1d58] sm:$0xff]
        %v1257 = vld [vmem:[%s213 + $0x1d60] sm:$0xff]
        %v1258 = vld [vmem:[%s213 + $0x1d68] sm:$0xff]
        %v1259 = vld [vmem:[%s213 + $0x1d70] sm:$0xff]
        %v1260 = vld [vmem:[%s213 + $0x1d78] sm:$0xff]
        %v1261 = vld [vmem:[%s213 + $0x1d80] sm:$0xff]
        %v1262 = vld [vmem:[%s213 + $0x1d88] sm:$0xff]
        %v1263 = vld [vmem:[%s213 + $0x1d90] sm:$0xff]
        %v1264 = vld [vmem:[%s213 + $0x1d98] sm:$0xff]
        %v1265 = vld [vmem:[%s213 + $0x1da0] sm:$0xff]
        %v1266 = vld [vmem:[%s213 + $0x1da8] sm:$0xff]
        %v1267 = vld [vmem:[%s213 + $0x1db0] sm:$0xff]
        %v1268 = vld [vmem:[%s213 + $0x1db8] sm:$0xff]
        %v1269 = vld [vmem:[%s213 + $0x1dc0] sm:$0xff]
        %v1270 = vld [vmem:[%s213 + $0x1dc8] sm:$0xff]
        %v1271 = vld [vmem:[%s213 + $0x1dd0] sm:$0xff]
        %v1272 = vld [vmem:[%s213 + $0x1dd8] sm:$0xff]
        %v1273 = vld [vmem:[%s213 + $0x1de0] sm:$0xff]
        %v1274 = vld [vmem:[%s213 + $0x1de8] sm:$0xff]
        %v1275 = vld [vmem:[%s213 + $0x1df0] sm:$0xff]
        %v1276 = vld [vmem:[%s213 + $0x1df8] sm:$0xff]
        %v1277 = vld [vmem:[%s213 + $0x1e00] sm:$0xff]
        %v1278 = vld [vmem:[%s213 + $0x1e08] sm:$0xff]
        %v1279 = vld [vmem:[%s213 + $0x1e10] sm:$0xff]
        %v1280 = vld [vmem:[%s213 + $0x1e18] sm:$0xff]
        %v1281 = vld [vmem:[%s213 + $0x1e20] sm:$0xff]
        %v1282 = vld [vmem:[%s213 + $0x1e28] sm:$0xff]
        %v1283 = vld [vmem:[%s213 + $0x1e30] sm:$0xff]
        %v1284 = vld [vmem:[%s213 + $0x1e38] sm:$0xff]
        %v1285 = vld [vmem:[%s213 + $0x1e40] sm:$0xff]
        %v1286 = vld [vmem:[%s213 + $0x1e48] sm:$0xff]
        %v1287 = vld [vmem:[%s213 + $0x1e50] sm:$0xff]
        %v1288 = vld [vmem:[%s213 + $0x1e58] sm:$0xff]
        %v1289 = vld [vmem:[%s213 + $0x1e60] sm:$0xff]
        %v1290 = vld [vmem:[%s213 + $0x1e68] sm:$0xff]
        %v1291 = vld [vmem:[%s213 + $0x1e70] sm:$0xff]
        %v1292 = vld [vmem:[%s213 + $0x1e78] sm:$0xff]
        %v1293 = vld [vmem:[%s213 + $0x1e80] sm:$0xff]
        %v1294 = vld [vmem:[%s213 + $0x1e88] sm:$0xff]
        %v1295 = vld [vmem:[%s213 + $0x1e90] sm:$0xff]
        %v1296 = vld [vmem:[%s213 + $0x1e98] sm:$0xff]
        %v1297 = vld [vmem:[%s213 + $0x1ea0] sm:$0xff]
        %v1298 = vld [vmem:[%s213 + $0x1ea8] sm:$0xff]
        %v1299 = vld [vmem:[%s213 + $0x1eb0] sm:$0xff]
        %v1300 = vld [vmem:[%s213 + $0x1eb8] sm:$0xff]
        %v1301 = vld [vmem:[%s213 + $0x1ec0] sm:$0xff]
        %v1302 = vld [vmem:[%s213 + $0x1ec8] sm:$0xff]
        %v1303 = vld [vmem:[%s213 + $0x1ed0] sm:$0xff]
        %v1304 = vld [vmem:[%s213 + $0x1ed8] sm:$0xff]
        %v1305 = vld [vmem:[%s213 + $0x1ee0] sm:$0xff]
        %v1306 = vld [vmem:[%s213 + $0x1ee8] sm:$0xff]
        %v1307 = vld [vmem:[%s213 + $0x1ef0] sm:$0xff]
        %v1308 = vld [vmem:[%s213 + $0x1ef8] sm:$0xff]
        %v1309 = vld [vmem:[%s213 + $0x1f00] sm:$0xff]
        %v1310 = vld [vmem:[%s213 + $0x1f08] sm:$0xff]
        %v1311 = vld [vmem:[%s213 + $0x1f10] sm:$0xff]
        %v1312 = vld [vmem:[%s213 + $0x1f18] sm:$0xff]
        %v1313 = vld [vmem:[%s213 + $0x1f20] sm:$0xff]
        %v1314 = vld [vmem:[%s213 + $0x1f28] sm:$0xff]
        %v1315 = vld [vmem:[%s213 + $0x1f30] sm:$0xff]
        %v1316 = vld [vmem:[%s213 + $0x1f38] sm:$0xff]
        %v1317 = vld [vmem:[%s213 + $0x1f40] sm:$0xff]
        %v1318 = vld [vmem:[%s213 + $0x1f48] sm:$0xff]
        %v1319 = vld [vmem:[%s213 + $0x1f50] sm:$0xff]
        %v1320 = vld [vmem:[%s213 + $0x1f58] sm:$0xff]
        %v1321 = vld [vmem:[%s213 + $0x1f60] sm:$0xff]
        %v1322 = vld [vmem:[%s213 + $0x1f68] sm:$0xff]
        %v1323 = vld [vmem:[%s213 + $0x1f70] sm:$0xff]
        %v1324 = vld [vmem:[%s213 + $0x1f78] sm:$0xff]
        %v1325 = vld [vmem:[%s213 + $0x1f80] sm:$0xff]
        %v1326 = vld [vmem:[%s213 + $0x1f88] sm:$0xff]
        %v1327 = vld [vmem:[%s213 + $0x1f90] sm:$0xff]
        %v1328 = vld [vmem:[%s213 + $0x1f98] sm:$0xff]
        %v1329 = vld [vmem:[%s213 + $0x1fa0] sm:$0xff]
        %v1330 = vld [vmem:[%s213 + $0x1fa8] sm:$0xff]
        %v1331 = vld [vmem:[%s213 + $0x1fb0] sm:$0xff]
        %v1332 = vld [vmem:[%s213 + $0x1fb8] sm:$0xff]
        %v1333 = vld [vmem:[%s213 + $0x1fc0] sm:$0xff]
        %v1334 = vld [vmem:[%s213 + $0x1fc8] sm:$0xff]
        %v1335 = vld [vmem:[%s213 + $0x1fd0] sm:$0xff]
        %v1336 = vld [vmem:[%s213 + $0x1fd8] sm:$0xff]
        %v1337 = vld [vmem:[%s213 + $0x1fe0] sm:$0xff]
        %v1338 = vld [vmem:[%s213 + $0x1fe8] sm:$0xff]
        %v1339 = vld [vmem:[%s213 + $0x1ff0] sm:$0xff]
        %v1340 = vld [vmem:[%s213 + $0x1ff8] sm:$0xff]
        %v1341 = vld [vmem:[%s213 + $0x2000] sm:$0xff]
        %v1342 = vld [vmem:[%s213 + $0x2008] sm:$0xff]
        %v1343 = vld [vmem:[%s213 + $0x2010] sm:$0xff]
        %v1344 = vld [vmem:[%s213 + $0x2018] sm:$0xff]
        %v1345 = vld [vmem:[%s213 + $0x2020] sm:$0xff]
        %v1346 = vld [vmem:[%s213 + $0x2028] sm:$0xff]
        %v1347 = vld [vmem:[%s213 + $0x2030] sm:$0xff]
        %v1348 = vld [vmem:[%s213 + $0x2038] sm:$0xff]
        %v1349 = vld [vmem:[%s213 + $0x2040] sm:$0xff]
        %v1350 = vld [vmem:[%s213 + $0x2048] sm:$0xff]
        %v1351 = vld [vmem:[%s213 + $0x2050] sm:$0xff]
        %v1352 = vld [vmem:[%s213 + $0x2058] sm:$0xff]
        %v1353 = vld [vmem:[%s213 + $0x2060] sm:$0xff]
        %v1354 = vld [vmem:[%s213 + $0x2068] sm:$0xff]
        %v1355 = vld [vmem:[%s213 + $0x2070] sm:$0xff]
        %v1356 = vld [vmem:[%s213 + $0x2078] sm:$0xff]
        %v1357 = vld [vmem:[%s213 + $0x2080] sm:$0xff]
        %v1358 = vld [vmem:[%s213 + $0x2088] sm:$0xff]
        %v1359 = vld [vmem:[%s213 + $0x2090] sm:$0xff]
        %v1360 = vld [vmem:[%s213 + $0x2098] sm:$0xff]
        %v1361 = vld [vmem:[%s213 + $0x20a0] sm:$0xff]
        %v1362 = vld [vmem:[%s213 + $0x20a8] sm:$0xff]
        %v1363 = vld [vmem:[%s213 + $0x20b0] sm:$0xff]
        %v1364 = vld [vmem:[%s213 + $0x20b8] sm:$0xff]
        %v1365 = vld [vmem:[%s213 + $0x20c0] sm:$0xff]
        %v1366 = vld [vmem:[%s213 + $0x20c8] sm:$0xff]
        %v1367 = vld [vmem:[%s213 + $0x20d0] sm:$0xff]
        %v1368 = vld [vmem:[%s213 + $0x20d8] sm:$0xff]
        %v1369 = vld [vmem:[%s213 + $0x20e0] sm:$0xff]
        %v1370 = vld [vmem:[%s213 + $0x20e8] sm:$0xff]
        %v1371 = vld [vmem:[%s213 + $0x20f0] sm:$0xff]
        %v1372 = vld [vmem:[%s213 + $0x20f8] sm:$0xff]
        %v1373 = vld [vmem:[%s213 + $0x2100] sm:$0xff]
        %v1374 = vld [vmem:[%s213 + $0x2108] sm:$0xff]
        %v1375 = vld [vmem:[%s213 + $0x2110] sm:$0xff]
        %v1376 = vld [vmem:[%s213 + $0x2118] sm:$0xff]
        %v1377 = vld [vmem:[%s213 + $0x2120] sm:$0xff]
        %v1378 = vld [vmem:[%s213 + $0x2128] sm:$0xff]
        %v1379 = vld [vmem:[%s213 + $0x2130] sm:$0xff]
        %v1380 = vld [vmem:[%s213 + $0x2138] sm:$0xff]
        %v1381 = vld [vmem:[%s213 + $0x2140] sm:$0xff]
        %v1382 = vld [vmem:[%s213 + $0x2148] sm:$0xff]
        %v1383 = vld [vmem:[%s213 + $0x2150] sm:$0xff]
        %v1384 = vld [vmem:[%s213 + $0x2158] sm:$0xff]
        %v1385 = vld [vmem:[%s213 + $0x2160] sm:$0xff]
        %v1386 = vld [vmem:[%s213 + $0x2168] sm:$0xff]
        %v1387 = vld [vmem:[%s213 + $0x2170] sm:$0xff]
        %v1388 = vld [vmem:[%s213 + $0x2178] sm:$0xff]
        %v1389 = vld [vmem:[%s213 + $0x2180] sm:$0xff]
        %v1390 = vld [vmem:[%s213 + $0x2188] sm:$0xff]
        %v1391 = vld [vmem:[%s213 + $0x2190] sm:$0xff]
        %v1392 = vld [vmem:[%s213 + $0x2198] sm:$0xff]
        %v1393 = vld [vmem:[%s213 + $0x21a0] sm:$0xff]
        %v1394 = vld [vmem:[%s213 + $0x21a8] sm:$0xff]
        %v1395 = vld [vmem:[%s213 + $0x21b0] sm:$0xff]
        %v1396 = vld [vmem:[%s213 + $0x21b8] sm:$0xff]
        %v1397 = vld [vmem:[%s213 + $0x21c0] sm:$0xff]
        %v1398 = vld [vmem:[%s213 + $0x21c8] sm:$0xff]
        %v1399 = vld [vmem:[%s213 + $0x21d0] sm:$0xff]
        %v1400 = vld [vmem:[%s213 + $0x21d8] sm:$0xff]
        %v1401 = vld [vmem:[%s213 + $0x21e0] sm:$0xff]
        %v1402 = vld [vmem:[%s213 + $0x21e8] sm:$0xff]
        %v1403 = vld [vmem:[%s213 + $0x21f0] sm:$0xff]
        %v1404 = vld [vmem:[%s213 + $0x21f8] sm:$0xff]
        %v1405 = vld [vmem:[%s213 + $0x2200] sm:$0xff]
        %v1406 = vld [vmem:[%s213 + $0x2208] sm:$0xff]
        %v1407 = vld [vmem:[%s213 + $0x2210] sm:$0xff]
        %v1408 = vld [vmem:[%s213 + $0x2218] sm:$0xff]
        %v1409 = vld [vmem:[%s213 + $0x2220] sm:$0xff]
        %v1410 = vld [vmem:[%s213 + $0x2228] sm:$0xff]
        %v1411 = vld [vmem:[%s213 + $0x2230] sm:$0xff]
        %v1412 = vld [vmem:[%s213 + $0x2238] sm:$0xff]
        %v1413 = vld [vmem:[%s213 + $0x2240] sm:$0xff]
        %v1414 = vld [vmem:[%s213 + $0x2248] sm:$0xff]
        %v1415 = vld [vmem:[%s213 + $0x2250] sm:$0xff]
        %v1416 = vld [vmem:[%s213 + $0x2258] sm:$0xff]
        %v1417 = vld [vmem:[%s213 + $0x2260] sm:$0xff]
        %v1418 = vld [vmem:[%s213 + $0x2268] sm:$0xff]
        %v1419 = vld [vmem:[%s213 + $0x2270] sm:$0xff]
        %v1420 = vld [vmem:[%s213 + $0x2278] sm:$0xff]
        %v1421 = vld [vmem:[%s213 + $0x2280] sm:$0xff]
        %v1422 = vld [vmem:[%s213 + $0x2288] sm:$0xff]
        %v1423 = vld [vmem:[%s213 + $0x2290] sm:$0xff]
        %v1424 = vld [vmem:[%s213 + $0x2298] sm:$0xff]
        %v1425 = vld [vmem:[%s213 + $0x22a0] sm:$0xff]
        %v1426 = vld [vmem:[%s213 + $0x22a8] sm:$0xff]
        %v1427 = vld [vmem:[%s213 + $0x22b0] sm:$0xff]
        %v1428 = vld [vmem:[%s213 + $0x22b8] sm:$0xff]
        %v1429 = vld [vmem:[%s213 + $0x22c0] sm:$0xff]
        %v1430 = vld [vmem:[%s213 + $0x22c8] sm:$0xff]
        %v1431 = vld [vmem:[%s213 + $0x22d0] sm:$0xff]
        %v1432 = vld [vmem:[%s213 + $0x22d8] sm:$0xff]
        %v1433 = vld [vmem:[%s213 + $0x22e0] sm:$0xff]
        %v1434 = vld [vmem:[%s213 + $0x22e8] sm:$0xff]
        %v1435 = vld [vmem:[%s213 + $0x22f0] sm:$0xff]
        %v1436 = vld [vmem:[%s213 + $0x22f8] sm:$0xff]
        %v1437 = vld [vmem:[%s213 + $0x2300] sm:$0xff]
        %v1438 = vld [vmem:[%s213 + $0x2308] sm:$0xff]
        %v1439 = vld [vmem:[%s213 + $0x2310] sm:$0xff]
        %v1440 = vld [vmem:[%s213 + $0x2318] sm:$0xff]
        %v1441 = vld [vmem:[%s213 + $0x2320] sm:$0xff]
        %v1442 = vld [vmem:[%s213 + $0x2328] sm:$0xff]
        %v1443 = vld [vmem:[%s213 + $0x2330] sm:$0xff]
        %v1444 = vld [vmem:[%s213 + $0x2338] sm:$0xff]
        %v1445 = vld [vmem:[%s213 + $0x2340] sm:$0xff]
        %v1446 = vld [vmem:[%s213 + $0x2348] sm:$0xff]
        %v1447 = vld [vmem:[%s213 + $0x2350] sm:$0xff]
        %v1448 = vld [vmem:[%s213 + $0x2358] sm:$0xff]
        %v1449 = vld [vmem:[%s213 + $0x2360] sm:$0xff]
        %v1450 = vld [vmem:[%s213 + $0x2368] sm:$0xff]
        %v1451 = vld [vmem:[%s213 + $0x2370] sm:$0xff]
        %v1452 = vld [vmem:[%s213 + $0x2378] sm:$0xff]
        %v1453 = vld [vmem:[%s213 + $0x2380] sm:$0xff]
        %v1454 = vld [vmem:[%s213 + $0x2388] sm:$0xff]
        %v1455 = vld [vmem:[%s213 + $0x2390] sm:$0xff]
        %v1456 = vld [vmem:[%s213 + $0x2398] sm:$0xff]
        %v1457 = vld [vmem:[%s213 + $0x23a0] sm:$0xff]
        %v1458 = vld [vmem:[%s213 + $0x23a8] sm:$0xff]
        %v1459 = vld [vmem:[%s213 + $0x23b0] sm:$0xff]
        %v1460 = vld [vmem:[%s213 + $0x23b8] sm:$0xff]
        %v1461 = vld [vmem:[%s213 + $0x23c0] sm:$0xff]
        %v1462 = vld [vmem:[%s213 + $0x23c8] sm:$0xff]
        %v1463 = vld [vmem:[%s213 + $0x23d0] sm:$0xff]
        %v1464 = vld [vmem:[%s213 + $0x23d8] sm:$0xff]
        %v1465 = vld [vmem:[%s213 + $0x23e0] sm:$0xff]
        %v1466 = vld [vmem:[%s213 + $0x23e8] sm:$0xff]
        %v1467 = vld [vmem:[%s213 + $0x23f0] sm:$0xff]
        %v1468 = vld [vmem:[%s213 + $0x23f8] sm:$0xff]
        %v1469 = vld [vmem:[%s213 + $0x2400] sm:$0xff]
        %v1470 = vld [vmem:[%s213 + $0x2408] sm:$0xff]
        %v1471 = vld [vmem:[%s213 + $0x2410] sm:$0xff]
        %v1472 = vld [vmem:[%s213 + $0x2418] sm:$0xff]
        %v1473 = vld [vmem:[%s213 + $0x2420] sm:$0xff]
        %v1474 = vld [vmem:[%s213 + $0x2428] sm:$0xff]
        %v1475 = vld [vmem:[%s213 + $0x2430] sm:$0xff]
        %v1476 = vld [vmem:[%s213 + $0x2438] sm:$0xff]
        %v1477 = vld [vmem:[%s213 + $0x2440] sm:$0xff]
        %v1478 = vld [vmem:[%s213 + $0x2448] sm:$0xff]
        %v1479 = vld [vmem:[%s213 + $0x2450] sm:$0xff]
        %v1480 = vld [vmem:[%s213 + $0x2458] sm:$0xff]
        %v1481 = vld [vmem:[%s213 + $0x2460] sm:$0xff]
        %v1482 = vld [vmem:[%s213 + $0x2468] sm:$0xff]
        %v1483 = vld [vmem:[%s213 + $0x2470] sm:$0xff]
        %v1484 = vld [vmem:[%s213 + $0x2478] sm:$0xff]
        %v1485 = vld [vmem:[%s213 + $0x2480] sm:$0xff]
        %v1486 = vld [vmem:[%s213 + $0x2488] sm:$0xff]
        %v1487 = vld [vmem:[%s213 + $0x2490] sm:$0xff]
        %v1488 = vld [vmem:[%s213 + $0x2498] sm:$0xff]
        %v1489 = vld [vmem:[%s213 + $0x24a0] sm:$0xff]
        %v1490 = vld [vmem:[%s213 + $0x24a8] sm:$0xff]
        %v1491 = vld [vmem:[%s213 + $0x24b0] sm:$0xff]
        %v1492 = vld [vmem:[%s213 + $0x24b8] sm:$0xff]
        %v1493 = vld [vmem:[%s213 + $0x24c0] sm:$0xff]
        %v1494 = vld [vmem:[%s213 + $0x24c8] sm:$0xff]
        %v1495 = vld [vmem:[%s213 + $0x24d0] sm:$0xff]
        %v1496 = vld [vmem:[%s213 + $0x24d8] sm:$0xff]
        %v1497 = vld [vmem:[%s213 + $0x24e0] sm:$0xff]
        %v1498 = vld [vmem:[%s213 + $0x24e8] sm:$0xff]
        %v1499 = vld [vmem:[%s213 + $0x24f0] sm:$0xff]
        %v1500 = vld [vmem:[%s213 + $0x24f8] sm:$0xff]
        %v1501 = vld [vmem:[%s213 + $0x2500] sm:$0xff]
        %v1502 = vld [vmem:[%s213 + $0x2508] sm:$0xff]
        %v1503 = vld [vmem:[%s213 + $0x2510] sm:$0xff]
        %v1504 = vld [vmem:[%s213 + $0x2518] sm:$0xff]
        %v1505 = vld [vmem:[%s213 + $0x2520] sm:$0xff]
        %v1506 = vld [vmem:[%s213 + $0x2528] sm:$0xff]
        %v1507 = vld [vmem:[%s213 + $0x2530] sm:$0xff]
        %v1508 = vld [vmem:[%s213 + $0x2538] sm:$0xff]
        %v1509 = vld [vmem:[%s213 + $0x2540] sm:$0xff]
        %v1510 = vld [vmem:[%s213 + $0x2548] sm:$0xff]
        %v1511 = vld [vmem:[%s213 + $0x2550] sm:$0xff]
        %v1512 = vld [vmem:[%s213 + $0x2558] sm:$0xff]
        %v1513 = vld [vmem:[%s213 + $0x2560] sm:$0xff]
        %v1514 = vld [vmem:[%s213 + $0x2568] sm:$0xff]
        %v1515 = vld [vmem:[%s213 + $0x2570] sm:$0xff]
        %v1516 = vld [vmem:[%s213 + $0x2578] sm:$0xff]
        %v1517 = vld [vmem:[%s213 + $0x2580] sm:$0xff]
        %v1518 = vld [vmem:[%s213 + $0x2588] sm:$0xff]
        %v1519 = vld [vmem:[%s213 + $0x2590] sm:$0xff]
        %v1520 = vld [vmem:[%s213 + $0x2598] sm:$0xff]
        %v1521 = vld [vmem:[%s213 + $0x25a0] sm:$0xff]
        %v1522 = vld [vmem:[%s213 + $0x25a8] sm:$0xff]
        %v1523 = vld [vmem:[%s213 + $0x25b0] sm:$0xff]
        %v1524 = vld [vmem:[%s213 + $0x25b8] sm:$0xff]
        %v1525 = vld [vmem:[%s213 + $0x25c0] sm:$0xff]
        %v1526 = vld [vmem:[%s213 + $0x25c8] sm:$0xff]
        %v1527 = vld [vmem:[%s213 + $0x25d0] sm:$0xff]
        %v1528 = vld [vmem:[%s213 + $0x25d8] sm:$0xff]
        %v1529 = vld [vmem:[%s213 + $0x25e0] sm:$0xff]
        %v1530 = vld [vmem:[%s213 + $0x25e8] sm:$0xff]
        %v1531 = vld [vmem:[%s213 + $0x25f0] sm:$0xff]
        %v1532 = vld [vmem:[%s213 + $0x25f8] sm:$0xff]
        %v1533 = vld [vmem:[%s213 + $0x2600] sm:$0xff]
        %v1534 = vld [vmem:[%s213 + $0x2608] sm:$0xff]
        %v1535 = vld [vmem:[%s213 + $0x2610] sm:$0xff]
        %v1536 = vld [vmem:[%s213 + $0x2618] sm:$0xff]
        %v1537 = vld [vmem:[%s213 + $0x2620] sm:$0xff]
        %v1538 = vld [vmem:[%s213 + $0x2628] sm:$0xff]
        %v1539 = vld [vmem:[%s213 + $0x2630] sm:$0xff]
        %v1540 = vld [vmem:[%s213 + $0x2638] sm:$0xff]
        %v1541 = vld [vmem:[%s213 + $0x2640] sm:$0xff]
        %v1542 = vld [vmem:[%s213 + $0x2648] sm:$0xff]
        %v1543 = vld [vmem:[%s213 + $0x2650] sm:$0xff]
        %v1544 = vld [vmem:[%s213 + $0x2658] sm:$0xff]
        %v1545 = vld [vmem:[%s213 + $0x2660] sm:$0xff]
        %v1546 = vld [vmem:[%s213 + $0x2668] sm:$0xff]
        %v1547 = vld [vmem:[%s213 + $0x2670] sm:$0xff]
        %v1548 = vld [vmem:[%s213 + $0x2678] sm:$0xff]
        %v1549 = vld [vmem:[%s213 + $0x2680] sm:$0xff]
        %v1550 = vld [vmem:[%s213 + $0x2688] sm:$0xff]
        %v1551 = vld [vmem:[%s213 + $0x2690] sm:$0xff]
        %v1552 = vld [vmem:[%s213 + $0x2698] sm:$0xff]
        %v1553 = vld [vmem:[%s213 + $0x26a0] sm:$0xff]
        %v1554 = vld [vmem:[%s213 + $0x26a8] sm:$0xff]
        %v1555 = vld [vmem:[%s213 + $0x26b0] sm:$0xff]
        %v1556 = vld [vmem:[%s213 + $0x26b8] sm:$0xff]
        %v1557 = vld [vmem:[%s213 + $0x26c0] sm:$0xff]
        %v1558 = vld [vmem:[%s213 + $0x26c8] sm:$0xff]
        %v1559 = vld [vmem:[%s213 + $0x26d0] sm:$0xff]
        %v1560 = vld [vmem:[%s213 + $0x26d8] sm:$0xff]
        %v1561 = vld [vmem:[%s213 + $0x26e0] sm:$0xff]
        %v1562 = vld [vmem:[%s213 + $0x26e8] sm:$0xff]
        %v1563 = vld [vmem:[%s213 + $0x26f0] sm:$0xff]
        %v1564 = vld [vmem:[%s213 + $0x26f8] sm:$0xff]
        %v1565 = vld [vmem:[%s213 + $0x2700] sm:$0xff]
        %v1566 = vld [vmem:[%s213 + $0x2708] sm:$0xff]
        %v1567 = vld [vmem:[%s213 + $0x2710] sm:$0xff]
        %v1568 = vld [vmem:[%s213 + $0x2718] sm:$0xff]
        %v1569 = vld [vmem:[%s213 + $0x2720] sm:$0xff]
        %v1570 = vld [vmem:[%s213 + $0x2728] sm:$0xff]
        %v1571 = vld [vmem:[%s213 + $0x2730] sm:$0xff]
        %v1572 = vld [vmem:[%s213 + $0x2738] sm:$0xff]
        %v1573 = vld [vmem:[%s213 + $0x2740] sm:$0xff]
        %v1574 = vld [vmem:[%s213 + $0x2748] sm:$0xff]
        %v1575 = vld [vmem:[%s213 + $0x2750] sm:$0xff]
        %v1576 = vld [vmem:[%s213 + $0x2758] sm:$0xff]
        %v1577 = vld [vmem:[%s213 + $0x2760] sm:$0xff]
        %v1578 = vld [vmem:[%s213 + $0x2768] sm:$0xff]
        %v1579 = vld [vmem:[%s213 + $0x2770] sm:$0xff]
        %v1580 = vld [vmem:[%s213 + $0x2778] sm:$0xff]
        %v1581 = vld [vmem:[%s213 + $0x2780] sm:$0xff]
        %v1582 = vld [vmem:[%s213 + $0x2788] sm:$0xff]
        %v1583 = vld [vmem:[%s213 + $0x2790] sm:$0xff]
        %v1584 = vld [vmem:[%s213 + $0x2798] sm:$0xff]
        %v1585 = vld [vmem:[%s213 + $0x27a0] sm:$0xff]
        %v1586 = vld [vmem:[%s213 + $0x27a8] sm:$0xff]
        %v1587 = vld [vmem:[%s213 + $0x27b0] sm:$0xff]
        %v1588 = vld [vmem:[%s213 + $0x27b8] sm:$0xff]
        %v1589 = vld [vmem:[%s213 + $0x27c0] sm:$0xff]
        %v1590 = vld [vmem:[%s213 + $0x27c8] sm:$0xff]
        %v1591 = vld [vmem:[%s213 + $0x27d0] sm:$0xff]
        %v1592 = vld [vmem:[%s213 + $0x27d8] sm:$0xff]
        %v1593 = vld [vmem:[%s213 + $0x27e0] sm:$0xff]
        %v1594 = vld [vmem:[%s213 + $0x27e8] sm:$0xff]
        %v1595 = vld [vmem:[%s213 + $0x27f0] sm:$0xff]
        %v1596 = vld [vmem:[%s213 + $0x27f8] sm:$0xff]
        %v1597 = vld [vmem:[%s213 + $0x2800] sm:$0xff]
        %v1598 = vld [vmem:[%s213 + $0x2808] sm:$0xff]
        %v1599 = vld [vmem:[%s213 + $0x2810] sm:$0xff]
        %v1600 = vld [vmem:[%s213 + $0x2818] sm:$0xff]
        %v1601 = vld [vmem:[%s213 + $0x2820] sm:$0xff]
        %v1602 = vld [vmem:[%s213 + $0x2828] sm:$0xff]
        %v1603 = vld [vmem:[%s213 + $0x2830] sm:$0xff]
        %v1604 = vld [vmem:[%s213 + $0x2838] sm:$0xff]
        %v1605 = vld [vmem:[%s213 + $0x2840] sm:$0xff]
        %v1606 = vld [vmem:[%s213 + $0x2848] sm:$0xff]
        %v1607 = vld [vmem:[%s213 + $0x2850] sm:$0xff]
        %v1608 = vld [vmem:[%s213 + $0x2858] sm:$0xff]
        %v1609 = vld [vmem:[%s213 + $0x2860] sm:$0xff]
        %v1610 = vld [vmem:[%s213 + $0x2868] sm:$0xff]
        %v1611 = vld [vmem:[%s213 + $0x2870] sm:$0xff]
        %v1612 = vld [vmem:[%s213 + $0x2878] sm:$0xff]
        %v1613 = vld [vmem:[%s213 + $0x2880] sm:$0xff]
        %v1614 = vld [vmem:[%s213 + $0x2888] sm:$0xff]
        %v1615 = vld [vmem:[%s213 + $0x2890] sm:$0xff]
        %v1616 = vld [vmem:[%s213 + $0x2898] sm:$0xff]
        %v1617 = vld [vmem:[%s213 + $0x28a0] sm:$0xff]
        %v1618 = vld [vmem:[%s213 + $0x28a8] sm:$0xff]
        %v1619 = vld [vmem:[%s213 + $0x28b0] sm:$0xff]
        %v1620 = vld [vmem:[%s213 + $0x28b8] sm:$0xff]
        %v1621 = vld [vmem:[%s213 + $0x28c0] sm:$0xff]
        %v1622 = vld [vmem:[%s213 + $0x28c8] sm:$0xff]
        %v1623 = vld [vmem:[%s213 + $0x28d0] sm:$0xff]
        %v1624 = vld [vmem:[%s213 + $0x28d8] sm:$0xff]
        %v1625 = vld [vmem:[%s213 + $0x28e0] sm:$0xff]
        %v1626 = vld [vmem:[%s213 + $0x28e8] sm:$0xff]
        %v1627 = vld [vmem:[%s213 + $0x28f0] sm:$0xff]
        %v1628 = vld [vmem:[%s213 + $0x28f8] sm:$0xff]
        %v1629 = vld [vmem:[%s213 + $0x2900] sm:$0xff]
        %v1630 = vld [vmem:[%s213 + $0x2908] sm:$0xff]
        %v1631 = vld [vmem:[%s213 + $0x2910] sm:$0xff]
        %v1632 = vld [vmem:[%s213 + $0x2918] sm:$0xff]
        %v1633 = vld [vmem:[%s213 + $0x2920] sm:$0xff]
        %v1634 = vld [vmem:[%s213 + $0x2928] sm:$0xff]
        %v1635 = vld [vmem:[%s213 + $0x2930] sm:$0xff]
        %v1636 = vld [vmem:[%s213 + $0x2938] sm:$0xff]
        %v1637 = vld [vmem:[%s213 + $0x2940] sm:$0xff]
        %v1638 = vld [vmem:[%s213 + $0x2948] sm:$0xff]
        %v1639 = vld [vmem:[%s213 + $0x2950] sm:$0xff]
        %v1640 = vld [vmem:[%s213 + $0x2958] sm:$0xff]
        %v1641 = vld [vmem:[%s213 + $0x2960] sm:$0xff]
        %v1642 = vld [vmem:[%s213 + $0x2968] sm:$0xff]
        %v1643 = vld [vmem:[%s213 + $0x2970] sm:$0xff]
        %v1644 = vld [vmem:[%s213 + $0x2978] sm:$0xff]
        %v1645 = vld [vmem:[%s213 + $0x2980] sm:$0xff]
        %v1646 = vld [vmem:[%s213 + $0x2988] sm:$0xff]
        %v1647 = vld [vmem:[%s213 + $0x2990] sm:$0xff]
        %v1648 = vld [vmem:[%s213 + $0x2998] sm:$0xff]
        %v1649 = vld [vmem:[%s213 + $0x29a0] sm:$0xff]
        %v1650 = vld [vmem:[%s213 + $0x29a8] sm:$0xff]
        %v1651 = vld [vmem:[%s213 + $0x29b0] sm:$0xff]
        %v1652 = vld [vmem:[%s213 + $0x29b8] sm:$0xff]
        %v1653 = vld [vmem:[%s213 + $0x29c0] sm:$0xff]
        %v1654 = vld [vmem:[%s213 + $0x29c8] sm:$0xff]
        %v1655 = vld [vmem:[%s213 + $0x29d0] sm:$0xff]
        %v1656 = vld [vmem:[%s213 + $0x29d8] sm:$0xff]
        %v1657 = vld [vmem:[%s213 + $0x29e0] sm:$0xff]
        %v1658 = vld [vmem:[%s213 + $0x29e8] sm:$0xff]
        %v1659 = vld [vmem:[%s213 + $0x29f0] sm:$0xff]
        %v1660 = vld [vmem:[%s213 + $0x29f8] sm:$0xff]
        %v1661 = vld [vmem:[%s213 + $0x2a00] sm:$0xff]
        %v1662 = vld [vmem:[%s213 + $0x2a08] sm:$0xff]
        %v1663 = vld [vmem:[%s213 + $0x2a10] sm:$0xff]
        %v1664 = vld [vmem:[%s213 + $0x2a18] sm:$0xff]
        %v1665 = vld [vmem:[%s213 + $0x2a20] sm:$0xff]
        %v1666 = vld [vmem:[%s213 + $0x2a28] sm:$0xff]
        %v1667 = vld [vmem:[%s213 + $0x2a30] sm:$0xff]
        %v1668 = vld [vmem:[%s213 + $0x2a38] sm:$0xff]
        %v1669 = vld [vmem:[%s213 + $0x2a40] sm:$0xff]
        %v1670 = vld [vmem:[%s213 + $0x2a48] sm:$0xff]
        %v1671 = vld [vmem:[%s213 + $0x2a50] sm:$0xff]
        %v1672 = vld [vmem:[%s213 + $0x2a58] sm:$0xff]
        %v1673 = vld [vmem:[%s213 + $0x2a60] sm:$0xff]
        %v1674 = vld [vmem:[%s213 + $0x2a68] sm:$0xff]
        %v1675 = vld [vmem:[%s213 + $0x2a70] sm:$0xff]
        %v1676 = vld [vmem:[%s213 + $0x2a78] sm:$0xff]
        %v1677 = vld [vmem:[%s213 + $0x2a80] sm:$0xff]
        %v1678 = vld [vmem:[%s213 + $0x2a88] sm:$0xff]
        %v1679 = vld [vmem:[%s213 + $0x2a90] sm:$0xff]
        %v1680 = vld [vmem:[%s213 + $0x2a98] sm:$0xff]
        %v1681 = vld [vmem:[%s213 + $0x2aa0] sm:$0xff]
        %v1682 = vld [vmem:[%s213 + $0x2aa8] sm:$0xff]
        %v1683 = vld [vmem:[%s213 + $0x2ab0] sm:$0xff]
        %v1684 = vld [vmem:[%s213 + $0x2ab8] sm:$0xff]
        %v1685 = vld [vmem:[%s213 + $0x2ac0] sm:$0xff]
        %v1686 = vld [vmem:[%s213 + $0x2ac8] sm:$0xff]
        %v1687 = vld [vmem:[%s213 + $0x2ad0] sm:$0xff]
        %v1688 = vld [vmem:[%s213 + $0x2ad8] sm:$0xff]
        %v1689 = vld [vmem:[%s213 + $0x2ae0] sm:$0xff]
        %v1690 = vld [vmem:[%s213 + $0x2ae8] sm:$0xff]
        %v1691 = vld [vmem:[%s213 + $0x2af0] sm:$0xff]
        %v1692 = vld [vmem:[%s213 + $0x2af8] sm:$0xff]
        %v1693 = vld [vmem:[%s213 + $0x2b00] sm:$0xff]
        %v1694 = vld [vmem:[%s213 + $0x2b08] sm:$0xff]
        %v1695 = vld [vmem:[%s213 + $0x2b10] sm:$0xff]
        %v1696 = vld [vmem:[%s213 + $0x2b18] sm:$0xff]
        %v1697 = vld [vmem:[%s213 + $0x2b20] sm:$0xff]
        %v1698 = vld [vmem:[%s213 + $0x2b28] sm:$0xff]
        %v1699 = vld [vmem:[%s213 + $0x2b30] sm:$0xff]
        %v1700 = vld [vmem:[%s213 + $0x2b38] sm:$0xff]
        %v1701 = vld [vmem:[%s213 + $0x2b40] sm:$0xff]
        %v1702 = vld [vmem:[%s213 + $0x2b48] sm:$0xff]
        %v1703 = vld [vmem:[%s213 + $0x2b50] sm:$0xff]
        %v1704 = vld [vmem:[%s213 + $0x2b58] sm:$0xff]
        %v1705 = vld [vmem:[%s213 + $0x2b60] sm:$0xff]
        %v1706 = vld [vmem:[%s213 + $0x2b68] sm:$0xff]
        %v1707 = vld [vmem:[%s213 + $0x2b70] sm:$0xff]
        %v1708 = vld [vmem:[%s213 + $0x2b78] sm:$0xff]
        %v1709 = vld [vmem:[%s213 + $0x2b80] sm:$0xff]
        %v1710 = vld [vmem:[%s213 + $0x2b88] sm:$0xff]
        %v1711 = vld [vmem:[%s213 + $0x2b90] sm:$0xff]
        %v1712 = vld [vmem:[%s213 + $0x2b98] sm:$0xff]
        %v1713 = vld [vmem:[%s213 + $0x2ba0] sm:$0xff]
        %v1714 = vld [vmem:[%s213 + $0x2ba8] sm:$0xff]
        %v1715 = vld [vmem:[%s213 + $0x2bb0] sm:$0xff]
        %v1716 = vld [vmem:[%s213 + $0x2bb8] sm:$0xff]
        %v1717 = vld [vmem:[%s213 + $0x2bc0] sm:$0xff]
        %v1718 = vld [vmem:[%s213 + $0x2bc8] sm:$0xff]
        %v1719 = vld [vmem:[%s213 + $0x2bd0] sm:$0xff]
        %v1720 = vld [vmem:[%s213 + $0x2bd8] sm:$0xff]
        %v1721 = vld [vmem:[%s213 + $0x2be0] sm:$0xff]
        %v1722 = vld [vmem:[%s213 + $0x2be8] sm:$0xff]
        %v1723 = vld [vmem:[%s213 + $0x2bf0] sm:$0xff]
        %v1724 = vld [vmem:[%s213 + $0x2bf8] sm:$0xff]
        %v1725 = vld [vmem:[%s213 + $0x2c00] sm:$0xff]
        %v1726 = vld [vmem:[%s213 + $0x2c08] sm:$0xff]
        %v1727 = vld [vmem:[%s213 + $0x2c10] sm:$0xff]
        %v1728 = vld [vmem:[%s213 + $0x2c18] sm:$0xff]
        %v1729 = vld [vmem:[%s213 + $0x2c20] sm:$0xff]
        %v1730 = vld [vmem:[%s213 + $0x2c28] sm:$0xff]
        %v1731 = vld [vmem:[%s213 + $0x2c30] sm:$0xff]
        %v1732 = vld [vmem:[%s213 + $0x2c38] sm:$0xff]
        %v1733 = vld [vmem:[%s213 + $0x2c40] sm:$0xff]
        %v1734 = vld [vmem:[%s213 + $0x2c48] sm:$0xff]
        %v1735 = vld [vmem:[%s213 + $0x2c50] sm:$0xff]
        %v1736 = vld [vmem:[%s213 + $0x2c58] sm:$0xff]
        %v1737 = vld [vmem:[%s213 + $0x2c60] sm:$0xff]
        %v1738 = vld [vmem:[%s213 + $0x2c68] sm:$0xff]
        %v1739 = vld [vmem:[%s213 + $0x2c70] sm:$0xff]
        %v1740 = vld [vmem:[%s213 + $0x2c78] sm:$0xff]
        %v1741 = vld [vmem:[%s213 + $0x2c80] sm:$0xff]
        %v1742 = vld [vmem:[%s213 + $0x2c88] sm:$0xff]
        %v1743 = vld [vmem:[%s213 + $0x2c90] sm:$0xff]
        %v1744 = vld [vmem:[%s213 + $0x2c98] sm:$0xff]
        %v1745 = vld [vmem:[%s213 + $0x2ca0] sm:$0xff]
        %v1746 = vld [vmem:[%s213 + $0x2ca8] sm:$0xff]
        %v1747 = vld [vmem:[%s213 + $0x2cb0] sm:$0xff]
        %v1748 = vld [vmem:[%s213 + $0x2cb8] sm:$0xff]
        %v1749 = vld [vmem:[%s213 + $0x2cc0] sm:$0xff]
        %v1750 = vld [vmem:[%s213 + $0x2cc8] sm:$0xff]
        %v1751 = vld [vmem:[%s213 + $0x2cd0] sm:$0xff]
        %v1752 = vld [vmem:[%s213 + $0x2cd8] sm:$0xff]
        %v1753 = vld [vmem:[%s213 + $0x2ce0] sm:$0xff]
        %v1754 = vld [vmem:[%s213 + $0x2ce8] sm:$0xff]
        %v1755 = vld [vmem:[%s213 + $0x2cf0] sm:$0xff]
        %v1756 = vld [vmem:[%s213 + $0x2cf8] sm:$0xff]
        %v1757 = vld [vmem:[%s213 + $0x2d00] sm:$0xff]
        %v1758 = vld [vmem:[%s213 + $0x2d08] sm:$0xff]
        %v1759 = vld [vmem:[%s213 + $0x2d10] sm:$0xff]
        %v1760 = vld [vmem:[%s213 + $0x2d18] sm:$0xff]
        %v1761 = vld [vmem:[%s213 + $0x2d20] sm:$0xff]
        %v1762 = vld [vmem:[%s213 + $0x2d28] sm:$0xff]
        %v1763 = vld [vmem:[%s213 + $0x2d30] sm:$0xff]
        %v1764 = vld [vmem:[%s213 + $0x2d38] sm:$0xff]
        %v1765 = vld [vmem:[%s213 + $0x2d40] sm:$0xff]
        %v1766 = vld [vmem:[%s213 + $0x2d48] sm:$0xff]
        %v1767 = vld [vmem:[%s213 + $0x2d50] sm:$0xff]
        %v1768 = vld [vmem:[%s213 + $0x2d58] sm:$0xff]
        %v1769 = vld [vmem:[%s213 + $0x2d60] sm:$0xff]
        %v1770 = vld [vmem:[%s213 + $0x2d68] sm:$0xff]
        %v1771 = vld [vmem:[%s213 + $0x2d70] sm:$0xff]
        %v1772 = vld [vmem:[%s213 + $0x2d78] sm:$0xff]
        %v1773 = vld [vmem:[%s213 + $0x2d80] sm:$0xff]
        %v1774 = vld [vmem:[%s213 + $0x2d88] sm:$0xff]
        %v1775 = vld [vmem:[%s213 + $0x2d90] sm:$0xff]
        %v1776 = vld [vmem:[%s213 + $0x2d98] sm:$0xff]
        %v1777 = vld [vmem:[%s213 + $0x2da0] sm:$0xff]
        %v1778 = vld [vmem:[%s213 + $0x2da8] sm:$0xff]
        %v1779 = vld [vmem:[%s213 + $0x2db0] sm:$0xff]
        %v1780 = vld [vmem:[%s213 + $0x2db8] sm:$0xff]
        %v1781 = vld [vmem:[%s213 + $0x2dc0] sm:$0xff]
        %v1782 = vld [vmem:[%s213 + $0x2dc8] sm:$0xff]
        %v1783 = vld [vmem:[%s213 + $0x2dd0] sm:$0xff]
        %v1784 = vld [vmem:[%s213 + $0x2dd8] sm:$0xff]
        %v1785 = vld [vmem:[%s213 + $0x2de0] sm:$0xff]
        %v1786 = vld [vmem:[%s213 + $0x2de8] sm:$0xff]
        %v1787 = vld [vmem:[%s213 + $0x2df0] sm:$0xff]
        %v1788 = vld [vmem:[%s213 + $0x2df8] sm:$0xff]
        %v1789 = vld [vmem:[%s213 + $0x2e00] sm:$0xff]
        %v1790 = vld [vmem:[%s213 + $0x2e08] sm:$0xff]
        %v1791 = vld [vmem:[%s213 + $0x2e10] sm:$0xff]
        %v1792 = vld [vmem:[%s213 + $0x2e18] sm:$0xff]
        %v1793 = vld [vmem:[%s213 + $0x2e20] sm:$0xff]
        %v1794 = vld [vmem:[%s213 + $0x2e28] sm:$0xff]
        %v1795 = vld [vmem:[%s213 + $0x2e30] sm:$0xff]
        %v1796 = vld [vmem:[%s213 + $0x2e38] sm:$0xff]
        %v1797 = vld [vmem:[%s213 + $0x2e40] sm:$0xff]
        %v1798 = vld [vmem:[%s213 + $0x2e48] sm:$0xff]
        %v1799 = vld [vmem:[%s213 + $0x2e50] sm:$0xff]
        %v1800 = vld [vmem:[%s213 + $0x2e58] sm:$0xff]
        %v1801 = vld [vmem:[%s213 + $0x2e60] sm:$0xff]
        %v1802 = vld [vmem:[%s213 + $0x2e68] sm:$0xff]
        %v1803 = vld [vmem:[%s213 + $0x2e70] sm:$0xff]
        %v1804 = vld [vmem:[%s213 + $0x2e78] sm:$0xff]
        %v1805 = vld [vmem:[%s213 + $0x2e80] sm:$0xff]
        %v1806 = vld [vmem:[%s213 + $0x2e88] sm:$0xff]
        %v1807 = vld [vmem:[%s213 + $0x2e90] sm:$0xff]
        %v1808 = vld [vmem:[%s213 + $0x2e98] sm:$0xff]
        %v1809 = vld [vmem:[%s213 + $0x2ea0] sm:$0xff]
        %v1810 = vld [vmem:[%s213 + $0x2ea8] sm:$0xff]
        %v1811 = vld [vmem:[%s213 + $0x2eb0] sm:$0xff]
        %v1812 = vld [vmem:[%s213 + $0x2eb8] sm:$0xff]
        %v1813 = vld [vmem:[%s213 + $0x2ec0] sm:$0xff]
        %v1814 = vld [vmem:[%s213 + $0x2ec8] sm:$0xff]
        %v1815 = vld [vmem:[%s213 + $0x2ed0] sm:$0xff]
        %v1816 = vld [vmem:[%s213 + $0x2ed8] sm:$0xff]
        %v1817 = vld [vmem:[%s213 + $0x2ee0] sm:$0xff]
        %v1818 = vld [vmem:[%s213 + $0x2ee8] sm:$0xff]
        %v1819 = vld [vmem:[%s213 + $0x2ef0] sm:$0xff]
        %v1820 = vld [vmem:[%s213 + $0x2ef8] sm:$0xff]
        %v1821 = vld [vmem:[%s213 + $0x2f00] sm:$0xff]
        %v1822 = vld [vmem:[%s213 + $0x2f08] sm:$0xff]
        %v1823 = vld [vmem:[%s213 + $0x2f10] sm:$0xff]
        %v1824 = vld [vmem:[%s213 + $0x2f18] sm:$0xff]
        %v1825 = vld [vmem:[%s213 + $0x2f20] sm:$0xff]
        %v1826 = vld [vmem:[%s213 + $0x2f28] sm:$0xff]
        %v1827 = vld [vmem:[%s213 + $0x2f30] sm:$0xff]
        %v1828 = vld [vmem:[%s213 + $0x2f38] sm:$0xff]
        %v1829 = vld [vmem:[%s213 + $0x2f40] sm:$0xff]
        %v1830 = vld [vmem:[%s213 + $0x2f48] sm:$0xff]
        %v1831 = vld [vmem:[%s213 + $0x2f50] sm:$0xff]
        %v1832 = vld [vmem:[%s213 + $0x2f58] sm:$0xff]
        %v1833 = vld [vmem:[%s213 + $0x2f60] sm:$0xff]
        %v1834 = vld [vmem:[%s213 + $0x2f68] sm:$0xff]
        %v1835 = vld [vmem:[%s213 + $0x2f70] sm:$0xff]
        %v1836 = vld [vmem:[%s213 + $0x2f78] sm:$0xff]
        %v1837 = vld [vmem:[%s213 + $0x2f80] sm:$0xff]
        %v1838 = vld [vmem:[%s213 + $0x2f88] sm:$0xff]
        %v1839 = vld [vmem:[%s213 + $0x2f90] sm:$0xff]
        %v1840 = vld [vmem:[%s213 + $0x2f98] sm:$0xff]
        %v1841 = vld [vmem:[%s213 + $0x2fa0] sm:$0xff]
        %v1842 = vld [vmem:[%s213 + $0x2fa8] sm:$0xff]
        %v1843 = vld [vmem:[%s213 + $0x2fb0] sm:$0xff]
        %v1844 = vld [vmem:[%s213 + $0x2fb8] sm:$0xff]
        %v1845 = vld [vmem:[%s213 + $0x2fc0] sm:$0xff]
        %v1846 = vld [vmem:[%s213 + $0x2fc8] sm:$0xff]
        %v1847 = vld [vmem:[%s213 + $0x2fd0] sm:$0xff]
        %v1848 = vld [vmem:[%s213 + $0x2fd8] sm:$0xff]
        %v1849 = vld [vmem:[%s213 + $0x2fe0] sm:$0xff]
        %v1850 = vld [vmem:[%s213 + $0x2fe8] sm:$0xff]
        %v1851 = vld [vmem:[%s213 + $0x2ff0] sm:$0xff]
        %v1852 = vld [vmem:[%s213 + $0x2ff8] sm:$0xff]
        %v1853 = vld [vmem:[%s213 + $0x3000] sm:$0xff]
        %v1854 = vld [vmem:[%s213 + $0x3008] sm:$0xff]
        %v1855 = vld [vmem:[%s213 + $0x3010] sm:$0xff]
        %v1856 = vld [vmem:[%s213 + $0x3018] sm:$0xff]
        %v1857 = vld [vmem:[%s213 + $0x3020] sm:$0xff]
        %v1858 = vld [vmem:[%s213 + $0x3028] sm:$0xff]
        %v1859 = vld [vmem:[%s213 + $0x3030] sm:$0xff]
        %v1860 = vld [vmem:[%s213 + $0x3038] sm:$0xff]
        %v1861 = vld [vmem:[%s213 + $0x3040] sm:$0xff]
        %v1862 = vld [vmem:[%s213 + $0x3048] sm:$0xff]
        %v1863 = vld [vmem:[%s213 + $0x3050] sm:$0xff]
        %v1864 = vld [vmem:[%s213 + $0x3058] sm:$0xff]
        %v1865 = vld [vmem:[%s213 + $0x3060] sm:$0xff]
        %v1866 = vld [vmem:[%s213 + $0x3068] sm:$0xff]
        %v1867 = vld [vmem:[%s213 + $0x3070] sm:$0xff]
        %v1868 = vld [vmem:[%s213 + $0x3078] sm:$0xff]
        %v1869 = vld [vmem:[%s213 + $0x3080] sm:$0xff]
        %v1870 = vld [vmem:[%s213 + $0x3088] sm:$0xff]
        %v1871 = vld [vmem:[%s213 + $0x3090] sm:$0xff]
        %v1872 = vld [vmem:[%s213 + $0x3098] sm:$0xff]
        %v1873 = vld [vmem:[%s213 + $0x30a0] sm:$0xff]
        %v1874 = vld [vmem:[%s213 + $0x30a8] sm:$0xff]
        %v1875 = vld [vmem:[%s213 + $0x30b0] sm:$0xff]
        %v1876 = vld [vmem:[%s213 + $0x30b8] sm:$0xff]
        %v1877 = vld [vmem:[%s213 + $0x30c0] sm:$0xff]
        %v1878 = vld [vmem:[%s213 + $0x30c8] sm:$0xff]
        %v1879 = vld [vmem:[%s213 + $0x30d0] sm:$0xff]
        %v1880 = vld [vmem:[%s213 + $0x30d8] sm:$0xff]
        %v1881 = vld [vmem:[%s213 + $0x30e0] sm:$0xff]
        %v1882 = vld [vmem:[%s213 + $0x30e8] sm:$0xff]
        %v1883 = vld [vmem:[%s213 + $0x30f0] sm:$0xff]
        %v1884 = vld [vmem:[%s213 + $0x30f8] sm:$0xff]
        %v1885 = vld [vmem:[%s222] sm:$0xf]
        %v1887 = vlaneseq
        %v1888 = vshrl.u32 %v1887, 7
        %v1889 = vsub.s32 0, %v1888
        %v1890 = vrot.slane %v1885, %v1889
        %v1891 = vlaneseq
        %v1892 = vshrl.u32 %v1891, 7
        %v1893 = vsub.s32 1, %v1892
        %v1894 = vrot.slane %v1885, %v1893
        %v1895 = vlaneseq
        %v1896 = vshrl.u32 %v1895, 7
        %v1897 = vsub.s32 2, %v1896
        %v1898 = vrot.slane %v1885, %v1897
        %v1899 = vlaneseq
        %v1900 = vshrl.u32 %v1899, 7
        %v1901 = vsub.s32 3, %v1900
        %v1902 = vrot.slane %v1885, %v1901
        %v1957 = vunpack.c.l.b16 %v267
        %v1958 = vunpack.c.h.b16 %v267
        %v1959 = vunpack.c.l.b16 %v268
        %v1960 = vunpack.c.h.b16 %v268
        %v1961 = vunpack.c.l.b16 %v269
        %v1962 = vunpack.c.h.b16 %v269
        %v1963 = vunpack.c.l.b16 %v270
        %v1964 = vunpack.c.h.b16 %v270
        %v1965 = vunpack.c.l.b16 %v271
        %v1966 = vunpack.c.h.b16 %v271
        %v1967 = vunpack.c.l.b16 %v272
        %v1968 = vunpack.c.h.b16 %v272
        %v1969 = vunpack.c.l.b16 %v273
        %v1970 = vunpack.c.h.b16 %v273
        %v1971 = vunpack.c.l.b16 %v274
        %v1972 = vunpack.c.h.b16 %v274
        %v1973 = vunpack.c.l.b16 %v275
        %v1974 = vunpack.c.h.b16 %v275
        %v1975 = vunpack.c.l.b16 %v276
        %v1976 = vunpack.c.h.b16 %v276
        %v1977 = vunpack.c.l.b16 %v277
        %v1978 = vunpack.c.h.b16 %v277
        %v1979 = vunpack.c.l.b16 %v278
        %v1980 = vunpack.c.h.b16 %v278
        %v1981 = vunpack.c.l.b16 %v279
        %v1982 = vunpack.c.h.b16 %v279
        %v1983 = vunpack.c.l.b16 %v280
        %v1984 = vunpack.c.h.b16 %v280
        %v1985 = vunpack.c.l.b16 %v281
        %v1986 = vunpack.c.h.b16 %v281
        %v1987 = vunpack.c.l.b16 %v282
        %v1988 = vunpack.c.h.b16 %v282
        %v1989 = vunpack.c.l.b16 %v283
        %v1990 = vunpack.c.h.b16 %v283
        %v1991 = vunpack.c.l.b16 %v284
        %v1992 = vunpack.c.h.b16 %v284
        %v1993 = vunpack.c.l.b16 %v285
        %v1994 = vunpack.c.h.b16 %v285
        %v1995 = vunpack.c.l.b16 %v286
        %v1996 = vunpack.c.h.b16 %v286
        %v1997 = vunpack.c.l.b16 %v287
        %v1998 = vunpack.c.h.b16 %v287
        %v1999 = vunpack.c.l.b16 %v288
        %v2000 = vunpack.c.h.b16 %v288
        %v2001 = vunpack.c.l.b16 %v289
        %v2002 = vunpack.c.h.b16 %v289
        %v2003 = vunpack.c.l.b16 %v290
        %v2004 = vunpack.c.h.b16 %v290
        %v2005 = vunpack.c.l.b16 %v291
        %v2006 = vunpack.c.l.b16 %v292
        %v2007 = vunpack.c.h.b16 %v292
        %v2008 = vunpack.c.l.b16 %v293
        %v2009 = vunpack.c.h.b16 %v293
        %v2010 = vunpack.c.l.b16 %v294
        %v2011 = vunpack.c.h.b16 %v294
        %v2012 = vunpack.c.l.b16 %v295
        %v2013 = vunpack.c.h.b16 %v295
        %v2014 = vunpack.c.l.b16 %v296
        %v2015 = vunpack.c.h.b16 %v296
        %v2016 = vunpack.c.l.b16 %v297
        %v2017 = vunpack.c.h.b16 %v297
        %v2018 = vunpack.c.l.b16 %v298
        %v2019 = vunpack.c.h.b16 %v298
        %v2020 = vunpack.c.l.b16 %v299
        %v2021 = vunpack.c.h.b16 %v299
        %v2022 = vunpack.c.l.b16 %v300
        %v2023 = vunpack.c.h.b16 %v300
        %v2024 = vunpack.c.l.b16 %v301
        %v2025 = vunpack.c.h.b16 %v301
        %v2026 = vunpack.c.l.b16 %v302
        %v2027 = vunpack.c.h.b16 %v302
        %v2028 = vunpack.c.l.b16 %v303
        %v2029 = vunpack.c.h.b16 %v303
        %v2030 = vunpack.c.l.b16 %v304
        %v2031 = vunpack.c.h.b16 %v304
        %v2032 = vunpack.c.l.b16 %v305
        %v2033 = vunpack.c.h.b16 %v305
        %v2034 = vunpack.c.l.b16 %v306
        %v2035 = vunpack.c.h.b16 %v306
        %v2036 = vunpack.c.l.b16 %v307
        %v2037 = vunpack.c.h.b16 %v307
        %v2038 = vunpack.c.l.b16 %v308
        %v2039 = vunpack.c.h.b16 %v308
        %v2040 = vunpack.c.l.b16 %v309
        %v2041 = vunpack.c.h.b16 %v309
        %v2042 = vunpack.c.l.b16 %v310
        %v2043 = vunpack.c.h.b16 %v310
        %v2044 = vunpack.c.l.b16 %v311
        %v2045 = vunpack.c.h.b16 %v311
        %v2046 = vunpack.c.l.b16 %v312
        %v2047 = vunpack.c.h.b16 %v312
        %v2048 = vunpack.c.l.b16 %v313
        %v2049 = vunpack.c.h.b16 %v313
        %v2050 = vunpack.c.l.b16 %v314
        %v2051 = vunpack.c.h.b16 %v314
        %v2052 = vunpack.c.l.b16 %v315
        %v2053 = vunpack.c.h.b16 %v315
        %v2054 = vunpack.c.l.b16 %v316
        %v2055 = vpack.c.b16 %v2006, %v1957
        %v2056 = vpack.c.b16 %v2007, %v1958
        %v2057 = vpack.c.b16 %v2008, %v1959
        %v2058 = vpack.c.b16 %v2009, %v1960
        %v2059 = vpack.c.b16 %v2010, %v1961
        %v2060 = vpack.c.b16 %v2011, %v1962
        %v2061 = vpack.c.b16 %v2012, %v1963
        %v2062 = vpack.c.b16 %v2013, %v1964
        %v2063 = vpack.c.b16 %v2014, %v1965
        %v2064 = vpack.c.b16 %v2015, %v1966
        %v2065 = vpack.c.b16 %v2016, %v1967
        %v2066 = vpack.c.b16 %v2017, %v1968
        %v2067 = vpack.c.b16 %v2018, %v1969
        %v2068 = vpack.c.b16 %v2019, %v1970
        %v2069 = vpack.c.b16 %v2020, %v1971
        %v2070 = vpack.c.b16 %v2021, %v1972
        %v2071 = vpack.c.b16 %v2022, %v1973
        %v2072 = vpack.c.b16 %v2023, %v1974
        %v2073 = vpack.c.b16 %v2024, %v1975
        %v2074 = vpack.c.b16 %v2025, %v1976
        %v2075 = vpack.c.b16 %v2026, %v1977
        %v2076 = vpack.c.b16 %v2027, %v1978
        %v2077 = vpack.c.b16 %v2028, %v1979
        %v2078 = vpack.c.b16 %v2029, %v1980
        %v2079 = vpack.c.b16 %v2030, %v1981
        %v2080 = vpack.c.b16 %v2031, %v1982
        %v2081 = vpack.c.b16 %v2032, %v1983
        %v2082 = vpack.c.b16 %v2033, %v1984
        %v2083 = vpack.c.b16 %v2034, %v1985
        %v2084 = vpack.c.b16 %v2035, %v1986
        %v2085 = vpack.c.b16 %v2036, %v1987
        %v2086 = vpack.c.b16 %v2037, %v1988
        %v2087 = vpack.c.b16 %v2038, %v1989
        %v2088 = vpack.c.b16 %v2039, %v1990
        %v2089 = vpack.c.b16 %v2040, %v1991
        %v2090 = vpack.c.b16 %v2041, %v1992
        %v2091 = vpack.c.b16 %v2042, %v1993
        %v2092 = vpack.c.b16 %v2043, %v1994
        %v2093 = vpack.c.b16 %v2044, %v1995
        %v2094 = vpack.c.b16 %v2045, %v1996
        %v2095 = vpack.c.b16 %v2046, %v1997
        %v2096 = vpack.c.b16 %v2047, %v1998
        %v2097 = vpack.c.b16 %v2048, %v1999
        %v2098 = vpack.c.b16 %v2049, %v2000
        %v2099 = vpack.c.b16 %v2050, %v2001
        %v2100 = vpack.c.b16 %v2051, %v2002
        %v2101 = vpack.c.b16 %v2052, %v2003
        %v2102 = vpack.c.b16 %v2053, %v2004
        %v2103 = vpack.c.b16 %v2054, %v2005
        %v3721 = vunpack.c.l.b16 %v317
        %v3722 = vunpack.c.h.b16 %v317
        %v3723 = vunpack.c.l.b16 %v318
        %v3724 = vunpack.c.h.b16 %v318
        %v3725 = vunpack.c.l.b16 %v319
        %v3726 = vunpack.c.h.b16 %v319
        %v3727 = vunpack.c.l.b16 %v320
        %v3728 = vunpack.c.h.b16 %v320
        %v3729 = vunpack.c.l.b16 %v321
        %v3730 = vunpack.c.h.b16 %v321
        %v3731 = vunpack.c.l.b16 %v322
        %v3732 = vunpack.c.h.b16 %v322
        %v3733 = vunpack.c.l.b16 %v323
        %v3734 = vunpack.c.h.b16 %v323
        %v3735 = vunpack.c.l.b16 %v324
        %v3736 = vunpack.c.h.b16 %v324
        %v3737 = vunpack.c.l.b16 %v325
        %v3738 = vunpack.c.h.b16 %v325
        %v3739 = vunpack.c.l.b16 %v326
        %v3740 = vunpack.c.h.b16 %v326
        %v3741 = vunpack.c.l.b16 %v327
        %v3742 = vunpack.c.h.b16 %v327
        %v3743 = vunpack.c.l.b16 %v328
        %v3744 = vunpack.c.h.b16 %v328
        %v3745 = vunpack.c.l.b16 %v329
        %v3746 = vunpack.c.h.b16 %v329
        %v3747 = vunpack.c.l.b16 %v330
        %v3748 = vunpack.c.h.b16 %v330
        %v3749 = vunpack.c.l.b16 %v331
        %v3750 = vunpack.c.h.b16 %v331
        %v3751 = vunpack.c.l.b16 %v332
        %v3752 = vunpack.c.h.b16 %v332
        %v3753 = vunpack.c.l.b16 %v333
        %v3754 = vunpack.c.h.b16 %v333
        %v3755 = vunpack.c.l.b16 %v334
        %v3756 = vunpack.c.h.b16 %v334
        %v3757 = vunpack.c.l.b16 %v335
        %v3758 = vunpack.c.h.b16 %v335
        %v3759 = vunpack.c.l.b16 %v336
        %v3760 = vunpack.c.h.b16 %v336
        %v3761 = vunpack.c.l.b16 %v337
        %v3762 = vunpack.c.h.b16 %v337
        %v3763 = vunpack.c.l.b16 %v338
        %v3764 = vunpack.c.h.b16 %v338
        %v3765 = vunpack.c.l.b16 %v339
        %v3766 = vunpack.c.h.b16 %v339
        %v3767 = vunpack.c.l.b16 %v340
        %v3768 = vunpack.c.h.b16 %v340
        %v3769 = vunpack.c.l.b16 %v341
        %v3770 = vunpack.c.h.b16 %v341
        %v3771 = vunpack.c.l.b16 %v342
        %v3772 = vunpack.c.h.b16 %v342
        %v3773 = vunpack.c.l.b16 %v343
        %v3774 = vunpack.c.h.b16 %v343
        %v3775 = vunpack.c.l.b16 %v344
        %v3776 = vunpack.c.h.b16 %v344
        %v3777 = vunpack.c.l.b16 %v345
        %v3778 = vunpack.c.h.b16 %v345
        %v3779 = vunpack.c.l.b16 %v346
        %v3780 = vunpack.c.h.b16 %v346
        %v3781 = vunpack.c.l.b16 %v347
        %v3782 = vunpack.c.h.b16 %v347
        %v3783 = vunpack.c.l.b16 %v348
        %v3784 = vunpack.c.h.b16 %v348
        %v3785 = vunpack.c.l.b16 %v349
        %v3786 = vunpack.c.h.b16 %v349
        %v3787 = vunpack.c.l.b16 %v350
        %v3788 = vunpack.c.h.b16 %v350
        %v3789 = vunpack.c.l.b16 %v351
        %v3790 = vunpack.c.h.b16 %v351
        %v3791 = vunpack.c.l.b16 %v352
        %v3792 = vunpack.c.h.b16 %v352
        %v3793 = vunpack.c.l.b16 %v353
        %v3794 = vunpack.c.h.b16 %v353
        %v3795 = vunpack.c.l.b16 %v354
        %v3796 = vunpack.c.h.b16 %v354
        %v3797 = vunpack.c.l.b16 %v355
        %v3798 = vunpack.c.h.b16 %v355
        %v3799 = vunpack.c.l.b16 %v356
        %v3800 = vunpack.c.h.b16 %v356
        %v3801 = vunpack.c.l.b16 %v357
        %v3802 = vunpack.c.h.b16 %v357
        %v3803 = vunpack.c.l.b16 %v358
        %v3804 = vunpack.c.h.b16 %v358
        %v3805 = vunpack.c.l.b16 %v359
        %v3806 = vunpack.c.h.b16 %v359
        %v3807 = vunpack.c.l.b16 %v360
        %v3808 = vunpack.c.h.b16 %v360
        %v3809 = vunpack.c.l.b16 %v361
        %v3810 = vunpack.c.h.b16 %v361
        %v3811 = vunpack.c.l.b16 %v362
        %v3812 = vunpack.c.h.b16 %v362
        %v3813 = vunpack.c.l.b16 %v363
        %v3814 = vunpack.c.h.b16 %v363
        %v3815 = vunpack.c.l.b16 %v364
        %v3816 = vunpack.c.h.b16 %v364
        %v3817 = vunpack.c.l.b16 %v365
        %v3818 = vunpack.c.h.b16 %v365
        %v3819 = vunpack.c.l.b16 %v366
        %v3820 = vunpack.c.h.b16 %v366
        %v3821 = vunpack.c.l.b16 %v367
        %v3822 = vunpack.c.h.b16 %v367
        %v3823 = vunpack.c.l.b16 %v368
        %v3824 = vunpack.c.h.b16 %v368
        %v3825 = vunpack.c.l.b16 %v369
        %v3826 = vunpack.c.h.b16 %v369
        %v3827 = vunpack.c.l.b16 %v370
        %v3828 = vunpack.c.h.b16 %v370
        %v3829 = vunpack.c.l.b16 %v371
        %v3830 = vunpack.c.h.b16 %v371
        %v3831 = vunpack.c.l.b16 %v372
        %v3832 = vunpack.c.h.b16 %v372
        %v3833 = vunpack.c.l.b16 %v373
        %v3834 = vunpack.c.h.b16 %v373
        %v3835 = vunpack.c.l.b16 %v374
        %v3836 = vunpack.c.h.b16 %v374
        %v3837 = vunpack.c.l.b16 %v375
        %v3838 = vunpack.c.h.b16 %v375
        %v3839 = vunpack.c.l.b16 %v376
        %v3840 = vunpack.c.h.b16 %v376
        %v3841 = vunpack.c.l.b16 %v377
        %v3842 = vunpack.c.h.b16 %v377
        %v3843 = vunpack.c.l.b16 %v378
        %v3844 = vunpack.c.h.b16 %v378
        %v3845 = vunpack.c.l.b16 %v379
        %v3846 = vunpack.c.h.b16 %v379
        %v3847 = vunpack.c.l.b16 %v380
        %v3848 = vunpack.c.h.b16 %v380
        %v3849 = vunpack.c.l.b16 %v381
        %v3850 = vunpack.c.h.b16 %v381
        %v3851 = vunpack.c.l.b16 %v382
        %v3852 = vunpack.c.h.b16 %v382
        %v3853 = vunpack.c.l.b16 %v383
        %v3854 = vunpack.c.h.b16 %v383
        %v3855 = vunpack.c.l.b16 %v384
        %v3856 = vunpack.c.h.b16 %v384
        %v3857 = vunpack.c.l.b16 %v385
        %v3858 = vunpack.c.h.b16 %v385
        %v3859 = vunpack.c.l.b16 %v386
        %v3860 = vunpack.c.h.b16 %v386
        %v3861 = vunpack.c.l.b16 %v387
        %v3862 = vunpack.c.h.b16 %v387
        %v3863 = vunpack.c.l.b16 %v388
        %v3864 = vunpack.c.h.b16 %v388
        %v3865 = vunpack.c.l.b16 %v389
        %v3866 = vunpack.c.h.b16 %v389
        %v3867 = vunpack.c.l.b16 %v390
        %v3868 = vunpack.c.h.b16 %v390
        %v3869 = vunpack.c.l.b16 %v391
        %v3870 = vunpack.c.h.b16 %v391
        %v3871 = vunpack.c.l.b16 %v392
        %v3872 = vunpack.c.h.b16 %v392
        %v3873 = vunpack.c.l.b16 %v393
        %v3874 = vunpack.c.h.b16 %v393
        %v3875 = vunpack.c.l.b16 %v394
        %v3876 = vunpack.c.h.b16 %v394
        %v3877 = vunpack.c.l.b16 %v395
        %v3878 = vunpack.c.h.b16 %v395
        %v3879 = vunpack.c.l.b16 %v396
        %v3880 = vunpack.c.h.b16 %v396
        %v3881 = vunpack.c.l.b16 %v397
        %v3882 = vunpack.c.h.b16 %v397
        %v3883 = vunpack.c.l.b16 %v398
        %v3884 = vunpack.c.h.b16 %v398
        %v3885 = vunpack.c.l.b16 %v399
        %v3886 = vunpack.c.h.b16 %v399
        %v3887 = vunpack.c.l.b16 %v400
        %v3888 = vunpack.c.h.b16 %v400
        %v3889 = vunpack.c.l.b16 %v401
        %v3890 = vunpack.c.h.b16 %v401
        %v3891 = vunpack.c.l.b16 %v402
        %v3892 = vunpack.c.h.b16 %v402
        %v3893 = vunpack.c.l.b16 %v403
        %v3894 = vunpack.c.h.b16 %v403
        %v3895 = vunpack.c.l.b16 %v404
        %v3896 = vunpack.c.h.b16 %v404
        %v3897 = vunpack.c.l.b16 %v405
        %v3898 = vunpack.c.h.b16 %v405
        %v3899 = vunpack.c.l.b16 %v406
        %v3900 = vunpack.c.h.b16 %v406
        %v3901 = vunpack.c.l.b16 %v407
        %v3902 = vunpack.c.h.b16 %v407
        %v3903 = vunpack.c.l.b16 %v408
        %v3904 = vunpack.c.h.b16 %v408
        %v3905 = vunpack.c.l.b16 %v409
        %v3906 = vunpack.c.h.b16 %v409
        %v3907 = vunpack.c.l.b16 %v410
        %v3908 = vunpack.c.h.b16 %v410
        %v3909 = vunpack.c.l.b16 %v411
        %v3910 = vunpack.c.h.b16 %v411
        %v3911 = vunpack.c.l.b16 %v412
        %v3912 = vunpack.c.h.b16 %v412
        %v3913 = vunpack.c.l.b16 %v413
        %v3914 = vunpack.c.h.b16 %v413
        %v3915 = vunpack.c.l.b16 %v414
        %v3916 = vunpack.c.h.b16 %v414
        %v3917 = vunpack.c.l.b16 %v415
        %v3918 = vunpack.c.h.b16 %v415
        %v3919 = vunpack.c.l.b16 %v416
        %v3920 = vunpack.c.h.b16 %v416
        %v3921 = vunpack.c.l.b16 %v417
        %v3922 = vunpack.c.h.b16 %v417
        %v3923 = vunpack.c.l.b16 %v418
        %v3924 = vunpack.c.h.b16 %v418
        %v3925 = vunpack.c.l.b16 %v419
        %v3926 = vunpack.c.h.b16 %v419
        %v3927 = vunpack.c.l.b16 %v420
        %v3928 = vunpack.c.h.b16 %v420
        %v3929 = vunpack.c.l.b16 %v421
        %v3930 = vunpack.c.h.b16 %v421
        %v3931 = vunpack.c.l.b16 %v422
        %v3932 = vunpack.c.h.b16 %v422
        %v3933 = vunpack.c.l.b16 %v423
        %v3934 = vunpack.c.h.b16 %v423
        %v3935 = vunpack.c.l.b16 %v424
        %v3936 = vunpack.c.h.b16 %v424
        %v3937 = vunpack.c.l.b16 %v425
        %v3938 = vunpack.c.h.b16 %v425
        %v3939 = vunpack.c.l.b16 %v426
        %v3940 = vunpack.c.h.b16 %v426
        %v3941 = vunpack.c.l.b16 %v427
        %v3942 = vunpack.c.h.b16 %v427
        %v3943 = vunpack.c.l.b16 %v428
        %v3944 = vunpack.c.h.b16 %v428
        %v3945 = vunpack.c.l.b16 %v429
        %v3946 = vunpack.c.h.b16 %v429
        %v3947 = vunpack.c.l.b16 %v430
        %v3948 = vunpack.c.h.b16 %v430
        %v3949 = vunpack.c.l.b16 %v431
        %v3950 = vunpack.c.h.b16 %v431
        %v3951 = vunpack.c.l.b16 %v432
        %v3952 = vunpack.c.h.b16 %v432
        %v3953 = vunpack.c.l.b16 %v433
        %v3954 = vunpack.c.h.b16 %v433
        %v3955 = vunpack.c.l.b16 %v434
        %v3956 = vunpack.c.h.b16 %v434
        %v3957 = vunpack.c.l.b16 %v435
        %v3958 = vunpack.c.h.b16 %v435
        %v3959 = vunpack.c.l.b16 %v436
        %v3960 = vunpack.c.h.b16 %v436
        %v3961 = vunpack.c.l.b16 %v437
        %v3962 = vunpack.c.h.b16 %v437
        %v3963 = vunpack.c.l.b16 %v438
        %v3964 = vunpack.c.h.b16 %v438
        %v3965 = vunpack.c.l.b16 %v439
        %v3966 = vunpack.c.h.b16 %v439
        %v3967 = vunpack.c.l.b16 %v440
        %v3968 = vunpack.c.h.b16 %v440
        %v3969 = vunpack.c.l.b16 %v441
        %v3970 = vunpack.c.h.b16 %v441
        %v3971 = vunpack.c.l.b16 %v442
        %v3972 = vunpack.c.h.b16 %v442
        %v3973 = vunpack.c.l.b16 %v443
        %v3974 = vunpack.c.h.b16 %v443
        %v3975 = vunpack.c.l.b16 %v444
        %v3976 = vunpack.c.h.b16 %v444
        %v3977 = vunpack.c.l.b16 %v445
        %v3978 = vunpack.c.h.b16 %v445
        %v3979 = vunpack.c.l.b16 %v446
        %v3980 = vunpack.c.h.b16 %v446
        %v3981 = vunpack.c.l.b16 %v447
        %v3982 = vunpack.c.h.b16 %v447
        %v3983 = vunpack.c.l.b16 %v448
        %v3984 = vunpack.c.h.b16 %v448
        %v3985 = vunpack.c.l.b16 %v449
        %v3986 = vunpack.c.h.b16 %v449
        %v3987 = vunpack.c.l.b16 %v450
        %v3988 = vunpack.c.h.b16 %v450
        %v3989 = vunpack.c.l.b16 %v451
        %v3990 = vunpack.c.h.b16 %v451
        %v3991 = vunpack.c.l.b16 %v452
        %v3992 = vunpack.c.h.b16 %v452
        %v3993 = vunpack.c.l.b16 %v453
        %v3994 = vunpack.c.h.b16 %v453
        %v3995 = vunpack.c.l.b16 %v454
        %v3996 = vunpack.c.h.b16 %v454
        %v3997 = vunpack.c.l.b16 %v455
        %v3998 = vunpack.c.h.b16 %v455
        %v3999 = vunpack.c.l.b16 %v456
        %v4000 = vunpack.c.h.b16 %v456
        %v4001 = vunpack.c.l.b16 %v457
        %v4002 = vunpack.c.h.b16 %v457
        %v4003 = vunpack.c.l.b16 %v458
        %v4004 = vunpack.c.h.b16 %v458
        %v4005 = vunpack.c.l.b16 %v459
        %v4006 = vunpack.c.h.b16 %v459
        %v4007 = vunpack.c.l.b16 %v460
        %v4008 = vunpack.c.h.b16 %v460
        %v4009 = vunpack.c.l.b16 %v461
        %v4010 = vunpack.c.h.b16 %v461
        %v4011 = vunpack.c.l.b16 %v462
        %v4012 = vunpack.c.h.b16 %v462
        %v4013 = vunpack.c.l.b16 %v463
        %v4014 = vunpack.c.h.b16 %v463
        %v4015 = vunpack.c.l.b16 %v464
        %v4016 = vunpack.c.h.b16 %v464
        %v4017 = vunpack.c.l.b16 %v465
        %v4018 = vunpack.c.h.b16 %v465
        %v4019 = vunpack.c.l.b16 %v466
        %v4020 = vunpack.c.h.b16 %v466
        %v4021 = vunpack.c.l.b16 %v467
        %v4022 = vunpack.c.h.b16 %v467
        %v4023 = vunpack.c.l.b16 %v468
        %v4024 = vunpack.c.h.b16 %v468
        %v4025 = vunpack.c.l.b16 %v469
        %v4026 = vunpack.c.h.b16 %v469
        %v4027 = vunpack.c.l.b16 %v470
        %v4028 = vunpack.c.h.b16 %v470
        %v4029 = vunpack.c.l.b16 %v471
        %v4030 = vunpack.c.h.b16 %v471
        %v4031 = vunpack.c.l.b16 %v472
        %v4032 = vunpack.c.h.b16 %v472
        %v4033 = vunpack.c.l.b16 %v473
        %v4034 = vunpack.c.h.b16 %v473
        %v4035 = vunpack.c.l.b16 %v474
        %v4036 = vunpack.c.h.b16 %v474
        %v4037 = vunpack.c.l.b16 %v475
        %v4038 = vunpack.c.h.b16 %v475
        %v4039 = vunpack.c.l.b16 %v476
        %v4040 = vunpack.c.h.b16 %v476
        %v4041 = vunpack.c.l.b16 %v477
        %v4042 = vunpack.c.h.b16 %v477
        %v4043 = vunpack.c.l.b16 %v478
        %v4044 = vunpack.c.h.b16 %v478
        %v4045 = vunpack.c.l.b16 %v479
        %v4046 = vunpack.c.h.b16 %v479
        %v4047 = vunpack.c.l.b16 %v480
        %v4048 = vunpack.c.h.b16 %v480
        %v4049 = vunpack.c.l.b16 %v481
        %v4050 = vunpack.c.h.b16 %v481
        %v4051 = vunpack.c.l.b16 %v482
        %v4052 = vunpack.c.h.b16 %v482
        %v4053 = vunpack.c.l.b16 %v483
        %v4054 = vunpack.c.h.b16 %v483
        %v4055 = vunpack.c.l.b16 %v484
        %v4056 = vunpack.c.h.b16 %v484
        %v4057 = vunpack.c.l.b16 %v485
        %v4058 = vunpack.c.h.b16 %v485
        %v4059 = vunpack.c.l.b16 %v486
        %v4060 = vunpack.c.h.b16 %v486
        %v4061 = vunpack.c.l.b16 %v487
        %v4062 = vunpack.c.h.b16 %v487
        %v4063 = vunpack.c.l.b16 %v488
        %v4064 = vunpack.c.h.b16 %v488
        %v4065 = vunpack.c.l.b16 %v489
        %v4066 = vunpack.c.h.b16 %v489
        %v4067 = vunpack.c.l.b16 %v490
        %v4068 = vunpack.c.h.b16 %v490
        %v4069 = vunpack.c.l.b16 %v491
        %v4070 = vunpack.c.h.b16 %v491
        %v4071 = vunpack.c.l.b16 %v492
        %v4072 = vunpack.c.h.b16 %v492
        %v4073 = vunpack.c.l.b16 %v493
        %v4074 = vunpack.c.h.b16 %v493
        %v4075 = vunpack.c.l.b16 %v494
        %v4076 = vunpack.c.h.b16 %v494
        %v4077 = vunpack.c.l.b16 %v495
        %v4078 = vunpack.c.h.b16 %v495
        %v4079 = vunpack.c.l.b16 %v496
        %v4080 = vunpack.c.h.b16 %v496
        %v4081 = vunpack.c.l.b16 %v497
        %v4082 = vunpack.c.h.b16 %v497
        %v4083 = vunpack.c.l.b16 %v498
        %v4084 = vunpack.c.h.b16 %v498
        %v4085 = vunpack.c.l.b16 %v499
        %v4086 = vunpack.c.h.b16 %v499
        %v4087 = vunpack.c.l.b16 %v500
        %v4088 = vunpack.c.h.b16 %v500
        %v4089 = vunpack.c.l.b16 %v501
        %v4090 = vunpack.c.h.b16 %v501
        %v4091 = vunpack.c.l.b16 %v502
        %v4092 = vunpack.c.h.b16 %v502
        %v4093 = vunpack.c.l.b16 %v503
        %v4094 = vunpack.c.h.b16 %v503
        %v4095 = vunpack.c.l.b16 %v504
        %v4096 = vunpack.c.h.b16 %v504
        %v4097 = vunpack.c.l.b16 %v505
        %v4098 = vunpack.c.h.b16 %v505
        %v4099 = vunpack.c.l.b16 %v506
        %v4100 = vunpack.c.h.b16 %v506
        %v4101 = vunpack.c.l.b16 %v507
        %v4102 = vunpack.c.h.b16 %v507
        %v4103 = vunpack.c.l.b16 %v508
        %v4104 = vunpack.c.h.b16 %v508
        %v4105 = vunpack.c.l.b16 %v509
        %v4106 = vunpack.c.h.b16 %v509
        %v4107 = vunpack.c.l.b16 %v510
        %v4108 = vunpack.c.h.b16 %v510
        %v4109 = vunpack.c.l.b16 %v511
        %v4110 = vunpack.c.h.b16 %v511
        %v4111 = vunpack.c.l.b16 %v512
        %v4112 = vunpack.c.h.b16 %v512
        %v4113 = vunpack.c.l.b16 %v513
        %v4114 = vunpack.c.h.b16 %v513
        %v4115 = vunpack.c.l.b16 %v514
        %v4116 = vunpack.c.h.b16 %v514
        %v4117 = vunpack.c.l.b16 %v515
        %v4118 = vunpack.c.h.b16 %v515
        %v4119 = vunpack.c.l.b16 %v516
        %v4120 = vunpack.c.h.b16 %v516
        %v4121 = vunpack.c.l.b16 %v517
        %v4122 = vunpack.c.h.b16 %v517
        %v4123 = vunpack.c.l.b16 %v518
        %v4124 = vunpack.c.h.b16 %v518
        %v4125 = vunpack.c.l.b16 %v519
        %v4126 = vunpack.c.h.b16 %v519
        %v4127 = vunpack.c.l.b16 %v520
        %v4128 = vunpack.c.h.b16 %v520
        %v4129 = vunpack.c.l.b16 %v521
        %v4130 = vunpack.c.h.b16 %v521
        %v4131 = vunpack.c.l.b16 %v522
        %v4132 = vunpack.c.h.b16 %v522
        %v4133 = vunpack.c.l.b16 %v523
        %v4134 = vunpack.c.h.b16 %v523
        %v4135 = vunpack.c.l.b16 %v524
        %v4136 = vunpack.c.h.b16 %v524
        %v4137 = vunpack.c.l.b16 %v525
        %v4138 = vunpack.c.h.b16 %v525
        %v4139 = vunpack.c.l.b16 %v526
        %v4140 = vunpack.c.h.b16 %v526
        %v4141 = vunpack.c.l.b16 %v527
        %v4142 = vunpack.c.h.b16 %v527
        %v4143 = vunpack.c.l.b16 %v528
        %v4144 = vunpack.c.h.b16 %v528
        %v4145 = vunpack.c.l.b16 %v529
        %v4146 = vunpack.c.h.b16 %v529
        %v4147 = vunpack.c.l.b16 %v530
        %v4148 = vunpack.c.h.b16 %v530
        %v4149 = vunpack.c.l.b16 %v531
        %v4150 = vunpack.c.h.b16 %v531
        %v4151 = vunpack.c.l.b16 %v532
        %v4152 = vunpack.c.h.b16 %v532
        %v4153 = vunpack.c.l.b16 %v533
        %v4154 = vunpack.c.h.b16 %v533
        %v4155 = vunpack.c.l.b16 %v534
        %v4156 = vunpack.c.h.b16 %v534
        %v4157 = vunpack.c.l.b16 %v535
        %v4158 = vunpack.c.h.b16 %v535
        %v4159 = vunpack.c.l.b16 %v536
        %v4160 = vunpack.c.h.b16 %v536
        %v4161 = vunpack.c.l.b16 %v537
        %v4162 = vunpack.c.h.b16 %v537
        %v4163 = vunpack.c.l.b16 %v538
        %v4164 = vunpack.c.h.b16 %v538
        %v4165 = vunpack.c.l.b16 %v539
        %v4166 = vunpack.c.h.b16 %v539
        %v4167 = vunpack.c.l.b16 %v540
        %v4168 = vunpack.c.h.b16 %v540
        %v4169 = vunpack.c.l.b16 %v541
        %v4170 = vunpack.c.h.b16 %v541
        %v4171 = vunpack.c.l.b16 %v542
        %v4172 = vunpack.c.h.b16 %v542
        %v4173 = vunpack.c.l.b16 %v543
        %v4174 = vunpack.c.h.b16 %v543
        %v4175 = vunpack.c.l.b16 %v544
        %v4176 = vunpack.c.h.b16 %v544
        %v4177 = vunpack.c.l.b16 %v545
        %v4178 = vunpack.c.h.b16 %v545
        %v4179 = vunpack.c.l.b16 %v546
        %v4180 = vunpack.c.h.b16 %v546
        %v4181 = vunpack.c.l.b16 %v547
        %v4182 = vunpack.c.h.b16 %v547
        %v4183 = vunpack.c.l.b16 %v548
        %v4184 = vunpack.c.h.b16 %v548
        %v4185 = vunpack.c.l.b16 %v549
        %v4186 = vunpack.c.h.b16 %v549
        %v4187 = vunpack.c.l.b16 %v550
        %v4188 = vunpack.c.h.b16 %v550
        %v4189 = vunpack.c.l.b16 %v551
        %v4190 = vunpack.c.h.b16 %v551
        %v4191 = vunpack.c.l.b16 %v552
        %v4192 = vunpack.c.h.b16 %v552
        %v4193 = vunpack.c.l.b16 %v553
        %v4194 = vunpack.c.h.b16 %v553
        %v4195 = vunpack.c.l.b16 %v554
        %v4196 = vunpack.c.h.b16 %v554
        %v4197 = vunpack.c.l.b16 %v555
        %v4198 = vunpack.c.h.b16 %v555
        %v4199 = vunpack.c.l.b16 %v556
        %v4200 = vunpack.c.h.b16 %v556
        %v4201 = vunpack.c.l.b16 %v557
        %v4202 = vunpack.c.h.b16 %v557
        %v4203 = vunpack.c.l.b16 %v558
        %v4204 = vunpack.c.h.b16 %v558
        %v4205 = vunpack.c.l.b16 %v559
        %v4206 = vunpack.c.h.b16 %v559
        %v4207 = vunpack.c.l.b16 %v560
        %v4208 = vunpack.c.h.b16 %v560
        %v4209 = vunpack.c.l.b16 %v561
        %v4210 = vunpack.c.h.b16 %v561
        %v4211 = vunpack.c.l.b16 %v562
        %v4212 = vunpack.c.h.b16 %v562
        %v4213 = vunpack.c.l.b16 %v563
        %v4214 = vunpack.c.h.b16 %v563
        %v4215 = vunpack.c.l.b16 %v564
        %v4216 = vunpack.c.h.b16 %v564
        %v4217 = vunpack.c.l.b16 %v565
        %v4218 = vunpack.c.h.b16 %v565
        %v4219 = vunpack.c.l.b16 %v566
        %v4220 = vunpack.c.h.b16 %v566
        %v4221 = vunpack.c.l.b16 %v567
        %v4222 = vunpack.c.h.b16 %v567
        %v4223 = vunpack.c.l.b16 %v568
        %v4224 = vunpack.c.h.b16 %v568
        %v4225 = vunpack.c.l.b16 %v569
        %v4226 = vunpack.c.h.b16 %v569
        %v4227 = vunpack.c.l.b16 %v570
        %v4228 = vunpack.c.h.b16 %v570
        %v4229 = vunpack.c.l.b16 %v571
        %v4230 = vunpack.c.h.b16 %v571
        %v4231 = vunpack.c.l.b16 %v572
        %v4232 = vunpack.c.h.b16 %v572
        %v4233 = vunpack.c.l.b16 %v573
        %v4234 = vunpack.c.h.b16 %v573
        %v4235 = vunpack.c.l.b16 %v574
        %v4236 = vunpack.c.h.b16 %v574
        %v4237 = vunpack.c.l.b16 %v575
        %v4238 = vunpack.c.h.b16 %v575
        %v4239 = vunpack.c.l.b16 %v576
        %v4240 = vunpack.c.h.b16 %v576
        %v4241 = vunpack.c.l.b16 %v577
        %v4242 = vunpack.c.h.b16 %v577
        %v4243 = vunpack.c.l.b16 %v578
        %v4244 = vunpack.c.h.b16 %v578
        %v4245 = vunpack.c.l.b16 %v579
        %v4246 = vunpack.c.h.b16 %v579
        %v4247 = vunpack.c.l.b16 %v580
        %v4248 = vunpack.c.h.b16 %v580
        %v4249 = vunpack.c.l.b16 %v581
        %v4250 = vunpack.c.h.b16 %v581
        %v4251 = vunpack.c.l.b16 %v582
        %v4252 = vunpack.c.h.b16 %v582
        %v4253 = vunpack.c.l.b16 %v583
        %v4254 = vunpack.c.h.b16 %v583
        %v4255 = vunpack.c.l.b16 %v584
        %v4256 = vunpack.c.h.b16 %v584
        %v4257 = vunpack.c.l.b16 %v585
        %v4258 = vunpack.c.h.b16 %v585
        %v4259 = vunpack.c.l.b16 %v586
        %v4260 = vunpack.c.h.b16 %v586
        %v4261 = vunpack.c.l.b16 %v587
        %v4262 = vunpack.c.h.b16 %v587
        %v4263 = vunpack.c.l.b16 %v588
        %v4264 = vunpack.c.h.b16 %v588
        %v4265 = vunpack.c.l.b16 %v589
        %v4266 = vunpack.c.h.b16 %v589
        %v4267 = vunpack.c.l.b16 %v590
        %v4268 = vunpack.c.h.b16 %v590
        %v4269 = vunpack.c.l.b16 %v591
        %v4270 = vunpack.c.h.b16 %v591
        %v4271 = vunpack.c.l.b16 %v592
        %v4272 = vunpack.c.h.b16 %v592
        %v4273 = vunpack.c.l.b16 %v593
        %v4274 = vunpack.c.h.b16 %v593
        %v4275 = vunpack.c.l.b16 %v594
        %v4276 = vunpack.c.h.b16 %v594
        %v4277 = vunpack.c.l.b16 %v595
        %v4278 = vunpack.c.h.b16 %v595
        %v4279 = vunpack.c.l.b16 %v596
        %v4280 = vunpack.c.h.b16 %v596
        %v4281 = vunpack.c.l.b16 %v597
        %v4282 = vunpack.c.h.b16 %v597
        %v4283 = vunpack.c.l.b16 %v598
        %v4284 = vunpack.c.h.b16 %v598
        %v4285 = vunpack.c.l.b16 %v599
        %v4286 = vunpack.c.h.b16 %v599
        %v4287 = vunpack.c.l.b16 %v600
        %v4288 = vunpack.c.h.b16 %v600
        %v4289 = vunpack.c.l.b16 %v601
        %v4290 = vunpack.c.h.b16 %v601
        %v4291 = vunpack.c.l.b16 %v602
        %v4292 = vunpack.c.h.b16 %v602
        %v4293 = vunpack.c.l.b16 %v603
        %v4294 = vunpack.c.h.b16 %v603
        %v4295 = vunpack.c.l.b16 %v604
        %v4296 = vunpack.c.h.b16 %v604
        %v4297 = vunpack.c.l.b16 %v605
        %v4298 = vunpack.c.h.b16 %v605
        %v4299 = vunpack.c.l.b16 %v606
        %v4300 = vunpack.c.h.b16 %v606
        %v4301 = vunpack.c.l.b16 %v607
        %v4302 = vunpack.c.h.b16 %v607
        %v4303 = vunpack.c.l.b16 %v608
        %v4304 = vunpack.c.h.b16 %v608
        %v4305 = vunpack.c.l.b16 %v609
        %v4306 = vunpack.c.h.b16 %v609
        %v4307 = vunpack.c.l.b16 %v610
        %v4308 = vunpack.c.h.b16 %v610
        %v4309 = vunpack.c.l.b16 %v611
        %v4310 = vunpack.c.h.b16 %v611
        %v4311 = vunpack.c.l.b16 %v612
        %v4312 = vunpack.c.h.b16 %v612
        %v4313 = vunpack.c.l.b16 %v613
        %v4314 = vunpack.c.h.b16 %v613
        %v4315 = vunpack.c.l.b16 %v614
        %v4316 = vunpack.c.h.b16 %v614
        %v4317 = vunpack.c.l.b16 %v615
        %v4318 = vunpack.c.h.b16 %v615
        %v4319 = vunpack.c.l.b16 %v616
        %v4320 = vunpack.c.h.b16 %v616
        %v4321 = vunpack.c.l.b16 %v617
        %v4322 = vunpack.c.h.b16 %v617
        %v4323 = vunpack.c.l.b16 %v618
        %v4324 = vunpack.c.h.b16 %v618
        %v4325 = vunpack.c.l.b16 %v619
        %v4326 = vunpack.c.h.b16 %v619
        %v4327 = vunpack.c.l.b16 %v620
        %v4328 = vunpack.c.h.b16 %v620
        %v4329 = vunpack.c.l.b16 %v621
        %v4330 = vunpack.c.h.b16 %v621
        %v4331 = vunpack.c.l.b16 %v622
        %v4332 = vunpack.c.h.b16 %v622
        %v4333 = vunpack.c.l.b16 %v623
        %v4334 = vunpack.c.h.b16 %v623
        %v4335 = vunpack.c.l.b16 %v624
        %v4336 = vunpack.c.h.b16 %v624
        %v4337 = vunpack.c.l.b16 %v625
        %v4338 = vunpack.c.h.b16 %v625
        %v4339 = vunpack.c.l.b16 %v626
        %v4340 = vunpack.c.h.b16 %v626
        %v4341 = vunpack.c.l.b16 %v627
        %v4342 = vunpack.c.h.b16 %v627
        %v4343 = vunpack.c.l.b16 %v628
        %v4344 = vunpack.c.h.b16 %v628
        %v4345 = vunpack.c.l.b16 %v629
        %v4346 = vunpack.c.h.b16 %v629
        %v4347 = vunpack.c.l.b16 %v630
        %v4348 = vunpack.c.h.b16 %v630
        %v4349 = vunpack.c.l.b16 %v631
        %v4350 = vunpack.c.h.b16 %v631
        %v4351 = vunpack.c.l.b16 %v632
        %v4352 = vunpack.c.h.b16 %v632
        %v4353 = vunpack.c.l.b16 %v633
        %v4354 = vunpack.c.h.b16 %v633
        %v4355 = vunpack.c.l.b16 %v634
        %v4356 = vunpack.c.h.b16 %v634
        %v4357 = vunpack.c.l.b16 %v635
        %v4358 = vunpack.c.h.b16 %v635
        %v4359 = vunpack.c.l.b16 %v636
        %v4360 = vunpack.c.h.b16 %v636
        %v4361 = vunpack.c.l.b16 %v637
        %v4362 = vunpack.c.h.b16 %v637
        %v4363 = vunpack.c.l.b16 %v638
        %v4364 = vunpack.c.h.b16 %v638
        %v4365 = vunpack.c.l.b16 %v639
        %v4366 = vunpack.c.h.b16 %v639
        %v4367 = vunpack.c.l.b16 %v640
        %v4368 = vunpack.c.h.b16 %v640
        %v4369 = vunpack.c.l.b16 %v641
        %v4370 = vunpack.c.h.b16 %v641
        %v4371 = vunpack.c.l.b16 %v642
        %v4372 = vunpack.c.h.b16 %v642
        %v4373 = vunpack.c.l.b16 %v643
        %v4374 = vunpack.c.h.b16 %v643
        %v4375 = vunpack.c.l.b16 %v644
        %v4376 = vunpack.c.h.b16 %v644
        %v4377 = vunpack.c.l.b16 %v645
        %v4378 = vunpack.c.h.b16 %v645
        %v4379 = vunpack.c.l.b16 %v646
        %v4380 = vunpack.c.h.b16 %v646
        %v4381 = vunpack.c.l.b16 %v647
        %v4382 = vunpack.c.h.b16 %v647
        %v4383 = vunpack.c.l.b16 %v648
        %v4384 = vunpack.c.h.b16 %v648
        %v4385 = vunpack.c.l.b16 %v649
        %v4386 = vunpack.c.h.b16 %v649
        %v4387 = vunpack.c.l.b16 %v650
        %v4388 = vunpack.c.h.b16 %v650
        %v4389 = vunpack.c.l.b16 %v651
        %v4390 = vunpack.c.h.b16 %v651
        %v4391 = vunpack.c.l.b16 %v652
        %v4392 = vunpack.c.h.b16 %v652
        %v4393 = vunpack.c.l.b16 %v653
        %v4394 = vunpack.c.h.b16 %v653
        %v4395 = vunpack.c.l.b16 %v654
        %v4396 = vunpack.c.h.b16 %v654
        %v4397 = vunpack.c.l.b16 %v655
        %v4398 = vunpack.c.h.b16 %v655
        %v4399 = vunpack.c.l.b16 %v656
        %v4400 = vunpack.c.h.b16 %v656
        %v4401 = vunpack.c.l.b16 %v657
        %v4402 = vunpack.c.h.b16 %v657
        %v4403 = vunpack.c.l.b16 %v658
        %v4404 = vunpack.c.h.b16 %v658
        %v4405 = vunpack.c.l.b16 %v659
        %v4406 = vunpack.c.h.b16 %v659
        %v4407 = vunpack.c.l.b16 %v660
        %v4408 = vunpack.c.h.b16 %v660
        %v4409 = vunpack.c.l.b16 %v661
        %v4410 = vunpack.c.h.b16 %v661
        %v4411 = vunpack.c.l.b16 %v662
        %v4412 = vunpack.c.h.b16 %v662
        %v4413 = vunpack.c.l.b16 %v663
        %v4414 = vunpack.c.h.b16 %v663
        %v4415 = vunpack.c.l.b16 %v664
        %v4416 = vunpack.c.h.b16 %v664
        %v4417 = vunpack.c.l.b16 %v665
        %v4418 = vunpack.c.h.b16 %v665
        %v4419 = vunpack.c.l.b16 %v666
        %v4420 = vunpack.c.h.b16 %v666
        %v4421 = vunpack.c.l.b16 %v667
        %v4422 = vunpack.c.h.b16 %v667
        %v4423 = vunpack.c.l.b16 %v668
        %v4424 = vunpack.c.h.b16 %v668
        %v4425 = vunpack.c.l.b16 %v669
        %v4426 = vunpack.c.h.b16 %v669
        %v4427 = vunpack.c.l.b16 %v670
        %v4428 = vunpack.c.h.b16 %v670
        %v4429 = vunpack.c.l.b16 %v671
        %v4430 = vunpack.c.h.b16 %v671
        %v4431 = vunpack.c.l.b16 %v672
        %v4432 = vunpack.c.h.b16 %v672
        %v4433 = vunpack.c.l.b16 %v673
        %v4434 = vunpack.c.h.b16 %v673
        %v4435 = vunpack.c.l.b16 %v674
        %v4436 = vunpack.c.h.b16 %v674
        %v4437 = vunpack.c.l.b16 %v675
        %v4438 = vunpack.c.h.b16 %v675
        %v4439 = vunpack.c.l.b16 %v676
        %v4440 = vunpack.c.h.b16 %v676
        %v4441 = vunpack.c.l.b16 %v677
        %v4442 = vunpack.c.h.b16 %v677
        %v4443 = vunpack.c.l.b16 %v678
        %v4444 = vunpack.c.h.b16 %v678
        %v4445 = vunpack.c.l.b16 %v679
        %v4446 = vunpack.c.h.b16 %v679
        %v4447 = vunpack.c.l.b16 %v680
        %v4448 = vunpack.c.h.b16 %v680
        %v4449 = vunpack.c.l.b16 %v681
        %v4450 = vunpack.c.h.b16 %v681
        %v4451 = vunpack.c.l.b16 %v682
        %v4452 = vunpack.c.h.b16 %v682
        %v4453 = vunpack.c.l.b16 %v683
        %v4454 = vunpack.c.h.b16 %v683
        %v4455 = vunpack.c.l.b16 %v684
        %v4456 = vunpack.c.h.b16 %v684
        %v4457 = vunpack.c.l.b16 %v685
        %v4458 = vunpack.c.h.b16 %v685
        %v4459 = vunpack.c.l.b16 %v686
        %v4460 = vunpack.c.h.b16 %v686
        %v4461 = vunpack.c.l.b16 %v687
        %v4462 = vunpack.c.h.b16 %v687
        %v4463 = vunpack.c.l.b16 %v688
        %v4464 = vunpack.c.h.b16 %v688
        %v4465 = vunpack.c.l.b16 %v689
        %v4466 = vunpack.c.h.b16 %v689
        %v4467 = vunpack.c.l.b16 %v690
        %v4468 = vunpack.c.h.b16 %v690
        %v4469 = vunpack.c.l.b16 %v691
        %v4470 = vunpack.c.h.b16 %v691
        %v4471 = vunpack.c.l.b16 %v692
        %v4472 = vunpack.c.h.b16 %v692
        %v4473 = vunpack.c.l.b16 %v693
        %v4474 = vunpack.c.h.b16 %v693
        %v4475 = vunpack.c.l.b16 %v694
        %v4476 = vunpack.c.h.b16 %v694
        %v4477 = vunpack.c.l.b16 %v695
        %v4478 = vunpack.c.h.b16 %v695
        %v4479 = vunpack.c.l.b16 %v696
        %v4480 = vunpack.c.h.b16 %v696
        %v4481 = vunpack.c.l.b16 %v697
        %v4482 = vunpack.c.h.b16 %v697
        %v4483 = vunpack.c.l.b16 %v698
        %v4484 = vunpack.c.h.b16 %v698
        %v4485 = vunpack.c.l.b16 %v699
        %v4486 = vunpack.c.h.b16 %v699
        %v4487 = vunpack.c.l.b16 %v700
        %v4488 = vunpack.c.h.b16 %v700
        %v4489 = vunpack.c.l.b16 %v701
        %v4490 = vunpack.c.h.b16 %v701
        %v4491 = vunpack.c.l.b16 %v702
        %v4492 = vunpack.c.h.b16 %v702
        %v4493 = vunpack.c.l.b16 %v703
        %v4494 = vunpack.c.h.b16 %v703
        %v4495 = vunpack.c.l.b16 %v704
        %v4496 = vunpack.c.h.b16 %v704
        %v4497 = vunpack.c.l.b16 %v705
        %v4498 = vunpack.c.h.b16 %v705
        %v4499 = vunpack.c.l.b16 %v706
        %v4500 = vunpack.c.h.b16 %v706
        %v4501 = vunpack.c.l.b16 %v707
        %v4502 = vunpack.c.h.b16 %v707
        %v4503 = vunpack.c.l.b16 %v708
        %v4504 = vunpack.c.h.b16 %v708
        %v4505 = vunpack.c.l.b16 %v709
        %v4506 = vunpack.c.h.b16 %v709
        %v4507 = vunpack.c.l.b16 %v710
        %v4508 = vunpack.c.h.b16 %v710
        %v4509 = vunpack.c.l.b16 %v711
        %v4510 = vunpack.c.h.b16 %v711
        %v4511 = vunpack.c.l.b16 %v712
        %v4512 = vunpack.c.h.b16 %v712
        %v4513 = vunpack.c.l.b16 %v713
        %v4514 = vunpack.c.h.b16 %v713
        %v4515 = vunpack.c.l.b16 %v714
        %v4516 = vunpack.c.h.b16 %v714
        %v4517 = vunpack.c.l.b16 %v715
        %v4518 = vunpack.c.h.b16 %v715
        %v4519 = vunpack.c.l.b16 %v716
        %v4520 = vunpack.c.h.b16 %v716
        %v4521 = vunpack.c.l.b16 %v717
        %v4522 = vunpack.c.h.b16 %v717
        %v4523 = vunpack.c.l.b16 %v718
        %v4524 = vunpack.c.h.b16 %v718
        %v4525 = vunpack.c.l.b16 %v719
        %v4526 = vunpack.c.h.b16 %v719
        %v4527 = vunpack.c.l.b16 %v720
        %v4528 = vunpack.c.h.b16 %v720
        %v4529 = vunpack.c.l.b16 %v721
        %v4530 = vunpack.c.h.b16 %v721
        %v4531 = vunpack.c.l.b16 %v722
        %v4532 = vunpack.c.h.b16 %v722
        %v4533 = vunpack.c.l.b16 %v723
        %v4534 = vunpack.c.h.b16 %v723
        %v4535 = vunpack.c.l.b16 %v724
        %v4536 = vunpack.c.h.b16 %v724
        %v4537 = vunpack.c.l.b16 %v725
        %v4538 = vunpack.c.h.b16 %v725
        %v4539 = vunpack.c.l.b16 %v726
        %v4540 = vunpack.c.h.b16 %v726
        %v4541 = vunpack.c.l.b16 %v727
        %v4542 = vunpack.c.h.b16 %v727
        %v4543 = vunpack.c.l.b16 %v728
        %v4544 = vunpack.c.h.b16 %v728
        %v4545 = vunpack.c.l.b16 %v729
        %v4546 = vunpack.c.h.b16 %v729
        %v4547 = vunpack.c.l.b16 %v730
        %v4548 = vunpack.c.h.b16 %v730
        %v4549 = vunpack.c.l.b16 %v731
        %v4550 = vunpack.c.h.b16 %v731
        %v4551 = vunpack.c.l.b16 %v732
        %v4552 = vunpack.c.h.b16 %v732
        %v4553 = vunpack.c.l.b16 %v733
        %v4554 = vunpack.c.h.b16 %v733
        %v4555 = vunpack.c.l.b16 %v734
        %v4556 = vunpack.c.h.b16 %v734
        %v4557 = vunpack.c.l.b16 %v735
        %v4558 = vunpack.c.h.b16 %v735
        %v4559 = vunpack.c.l.b16 %v736
        %v4560 = vunpack.c.h.b16 %v736
        %v4561 = vunpack.c.l.b16 %v737
        %v4562 = vunpack.c.h.b16 %v737
        %v4563 = vunpack.c.l.b16 %v738
        %v4564 = vunpack.c.h.b16 %v738
        %v4565 = vunpack.c.l.b16 %v739
        %v4566 = vunpack.c.h.b16 %v739
        %v4567 = vunpack.c.l.b16 %v740
        %v4568 = vunpack.c.h.b16 %v740
        %v4569 = vunpack.c.l.b16 %v741
        %v4570 = vunpack.c.h.b16 %v741
        %v4571 = vunpack.c.l.b16 %v742
        %v4572 = vunpack.c.h.b16 %v742
        %v4573 = vunpack.c.l.b16 %v743
        %v4574 = vunpack.c.h.b16 %v743
        %v4575 = vunpack.c.l.b16 %v744
        %v4576 = vunpack.c.h.b16 %v744
        %v4577 = vunpack.c.l.b16 %v745
        %v4578 = vunpack.c.h.b16 %v745
        %v4579 = vunpack.c.l.b16 %v746
        %v4580 = vunpack.c.h.b16 %v746
        %v4581 = vunpack.c.l.b16 %v747
        %v4582 = vunpack.c.h.b16 %v747
        %v4583 = vunpack.c.l.b16 %v748
        %v4584 = vunpack.c.h.b16 %v748
        %v4585 = vunpack.c.l.b16 %v749
        %v4586 = vunpack.c.h.b16 %v749
        %v4587 = vunpack.c.l.b16 %v750
        %v4588 = vunpack.c.h.b16 %v750
        %v4589 = vunpack.c.l.b16 %v751
        %v4590 = vunpack.c.h.b16 %v751
        %v4591 = vunpack.c.l.b16 %v752
        %v4592 = vunpack.c.h.b16 %v752
        %v4593 = vunpack.c.l.b16 %v753
        %v4594 = vunpack.c.h.b16 %v753
        %v4595 = vunpack.c.l.b16 %v754
        %v4596 = vunpack.c.h.b16 %v754
        %v4597 = vunpack.c.l.b16 %v755
        %v4598 = vunpack.c.h.b16 %v755
        %v4599 = vunpack.c.l.b16 %v756
        %v4600 = vunpack.c.h.b16 %v756
        %v4601 = vunpack.c.l.b16 %v757
        %v4602 = vunpack.c.h.b16 %v757
        %v4603 = vunpack.c.l.b16 %v758
        %v4604 = vunpack.c.h.b16 %v758
        %v4605 = vunpack.c.l.b16 %v759
        %v4606 = vunpack.c.h.b16 %v759
        %v4607 = vunpack.c.l.b16 %v760
        %v4608 = vunpack.c.h.b16 %v760
        %v4609 = vunpack.c.l.b16 %v761
        %v4610 = vunpack.c.h.b16 %v761
        %v4611 = vunpack.c.l.b16 %v762
        %v4612 = vunpack.c.h.b16 %v762
        %v4613 = vunpack.c.l.b16 %v763
        %v4614 = vunpack.c.h.b16 %v763
        %v4615 = vunpack.c.l.b16 %v764
        %v4616 = vunpack.c.h.b16 %v764
        %v4617 = vunpack.c.l.b16 %v765
        %v4618 = vunpack.c.h.b16 %v765
        %v4619 = vunpack.c.l.b16 %v766
        %v4620 = vunpack.c.h.b16 %v766
        %v4621 = vunpack.c.l.b16 %v767
        %v4622 = vunpack.c.h.b16 %v767
        %v4623 = vunpack.c.l.b16 %v768
        %v4624 = vunpack.c.h.b16 %v768
        %v4625 = vunpack.c.l.b16 %v769
        %v4626 = vunpack.c.h.b16 %v769
        %v4627 = vunpack.c.l.b16 %v770
        %v4628 = vunpack.c.h.b16 %v770
        %v4629 = vunpack.c.l.b16 %v771
        %v4630 = vunpack.c.h.b16 %v771
        %v4631 = vunpack.c.l.b16 %v772
        %v4632 = vunpack.c.h.b16 %v772
        %v4633 = vunpack.c.l.b16 %v773
        %v4634 = vunpack.c.h.b16 %v773
        %v4635 = vunpack.c.l.b16 %v774
        %v4636 = vunpack.c.h.b16 %v774
        %v4637 = vunpack.c.l.b16 %v775
        %v4638 = vunpack.c.h.b16 %v775
        %v4639 = vunpack.c.l.b16 %v776
        %v4640 = vunpack.c.h.b16 %v776
        %v4641 = vunpack.c.l.b16 %v777
        %v4642 = vunpack.c.h.b16 %v777
        %v4643 = vunpack.c.l.b16 %v778
        %v4644 = vunpack.c.h.b16 %v778
        %v4645 = vunpack.c.l.b16 %v779
        %v4646 = vunpack.c.h.b16 %v779
        %v4647 = vunpack.c.l.b16 %v780
        %v4648 = vunpack.c.h.b16 %v780
        %v4649 = vunpack.c.l.b16 %v781
        %v4650 = vunpack.c.h.b16 %v781
        %v4651 = vunpack.c.l.b16 %v782
        %v4652 = vunpack.c.h.b16 %v782
        %v4653 = vunpack.c.l.b16 %v783
        %v4654 = vunpack.c.h.b16 %v783
        %v4655 = vunpack.c.l.b16 %v784
        %v4656 = vunpack.c.h.b16 %v784
        %v4657 = vunpack.c.l.b16 %v785
        %v4658 = vunpack.c.h.b16 %v785
        %v4659 = vunpack.c.l.b16 %v786
        %v4660 = vunpack.c.h.b16 %v786
        %v4661 = vunpack.c.l.b16 %v787
        %v4662 = vunpack.c.h.b16 %v787
        %v4663 = vunpack.c.l.b16 %v788
        %v4664 = vunpack.c.h.b16 %v788
        %v4665 = vunpack.c.l.b16 %v789
        %v4666 = vunpack.c.h.b16 %v789
        %v4667 = vunpack.c.l.b16 %v790
        %v4668 = vunpack.c.h.b16 %v790
        %v4669 = vunpack.c.l.b16 %v791
        %v4670 = vunpack.c.h.b16 %v791
        %v4671 = vunpack.c.l.b16 %v792
        %v4672 = vunpack.c.h.b16 %v792
        %v4673 = vunpack.c.l.b16 %v793
        %v4674 = vunpack.c.h.b16 %v793
        %v4675 = vunpack.c.l.b16 %v794
        %v4676 = vunpack.c.h.b16 %v794
        %v4677 = vunpack.c.l.b16 %v795
        %v4678 = vunpack.c.h.b16 %v795
        %v4679 = vunpack.c.l.b16 %v796
        %v4680 = vunpack.c.h.b16 %v796
        %v4681 = vunpack.c.l.b16 %v797
        %v4682 = vunpack.c.h.b16 %v797
        %v4683 = vunpack.c.l.b16 %v798
        %v4684 = vunpack.c.h.b16 %v798
        %v4685 = vunpack.c.l.b16 %v799
        %v4686 = vunpack.c.h.b16 %v799
        %v4687 = vunpack.c.l.b16 %v800
        %v4688 = vunpack.c.h.b16 %v800
        %v4689 = vunpack.c.l.b16 %v801
        %v4690 = vunpack.c.h.b16 %v801
        %v4691 = vunpack.c.l.b16 %v802
        %v4692 = vunpack.c.h.b16 %v802
        %v4693 = vunpack.c.l.b16 %v803
        %v4694 = vunpack.c.h.b16 %v803
        %v4695 = vunpack.c.l.b16 %v804
        %v4696 = vunpack.c.h.b16 %v804
        %v4697 = vunpack.c.l.b16 %v805
        %v4698 = vunpack.c.h.b16 %v805
        %v4699 = vunpack.c.l.b16 %v806
        %v4700 = vunpack.c.h.b16 %v806
        %v4701 = vunpack.c.l.b16 %v807
        %v4702 = vunpack.c.h.b16 %v807
        %v4703 = vunpack.c.l.b16 %v808
        %v4704 = vunpack.c.h.b16 %v808
        %v4705 = vunpack.c.l.b16 %v809
        %v4706 = vunpack.c.h.b16 %v809
        %v4707 = vunpack.c.l.b16 %v810
        %v4708 = vunpack.c.h.b16 %v810
        %v4709 = vunpack.c.l.b16 %v811
        %v4710 = vunpack.c.h.b16 %v811
        %v4711 = vunpack.c.l.b16 %v812
        %v4712 = vunpack.c.h.b16 %v812
        %v4713 = vunpack.c.l.b16 %v813
        %v4714 = vunpack.c.h.b16 %v813
        %v4715 = vunpack.c.l.b16 %v814
        %v4716 = vunpack.c.h.b16 %v814
        %v4717 = vunpack.c.l.b16 %v815
        %v4718 = vunpack.c.h.b16 %v815
        %v4719 = vunpack.c.l.b16 %v816
        %v4720 = vunpack.c.h.b16 %v816
        %v4721 = vunpack.c.l.b16 %v817
        %v4722 = vunpack.c.h.b16 %v817
        %v4723 = vunpack.c.l.b16 %v818
        %v4724 = vunpack.c.h.b16 %v818
        %v4725 = vunpack.c.l.b16 %v819
        %v4726 = vunpack.c.h.b16 %v819
        %v4727 = vunpack.c.l.b16 %v820
        %v4728 = vunpack.c.h.b16 %v820
        %v4729 = vunpack.c.l.b16 %v821
        %v4730 = vunpack.c.h.b16 %v821
        %v4731 = vunpack.c.l.b16 %v822
        %v4732 = vunpack.c.h.b16 %v822
        %v4733 = vunpack.c.l.b16 %v823
        %v4734 = vunpack.c.h.b16 %v823
        %v4735 = vunpack.c.l.b16 %v824
        %v4736 = vunpack.c.h.b16 %v824
        %v4737 = vunpack.c.l.b16 %v825
        %v4738 = vunpack.c.h.b16 %v825
        %v4739 = vunpack.c.l.b16 %v826
        %v4740 = vunpack.c.h.b16 %v826
        %v4741 = vunpack.c.l.b16 %v827
        %v4742 = vunpack.c.h.b16 %v827
        %v4743 = vunpack.c.l.b16 %v828
        %v4744 = vunpack.c.h.b16 %v828
        %v4745 = vunpack.c.l.b16 %v829
        %v4746 = vunpack.c.h.b16 %v829
        %v4747 = vunpack.c.l.b16 %v830
        %v4748 = vunpack.c.h.b16 %v830
        %v4749 = vunpack.c.l.b16 %v831
        %v4750 = vunpack.c.h.b16 %v831
        %v4751 = vunpack.c.l.b16 %v832
        %v4752 = vunpack.c.h.b16 %v832
        %v4753 = vunpack.c.l.b16 %v833
        %v4754 = vunpack.c.h.b16 %v833
        %v4755 = vunpack.c.l.b16 %v834
        %v4756 = vunpack.c.h.b16 %v834
        %v4757 = vunpack.c.l.b16 %v835
        %v4758 = vunpack.c.h.b16 %v835
        %v4759 = vunpack.c.l.b16 %v836
        %v4760 = vunpack.c.h.b16 %v836
        %v4761 = vunpack.c.l.b16 %v837
        %v4762 = vunpack.c.h.b16 %v837
        %v4763 = vunpack.c.l.b16 %v838
        %v4764 = vunpack.c.h.b16 %v838
        %v4765 = vunpack.c.l.b16 %v839
        %v4766 = vunpack.c.h.b16 %v839
        %v4767 = vunpack.c.l.b16 %v840
        %v4768 = vunpack.c.h.b16 %v840
        %v4769 = vunpack.c.l.b16 %v841
        %v4770 = vunpack.c.h.b16 %v841
        %v4771 = vunpack.c.l.b16 %v842
        %v4772 = vunpack.c.h.b16 %v842
        %v4773 = vunpack.c.l.b16 %v843
        %v4774 = vunpack.c.h.b16 %v843
        %v4775 = vunpack.c.l.b16 %v844
        %v4776 = vunpack.c.h.b16 %v844
        %v4777 = vunpack.c.l.b16 %v845
        %v4778 = vunpack.c.h.b16 %v845
        %v4779 = vunpack.c.l.b16 %v846
        %v4780 = vunpack.c.h.b16 %v846
        %v4781 = vunpack.c.l.b16 %v847
        %v4782 = vunpack.c.h.b16 %v847
        %v4783 = vunpack.c.l.b16 %v848
        %v4784 = vunpack.c.h.b16 %v848
        %v4785 = vunpack.c.l.b16 %v849
        %v4786 = vunpack.c.h.b16 %v849
        %v4787 = vunpack.c.l.b16 %v850
        %v4788 = vunpack.c.h.b16 %v850
        %v4789 = vunpack.c.l.b16 %v851
        %v4790 = vunpack.c.h.b16 %v851
        %v4791 = vunpack.c.l.b16 %v852
        %v4792 = vunpack.c.h.b16 %v852
        %v4793 = vunpack.c.l.b16 %v853
        %v4794 = vunpack.c.h.b16 %v853
        %v4795 = vunpack.c.l.b16 %v854
        %v4796 = vunpack.c.h.b16 %v854
        %v4797 = vunpack.c.l.b16 %v855
        %v4798 = vunpack.c.h.b16 %v855
        %v4799 = vunpack.c.l.b16 %v856
        %v4800 = vunpack.c.h.b16 %v856
        %v4801 = vunpack.c.l.b16 %v857
        %v4802 = vunpack.c.h.b16 %v857
        %v4803 = vunpack.c.l.b16 %v858
        %v4804 = vunpack.c.h.b16 %v858
        %v4805 = vunpack.c.l.b16 %v859
        %v4806 = vunpack.c.h.b16 %v859
        %v4807 = vunpack.c.l.b16 %v860
        %v4808 = vunpack.c.h.b16 %v860
        %v4809 = vunpack.c.l.b16 %v861
        %v4810 = vunpack.c.h.b16 %v861
        %v4811 = vunpack.c.l.b16 %v862
        %v4812 = vunpack.c.h.b16 %v862
        %v4813 = vunpack.c.l.b16 %v863
        %v4814 = vunpack.c.h.b16 %v863
        %v4815 = vunpack.c.l.b16 %v864
        %v4816 = vunpack.c.h.b16 %v864
        %v4817 = vunpack.c.l.b16 %v865
        %v4818 = vunpack.c.h.b16 %v865
        %v4819 = vunpack.c.l.b16 %v866
        %v4820 = vunpack.c.h.b16 %v866
        %v4821 = vunpack.c.l.b16 %v867
        %v4822 = vunpack.c.h.b16 %v867
        %v4823 = vunpack.c.l.b16 %v868
        %v4824 = vunpack.c.h.b16 %v868
        %v4825 = vunpack.c.l.b16 %v869
        %v4826 = vunpack.c.h.b16 %v869
        %v4827 = vunpack.c.l.b16 %v870
        %v4828 = vunpack.c.h.b16 %v870
        %v4829 = vunpack.c.l.b16 %v871
        %v4830 = vunpack.c.h.b16 %v871
        %v4831 = vunpack.c.l.b16 %v872
        %v4832 = vunpack.c.h.b16 %v872
        %v4833 = vunpack.c.l.b16 %v873
        %v4834 = vunpack.c.h.b16 %v873
        %v4835 = vunpack.c.l.b16 %v874
        %v4836 = vunpack.c.h.b16 %v874
        %v4837 = vunpack.c.l.b16 %v875
        %v4838 = vunpack.c.h.b16 %v875
        %v4839 = vunpack.c.l.b16 %v876
        %v4840 = vunpack.c.h.b16 %v876
        %v4841 = vunpack.c.l.b16 %v877
        %v4842 = vunpack.c.h.b16 %v877
        %v4843 = vunpack.c.l.b16 %v878
        %v4844 = vunpack.c.h.b16 %v878
        %v4845 = vunpack.c.l.b16 %v879
        %v4846 = vunpack.c.h.b16 %v879
        %v4847 = vunpack.c.l.b16 %v880
        %v4848 = vunpack.c.h.b16 %v880
        %v4849 = vunpack.c.l.b16 %v881
        %v4850 = vunpack.c.h.b16 %v881
        %v4851 = vunpack.c.l.b16 %v882
        %v4852 = vunpack.c.h.b16 %v882
        %v4853 = vunpack.c.l.b16 %v883
        %v4854 = vunpack.c.h.b16 %v883
        %v4855 = vunpack.c.l.b16 %v884
        %v4856 = vunpack.c.h.b16 %v884
        %v4857 = vunpack.c.l.b16 %v885
        %v4858 = vunpack.c.h.b16 %v885
        %v4859 = vunpack.c.l.b16 %v886
        %v4860 = vunpack.c.h.b16 %v886
        %v4861 = vunpack.c.l.b16 %v887
        %v4862 = vunpack.c.h.b16 %v887
        %v4863 = vunpack.c.l.b16 %v888
        %v4864 = vunpack.c.h.b16 %v888
        %v4865 = vunpack.c.l.b16 %v889
        %v4866 = vunpack.c.h.b16 %v889
        %v4867 = vunpack.c.l.b16 %v890
        %v4868 = vunpack.c.h.b16 %v890
        %v4869 = vunpack.c.l.b16 %v891
        %v4870 = vunpack.c.h.b16 %v891
        %v4871 = vunpack.c.l.b16 %v892
        %v4872 = vunpack.c.h.b16 %v892
        %v4873 = vunpack.c.l.b16 %v893
        %v4874 = vunpack.c.h.b16 %v893
        %v4875 = vunpack.c.l.b16 %v894
        %v4876 = vunpack.c.h.b16 %v894
        %v4877 = vunpack.c.l.b16 %v895
        %v4878 = vunpack.c.h.b16 %v895
        %v4879 = vunpack.c.l.b16 %v896
        %v4880 = vunpack.c.h.b16 %v896
        %v4881 = vunpack.c.l.b16 %v897
        %v4882 = vunpack.c.h.b16 %v897
        %v4883 = vunpack.c.l.b16 %v898
        %v4884 = vunpack.c.h.b16 %v898
        %v4885 = vunpack.c.l.b16 %v899
        %v4886 = vunpack.c.h.b16 %v899
        %v4887 = vunpack.c.l.b16 %v900
        %v4888 = vunpack.c.h.b16 %v900
        %v4889 = vunpack.c.l.b16 %v901
        %v4890 = vunpack.c.h.b16 %v901
        %v4891 = vunpack.c.l.b16 %v902
        %v4892 = vunpack.c.h.b16 %v902
        %v4893 = vunpack.c.l.b16 %v903
        %v4894 = vunpack.c.h.b16 %v903
        %v4895 = vunpack.c.l.b16 %v904
        %v4896 = vunpack.c.h.b16 %v904
        %v4897 = vunpack.c.l.b16 %v905
        %v4898 = vunpack.c.h.b16 %v905
        %v4899 = vunpack.c.l.b16 %v906
        %v4900 = vunpack.c.h.b16 %v906
        %v4901 = vunpack.c.l.b16 %v907
        %v4902 = vunpack.c.h.b16 %v907
        %v4903 = vunpack.c.l.b16 %v908
        %v4904 = vunpack.c.h.b16 %v908
        %v4905 = vunpack.c.l.b16 %v909
        %v4906 = vunpack.c.h.b16 %v909
        %v4907 = vunpack.c.l.b16 %v910
        %v4908 = vunpack.c.h.b16 %v910
        %v4909 = vunpack.c.l.b16 %v911
        %v4910 = vunpack.c.h.b16 %v911
        %v4911 = vunpack.c.l.b16 %v912
        %v4912 = vunpack.c.h.b16 %v912
        %v4913 = vunpack.c.l.b16 %v913
        %v4914 = vunpack.c.h.b16 %v913
        %v4915 = vunpack.c.l.b16 %v914
        %v4916 = vunpack.c.h.b16 %v914
        %v4917 = vunpack.c.l.b16 %v915
        %v4918 = vunpack.c.h.b16 %v915
        %v4919 = vunpack.c.l.b16 %v916
        %v4920 = vunpack.c.h.b16 %v916
        %v4921 = vunpack.c.l.b16 %v917
        %v4922 = vunpack.c.h.b16 %v917
        %v4923 = vunpack.c.l.b16 %v918
        %v4924 = vunpack.c.h.b16 %v918
        %v4925 = vunpack.c.l.b16 %v919
        %v4926 = vunpack.c.h.b16 %v919
        %v4927 = vunpack.c.l.b16 %v920
        %v4928 = vunpack.c.h.b16 %v920
        %v4929 = vunpack.c.l.b16 %v921
        %v4930 = vunpack.c.h.b16 %v921
        %v4931 = vunpack.c.l.b16 %v922
        %v4932 = vunpack.c.h.b16 %v922
        %v4933 = vunpack.c.l.b16 %v923
        %v4934 = vunpack.c.h.b16 %v923
        %v4935 = vunpack.c.l.b16 %v924
        %v4936 = vunpack.c.h.b16 %v924
        %v4937 = vunpack.c.l.b16 %v925
        %v4938 = vunpack.c.h.b16 %v925
        %v4939 = vunpack.c.l.b16 %v926
        %v4940 = vunpack.c.h.b16 %v926
        %v4941 = vunpack.c.l.b16 %v927
        %v4942 = vunpack.c.h.b16 %v927
        %v4943 = vunpack.c.l.b16 %v928
        %v4944 = vunpack.c.h.b16 %v928
        %v4945 = vunpack.c.l.b16 %v929
        %v4946 = vunpack.c.h.b16 %v929
        %v4947 = vunpack.c.l.b16 %v930
        %v4948 = vunpack.c.h.b16 %v930
        %v4949 = vunpack.c.l.b16 %v931
        %v4950 = vunpack.c.h.b16 %v931
        %v4951 = vunpack.c.l.b16 %v932
        %v4952 = vunpack.c.h.b16 %v932
        %v4953 = vunpack.c.l.b16 %v933
        %v4954 = vunpack.c.h.b16 %v933
        %v4955 = vunpack.c.l.b16 %v934
        %v4956 = vunpack.c.h.b16 %v934
        %v4957 = vunpack.c.l.b16 %v935
        %v4958 = vunpack.c.h.b16 %v935
        %v4959 = vunpack.c.l.b16 %v936
        %v4960 = vunpack.c.h.b16 %v936
        %v4961 = vunpack.c.l.b16 %v937
        %v4962 = vunpack.c.h.b16 %v937
        %v4963 = vunpack.c.l.b16 %v938
        %v4964 = vunpack.c.h.b16 %v938
        %v4965 = vunpack.c.l.b16 %v939
        %v4966 = vunpack.c.h.b16 %v939
        %v4967 = vunpack.c.l.b16 %v940
        %v4968 = vunpack.c.h.b16 %v940
        %v4969 = vunpack.c.l.b16 %v941
        %v4970 = vunpack.c.h.b16 %v941
        %v4971 = vunpack.c.l.b16 %v942
        %v4972 = vunpack.c.h.b16 %v942
        %v4973 = vunpack.c.l.b16 %v943
        %v4974 = vunpack.c.h.b16 %v943
        %v4975 = vunpack.c.l.b16 %v944
        %v4976 = vunpack.c.h.b16 %v944
        %v4977 = vunpack.c.l.b16 %v945
        %v4978 = vunpack.c.h.b16 %v945
        %v4979 = vunpack.c.l.b16 %v946
        %v4980 = vunpack.c.h.b16 %v946
        %v4981 = vunpack.c.l.b16 %v947
        %v4982 = vunpack.c.h.b16 %v947
        %v4983 = vunpack.c.l.b16 %v948
        %v4984 = vunpack.c.h.b16 %v948
        %v4985 = vunpack.c.l.b16 %v949
        %v4986 = vunpack.c.h.b16 %v949
        %v4987 = vunpack.c.l.b16 %v950
        %v4988 = vunpack.c.h.b16 %v950
        %v4989 = vunpack.c.l.b16 %v951
        %v4990 = vunpack.c.h.b16 %v951
        %v4991 = vunpack.c.l.b16 %v952
        %v4992 = vunpack.c.h.b16 %v952
        %v4993 = vunpack.c.l.b16 %v953
        %v4994 = vunpack.c.h.b16 %v953
        %v4995 = vunpack.c.l.b16 %v954
        %v4996 = vunpack.c.h.b16 %v954
        %v4997 = vunpack.c.l.b16 %v955
        %v4998 = vunpack.c.h.b16 %v955
        %v4999 = vunpack.c.l.b16 %v956
        %v5000 = vunpack.c.h.b16 %v956
        %v5001 = vunpack.c.l.b16 %v957
        %v5002 = vunpack.c.h.b16 %v957
        %v5003 = vunpack.c.l.b16 %v958
        %v5004 = vunpack.c.h.b16 %v958
        %v5005 = vunpack.c.l.b16 %v959
        %v5006 = vunpack.c.h.b16 %v959
        %v5007 = vunpack.c.l.b16 %v960
        %v5008 = vunpack.c.h.b16 %v960
        %v5009 = vunpack.c.l.b16 %v961
        %v5010 = vunpack.c.h.b16 %v961
        %v5011 = vunpack.c.l.b16 %v962
        %v5012 = vunpack.c.h.b16 %v962
        %v5013 = vunpack.c.l.b16 %v963
        %v5014 = vunpack.c.h.b16 %v963
        %v5015 = vunpack.c.l.b16 %v964
        %v5016 = vunpack.c.h.b16 %v964
        %v5017 = vunpack.c.l.b16 %v965
        %v5018 = vunpack.c.h.b16 %v965
        %v5019 = vunpack.c.l.b16 %v966
        %v5020 = vunpack.c.h.b16 %v966
        %v5021 = vunpack.c.l.b16 %v967
        %v5022 = vunpack.c.h.b16 %v967
        %v5023 = vunpack.c.l.b16 %v968
        %v5024 = vunpack.c.h.b16 %v968
        %v5025 = vunpack.c.l.b16 %v969
        %v5026 = vunpack.c.h.b16 %v969
        %v5027 = vunpack.c.l.b16 %v970
        %v5028 = vunpack.c.h.b16 %v970
        %v5029 = vunpack.c.l.b16 %v971
        %v5030 = vunpack.c.h.b16 %v971
        %v5031 = vunpack.c.l.b16 %v972
        %v5032 = vunpack.c.h.b16 %v972
        %v5033 = vunpack.c.l.b16 %v973
        %v5034 = vunpack.c.h.b16 %v973
        %v5035 = vunpack.c.l.b16 %v974
        %v5036 = vunpack.c.h.b16 %v974
        %v5037 = vunpack.c.l.b16 %v975
        %v5038 = vunpack.c.h.b16 %v975
        %v5039 = vunpack.c.l.b16 %v976
        %v5040 = vunpack.c.h.b16 %v976
        %v5041 = vunpack.c.l.b16 %v977
        %v5042 = vunpack.c.h.b16 %v977
        %v5043 = vunpack.c.l.b16 %v978
        %v5044 = vunpack.c.h.b16 %v978
        %v5045 = vunpack.c.l.b16 %v979
        %v5046 = vunpack.c.h.b16 %v979
        %v5047 = vunpack.c.l.b16 %v980
        %v5048 = vunpack.c.h.b16 %v980
        %v5049 = vunpack.c.l.b16 %v981
        %v5050 = vunpack.c.h.b16 %v981
        %v5051 = vunpack.c.l.b16 %v982
        %v5052 = vunpack.c.h.b16 %v982
        %v5053 = vunpack.c.l.b16 %v983
        %v5054 = vunpack.c.h.b16 %v983
        %v5055 = vunpack.c.l.b16 %v984
        %v5056 = vunpack.c.h.b16 %v984
        %v5057 = vunpack.c.l.b16 %v985
        %v5058 = vunpack.c.h.b16 %v985
        %v5059 = vunpack.c.l.b16 %v986
        %v5060 = vunpack.c.h.b16 %v986
        %v5061 = vunpack.c.l.b16 %v987
        %v5062 = vunpack.c.h.b16 %v987
        %v5063 = vunpack.c.l.b16 %v988
        %v5064 = vunpack.c.h.b16 %v988
        %v5065 = vunpack.c.l.b16 %v989
        %v5066 = vunpack.c.h.b16 %v989
        %v5067 = vunpack.c.l.b16 %v990
        %v5068 = vunpack.c.h.b16 %v990
        %v5069 = vunpack.c.l.b16 %v991
        %v5070 = vunpack.c.h.b16 %v991
        %v5071 = vunpack.c.l.b16 %v992
        %v5072 = vunpack.c.h.b16 %v992
        %v5073 = vunpack.c.l.b16 %v993
        %v5074 = vunpack.c.h.b16 %v993
        %v5075 = vunpack.c.l.b16 %v994
        %v5076 = vunpack.c.h.b16 %v994
        %v5077 = vunpack.c.l.b16 %v995
        %v5078 = vunpack.c.h.b16 %v995
        %v5079 = vunpack.c.l.b16 %v996
        %v5080 = vunpack.c.h.b16 %v996
        %v5081 = vunpack.c.l.b16 %v997
        %v5082 = vunpack.c.h.b16 %v997
        %v5083 = vunpack.c.l.b16 %v998
        %v5084 = vunpack.c.h.b16 %v998
        %v5085 = vunpack.c.l.b16 %v999
        %v5086 = vunpack.c.h.b16 %v999
        %v5087 = vunpack.c.l.b16 %v1000
        %v5088 = vunpack.c.h.b16 %v1000
        %v5089 = vunpack.c.l.b16 %v1001
        %v5090 = vunpack.c.h.b16 %v1001
        %v5091 = vunpack.c.l.b16 %v1002
        %v5092 = vunpack.c.h.b16 %v1002
        %v5093 = vunpack.c.l.b16 %v1003
        %v5094 = vunpack.c.h.b16 %v1003
        %v5095 = vunpack.c.l.b16 %v1004
        %v5096 = vunpack.c.h.b16 %v1004
        %v5097 = vunpack.c.l.b16 %v1005
        %v5098 = vunpack.c.h.b16 %v1005
        %v5099 = vunpack.c.l.b16 %v1006
        %v5100 = vunpack.c.h.b16 %v1006
        %v5101 = vunpack.c.l.b16 %v1007
        %v5102 = vunpack.c.h.b16 %v1007
        %v5103 = vunpack.c.l.b16 %v1008
        %v5104 = vunpack.c.h.b16 %v1008
        %v5105 = vunpack.c.l.b16 %v1009
        %v5106 = vunpack.c.h.b16 %v1009
        %v5107 = vunpack.c.l.b16 %v1010
        %v5108 = vunpack.c.h.b16 %v1010
        %v5109 = vunpack.c.l.b16 %v1011
        %v5110 = vunpack.c.h.b16 %v1011
        %v5111 = vunpack.c.l.b16 %v1012
        %v5112 = vunpack.c.h.b16 %v1012
        %v5113 = vunpack.c.l.b16 %v1013
        %v5114 = vunpack.c.h.b16 %v1013
        %v5115 = vunpack.c.l.b16 %v1014
        %v5116 = vunpack.c.h.b16 %v1014
        %v5117 = vunpack.c.l.b16 %v1015
        %v5118 = vunpack.c.h.b16 %v1015
        %v5119 = vunpack.c.l.b16 %v1016
        %v5120 = vunpack.c.h.b16 %v1016
        %v5121 = vunpack.c.l.b16 %v1017
        %v5122 = vunpack.c.h.b16 %v1017
        %v5123 = vunpack.c.l.b16 %v1018
        %v5124 = vunpack.c.h.b16 %v1018
        %v5125 = vunpack.c.l.b16 %v1019
        %v5126 = vunpack.c.h.b16 %v1019
        %v5127 = vunpack.c.l.b16 %v1020
        %v5128 = vunpack.c.h.b16 %v1020
        %v5129 = vunpack.c.l.b16 %v1021
        %v5130 = vunpack.c.h.b16 %v1021
        %v5131 = vunpack.c.l.b16 %v1022
        %v5132 = vunpack.c.h.b16 %v1022
        %v5133 = vunpack.c.l.b16 %v1023
        %v5134 = vunpack.c.h.b16 %v1023
        %v5135 = vunpack.c.l.b16 %v1024
        %v5136 = vunpack.c.h.b16 %v1024
        %v5137 = vunpack.c.l.b16 %v1025
        %v5138 = vunpack.c.h.b16 %v1025
        %v5139 = vunpack.c.l.b16 %v1026
        %v5140 = vunpack.c.h.b16 %v1026
        %v5141 = vunpack.c.l.b16 %v1027
        %v5142 = vunpack.c.h.b16 %v1027
        %v5143 = vunpack.c.l.b16 %v1028
        %v5144 = vunpack.c.h.b16 %v1028
        %v5145 = vunpack.c.l.b16 %v1029
        %v5146 = vunpack.c.h.b16 %v1029
        %v5147 = vunpack.c.l.b16 %v1030
        %v5148 = vunpack.c.h.b16 %v1030
        %v5149 = vunpack.c.l.b16 %v1031
        %v5150 = vunpack.c.h.b16 %v1031
        %v5151 = vunpack.c.l.b16 %v1032
        %v5152 = vunpack.c.h.b16 %v1032
        %v5153 = vunpack.c.l.b16 %v1033
        %v5154 = vunpack.c.h.b16 %v1033
        %v5155 = vunpack.c.l.b16 %v1034
        %v5156 = vunpack.c.h.b16 %v1034
        %v5157 = vunpack.c.l.b16 %v1035
        %v5158 = vunpack.c.h.b16 %v1035
        %v5159 = vunpack.c.l.b16 %v1036
        %v5160 = vunpack.c.h.b16 %v1036
        %v5161 = vunpack.c.l.b16 %v1037
        %v5162 = vunpack.c.h.b16 %v1037
        %v5163 = vunpack.c.l.b16 %v1038
        %v5164 = vunpack.c.h.b16 %v1038
        %v5165 = vunpack.c.l.b16 %v1039
        %v5166 = vunpack.c.h.b16 %v1039
        %v5167 = vunpack.c.l.b16 %v1040
        %v5168 = vunpack.c.h.b16 %v1040
        %v5169 = vunpack.c.l.b16 %v1041
        %v5170 = vunpack.c.h.b16 %v1041
        %v5171 = vunpack.c.l.b16 %v1042
        %v5172 = vunpack.c.h.b16 %v1042
        %v5173 = vunpack.c.l.b16 %v1043
        %v5174 = vunpack.c.h.b16 %v1043
        %v5175 = vunpack.c.l.b16 %v1044
        %v5176 = vunpack.c.h.b16 %v1044
        %v5177 = vunpack.c.l.b16 %v1045
        %v5178 = vunpack.c.h.b16 %v1045
        %v5179 = vunpack.c.l.b16 %v1046
        %v5180 = vunpack.c.h.b16 %v1046
        %v5181 = vunpack.c.l.b16 %v1047
        %v5182 = vunpack.c.h.b16 %v1047
        %v5183 = vunpack.c.l.b16 %v1048
        %v5184 = vunpack.c.h.b16 %v1048
        %v5185 = vunpack.c.l.b16 %v1049
        %v5186 = vunpack.c.h.b16 %v1049
        %v5187 = vunpack.c.l.b16 %v1050
        %v5188 = vunpack.c.h.b16 %v1050
        %v5189 = vunpack.c.l.b16 %v1051
        %v5190 = vunpack.c.h.b16 %v1051
        %v5191 = vunpack.c.l.b16 %v1052
        %v5192 = vunpack.c.h.b16 %v1052
        %v5193 = vunpack.c.l.b16 %v1053
        %v5194 = vunpack.c.h.b16 %v1053
        %v5195 = vunpack.c.l.b16 %v1054
        %v5196 = vunpack.c.h.b16 %v1054
        %v5197 = vunpack.c.l.b16 %v1055
        %v5198 = vunpack.c.h.b16 %v1055
        %v5199 = vunpack.c.l.b16 %v1056
        %v5200 = vunpack.c.h.b16 %v1056
        %v5201 = vunpack.c.l.b16 %v1057
        %v5202 = vunpack.c.h.b16 %v1057
        %v5203 = vunpack.c.l.b16 %v1058
        %v5204 = vunpack.c.h.b16 %v1058
        %v5205 = vunpack.c.l.b16 %v1059
        %v5206 = vunpack.c.h.b16 %v1059
        %v5207 = vunpack.c.l.b16 %v1060
        %v5208 = vunpack.c.h.b16 %v1060
        %v5209 = vunpack.c.l.b16 %v1061
        %v5210 = vunpack.c.h.b16 %v1061
        %v5211 = vunpack.c.l.b16 %v1062
        %v5212 = vunpack.c.h.b16 %v1062
        %v5213 = vunpack.c.l.b16 %v1063
        %v5214 = vunpack.c.h.b16 %v1063
        %v5215 = vunpack.c.l.b16 %v1064
        %v5216 = vunpack.c.h.b16 %v1064
        %v5217 = vunpack.c.l.b16 %v1065
        %v5218 = vunpack.c.h.b16 %v1065
        %v5219 = vunpack.c.l.b16 %v1066
        %v5220 = vunpack.c.h.b16 %v1066
        %v5221 = vunpack.c.l.b16 %v1067
        %v5222 = vunpack.c.h.b16 %v1067
        %v5223 = vunpack.c.l.b16 %v1068
        %v5224 = vunpack.c.h.b16 %v1068
        %v5225 = vunpack.c.l.b16 %v1069
        %v5226 = vunpack.c.h.b16 %v1069
        %v5227 = vunpack.c.l.b16 %v1070
        %v5228 = vunpack.c.h.b16 %v1070
        %v5229 = vunpack.c.l.b16 %v1071
        %v5230 = vunpack.c.h.b16 %v1071
        %v5231 = vunpack.c.l.b16 %v1072
        %v5232 = vunpack.c.h.b16 %v1072
        %v5233 = vunpack.c.l.b16 %v1073
        %v5234 = vunpack.c.h.b16 %v1073
        %v5235 = vunpack.c.l.b16 %v1074
        %v5236 = vunpack.c.h.b16 %v1074
        %v5237 = vunpack.c.l.b16 %v1075
        %v5238 = vunpack.c.h.b16 %v1075
        %v5239 = vunpack.c.l.b16 %v1076
        %v5240 = vunpack.c.h.b16 %v1076
        %v5241 = vunpack.c.l.b16 %v1077
        %v5242 = vunpack.c.h.b16 %v1077
        %v5243 = vunpack.c.l.b16 %v1078
        %v5244 = vunpack.c.h.b16 %v1078
        %v5245 = vunpack.c.l.b16 %v1079
        %v5246 = vunpack.c.h.b16 %v1079
        %v5247 = vunpack.c.l.b16 %v1080
        %v5248 = vunpack.c.h.b16 %v1080
        %v5249 = vunpack.c.l.b16 %v1081
        %v5250 = vunpack.c.h.b16 %v1081
        %v5251 = vunpack.c.l.b16 %v1082
        %v5252 = vunpack.c.h.b16 %v1082
        %v5253 = vunpack.c.l.b16 %v1083
        %v5254 = vunpack.c.h.b16 %v1083
        %v5255 = vunpack.c.l.b16 %v1084
        %v5256 = vunpack.c.h.b16 %v1084
        %v5257 = vunpack.c.l.b16 %v1085
        %v5258 = vunpack.c.h.b16 %v1085
        %v5259 = vunpack.c.l.b16 %v1086
        %v5260 = vunpack.c.h.b16 %v1086
        %v5261 = vunpack.c.l.b16 %v1087
        %v5262 = vunpack.c.h.b16 %v1087
        %v5263 = vunpack.c.l.b16 %v1088
        %v5264 = vunpack.c.h.b16 %v1088
        %v5265 = vunpack.c.l.b16 %v1089
        %v5266 = vunpack.c.h.b16 %v1089
        %v5267 = vunpack.c.l.b16 %v1090
        %v5268 = vunpack.c.h.b16 %v1090
        %v5269 = vunpack.c.l.b16 %v1091
        %v5270 = vunpack.c.h.b16 %v1091
        %v5271 = vunpack.c.l.b16 %v1092
        %v5272 = vunpack.c.h.b16 %v1092
        %v5273 = vunpack.c.l.b16 %v1093
        %v5274 = vunpack.c.h.b16 %v1093
        %v5275 = vunpack.c.l.b16 %v1094
        %v5276 = vunpack.c.h.b16 %v1094
        %v5277 = vunpack.c.l.b16 %v1095
        %v5278 = vunpack.c.h.b16 %v1095
        %v5279 = vunpack.c.l.b16 %v1096
        %v5280 = vunpack.c.h.b16 %v1096
        %v5281 = vunpack.c.l.b16 %v1097
        %v5282 = vunpack.c.h.b16 %v1097
        %v5283 = vunpack.c.l.b16 %v1098
        %v5284 = vunpack.c.h.b16 %v1098
        %v5285 = vunpack.c.l.b16 %v1099
        %v5286 = vunpack.c.h.b16 %v1099
        %v5287 = vunpack.c.l.b16 %v1100
        %v5288 = vunpack.c.h.b16 %v1100
        %v5289 = vunpack.c.l.b16 %v1101
        %v5290 = vunpack.c.h.b16 %v1101
        %v5291 = vunpack.c.l.b16 %v1102
        %v5292 = vunpack.c.h.b16 %v1102
        %v5293 = vunpack.c.l.b16 %v1103
        %v5294 = vunpack.c.h.b16 %v1103
        %v5295 = vunpack.c.l.b16 %v1104
        %v5296 = vunpack.c.h.b16 %v1104
        %v5297 = vunpack.c.l.b16 %v1105
        %v5298 = vunpack.c.h.b16 %v1105
        %v5299 = vunpack.c.l.b16 %v1106
        %v5300 = vunpack.c.h.b16 %v1106
        %v5301 = vunpack.c.l.b16 %v1107
        %v5302 = vunpack.c.h.b16 %v1107
        %v5303 = vunpack.c.l.b16 %v1108
        %v5304 = vunpack.c.h.b16 %v1108
        %v5305 = vunpack.c.l.b16 %v1109
        %v5306 = vunpack.c.h.b16 %v1109
        %v5307 = vunpack.c.l.b16 %v1110
        %v5308 = vunpack.c.h.b16 %v1110
        %v5309 = vunpack.c.l.b16 %v1111
        %v5310 = vunpack.c.h.b16 %v1111
        %v5311 = vunpack.c.l.b16 %v1112
        %v5312 = vunpack.c.h.b16 %v1112
        %v5313 = vunpack.c.l.b16 %v1113
        %v5314 = vunpack.c.h.b16 %v1113
        %v5315 = vunpack.c.l.b16 %v1114
        %v5316 = vunpack.c.h.b16 %v1114
        %v5317 = vunpack.c.l.b16 %v1115
        %v5318 = vunpack.c.h.b16 %v1115
        %v5319 = vunpack.c.l.b16 %v1116
        %v5320 = vunpack.c.h.b16 %v1116
        %v5321 = vunpack.c.l.b16 %v1117
        %v5322 = vunpack.c.h.b16 %v1117
        %v5323 = vunpack.c.l.b16 %v1118
        %v5324 = vunpack.c.h.b16 %v1118
        %v5325 = vunpack.c.l.b16 %v1119
        %v5326 = vunpack.c.h.b16 %v1119
        %v5327 = vunpack.c.l.b16 %v1120
        %v5328 = vunpack.c.h.b16 %v1120
        %v5329 = vunpack.c.l.b16 %v1121
        %v5330 = vunpack.c.h.b16 %v1121
        %v5331 = vunpack.c.l.b16 %v1122
        %v5332 = vunpack.c.h.b16 %v1122
        %v5333 = vunpack.c.l.b16 %v1123
        %v5334 = vunpack.c.h.b16 %v1123
        %v5335 = vunpack.c.l.b16 %v1124
        %v5336 = vunpack.c.h.b16 %v1124
        %v5337 = vunpack.c.l.b16 %v1125
        %v5338 = vunpack.c.h.b16 %v1125
        %v5339 = vunpack.c.l.b16 %v1126
        %v5340 = vunpack.c.h.b16 %v1126
        %v5341 = vunpack.c.l.b16 %v1127
        %v5342 = vunpack.c.h.b16 %v1127
        %v5343 = vunpack.c.l.b16 %v1128
        %v5344 = vunpack.c.h.b16 %v1128
        %v5345 = vunpack.c.l.b16 %v1129
        %v5346 = vunpack.c.h.b16 %v1129
        %v5347 = vunpack.c.l.b16 %v1130
        %v5348 = vunpack.c.h.b16 %v1130
        %v5349 = vunpack.c.l.b16 %v1131
        %v5350 = vunpack.c.h.b16 %v1131
        %v5351 = vunpack.c.l.b16 %v1132
        %v5352 = vunpack.c.h.b16 %v1132
        %v5353 = vunpack.c.l.b16 %v1133
        %v5354 = vunpack.c.h.b16 %v1133
        %v5355 = vunpack.c.l.b16 %v1134
        %v5356 = vunpack.c.h.b16 %v1134
        %v5357 = vunpack.c.l.b16 %v1135
        %v5358 = vunpack.c.h.b16 %v1135
        %v5359 = vunpack.c.l.b16 %v1136
        %v5360 = vunpack.c.h.b16 %v1136
        %v5361 = vunpack.c.l.b16 %v1137
        %v5362 = vunpack.c.h.b16 %v1137
        %v5363 = vunpack.c.l.b16 %v1138
        %v5364 = vunpack.c.h.b16 %v1138
        %v5365 = vunpack.c.l.b16 %v1139
        %v5366 = vunpack.c.h.b16 %v1139
        %v5367 = vunpack.c.l.b16 %v1140
        %v5368 = vunpack.c.h.b16 %v1140
        %v5369 = vunpack.c.l.b16 %v1141
        %v5370 = vunpack.c.h.b16 %v1141
        %v5371 = vunpack.c.l.b16 %v1142
        %v5372 = vunpack.c.h.b16 %v1142
        %v5373 = vunpack.c.l.b16 %v1143
        %v5374 = vunpack.c.h.b16 %v1143
        %v5375 = vunpack.c.l.b16 %v1144
        %v5376 = vunpack.c.h.b16 %v1144
        %v5377 = vunpack.c.l.b16 %v1145
        %v5378 = vunpack.c.h.b16 %v1145
        %v5379 = vunpack.c.l.b16 %v1146
        %v5380 = vunpack.c.h.b16 %v1146
        %v5381 = vunpack.c.l.b16 %v1147
        %v5382 = vunpack.c.h.b16 %v1147
        %v5383 = vunpack.c.l.b16 %v1148
        %v5384 = vunpack.c.h.b16 %v1148
        %v5385 = vunpack.c.l.b16 %v1149
        %v5386 = vunpack.c.h.b16 %v1149
        %v5387 = vunpack.c.l.b16 %v1150
        %v5388 = vunpack.c.h.b16 %v1150
        %v5389 = vunpack.c.l.b16 %v1151
        %v5390 = vunpack.c.h.b16 %v1151
        %v5391 = vunpack.c.l.b16 %v1152
        %v5392 = vunpack.c.h.b16 %v1152
        %v5393 = vunpack.c.l.b16 %v1153
        %v5394 = vunpack.c.h.b16 %v1153
        %v5395 = vunpack.c.l.b16 %v1154
        %v5396 = vunpack.c.h.b16 %v1154
        %v5397 = vunpack.c.l.b16 %v1155
        %v5398 = vunpack.c.h.b16 %v1155
        %v5399 = vunpack.c.l.b16 %v1156
        %v5400 = vunpack.c.h.b16 %v1156
        %v5401 = vunpack.c.l.b16 %v1157
        %v5402 = vunpack.c.h.b16 %v1157
        %v5403 = vunpack.c.l.b16 %v1158
        %v5404 = vunpack.c.h.b16 %v1158
        %v5405 = vunpack.c.l.b16 %v1159
        %v5406 = vunpack.c.h.b16 %v1159
        %v5407 = vunpack.c.l.b16 %v1160
        %v5408 = vunpack.c.h.b16 %v1160
        %v5409 = vunpack.c.l.b16 %v1161
        %v5410 = vunpack.c.h.b16 %v1161
        %v5411 = vunpack.c.l.b16 %v1162
        %v5412 = vunpack.c.h.b16 %v1162
        %v5413 = vunpack.c.l.b16 %v1163
        %v5414 = vunpack.c.h.b16 %v1163
        %v5415 = vunpack.c.l.b16 %v1164
        %v5416 = vunpack.c.h.b16 %v1164
        %v5417 = vunpack.c.l.b16 %v1165
        %v5418 = vunpack.c.h.b16 %v1165
        %v5419 = vunpack.c.l.b16 %v1166
        %v5420 = vunpack.c.h.b16 %v1166
        %v5421 = vunpack.c.l.b16 %v1167
        %v5422 = vunpack.c.h.b16 %v1167
        %v5423 = vunpack.c.l.b16 %v1168
        %v5424 = vunpack.c.h.b16 %v1168
        %v5425 = vunpack.c.l.b16 %v1169
        %v5426 = vunpack.c.h.b16 %v1169
        %v5427 = vunpack.c.l.b16 %v1170
        %v5428 = vunpack.c.h.b16 %v1170
        %v5429 = vunpack.c.l.b16 %v1171
        %v5430 = vunpack.c.h.b16 %v1171
        %v5431 = vunpack.c.l.b16 %v1172
        %v5432 = vunpack.c.h.b16 %v1172
        %v5433 = vunpack.c.l.b16 %v1173
        %v5434 = vunpack.c.h.b16 %v1173
        %v5435 = vunpack.c.l.b16 %v1174
        %v5436 = vunpack.c.h.b16 %v1174
        %v5437 = vunpack.c.l.b16 %v1175
        %v5438 = vunpack.c.h.b16 %v1175
        %v5439 = vunpack.c.l.b16 %v1176
        %v5440 = vunpack.c.h.b16 %v1176
        %v5441 = vunpack.c.l.b16 %v1177
        %v5442 = vunpack.c.h.b16 %v1177
        %v5443 = vunpack.c.l.b16 %v1178
        %v5444 = vunpack.c.h.b16 %v1178
        %v5445 = vunpack.c.l.b16 %v1179
        %v5446 = vunpack.c.h.b16 %v1179
        %v5447 = vunpack.c.l.b16 %v1180
        %v5448 = vunpack.c.h.b16 %v1180
        %v5449 = vunpack.c.l.b16 %v1181
        %v5450 = vunpack.c.h.b16 %v1181
        %v5451 = vunpack.c.l.b16 %v1182
        %v5452 = vunpack.c.h.b16 %v1182
        %v5453 = vunpack.c.l.b16 %v1183
        %v5454 = vunpack.c.h.b16 %v1183
        %v5455 = vunpack.c.l.b16 %v1184
        %v5456 = vunpack.c.h.b16 %v1184
        %v5457 = vunpack.c.l.b16 %v1185
        %v5458 = vunpack.c.h.b16 %v1185
        %v5459 = vunpack.c.l.b16 %v1186
        %v5460 = vunpack.c.h.b16 %v1186
        %v5461 = vunpack.c.l.b16 %v1187
        %v5462 = vunpack.c.h.b16 %v1187
        %v5463 = vunpack.c.l.b16 %v1188
        %v5464 = vunpack.c.h.b16 %v1188
        %v5465 = vunpack.c.l.b16 %v1189
        %v5466 = vunpack.c.h.b16 %v1189
        %v5467 = vunpack.c.l.b16 %v1190
        %v5468 = vunpack.c.h.b16 %v1190
        %v5469 = vunpack.c.l.b16 %v1191
        %v5470 = vunpack.c.h.b16 %v1191
        %v5471 = vunpack.c.l.b16 %v1192
        %v5472 = vunpack.c.h.b16 %v1192
        %v5473 = vunpack.c.l.b16 %v1193
        %v5474 = vunpack.c.h.b16 %v1193
        %v5475 = vunpack.c.l.b16 %v1194
        %v5476 = vunpack.c.h.b16 %v1194
        %v5477 = vunpack.c.l.b16 %v1195
        %v5478 = vunpack.c.h.b16 %v1195
        %v5479 = vunpack.c.l.b16 %v1196
        %v5480 = vunpack.c.h.b16 %v1196
        %v5481 = vunpack.c.l.b16 %v1197
        %v5482 = vunpack.c.h.b16 %v1197
        %v5483 = vunpack.c.l.b16 %v1198
        %v5484 = vunpack.c.h.b16 %v1198
        %v5485 = vunpack.c.l.b16 %v1199
        %v5486 = vunpack.c.h.b16 %v1199
        %v5487 = vunpack.c.l.b16 %v1200
        %v5488 = vunpack.c.h.b16 %v1200
        %v5489 = vunpack.c.l.b16 %v1201
        %v5490 = vunpack.c.h.b16 %v1201
        %v5491 = vunpack.c.l.b16 %v1202
        %v5492 = vunpack.c.h.b16 %v1202
        %v5493 = vunpack.c.l.b16 %v1203
        %v5494 = vunpack.c.h.b16 %v1203
        %v5495 = vunpack.c.l.b16 %v1204
        %v5496 = vunpack.c.h.b16 %v1204
        %v5497 = vunpack.c.l.b16 %v1205
        %v5498 = vunpack.c.h.b16 %v1205
        %v5499 = vunpack.c.l.b16 %v1206
        %v5500 = vunpack.c.h.b16 %v1206
        %v5501 = vunpack.c.l.b16 %v1207
        %v5502 = vunpack.c.h.b16 %v1207
        %v5503 = vunpack.c.l.b16 %v1208
        %v5504 = vunpack.c.h.b16 %v1208
        %v5505 = vunpack.c.l.b16 %v1209
        %v5506 = vunpack.c.h.b16 %v1209
        %v5507 = vunpack.c.l.b16 %v1210
        %v5508 = vunpack.c.h.b16 %v1210
        %v5509 = vunpack.c.l.b16 %v1211
        %v5510 = vunpack.c.h.b16 %v1211
        %v5511 = vunpack.c.l.b16 %v1212
        %v5512 = vunpack.c.h.b16 %v1212
        %v5513 = vunpack.c.l.b16 %v1213
        %v5514 = vunpack.c.h.b16 %v1213
        %v5515 = vunpack.c.l.b16 %v1214
        %v5516 = vunpack.c.h.b16 %v1214
        %v5517 = vunpack.c.l.b16 %v1215
        %v5518 = vunpack.c.h.b16 %v1215
        %v5519 = vunpack.c.l.b16 %v1216
        %v5520 = vunpack.c.h.b16 %v1216
        %v5521 = vunpack.c.l.b16 %v1217
        %v5522 = vunpack.c.h.b16 %v1217
        %v5523 = vunpack.c.l.b16 %v1218
        %v5524 = vunpack.c.h.b16 %v1218
        %v5525 = vunpack.c.l.b16 %v1219
        %v5526 = vunpack.c.h.b16 %v1219
        %v5527 = vunpack.c.l.b16 %v1220
        %v5528 = vunpack.c.h.b16 %v1220
        %v5529 = vunpack.c.l.b16 %v1221
        %v5530 = vunpack.c.h.b16 %v1221
        %v5531 = vunpack.c.l.b16 %v1222
        %v5532 = vunpack.c.h.b16 %v1222
        %v5533 = vunpack.c.l.b16 %v1223
        %v5534 = vunpack.c.h.b16 %v1223
        %v5535 = vunpack.c.l.b16 %v1224
        %v5536 = vunpack.c.h.b16 %v1224
        %v5537 = vunpack.c.l.b16 %v1225
        %v5538 = vunpack.c.h.b16 %v1225
        %v5539 = vunpack.c.l.b16 %v1226
        %v5540 = vunpack.c.h.b16 %v1226
        %v5541 = vunpack.c.l.b16 %v1227
        %v5542 = vunpack.c.h.b16 %v1227
        %v5543 = vunpack.c.l.b16 %v1228
        %v5544 = vunpack.c.h.b16 %v1228
        %v5545 = vunpack.c.l.b16 %v1229
        %v5546 = vunpack.c.h.b16 %v1229
        %v5547 = vunpack.c.l.b16 %v1230
        %v5548 = vunpack.c.h.b16 %v1230
        %v5549 = vunpack.c.l.b16 %v1231
        %v5550 = vunpack.c.h.b16 %v1231
        %v5551 = vunpack.c.l.b16 %v1232
        %v5552 = vunpack.c.h.b16 %v1232
        %v5553 = vunpack.c.l.b16 %v1233
        %v5554 = vunpack.c.h.b16 %v1233
        %v5555 = vunpack.c.l.b16 %v1234
        %v5556 = vunpack.c.h.b16 %v1234
        %v5557 = vunpack.c.l.b16 %v1235
        %v5558 = vunpack.c.h.b16 %v1235
        %v5559 = vunpack.c.l.b16 %v1236
        %v5560 = vunpack.c.h.b16 %v1236
        %v5561 = vunpack.c.l.b16 %v1237
        %v5562 = vunpack.c.h.b16 %v1237
        %v5563 = vunpack.c.l.b16 %v1238
        %v5564 = vunpack.c.h.b16 %v1238
        %v5565 = vunpack.c.l.b16 %v1239
        %v5566 = vunpack.c.h.b16 %v1239
        %v5567 = vunpack.c.l.b16 %v1240
        %v5568 = vunpack.c.h.b16 %v1240
        %v5569 = vunpack.c.l.b16 %v1241
        %v5570 = vunpack.c.h.b16 %v1241
        %v5571 = vunpack.c.l.b16 %v1242
        %v5572 = vunpack.c.h.b16 %v1242
        %v5573 = vunpack.c.l.b16 %v1243
        %v5574 = vunpack.c.h.b16 %v1243
        %v5575 = vunpack.c.l.b16 %v1244
        %v5576 = vunpack.c.h.b16 %v1244
        %v5577 = vunpack.c.l.b16 %v1245
        %v5578 = vunpack.c.h.b16 %v1245
        %v5579 = vunpack.c.l.b16 %v1246
        %v5580 = vunpack.c.h.b16 %v1246
        %v5581 = vunpack.c.l.b16 %v1247
        %v5582 = vunpack.c.h.b16 %v1247
        %v5583 = vunpack.c.l.b16 %v1248
        %v5584 = vunpack.c.h.b16 %v1248
        %v5585 = vunpack.c.l.b16 %v1249
        %v5586 = vunpack.c.h.b16 %v1249
        %v5587 = vunpack.c.l.b16 %v1250
        %v5588 = vunpack.c.h.b16 %v1250
        %v5589 = vunpack.c.l.b16 %v1251
        %v5590 = vunpack.c.h.b16 %v1251
        %v5591 = vunpack.c.l.b16 %v1252
        %v5592 = vunpack.c.h.b16 %v1252
        %v5593 = vunpack.c.l.b16 %v1253
        %v5594 = vunpack.c.h.b16 %v1253
        %v5595 = vunpack.c.l.b16 %v1254
        %v5596 = vunpack.c.h.b16 %v1254
        %v5597 = vunpack.c.l.b16 %v1255
        %v5598 = vunpack.c.h.b16 %v1255
        %v5599 = vunpack.c.l.b16 %v1256
        %v5600 = vunpack.c.h.b16 %v1256
        %v5601 = vunpack.c.l.b16 %v1257
        %v5602 = vunpack.c.h.b16 %v1257
        %v5603 = vunpack.c.l.b16 %v1258
        %v5604 = vunpack.c.h.b16 %v1258
        %v5605 = vunpack.c.l.b16 %v1259
        %v5606 = vunpack.c.h.b16 %v1259
        %v5607 = vunpack.c.l.b16 %v1260
        %v5608 = vunpack.c.h.b16 %v1260
        %v5609 = vunpack.c.l.b16 %v1261
        %v5610 = vunpack.c.h.b16 %v1261
        %v5611 = vunpack.c.l.b16 %v1262
        %v5612 = vunpack.c.h.b16 %v1262
        %v5613 = vunpack.c.l.b16 %v1263
        %v5614 = vunpack.c.h.b16 %v1263
        %v5615 = vunpack.c.l.b16 %v1264
        %v5616 = vunpack.c.h.b16 %v1264
        %v5617 = vunpack.c.l.b16 %v1265
        %v5618 = vunpack.c.h.b16 %v1265
        %v5619 = vunpack.c.l.b16 %v1266
        %v5620 = vunpack.c.h.b16 %v1266
        %v5621 = vunpack.c.l.b16 %v1267
        %v5622 = vunpack.c.h.b16 %v1267
        %v5623 = vunpack.c.l.b16 %v1268
        %v5624 = vunpack.c.h.b16 %v1268
        %v5625 = vunpack.c.l.b16 %v1269
        %v5626 = vunpack.c.h.b16 %v1269
        %v5627 = vunpack.c.l.b16 %v1270
        %v5628 = vunpack.c.h.b16 %v1270
        %v5629 = vunpack.c.l.b16 %v1271
        %v5630 = vunpack.c.h.b16 %v1271
        %v5631 = vunpack.c.l.b16 %v1272
        %v5632 = vunpack.c.h.b16 %v1272
        %v5633 = vunpack.c.l.b16 %v1273
        %v5634 = vunpack.c.h.b16 %v1273
        %v5635 = vunpack.c.l.b16 %v1274
        %v5636 = vunpack.c.h.b16 %v1274
        %v5637 = vunpack.c.l.b16 %v1275
        %v5638 = vunpack.c.h.b16 %v1275
        %v5639 = vunpack.c.l.b16 %v1276
        %v5640 = vunpack.c.h.b16 %v1276
        %v5641 = vunpack.c.l.b16 %v1277
        %v5642 = vunpack.c.h.b16 %v1277
        %v5643 = vunpack.c.l.b16 %v1278
        %v5644 = vunpack.c.h.b16 %v1278
        %v5645 = vunpack.c.l.b16 %v1279
        %v5646 = vunpack.c.h.b16 %v1279
        %v5647 = vunpack.c.l.b16 %v1280
        %v5648 = vunpack.c.h.b16 %v1280
        %v5649 = vunpack.c.l.b16 %v1281
        %v5650 = vunpack.c.h.b16 %v1281
        %v5651 = vunpack.c.l.b16 %v1282
        %v5652 = vunpack.c.h.b16 %v1282
        %v5653 = vunpack.c.l.b16 %v1283
        %v5654 = vunpack.c.h.b16 %v1283
        %v5655 = vunpack.c.l.b16 %v1284
        %v5656 = vunpack.c.h.b16 %v1284
        %v5657 = vunpack.c.l.b16 %v1285
        %v5658 = vunpack.c.h.b16 %v1285
        %v5659 = vunpack.c.l.b16 %v1286
        %v5660 = vunpack.c.h.b16 %v1286
        %v5661 = vunpack.c.l.b16 %v1287
        %v5662 = vunpack.c.h.b16 %v1287
        %v5663 = vunpack.c.l.b16 %v1288
        %v5664 = vunpack.c.h.b16 %v1288
        %v5665 = vunpack.c.l.b16 %v1289
        %v5666 = vunpack.c.h.b16 %v1289
        %v5667 = vunpack.c.l.b16 %v1290
        %v5668 = vunpack.c.h.b16 %v1290
        %v5669 = vunpack.c.l.b16 %v1291
        %v5670 = vunpack.c.h.b16 %v1291
        %v5671 = vunpack.c.l.b16 %v1292
        %v5672 = vunpack.c.h.b16 %v1292
        %v5673 = vunpack.c.l.b16 %v1293
        %v5674 = vunpack.c.h.b16 %v1293
        %v5675 = vunpack.c.l.b16 %v1294
        %v5676 = vunpack.c.h.b16 %v1294
        %v5677 = vunpack.c.l.b16 %v1295
        %v5678 = vunpack.c.h.b16 %v1295
        %v5679 = vunpack.c.l.b16 %v1296
        %v5680 = vunpack.c.h.b16 %v1296
        %v5681 = vunpack.c.l.b16 %v1297
        %v5682 = vunpack.c.h.b16 %v1297
        %v5683 = vunpack.c.l.b16 %v1298
        %v5684 = vunpack.c.h.b16 %v1298
        %v5685 = vunpack.c.l.b16 %v1299
        %v5686 = vunpack.c.h.b16 %v1299
        %v5687 = vunpack.c.l.b16 %v1300
        %v5688 = vunpack.c.h.b16 %v1300
        %v5689 = vunpack.c.l.b16 %v1301
        %v5690 = vunpack.c.h.b16 %v1301
        %v5691 = vunpack.c.l.b16 %v1302
        %v5692 = vunpack.c.h.b16 %v1302
        %v5693 = vunpack.c.l.b16 %v1303
        %v5694 = vunpack.c.h.b16 %v1303
        %v5695 = vunpack.c.l.b16 %v1304
        %v5696 = vunpack.c.h.b16 %v1304
        %v5697 = vunpack.c.l.b16 %v1305
        %v5698 = vunpack.c.h.b16 %v1305
        %v5699 = vunpack.c.l.b16 %v1306
        %v5700 = vunpack.c.h.b16 %v1306
        %v5701 = vunpack.c.l.b16 %v1307
        %v5702 = vunpack.c.h.b16 %v1307
        %v5703 = vunpack.c.l.b16 %v1308
        %v5704 = vunpack.c.h.b16 %v1308
        %v5705 = vunpack.c.l.b16 %v1309
        %v5706 = vunpack.c.h.b16 %v1309
        %v5707 = vunpack.c.l.b16 %v1310
        %v5708 = vunpack.c.h.b16 %v1310
        %v5709 = vunpack.c.l.b16 %v1311
        %v5710 = vunpack.c.h.b16 %v1311
        %v5711 = vunpack.c.l.b16 %v1312
        %v5712 = vunpack.c.h.b16 %v1312
        %v5713 = vunpack.c.l.b16 %v1313
        %v5714 = vunpack.c.h.b16 %v1313
        %v5715 = vunpack.c.l.b16 %v1314
        %v5716 = vunpack.c.h.b16 %v1314
        %v5717 = vunpack.c.l.b16 %v1315
        %v5718 = vunpack.c.h.b16 %v1315
        %v5719 = vunpack.c.l.b16 %v1316
        %v5720 = vunpack.c.h.b16 %v1316
        %v5721 = vunpack.c.l.b16 %v1317
        %v5722 = vunpack.c.h.b16 %v1317
        %v5723 = vunpack.c.l.b16 %v1318
        %v5724 = vunpack.c.h.b16 %v1318
        %v5725 = vunpack.c.l.b16 %v1319
        %v5726 = vunpack.c.h.b16 %v1319
        %v5727 = vunpack.c.l.b16 %v1320
        %v5728 = vunpack.c.h.b16 %v1320
        %v5729 = vunpack.c.l.b16 %v1321
        %v5730 = vunpack.c.h.b16 %v1321
        %v5731 = vunpack.c.l.b16 %v1322
        %v5732 = vunpack.c.h.b16 %v1322
        %v5733 = vunpack.c.l.b16 %v1323
        %v5734 = vunpack.c.h.b16 %v1323
        %v5735 = vunpack.c.l.b16 %v1324
        %v5736 = vunpack.c.h.b16 %v1324
        %v5737 = vunpack.c.l.b16 %v1325
        %v5738 = vunpack.c.h.b16 %v1325
        %v5739 = vunpack.c.l.b16 %v1326
        %v5740 = vunpack.c.h.b16 %v1326
        %v5741 = vunpack.c.l.b16 %v1327
        %v5742 = vunpack.c.h.b16 %v1327
        %v5743 = vunpack.c.l.b16 %v1328
        %v5744 = vunpack.c.h.b16 %v1328
        %v5745 = vunpack.c.l.b16 %v1329
        %v5746 = vunpack.c.h.b16 %v1329
        %v5747 = vunpack.c.l.b16 %v1330
        %v5748 = vunpack.c.h.b16 %v1330
        %v5749 = vunpack.c.l.b16 %v1331
        %v5750 = vunpack.c.h.b16 %v1331
        %v5751 = vunpack.c.l.b16 %v1332
        %v5752 = vunpack.c.h.b16 %v1332
        %v5753 = vunpack.c.l.b16 %v1333
        %v5754 = vunpack.c.h.b16 %v1333
        %v5755 = vunpack.c.l.b16 %v1334
        %v5756 = vunpack.c.h.b16 %v1334
        %v5757 = vunpack.c.l.b16 %v1335
        %v5758 = vunpack.c.h.b16 %v1335
        %v5759 = vunpack.c.l.b16 %v1336
        %v5760 = vunpack.c.h.b16 %v1336
        %v5761 = vunpack.c.l.b16 %v1337
        %v5762 = vunpack.c.h.b16 %v1337
        %v5763 = vunpack.c.l.b16 %v1338
        %v5764 = vunpack.c.h.b16 %v1338
        %v5765 = vunpack.c.l.b16 %v1339
        %v5766 = vunpack.c.h.b16 %v1339
        %v5767 = vunpack.c.l.b16 %v1340
        %v5768 = vunpack.c.h.b16 %v1340
        %v5769 = vunpack.c.l.b16 %v1341
        %v5770 = vunpack.c.h.b16 %v1341
        %v5771 = vunpack.c.l.b16 %v1342
        %v5772 = vunpack.c.h.b16 %v1342
        %v5773 = vunpack.c.l.b16 %v1343
        %v5774 = vunpack.c.h.b16 %v1343
        %v5775 = vunpack.c.l.b16 %v1344
        %v5776 = vunpack.c.h.b16 %v1344
        %v5777 = vunpack.c.l.b16 %v1345
        %v5778 = vunpack.c.h.b16 %v1345
        %v5779 = vunpack.c.l.b16 %v1346
        %v5780 = vunpack.c.h.b16 %v1346
        %v5781 = vunpack.c.l.b16 %v1347
        %v5782 = vunpack.c.h.b16 %v1347
        %v5783 = vunpack.c.l.b16 %v1348
        %v5784 = vunpack.c.h.b16 %v1348
        %v5785 = vunpack.c.l.b16 %v1349
        %v5786 = vunpack.c.h.b16 %v1349
        %v5787 = vunpack.c.l.b16 %v1350
        %v5788 = vunpack.c.h.b16 %v1350
        %v5789 = vunpack.c.l.b16 %v1351
        %v5790 = vunpack.c.h.b16 %v1351
        %v5791 = vunpack.c.l.b16 %v1352
        %v5792 = vunpack.c.h.b16 %v1352
        %v5793 = vunpack.c.l.b16 %v1353
        %v5794 = vunpack.c.h.b16 %v1353
        %v5795 = vunpack.c.l.b16 %v1354
        %v5796 = vunpack.c.h.b16 %v1354
        %v5797 = vunpack.c.l.b16 %v1355
        %v5798 = vunpack.c.h.b16 %v1355
        %v5799 = vunpack.c.l.b16 %v1356
        %v5800 = vunpack.c.h.b16 %v1356
        %v5801 = vunpack.c.l.b16 %v1357
        %v5802 = vunpack.c.h.b16 %v1357
        %v5803 = vunpack.c.l.b16 %v1358
        %v5804 = vunpack.c.h.b16 %v1358
        %v5805 = vunpack.c.l.b16 %v1359
        %v5806 = vunpack.c.h.b16 %v1359
        %v5807 = vunpack.c.l.b16 %v1360
        %v5808 = vunpack.c.h.b16 %v1360
        %v5809 = vunpack.c.l.b16 %v1361
        %v5810 = vunpack.c.h.b16 %v1361
        %v5811 = vunpack.c.l.b16 %v1362
        %v5812 = vunpack.c.h.b16 %v1362
        %v5813 = vunpack.c.l.b16 %v1363
        %v5814 = vunpack.c.h.b16 %v1363
        %v5815 = vunpack.c.l.b16 %v1364
        %v5816 = vunpack.c.h.b16 %v1364
        %v5817 = vunpack.c.l.b16 %v1365
        %v5818 = vunpack.c.h.b16 %v1365
        %v5819 = vunpack.c.l.b16 %v1366
        %v5820 = vunpack.c.h.b16 %v1366
        %v5821 = vunpack.c.l.b16 %v1367
        %v5822 = vunpack.c.h.b16 %v1367
        %v5823 = vunpack.c.l.b16 %v1368
        %v5824 = vunpack.c.h.b16 %v1368
        %v5825 = vunpack.c.l.b16 %v1369
        %v5826 = vunpack.c.h.b16 %v1369
        %v5827 = vunpack.c.l.b16 %v1370
        %v5828 = vunpack.c.h.b16 %v1370
        %v5829 = vunpack.c.l.b16 %v1371
        %v5830 = vunpack.c.h.b16 %v1371
        %v5831 = vunpack.c.l.b16 %v1372
        %v5832 = vunpack.c.h.b16 %v1372
        %v5833 = vunpack.c.l.b16 %v1373
        %v5834 = vunpack.c.h.b16 %v1373
        %v5835 = vunpack.c.l.b16 %v1374
        %v5836 = vunpack.c.h.b16 %v1374
        %v5837 = vunpack.c.l.b16 %v1375
        %v5838 = vunpack.c.h.b16 %v1375
        %v5839 = vunpack.c.l.b16 %v1376
        %v5840 = vunpack.c.h.b16 %v1376
        %v5841 = vunpack.c.l.b16 %v1377
        %v5842 = vunpack.c.h.b16 %v1377
        %v5843 = vunpack.c.l.b16 %v1378
        %v5844 = vunpack.c.h.b16 %v1378
        %v5845 = vunpack.c.l.b16 %v1379
        %v5846 = vunpack.c.h.b16 %v1379
        %v5847 = vunpack.c.l.b16 %v1380
        %v5848 = vunpack.c.h.b16 %v1380
        %v5849 = vunpack.c.l.b16 %v1381
        %v5850 = vunpack.c.h.b16 %v1381
        %v5851 = vunpack.c.l.b16 %v1382
        %v5852 = vunpack.c.h.b16 %v1382
        %v5853 = vunpack.c.l.b16 %v1383
        %v5854 = vunpack.c.h.b16 %v1383
        %v5855 = vunpack.c.l.b16 %v1384
        %v5856 = vunpack.c.h.b16 %v1384
        %v5857 = vunpack.c.l.b16 %v1385
        %v5858 = vunpack.c.h.b16 %v1385
        %v5859 = vunpack.c.l.b16 %v1386
        %v5860 = vunpack.c.h.b16 %v1386
        %v5861 = vunpack.c.l.b16 %v1387
        %v5862 = vunpack.c.h.b16 %v1387
        %v5863 = vunpack.c.l.b16 %v1388
        %v5864 = vunpack.c.h.b16 %v1388
        %v5865 = vunpack.c.l.b16 %v1389
        %v5866 = vunpack.c.h.b16 %v1389
        %v5867 = vunpack.c.l.b16 %v1390
        %v5868 = vunpack.c.h.b16 %v1390
        %v5869 = vunpack.c.l.b16 %v1391
        %v5870 = vunpack.c.h.b16 %v1391
        %v5871 = vunpack.c.l.b16 %v1392
        %v5872 = vunpack.c.h.b16 %v1392
        %v5873 = vunpack.c.l.b16 %v1393
        %v5874 = vunpack.c.h.b16 %v1393
        %v5875 = vunpack.c.l.b16 %v1394
        %v5876 = vunpack.c.h.b16 %v1394
        %v5877 = vunpack.c.l.b16 %v1395
        %v5878 = vunpack.c.h.b16 %v1395
        %v5879 = vunpack.c.l.b16 %v1396
        %v5880 = vunpack.c.h.b16 %v1396
        %v5881 = vunpack.c.l.b16 %v1397
        %v5882 = vunpack.c.h.b16 %v1397
        %v5883 = vunpack.c.l.b16 %v1398
        %v5884 = vunpack.c.h.b16 %v1398
        %v5885 = vunpack.c.l.b16 %v1399
        %v5886 = vunpack.c.h.b16 %v1399
        %v5887 = vunpack.c.l.b16 %v1400
        %v5888 = vunpack.c.h.b16 %v1400
        %v5889 = vunpack.c.l.b16 %v1401
        %v5890 = vunpack.c.h.b16 %v1401
        %v5891 = vunpack.c.l.b16 %v1402
        %v5892 = vunpack.c.h.b16 %v1402
        %v5893 = vunpack.c.l.b16 %v1403
        %v5894 = vunpack.c.h.b16 %v1403
        %v5895 = vunpack.c.l.b16 %v1404
        %v5896 = vunpack.c.h.b16 %v1404
        %v5897 = vunpack.c.l.b16 %v1405
        %v5898 = vunpack.c.h.b16 %v1405
        %v5899 = vunpack.c.l.b16 %v1406
        %v5900 = vunpack.c.h.b16 %v1406
        %v5901 = vunpack.c.l.b16 %v1407
        %v5902 = vunpack.c.h.b16 %v1407
        %v5903 = vunpack.c.l.b16 %v1408
        %v5904 = vunpack.c.h.b16 %v1408
        %v5905 = vunpack.c.l.b16 %v1409
        %v5906 = vunpack.c.h.b16 %v1409
        %v5907 = vunpack.c.l.b16 %v1410
        %v5908 = vunpack.c.h.b16 %v1410
        %v5909 = vunpack.c.l.b16 %v1411
        %v5910 = vunpack.c.h.b16 %v1411
        %v5911 = vunpack.c.l.b16 %v1412
        %v5912 = vunpack.c.h.b16 %v1412
        %v5913 = vunpack.c.l.b16 %v1413
        %v5914 = vunpack.c.h.b16 %v1413
        %v5915 = vunpack.c.l.b16 %v1414
        %v5916 = vunpack.c.h.b16 %v1414
        %v5917 = vunpack.c.l.b16 %v1415
        %v5918 = vunpack.c.h.b16 %v1415
        %v5919 = vunpack.c.l.b16 %v1416
        %v5920 = vunpack.c.h.b16 %v1416
        %v5921 = vunpack.c.l.b16 %v1417
        %v5922 = vunpack.c.h.b16 %v1417
        %v5923 = vunpack.c.l.b16 %v1418
        %v5924 = vunpack.c.h.b16 %v1418
        %v5925 = vunpack.c.l.b16 %v1419
        %v5926 = vunpack.c.h.b16 %v1419
        %v5927 = vunpack.c.l.b16 %v1420
        %v5928 = vunpack.c.h.b16 %v1420
        %v5929 = vunpack.c.l.b16 %v1421
        %v5930 = vunpack.c.h.b16 %v1421
        %v5931 = vunpack.c.l.b16 %v1422
        %v5932 = vunpack.c.h.b16 %v1422
        %v5933 = vunpack.c.l.b16 %v1423
        %v5934 = vunpack.c.h.b16 %v1423
        %v5935 = vunpack.c.l.b16 %v1424
        %v5936 = vunpack.c.h.b16 %v1424
        %v5937 = vunpack.c.l.b16 %v1425
        %v5938 = vunpack.c.h.b16 %v1425
        %v5939 = vunpack.c.l.b16 %v1426
        %v5940 = vunpack.c.h.b16 %v1426
        %v5941 = vunpack.c.l.b16 %v1427
        %v5942 = vunpack.c.h.b16 %v1427
        %v5943 = vunpack.c.l.b16 %v1428
        %v5944 = vunpack.c.h.b16 %v1428
        %v5945 = vunpack.c.l.b16 %v1429
        %v5946 = vunpack.c.h.b16 %v1429
        %v5947 = vunpack.c.l.b16 %v1430
        %v5948 = vunpack.c.h.b16 %v1430
        %v5949 = vunpack.c.l.b16 %v1431
        %v5950 = vunpack.c.h.b16 %v1431
        %v5951 = vunpack.c.l.b16 %v1432
        %v5952 = vunpack.c.h.b16 %v1432
        %v5953 = vunpack.c.l.b16 %v1433
        %v5954 = vunpack.c.h.b16 %v1433
        %v5955 = vunpack.c.l.b16 %v1434
        %v5956 = vunpack.c.h.b16 %v1434
        %v5957 = vunpack.c.l.b16 %v1435
        %v5958 = vunpack.c.h.b16 %v1435
        %v5959 = vunpack.c.l.b16 %v1436
        %v5960 = vunpack.c.h.b16 %v1436
        %v5961 = vunpack.c.l.b16 %v1437
        %v5962 = vunpack.c.h.b16 %v1437
        %v5963 = vunpack.c.l.b16 %v1438
        %v5964 = vunpack.c.h.b16 %v1438
        %v5965 = vunpack.c.l.b16 %v1439
        %v5966 = vunpack.c.h.b16 %v1439
        %v5967 = vunpack.c.l.b16 %v1440
        %v5968 = vunpack.c.h.b16 %v1440
        %v5969 = vunpack.c.l.b16 %v1441
        %v5970 = vunpack.c.h.b16 %v1441
        %v5971 = vunpack.c.l.b16 %v1442
        %v5972 = vunpack.c.h.b16 %v1442
        %v5973 = vunpack.c.l.b16 %v1443
        %v5974 = vunpack.c.h.b16 %v1443
        %v5975 = vunpack.c.l.b16 %v1444
        %v5976 = vunpack.c.h.b16 %v1444
        %v5977 = vunpack.c.l.b16 %v1445
        %v5978 = vunpack.c.h.b16 %v1445
        %v5979 = vunpack.c.l.b16 %v1446
        %v5980 = vunpack.c.h.b16 %v1446
        %v5981 = vunpack.c.l.b16 %v1447
        %v5982 = vunpack.c.h.b16 %v1447
        %v5983 = vunpack.c.l.b16 %v1448
        %v5984 = vunpack.c.h.b16 %v1448
        %v5985 = vunpack.c.l.b16 %v1449
        %v5986 = vunpack.c.h.b16 %v1449
        %v5987 = vunpack.c.l.b16 %v1450
        %v5988 = vunpack.c.h.b16 %v1450
        %v5989 = vunpack.c.l.b16 %v1451
        %v5990 = vunpack.c.h.b16 %v1451
        %v5991 = vunpack.c.l.b16 %v1452
        %v5992 = vunpack.c.h.b16 %v1452
        %v5993 = vunpack.c.l.b16 %v1453
        %v5994 = vunpack.c.h.b16 %v1453
        %v5995 = vunpack.c.l.b16 %v1454
        %v5996 = vunpack.c.h.b16 %v1454
        %v5997 = vunpack.c.l.b16 %v1455
        %v5998 = vunpack.c.h.b16 %v1455
        %v5999 = vunpack.c.l.b16 %v1456
        %v6000 = vunpack.c.h.b16 %v1456
        %v6001 = vunpack.c.l.b16 %v1457
        %v6002 = vunpack.c.h.b16 %v1457
        %v6003 = vunpack.c.l.b16 %v1458
        %v6004 = vunpack.c.h.b16 %v1458
        %v6005 = vunpack.c.l.b16 %v1459
        %v6006 = vunpack.c.h.b16 %v1459
        %v6007 = vunpack.c.l.b16 %v1460
        %v6008 = vunpack.c.h.b16 %v1460
        %v6009 = vunpack.c.l.b16 %v1461
        %v6010 = vunpack.c.h.b16 %v1461
        %v6011 = vunpack.c.l.b16 %v1462
        %v6012 = vunpack.c.h.b16 %v1462
        %v6013 = vunpack.c.l.b16 %v1463
        %v6014 = vunpack.c.h.b16 %v1463
        %v6015 = vunpack.c.l.b16 %v1464
        %v6016 = vunpack.c.h.b16 %v1464
        %v6017 = vunpack.c.l.b16 %v1465
        %v6018 = vunpack.c.h.b16 %v1465
        %v6019 = vunpack.c.l.b16 %v1466
        %v6020 = vunpack.c.h.b16 %v1466
        %v6021 = vunpack.c.l.b16 %v1467
        %v6022 = vunpack.c.h.b16 %v1467
        %v6023 = vunpack.c.l.b16 %v1468
        %v6024 = vunpack.c.h.b16 %v1468
        %v6025 = vunpack.c.l.b16 %v1469
        %v6026 = vunpack.c.h.b16 %v1469
        %v6027 = vunpack.c.l.b16 %v1470
        %v6028 = vunpack.c.h.b16 %v1470
        %v6029 = vunpack.c.l.b16 %v1471
        %v6030 = vunpack.c.h.b16 %v1471
        %v6031 = vunpack.c.l.b16 %v1472
        %v6032 = vunpack.c.h.b16 %v1472
        %v6033 = vunpack.c.l.b16 %v1473
        %v6034 = vunpack.c.h.b16 %v1473
        %v6035 = vunpack.c.l.b16 %v1474
        %v6036 = vunpack.c.h.b16 %v1474
        %v6037 = vunpack.c.l.b16 %v1475
        %v6038 = vunpack.c.h.b16 %v1475
        %v6039 = vunpack.c.l.b16 %v1476
        %v6040 = vunpack.c.h.b16 %v1476
        %v6041 = vunpack.c.l.b16 %v1477
        %v6042 = vunpack.c.h.b16 %v1477
        %v6043 = vunpack.c.l.b16 %v1478
        %v6044 = vunpack.c.h.b16 %v1478
        %v6045 = vunpack.c.l.b16 %v1479
        %v6046 = vunpack.c.h.b16 %v1479
        %v6047 = vunpack.c.l.b16 %v1480
        %v6048 = vunpack.c.h.b16 %v1480
        %v6049 = vunpack.c.l.b16 %v1481
        %v6050 = vunpack.c.h.b16 %v1481
        %v6051 = vunpack.c.l.b16 %v1482
        %v6052 = vunpack.c.h.b16 %v1482
        %v6053 = vunpack.c.l.b16 %v1483
        %v6054 = vunpack.c.h.b16 %v1483
        %v6055 = vunpack.c.l.b16 %v1484
        %v6056 = vunpack.c.h.b16 %v1484
        %v6057 = vunpack.c.l.b16 %v1485
        %v6058 = vunpack.c.h.b16 %v1485
        %v6059 = vunpack.c.l.b16 %v1486
        %v6060 = vunpack.c.h.b16 %v1486
        %v6061 = vunpack.c.l.b16 %v1487
        %v6062 = vunpack.c.h.b16 %v1487
        %v6063 = vunpack.c.l.b16 %v1488
        %v6064 = vunpack.c.h.b16 %v1488
        %v6065 = vunpack.c.l.b16 %v1489
        %v6066 = vunpack.c.h.b16 %v1489
        %v6067 = vunpack.c.l.b16 %v1490
        %v6068 = vunpack.c.h.b16 %v1490
        %v6069 = vunpack.c.l.b16 %v1491
        %v6070 = vunpack.c.h.b16 %v1491
        %v6071 = vunpack.c.l.b16 %v1492
        %v6072 = vunpack.c.h.b16 %v1492
        %v6073 = vunpack.c.l.b16 %v1493
        %v6074 = vunpack.c.h.b16 %v1493
        %v6075 = vunpack.c.l.b16 %v1494
        %v6076 = vunpack.c.h.b16 %v1494
        %v6077 = vunpack.c.l.b16 %v1495
        %v6078 = vunpack.c.h.b16 %v1495
        %v6079 = vunpack.c.l.b16 %v1496
        %v6080 = vunpack.c.h.b16 %v1496
        %v6081 = vunpack.c.l.b16 %v1497
        %v6082 = vunpack.c.h.b16 %v1497
        %v6083 = vunpack.c.l.b16 %v1498
        %v6084 = vunpack.c.h.b16 %v1498
        %v6085 = vunpack.c.l.b16 %v1499
        %v6086 = vunpack.c.h.b16 %v1499
        %v6087 = vunpack.c.l.b16 %v1500
        %v6088 = vunpack.c.h.b16 %v1500
        %v6089 = vunpack.c.l.b16 %v1501
        %v6090 = vunpack.c.h.b16 %v1501
        %v6091 = vunpack.c.l.b16 %v1502
        %v6092 = vunpack.c.h.b16 %v1502
        %v6093 = vunpack.c.l.b16 %v1503
        %v6094 = vunpack.c.h.b16 %v1503
        %v6095 = vunpack.c.l.b16 %v1504
        %v6096 = vunpack.c.h.b16 %v1504
        %v6097 = vunpack.c.l.b16 %v1505
        %v6098 = vunpack.c.h.b16 %v1505
        %v6099 = vunpack.c.l.b16 %v1506
        %v6100 = vunpack.c.h.b16 %v1506
        %v6101 = vunpack.c.l.b16 %v1507
        %v6102 = vunpack.c.h.b16 %v1507
        %v6103 = vunpack.c.l.b16 %v1508
        %v6104 = vunpack.c.h.b16 %v1508
        %v6105 = vunpack.c.l.b16 %v1509
        %v6106 = vunpack.c.h.b16 %v1509
        %v6107 = vunpack.c.l.b16 %v1510
        %v6108 = vunpack.c.h.b16 %v1510
        %v6109 = vunpack.c.l.b16 %v1511
        %v6110 = vunpack.c.h.b16 %v1511
        %v6111 = vunpack.c.l.b16 %v1512
        %v6112 = vunpack.c.h.b16 %v1512
        %v6113 = vunpack.c.l.b16 %v1513
        %v6114 = vunpack.c.h.b16 %v1513
        %v6115 = vunpack.c.l.b16 %v1514
        %v6116 = vunpack.c.h.b16 %v1514
        %v6117 = vunpack.c.l.b16 %v1515
        %v6118 = vunpack.c.h.b16 %v1515
        %v6119 = vunpack.c.l.b16 %v1516
        %v6120 = vunpack.c.h.b16 %v1516
        %v6121 = vunpack.c.l.b16 %v1517
        %v6122 = vunpack.c.h.b16 %v1517
        %v6123 = vunpack.c.l.b16 %v1518
        %v6124 = vunpack.c.h.b16 %v1518
        %v6125 = vunpack.c.l.b16 %v1519
        %v6126 = vunpack.c.h.b16 %v1519
        %v6127 = vunpack.c.l.b16 %v1520
        %v6128 = vunpack.c.h.b16 %v1520
        %v6129 = vunpack.c.l.b16 %v1521
        %v6130 = vunpack.c.h.b16 %v1521
        %v6131 = vunpack.c.l.b16 %v1522
        %v6132 = vunpack.c.h.b16 %v1522
        %v6133 = vunpack.c.l.b16 %v1523
        %v6134 = vunpack.c.h.b16 %v1523
        %v6135 = vunpack.c.l.b16 %v1524
        %v6136 = vunpack.c.h.b16 %v1524
        %v6137 = vunpack.c.l.b16 %v1525
        %v6138 = vunpack.c.h.b16 %v1525
        %v6139 = vunpack.c.l.b16 %v1526
        %v6140 = vunpack.c.h.b16 %v1526
        %v6141 = vunpack.c.l.b16 %v1527
        %v6142 = vunpack.c.h.b16 %v1527
        %v6143 = vunpack.c.l.b16 %v1528
        %v6144 = vunpack.c.h.b16 %v1528
        %v6145 = vunpack.c.l.b16 %v1529
        %v6146 = vunpack.c.h.b16 %v1529
        %v6147 = vunpack.c.l.b16 %v1530
        %v6148 = vunpack.c.h.b16 %v1530
        %v6149 = vunpack.c.l.b16 %v1531
        %v6150 = vunpack.c.h.b16 %v1531
        %v6151 = vunpack.c.l.b16 %v1532
        %v6152 = vunpack.c.h.b16 %v1532
        %v6153 = vunpack.c.l.b16 %v1533
        %v6154 = vunpack.c.h.b16 %v1533
        %v6155 = vunpack.c.l.b16 %v1534
        %v6156 = vunpack.c.h.b16 %v1534
        %v6157 = vunpack.c.l.b16 %v1535
        %v6158 = vunpack.c.h.b16 %v1535
        %v6159 = vunpack.c.l.b16 %v1536
        %v6160 = vunpack.c.h.b16 %v1536
        %v6161 = vunpack.c.l.b16 %v1537
        %v6162 = vunpack.c.h.b16 %v1537
        %v6163 = vunpack.c.l.b16 %v1538
        %v6164 = vunpack.c.h.b16 %v1538
        %v6165 = vunpack.c.l.b16 %v1539
        %v6166 = vunpack.c.h.b16 %v1539
        %v6167 = vunpack.c.l.b16 %v1540
        %v6168 = vunpack.c.h.b16 %v1540
        %v6169 = vunpack.c.l.b16 %v1541
        %v6170 = vunpack.c.h.b16 %v1541
        %v6171 = vunpack.c.l.b16 %v1542
        %v6172 = vunpack.c.h.b16 %v1542
        %v6173 = vunpack.c.l.b16 %v1543
        %v6174 = vunpack.c.h.b16 %v1543
        %v6175 = vunpack.c.l.b16 %v1544
        %v6176 = vunpack.c.h.b16 %v1544
        %v6177 = vunpack.c.l.b16 %v1545
        %v6178 = vunpack.c.h.b16 %v1545
        %v6179 = vunpack.c.l.b16 %v1546
        %v6180 = vunpack.c.h.b16 %v1546
        %v6181 = vunpack.c.l.b16 %v1547
        %v6182 = vunpack.c.h.b16 %v1547
        %v6183 = vunpack.c.l.b16 %v1548
        %v6184 = vunpack.c.h.b16 %v1548
        %v6185 = vunpack.c.l.b16 %v1549
        %v6186 = vunpack.c.h.b16 %v1549
        %v6187 = vunpack.c.l.b16 %v1550
        %v6188 = vunpack.c.h.b16 %v1550
        %v6189 = vunpack.c.l.b16 %v1551
        %v6190 = vunpack.c.h.b16 %v1551
        %v6191 = vunpack.c.l.b16 %v1552
        %v6192 = vunpack.c.h.b16 %v1552
        %v6193 = vunpack.c.l.b16 %v1553
        %v6194 = vunpack.c.h.b16 %v1553
        %v6195 = vunpack.c.l.b16 %v1554
        %v6196 = vunpack.c.h.b16 %v1554
        %v6197 = vunpack.c.l.b16 %v1555
        %v6198 = vunpack.c.h.b16 %v1555
        %v6199 = vunpack.c.l.b16 %v1556
        %v6200 = vunpack.c.h.b16 %v1556
        %v6201 = vunpack.c.l.b16 %v1557
        %v6202 = vunpack.c.h.b16 %v1557
        %v6203 = vunpack.c.l.b16 %v1558
        %v6204 = vunpack.c.h.b16 %v1558
        %v6205 = vunpack.c.l.b16 %v1559
        %v6206 = vunpack.c.h.b16 %v1559
        %v6207 = vunpack.c.l.b16 %v1560
        %v6208 = vunpack.c.h.b16 %v1560
        %v6209 = vunpack.c.l.b16 %v1561
        %v6210 = vunpack.c.h.b16 %v1561
        %v6211 = vunpack.c.l.b16 %v1562
        %v6212 = vunpack.c.h.b16 %v1562
        %v6213 = vunpack.c.l.b16 %v1563
        %v6214 = vunpack.c.h.b16 %v1563
        %v6215 = vunpack.c.l.b16 %v1564
        %v6216 = vunpack.c.h.b16 %v1564
        %v6217 = vunpack.c.l.b16 %v1565
        %v6218 = vunpack.c.h.b16 %v1565
        %v6219 = vunpack.c.l.b16 %v1566
        %v6220 = vunpack.c.h.b16 %v1566
        %v6221 = vunpack.c.l.b16 %v1567
        %v6222 = vunpack.c.h.b16 %v1567
        %v6223 = vunpack.c.l.b16 %v1568
        %v6224 = vunpack.c.h.b16 %v1568
        %v6225 = vunpack.c.l.b16 %v1569
        %v6226 = vunpack.c.h.b16 %v1569
        %v6227 = vunpack.c.l.b16 %v1570
        %v6228 = vunpack.c.h.b16 %v1570
        %v6229 = vunpack.c.l.b16 %v1571
        %v6230 = vunpack.c.h.b16 %v1571
        %v6231 = vunpack.c.l.b16 %v1572
        %v6232 = vunpack.c.h.b16 %v1572
        %v6233 = vunpack.c.l.b16 %v1573
        %v6234 = vunpack.c.h.b16 %v1573
        %v6235 = vunpack.c.l.b16 %v1574
        %v6236 = vunpack.c.h.b16 %v1574
        %v6237 = vunpack.c.l.b16 %v1575
        %v6238 = vunpack.c.h.b16 %v1575
        %v6239 = vunpack.c.l.b16 %v1576
        %v6240 = vunpack.c.h.b16 %v1576
        %v6241 = vunpack.c.l.b16 %v1577
        %v6242 = vunpack.c.h.b16 %v1577
        %v6243 = vunpack.c.l.b16 %v1578
        %v6244 = vunpack.c.h.b16 %v1578
        %v6245 = vunpack.c.l.b16 %v1579
        %v6246 = vunpack.c.h.b16 %v1579
        %v6247 = vunpack.c.l.b16 %v1580
        %v6248 = vunpack.c.h.b16 %v1580
        %v6249 = vunpack.c.l.b16 %v1581
        %v6250 = vunpack.c.h.b16 %v1581
        %v6251 = vunpack.c.l.b16 %v1582
        %v6252 = vunpack.c.h.b16 %v1582
        %v6253 = vunpack.c.l.b16 %v1583
        %v6254 = vunpack.c.h.b16 %v1583
        %v6255 = vunpack.c.l.b16 %v1584
        %v6256 = vunpack.c.h.b16 %v1584
        %v6257 = vunpack.c.l.b16 %v1585
        %v6258 = vunpack.c.h.b16 %v1585
        %v6259 = vunpack.c.l.b16 %v1586
        %v6260 = vunpack.c.h.b16 %v1586
        %v6261 = vunpack.c.l.b16 %v1587
        %v6262 = vunpack.c.h.b16 %v1587
        %v6263 = vunpack.c.l.b16 %v1588
        %v6264 = vunpack.c.h.b16 %v1588
        %v6265 = vunpack.c.l.b16 %v1589
        %v6266 = vunpack.c.h.b16 %v1589
        %v6267 = vunpack.c.l.b16 %v1590
        %v6268 = vunpack.c.h.b16 %v1590
        %v6269 = vunpack.c.l.b16 %v1591
        %v6270 = vunpack.c.h.b16 %v1591
        %v6271 = vunpack.c.l.b16 %v1592
        %v6272 = vunpack.c.h.b16 %v1592
        %v6273 = vunpack.c.l.b16 %v1593
        %v6274 = vunpack.c.h.b16 %v1593
        %v6275 = vunpack.c.l.b16 %v1594
        %v6276 = vunpack.c.h.b16 %v1594
        %v6277 = vunpack.c.l.b16 %v1595
        %v6278 = vunpack.c.h.b16 %v1595
        %v6279 = vunpack.c.l.b16 %v1596
        %v6280 = vunpack.c.h.b16 %v1596
        %v6281 = vunpack.c.l.b16 %v1597
        %v6282 = vunpack.c.h.b16 %v1597
        %v6283 = vunpack.c.l.b16 %v1598
        %v6284 = vunpack.c.h.b16 %v1598
        %v6285 = vunpack.c.l.b16 %v1599
        %v6286 = vunpack.c.h.b16 %v1599
        %v6287 = vunpack.c.l.b16 %v1600
        %v6288 = vunpack.c.h.b16 %v1600
        %v6289 = vunpack.c.l.b16 %v1601
        %v6290 = vunpack.c.h.b16 %v1601
        %v6291 = vunpack.c.l.b16 %v1602
        %v6292 = vunpack.c.h.b16 %v1602
        %v6293 = vunpack.c.l.b16 %v1603
        %v6294 = vunpack.c.h.b16 %v1603
        %v6295 = vunpack.c.l.b16 %v1604
        %v6296 = vunpack.c.h.b16 %v1604
        %v6297 = vunpack.c.l.b16 %v1605
        %v6298 = vunpack.c.h.b16 %v1605
        %v6299 = vunpack.c.l.b16 %v1606
        %v6300 = vunpack.c.h.b16 %v1606
        %v6301 = vunpack.c.l.b16 %v1607
        %v6302 = vunpack.c.h.b16 %v1607
        %v6303 = vunpack.c.l.b16 %v1608
        %v6304 = vunpack.c.h.b16 %v1608
        %v6305 = vunpack.c.l.b16 %v1609
        %v6306 = vunpack.c.h.b16 %v1609
        %v6307 = vunpack.c.l.b16 %v1610
        %v6308 = vunpack.c.h.b16 %v1610
        %v6309 = vunpack.c.l.b16 %v1611
        %v6310 = vunpack.c.h.b16 %v1611
        %v6311 = vunpack.c.l.b16 %v1612
        %v6312 = vunpack.c.h.b16 %v1612
        %v6313 = vunpack.c.l.b16 %v1613
        %v6314 = vunpack.c.h.b16 %v1613
        %v6315 = vunpack.c.l.b16 %v1614
        %v6316 = vunpack.c.h.b16 %v1614
        %v6317 = vunpack.c.l.b16 %v1615
        %v6318 = vunpack.c.h.b16 %v1615
        %v6319 = vunpack.c.l.b16 %v1616
        %v6320 = vunpack.c.h.b16 %v1616
        %v6321 = vunpack.c.l.b16 %v1617
        %v6322 = vunpack.c.h.b16 %v1617
        %v6323 = vunpack.c.l.b16 %v1618
        %v6324 = vunpack.c.h.b16 %v1618
        %v6325 = vunpack.c.l.b16 %v1619
        %v6326 = vunpack.c.h.b16 %v1619
        %v6327 = vunpack.c.l.b16 %v1620
        %v6328 = vunpack.c.h.b16 %v1620
        %v6329 = vunpack.c.l.b16 %v1621
        %v6330 = vunpack.c.h.b16 %v1621
        %v6331 = vunpack.c.l.b16 %v1622
        %v6332 = vunpack.c.h.b16 %v1622
        %v6333 = vunpack.c.l.b16 %v1623
        %v6334 = vunpack.c.h.b16 %v1623
        %v6335 = vunpack.c.l.b16 %v1624
        %v6336 = vunpack.c.h.b16 %v1624
        %v6337 = vunpack.c.l.b16 %v1625
        %v6338 = vunpack.c.h.b16 %v1625
        %v6339 = vunpack.c.l.b16 %v1626
        %v6340 = vunpack.c.h.b16 %v1626
        %v6341 = vunpack.c.l.b16 %v1627
        %v6342 = vunpack.c.h.b16 %v1627
        %v6343 = vunpack.c.l.b16 %v1628
        %v6344 = vunpack.c.h.b16 %v1628
        %v6345 = vunpack.c.l.b16 %v1629
        %v6346 = vunpack.c.h.b16 %v1629
        %v6347 = vunpack.c.l.b16 %v1630
        %v6348 = vunpack.c.h.b16 %v1630
        %v6349 = vunpack.c.l.b16 %v1631
        %v6350 = vunpack.c.h.b16 %v1631
        %v6351 = vunpack.c.l.b16 %v1632
        %v6352 = vunpack.c.h.b16 %v1632
        %v6353 = vunpack.c.l.b16 %v1633
        %v6354 = vunpack.c.h.b16 %v1633
        %v6355 = vunpack.c.l.b16 %v1634
        %v6356 = vunpack.c.h.b16 %v1634
        %v6357 = vunpack.c.l.b16 %v1635
        %v6358 = vunpack.c.h.b16 %v1635
        %v6359 = vunpack.c.l.b16 %v1636
        %v6360 = vunpack.c.h.b16 %v1636
        %v6361 = vunpack.c.l.b16 %v1637
        %v6362 = vunpack.c.h.b16 %v1637
        %v6363 = vunpack.c.l.b16 %v1638
        %v6364 = vunpack.c.h.b16 %v1638
        %v6365 = vunpack.c.l.b16 %v1639
        %v6366 = vunpack.c.h.b16 %v1639
        %v6367 = vunpack.c.l.b16 %v1640
        %v6368 = vunpack.c.h.b16 %v1640
        %v6369 = vunpack.c.l.b16 %v1641
        %v6370 = vunpack.c.h.b16 %v1641
        %v6371 = vunpack.c.l.b16 %v1642
        %v6372 = vunpack.c.h.b16 %v1642
        %v6373 = vunpack.c.l.b16 %v1643
        %v6374 = vunpack.c.h.b16 %v1643
        %v6375 = vunpack.c.l.b16 %v1644
        %v6376 = vunpack.c.h.b16 %v1644
        %v6377 = vunpack.c.l.b16 %v1645
        %v6378 = vunpack.c.h.b16 %v1645
        %v6379 = vunpack.c.l.b16 %v1646
        %v6380 = vunpack.c.h.b16 %v1646
        %v6381 = vunpack.c.l.b16 %v1647
        %v6382 = vunpack.c.h.b16 %v1647
        %v6383 = vunpack.c.l.b16 %v1648
        %v6384 = vunpack.c.h.b16 %v1648
        %v6385 = vunpack.c.l.b16 %v1649
        %v6386 = vunpack.c.h.b16 %v1649
        %v6387 = vunpack.c.l.b16 %v1650
        %v6388 = vunpack.c.h.b16 %v1650
        %v6389 = vunpack.c.l.b16 %v1651
        %v6390 = vunpack.c.h.b16 %v1651
        %v6391 = vunpack.c.l.b16 %v1652
        %v6392 = vunpack.c.h.b16 %v1652
        %v6393 = vunpack.c.l.b16 %v1653
        %v6394 = vunpack.c.h.b16 %v1653
        %v6395 = vunpack.c.l.b16 %v1654
        %v6396 = vunpack.c.h.b16 %v1654
        %v6397 = vunpack.c.l.b16 %v1655
        %v6398 = vunpack.c.h.b16 %v1655
        %v6399 = vunpack.c.l.b16 %v1656
        %v6400 = vunpack.c.h.b16 %v1656
        %v6401 = vunpack.c.l.b16 %v1657
        %v6402 = vunpack.c.h.b16 %v1657
        %v6403 = vunpack.c.l.b16 %v1658
        %v6404 = vunpack.c.h.b16 %v1658
        %v6405 = vunpack.c.l.b16 %v1659
        %v6406 = vunpack.c.h.b16 %v1659
        %v6407 = vunpack.c.l.b16 %v1660
        %v6408 = vunpack.c.h.b16 %v1660
        %v6409 = vunpack.c.l.b16 %v1661
        %v6410 = vunpack.c.h.b16 %v1661
        %v6411 = vunpack.c.l.b16 %v1662
        %v6412 = vunpack.c.h.b16 %v1662
        %v6413 = vunpack.c.l.b16 %v1663
        %v6414 = vunpack.c.h.b16 %v1663
        %v6415 = vunpack.c.l.b16 %v1664
        %v6416 = vunpack.c.h.b16 %v1664
        %v6417 = vunpack.c.l.b16 %v1665
        %v6418 = vunpack.c.h.b16 %v1665
        %v6419 = vunpack.c.l.b16 %v1666
        %v6420 = vunpack.c.h.b16 %v1666
        %v6421 = vunpack.c.l.b16 %v1667
        %v6422 = vunpack.c.h.b16 %v1667
        %v6423 = vunpack.c.l.b16 %v1668
        %v6424 = vunpack.c.h.b16 %v1668
        %v6425 = vunpack.c.l.b16 %v1669
        %v6426 = vunpack.c.h.b16 %v1669
        %v6427 = vunpack.c.l.b16 %v1670
        %v6428 = vunpack.c.h.b16 %v1670
        %v6429 = vunpack.c.l.b16 %v1671
        %v6430 = vunpack.c.h.b16 %v1671
        %v6431 = vunpack.c.l.b16 %v1672
        %v6432 = vunpack.c.h.b16 %v1672
        %v6433 = vunpack.c.l.b16 %v1673
        %v6434 = vunpack.c.h.b16 %v1673
        %v6435 = vunpack.c.l.b16 %v1674
        %v6436 = vunpack.c.h.b16 %v1674
        %v6437 = vunpack.c.l.b16 %v1675
        %v6438 = vunpack.c.h.b16 %v1675
        %v6439 = vunpack.c.l.b16 %v1676
        %v6440 = vunpack.c.h.b16 %v1676
        %v6441 = vunpack.c.l.b16 %v1677
        %v6442 = vunpack.c.h.b16 %v1677
        %v6443 = vunpack.c.l.b16 %v1678
        %v6444 = vunpack.c.h.b16 %v1678
        %v6445 = vunpack.c.l.b16 %v1679
        %v6446 = vunpack.c.h.b16 %v1679
        %v6447 = vunpack.c.l.b16 %v1680
        %v6448 = vunpack.c.h.b16 %v1680
        %v6449 = vunpack.c.l.b16 %v1681
        %v6450 = vunpack.c.h.b16 %v1681
        %v6451 = vunpack.c.l.b16 %v1682
        %v6452 = vunpack.c.h.b16 %v1682
        %v6453 = vunpack.c.l.b16 %v1683
        %v6454 = vunpack.c.h.b16 %v1683
        %v6455 = vunpack.c.l.b16 %v1684
        %v6456 = vunpack.c.h.b16 %v1684
        %v6457 = vunpack.c.l.b16 %v1685
        %v6458 = vunpack.c.h.b16 %v1685
        %v6459 = vunpack.c.l.b16 %v1686
        %v6460 = vunpack.c.h.b16 %v1686
        %v6461 = vunpack.c.l.b16 %v1687
        %v6462 = vunpack.c.h.b16 %v1687
        %v6463 = vunpack.c.l.b16 %v1688
        %v6464 = vunpack.c.h.b16 %v1688
        %v6465 = vunpack.c.l.b16 %v1689
        %v6466 = vunpack.c.h.b16 %v1689
        %v6467 = vunpack.c.l.b16 %v1690
        %v6468 = vunpack.c.h.b16 %v1690
        %v6469 = vunpack.c.l.b16 %v1691
        %v6470 = vunpack.c.h.b16 %v1691
        %v6471 = vunpack.c.l.b16 %v1692
        %v6472 = vunpack.c.h.b16 %v1692
        %v6473 = vunpack.c.l.b16 %v1693
        %v6474 = vunpack.c.h.b16 %v1693
        %v6475 = vunpack.c.l.b16 %v1694
        %v6476 = vunpack.c.h.b16 %v1694
        %v6477 = vunpack.c.l.b16 %v1695
        %v6478 = vunpack.c.h.b16 %v1695
        %v6479 = vunpack.c.l.b16 %v1696
        %v6480 = vunpack.c.h.b16 %v1696
        %v6481 = vunpack.c.l.b16 %v1697
        %v6482 = vunpack.c.h.b16 %v1697
        %v6483 = vunpack.c.l.b16 %v1698
        %v6484 = vunpack.c.h.b16 %v1698
        %v6485 = vunpack.c.l.b16 %v1699
        %v6486 = vunpack.c.h.b16 %v1699
        %v6487 = vunpack.c.l.b16 %v1700
        %v6488 = vunpack.c.h.b16 %v1700
        %v6489 = vunpack.c.l.b16 %v1701
        %v6490 = vunpack.c.h.b16 %v1701
        %v6491 = vunpack.c.l.b16 %v1702
        %v6492 = vunpack.c.h.b16 %v1702
        %v6493 = vunpack.c.l.b16 %v1703
        %v6494 = vunpack.c.h.b16 %v1703
        %v6495 = vunpack.c.l.b16 %v1704
        %v6496 = vunpack.c.h.b16 %v1704
        %v6497 = vunpack.c.l.b16 %v1705
        %v6498 = vunpack.c.h.b16 %v1705
        %v6499 = vunpack.c.l.b16 %v1706
        %v6500 = vunpack.c.h.b16 %v1706
        %v6501 = vunpack.c.l.b16 %v1707
        %v6502 = vunpack.c.h.b16 %v1707
        %v6503 = vunpack.c.l.b16 %v1708
        %v6504 = vunpack.c.h.b16 %v1708
        %v6505 = vunpack.c.l.b16 %v1709
        %v6506 = vunpack.c.h.b16 %v1709
        %v6507 = vunpack.c.l.b16 %v1710
        %v6508 = vunpack.c.h.b16 %v1710
        %v6509 = vunpack.c.l.b16 %v1711
        %v6510 = vunpack.c.h.b16 %v1711
        %v6511 = vunpack.c.l.b16 %v1712
        %v6512 = vunpack.c.h.b16 %v1712
        %v6513 = vunpack.c.l.b16 %v1713
        %v6514 = vunpack.c.h.b16 %v1713
        %v6515 = vunpack.c.l.b16 %v1714
        %v6516 = vunpack.c.h.b16 %v1714
        %v6517 = vunpack.c.l.b16 %v1715
        %v6518 = vunpack.c.h.b16 %v1715
        %v6519 = vunpack.c.l.b16 %v1716
        %v6520 = vunpack.c.h.b16 %v1716
        %v6521 = vunpack.c.l.b16 %v1717
        %v6522 = vunpack.c.h.b16 %v1717
        %v6523 = vunpack.c.l.b16 %v1718
        %v6524 = vunpack.c.h.b16 %v1718
        %v6525 = vunpack.c.l.b16 %v1719
        %v6526 = vunpack.c.h.b16 %v1719
        %v6527 = vunpack.c.l.b16 %v1720
        %v6528 = vunpack.c.h.b16 %v1720
        %v6529 = vunpack.c.l.b16 %v1721
        %v6530 = vunpack.c.h.b16 %v1721
        %v6531 = vunpack.c.l.b16 %v1722
        %v6532 = vunpack.c.h.b16 %v1722
        %v6533 = vunpack.c.l.b16 %v1723
        %v6534 = vunpack.c.h.b16 %v1723
        %v6535 = vunpack.c.l.b16 %v1724
        %v6536 = vunpack.c.h.b16 %v1724
        %v6537 = vunpack.c.l.b16 %v1725
        %v6538 = vunpack.c.h.b16 %v1725
        %v6539 = vunpack.c.l.b16 %v1726
        %v6540 = vunpack.c.h.b16 %v1726
        %v6541 = vunpack.c.l.b16 %v1727
        %v6542 = vunpack.c.h.b16 %v1727
        %v6543 = vunpack.c.l.b16 %v1728
        %v6544 = vunpack.c.h.b16 %v1728
        %v6545 = vunpack.c.l.b16 %v1729
        %v6546 = vunpack.c.h.b16 %v1729
        %v6547 = vunpack.c.l.b16 %v1730
        %v6548 = vunpack.c.h.b16 %v1730
        %v6549 = vunpack.c.l.b16 %v1731
        %v6550 = vunpack.c.h.b16 %v1731
        %v6551 = vunpack.c.l.b16 %v1732
        %v6552 = vunpack.c.h.b16 %v1732
        %v6553 = vunpack.c.l.b16 %v1733
        %v6554 = vunpack.c.h.b16 %v1733
        %v6555 = vunpack.c.l.b16 %v1734
        %v6556 = vunpack.c.h.b16 %v1734
        %v6557 = vunpack.c.l.b16 %v1735
        %v6558 = vunpack.c.h.b16 %v1735
        %v6559 = vunpack.c.l.b16 %v1736
        %v6560 = vunpack.c.h.b16 %v1736
        %v6561 = vunpack.c.l.b16 %v1737
        %v6562 = vunpack.c.h.b16 %v1737
        %v6563 = vunpack.c.l.b16 %v1738
        %v6564 = vunpack.c.h.b16 %v1738
        %v6565 = vunpack.c.l.b16 %v1739
        %v6566 = vunpack.c.h.b16 %v1739
        %v6567 = vunpack.c.l.b16 %v1740
        %v6568 = vunpack.c.h.b16 %v1740
        %v6569 = vunpack.c.l.b16 %v1741
        %v6570 = vunpack.c.h.b16 %v1741
        %v6571 = vunpack.c.l.b16 %v1742
        %v6572 = vunpack.c.h.b16 %v1742
        %v6573 = vunpack.c.l.b16 %v1743
        %v6574 = vunpack.c.h.b16 %v1743
        %v6575 = vunpack.c.l.b16 %v1744
        %v6576 = vunpack.c.h.b16 %v1744
        %v6577 = vunpack.c.l.b16 %v1745
        %v6578 = vunpack.c.h.b16 %v1745
        %v6579 = vunpack.c.l.b16 %v1746
        %v6580 = vunpack.c.h.b16 %v1746
        %v6581 = vunpack.c.l.b16 %v1747
        %v6582 = vunpack.c.h.b16 %v1747
        %v6583 = vunpack.c.l.b16 %v1748
        %v6584 = vunpack.c.h.b16 %v1748
        %v6585 = vunpack.c.l.b16 %v1749
        %v6586 = vunpack.c.h.b16 %v1749
        %v6587 = vunpack.c.l.b16 %v1750
        %v6588 = vunpack.c.h.b16 %v1750
        %v6589 = vunpack.c.l.b16 %v1751
        %v6590 = vunpack.c.h.b16 %v1751
        %v6591 = vunpack.c.l.b16 %v1752
        %v6592 = vunpack.c.h.b16 %v1752
        %v6593 = vunpack.c.l.b16 %v1753
        %v6594 = vunpack.c.h.b16 %v1753
        %v6595 = vunpack.c.l.b16 %v1754
        %v6596 = vunpack.c.h.b16 %v1754
        %v6597 = vunpack.c.l.b16 %v1755
        %v6598 = vunpack.c.h.b16 %v1755
        %v6599 = vunpack.c.l.b16 %v1756
        %v6600 = vunpack.c.h.b16 %v1756
        %v6601 = vunpack.c.l.b16 %v1757
        %v6602 = vunpack.c.h.b16 %v1757
        %v6603 = vunpack.c.l.b16 %v1758
        %v6604 = vunpack.c.h.b16 %v1758
        %v6605 = vunpack.c.l.b16 %v1759
        %v6606 = vunpack.c.h.b16 %v1759
        %v6607 = vunpack.c.l.b16 %v1760
        %v6608 = vunpack.c.h.b16 %v1760
        %v6609 = vunpack.c.l.b16 %v1761
        %v6610 = vunpack.c.h.b16 %v1761
        %v6611 = vunpack.c.l.b16 %v1762
        %v6612 = vunpack.c.h.b16 %v1762
        %v6613 = vunpack.c.l.b16 %v1763
        %v6614 = vunpack.c.h.b16 %v1763
        %v6615 = vunpack.c.l.b16 %v1764
        %v6616 = vunpack.c.h.b16 %v1764
        %v6617 = vunpack.c.l.b16 %v1765
        %v6618 = vunpack.c.h.b16 %v1765
        %v6619 = vunpack.c.l.b16 %v1766
        %v6620 = vunpack.c.h.b16 %v1766
        %v6621 = vunpack.c.l.b16 %v1767
        %v6622 = vunpack.c.h.b16 %v1767
        %v6623 = vunpack.c.l.b16 %v1768
        %v6624 = vunpack.c.h.b16 %v1768
        %v6625 = vunpack.c.l.b16 %v1769
        %v6626 = vunpack.c.h.b16 %v1769
        %v6627 = vunpack.c.l.b16 %v1770
        %v6628 = vunpack.c.h.b16 %v1770
        %v6629 = vunpack.c.l.b16 %v1771
        %v6630 = vunpack.c.h.b16 %v1771
        %v6631 = vunpack.c.l.b16 %v1772
        %v6632 = vunpack.c.h.b16 %v1772
        %v6633 = vunpack.c.l.b16 %v1773
        %v6634 = vunpack.c.h.b16 %v1773
        %v6635 = vunpack.c.l.b16 %v1774
        %v6636 = vunpack.c.h.b16 %v1774
        %v6637 = vunpack.c.l.b16 %v1775
        %v6638 = vunpack.c.h.b16 %v1775
        %v6639 = vunpack.c.l.b16 %v1776
        %v6640 = vunpack.c.h.b16 %v1776
        %v6641 = vunpack.c.l.b16 %v1777
        %v6642 = vunpack.c.h.b16 %v1777
        %v6643 = vunpack.c.l.b16 %v1778
        %v6644 = vunpack.c.h.b16 %v1778
        %v6645 = vunpack.c.l.b16 %v1779
        %v6646 = vunpack.c.h.b16 %v1779
        %v6647 = vunpack.c.l.b16 %v1780
        %v6648 = vunpack.c.h.b16 %v1780
        %v6649 = vunpack.c.l.b16 %v1781
        %v6650 = vunpack.c.h.b16 %v1781
        %v6651 = vunpack.c.l.b16 %v1782
        %v6652 = vunpack.c.h.b16 %v1782
        %v6653 = vunpack.c.l.b16 %v1783
        %v6654 = vunpack.c.h.b16 %v1783
        %v6655 = vunpack.c.l.b16 %v1784
        %v6656 = vunpack.c.h.b16 %v1784
        %v6657 = vunpack.c.l.b16 %v1785
        %v6658 = vunpack.c.h.b16 %v1785
        %v6659 = vunpack.c.l.b16 %v1786
        %v6660 = vunpack.c.h.b16 %v1786
        %v6661 = vunpack.c.l.b16 %v1787
        %v6662 = vunpack.c.h.b16 %v1787
        %v6663 = vunpack.c.l.b16 %v1788
        %v6664 = vunpack.c.h.b16 %v1788
        %v6665 = vunpack.c.l.b16 %v1789
        %v6666 = vunpack.c.h.b16 %v1789
        %v6667 = vunpack.c.l.b16 %v1790
        %v6668 = vunpack.c.h.b16 %v1790
        %v6669 = vunpack.c.l.b16 %v1791
        %v6670 = vunpack.c.h.b16 %v1791
        %v6671 = vunpack.c.l.b16 %v1792
        %v6672 = vunpack.c.h.b16 %v1792
        %v6673 = vunpack.c.l.b16 %v1793
        %v6674 = vunpack.c.h.b16 %v1793
        %v6675 = vunpack.c.l.b16 %v1794
        %v6676 = vunpack.c.h.b16 %v1794
        %v6677 = vunpack.c.l.b16 %v1795
        %v6678 = vunpack.c.h.b16 %v1795
        %v6679 = vunpack.c.l.b16 %v1796
        %v6680 = vunpack.c.h.b16 %v1796
        %v6681 = vunpack.c.l.b16 %v1797
        %v6682 = vunpack.c.h.b16 %v1797
        %v6683 = vunpack.c.l.b16 %v1798
        %v6684 = vunpack.c.h.b16 %v1798
        %v6685 = vunpack.c.l.b16 %v1799
        %v6686 = vunpack.c.h.b16 %v1799
        %v6687 = vunpack.c.l.b16 %v1800
        %v6688 = vunpack.c.h.b16 %v1800
        %v6689 = vunpack.c.l.b16 %v1801
        %v6690 = vunpack.c.h.b16 %v1801
        %v6691 = vunpack.c.l.b16 %v1802
        %v6692 = vunpack.c.h.b16 %v1802
        %v6693 = vunpack.c.l.b16 %v1803
        %v6694 = vunpack.c.h.b16 %v1803
        %v6695 = vunpack.c.l.b16 %v1804
        %v6696 = vunpack.c.h.b16 %v1804
        %v6697 = vunpack.c.l.b16 %v1805
        %v6698 = vunpack.c.h.b16 %v1805
        %v6699 = vunpack.c.l.b16 %v1806
        %v6700 = vunpack.c.h.b16 %v1806
        %v6701 = vunpack.c.l.b16 %v1807
        %v6702 = vunpack.c.h.b16 %v1807
        %v6703 = vunpack.c.l.b16 %v1808
        %v6704 = vunpack.c.h.b16 %v1808
        %v6705 = vunpack.c.l.b16 %v1809
        %v6706 = vunpack.c.h.b16 %v1809
        %v6707 = vunpack.c.l.b16 %v1810
        %v6708 = vunpack.c.h.b16 %v1810
        %v6709 = vunpack.c.l.b16 %v1811
        %v6710 = vunpack.c.h.b16 %v1811
        %v6711 = vunpack.c.l.b16 %v1812
        %v6712 = vunpack.c.h.b16 %v1812
        %v6713 = vunpack.c.l.b16 %v1813
        %v6714 = vunpack.c.h.b16 %v1813
        %v6715 = vunpack.c.l.b16 %v1814
        %v6716 = vunpack.c.h.b16 %v1814
        %v6717 = vunpack.c.l.b16 %v1815
        %v6718 = vunpack.c.h.b16 %v1815
        %v6719 = vunpack.c.l.b16 %v1816
        %v6720 = vunpack.c.h.b16 %v1816
        %v6721 = vunpack.c.l.b16 %v1817
        %v6722 = vunpack.c.h.b16 %v1817
        %v6723 = vunpack.c.l.b16 %v1818
        %v6724 = vunpack.c.h.b16 %v1818
        %v6725 = vunpack.c.l.b16 %v1819
        %v6726 = vunpack.c.h.b16 %v1819
        %v6727 = vunpack.c.l.b16 %v1820
        %v6728 = vunpack.c.h.b16 %v1820
        %v6729 = vunpack.c.l.b16 %v1821
        %v6730 = vunpack.c.h.b16 %v1821
        %v6731 = vunpack.c.l.b16 %v1822
        %v6732 = vunpack.c.h.b16 %v1822
        %v6733 = vunpack.c.l.b16 %v1823
        %v6734 = vunpack.c.h.b16 %v1823
        %v6735 = vunpack.c.l.b16 %v1824
        %v6736 = vunpack.c.h.b16 %v1824
        %v6737 = vunpack.c.l.b16 %v1825
        %v6738 = vunpack.c.h.b16 %v1825
        %v6739 = vunpack.c.l.b16 %v1826
        %v6740 = vunpack.c.h.b16 %v1826
        %v6741 = vunpack.c.l.b16 %v1827
        %v6742 = vunpack.c.h.b16 %v1827
        %v6743 = vunpack.c.l.b16 %v1828
        %v6744 = vunpack.c.h.b16 %v1828
        %v6745 = vunpack.c.l.b16 %v1829
        %v6746 = vunpack.c.h.b16 %v1829
        %v6747 = vunpack.c.l.b16 %v1830
        %v6748 = vunpack.c.h.b16 %v1830
        %v6749 = vunpack.c.l.b16 %v1831
        %v6750 = vunpack.c.h.b16 %v1831
        %v6751 = vunpack.c.l.b16 %v1832
        %v6752 = vunpack.c.h.b16 %v1832
        %v6753 = vunpack.c.l.b16 %v1833
        %v6754 = vunpack.c.h.b16 %v1833
        %v6755 = vunpack.c.l.b16 %v1834
        %v6756 = vunpack.c.h.b16 %v1834
        %v6757 = vunpack.c.l.b16 %v1835
        %v6758 = vunpack.c.h.b16 %v1835
        %v6759 = vunpack.c.l.b16 %v1836
        %v6760 = vunpack.c.h.b16 %v1836
        %v6761 = vunpack.c.l.b16 %v1837
        %v6762 = vunpack.c.h.b16 %v1837
        %v6763 = vunpack.c.l.b16 %v1838
        %v6764 = vunpack.c.h.b16 %v1838
        %v6765 = vunpack.c.l.b16 %v1839
        %v6766 = vunpack.c.h.b16 %v1839
        %v6767 = vunpack.c.l.b16 %v1840
        %v6768 = vunpack.c.h.b16 %v1840
        %v6769 = vunpack.c.l.b16 %v1841
        %v6770 = vunpack.c.h.b16 %v1841
        %v6771 = vunpack.c.l.b16 %v1842
        %v6772 = vunpack.c.h.b16 %v1842
        %v6773 = vunpack.c.l.b16 %v1843
        %v6774 = vunpack.c.h.b16 %v1843
        %v6775 = vunpack.c.l.b16 %v1844
        %v6776 = vunpack.c.h.b16 %v1844
        %v6777 = vunpack.c.l.b16 %v1845
        %v6778 = vunpack.c.h.b16 %v1845
        %v6779 = vunpack.c.l.b16 %v1846
        %v6780 = vunpack.c.h.b16 %v1846
        %v6781 = vunpack.c.l.b16 %v1847
        %v6782 = vunpack.c.h.b16 %v1847
        %v6783 = vunpack.c.l.b16 %v1848
        %v6784 = vunpack.c.h.b16 %v1848
        %v6785 = vunpack.c.l.b16 %v1849
        %v6786 = vunpack.c.h.b16 %v1849
        %v6787 = vunpack.c.l.b16 %v1850
        %v6788 = vunpack.c.h.b16 %v1850
        %v6789 = vunpack.c.l.b16 %v1851
        %v6790 = vunpack.c.h.b16 %v1851
        %v6791 = vunpack.c.l.b16 %v1852
        %v6792 = vunpack.c.h.b16 %v1852
        %v6793 = vunpack.c.l.b16 %v1853
        %v6794 = vunpack.c.h.b16 %v1853
        %v6795 = vunpack.c.l.b16 %v1854
        %v6796 = vunpack.c.h.b16 %v1854
        %v6797 = vunpack.c.l.b16 %v1855
        %v6798 = vunpack.c.h.b16 %v1855
        %v6799 = vunpack.c.l.b16 %v1856
        %v6800 = vunpack.c.h.b16 %v1856
        %v6801 = vunpack.c.l.b16 %v1857
        %v6802 = vunpack.c.h.b16 %v1857
        %v6803 = vunpack.c.l.b16 %v1858
        %v6804 = vunpack.c.h.b16 %v1858
        %v6805 = vunpack.c.l.b16 %v1859
        %v6806 = vunpack.c.h.b16 %v1859
        %v6807 = vunpack.c.l.b16 %v1860
        %v6808 = vunpack.c.h.b16 %v1860
        %v6809 = vunpack.c.l.b16 %v1861
        %v6810 = vunpack.c.h.b16 %v1861
        %v6811 = vunpack.c.l.b16 %v1862
        %v6812 = vunpack.c.h.b16 %v1862
        %v6813 = vunpack.c.l.b16 %v1863
        %v6814 = vunpack.c.h.b16 %v1863
        %v6815 = vunpack.c.l.b16 %v1864
        %v6816 = vunpack.c.h.b16 %v1864
        %v6817 = vunpack.c.l.b16 %v1865
        %v6818 = vunpack.c.h.b16 %v1865
        %v6819 = vunpack.c.l.b16 %v1866
        %v6820 = vunpack.c.h.b16 %v1866
        %v6821 = vunpack.c.l.b16 %v1867
        %v6822 = vunpack.c.h.b16 %v1867
        %v6823 = vunpack.c.l.b16 %v1868
        %v6824 = vunpack.c.h.b16 %v1868
        %v6825 = vunpack.c.l.b16 %v1869
        %v6826 = vunpack.c.h.b16 %v1869
        %v6827 = vunpack.c.l.b16 %v1870
        %v6828 = vunpack.c.h.b16 %v1870
        %v6829 = vunpack.c.l.b16 %v1871
        %v6830 = vunpack.c.h.b16 %v1871
        %v6831 = vunpack.c.l.b16 %v1872
        %v6832 = vunpack.c.h.b16 %v1872
        %v6833 = vunpack.c.l.b16 %v1873
        %v6834 = vunpack.c.h.b16 %v1873
        %v6835 = vunpack.c.l.b16 %v1874
        %v6836 = vunpack.c.h.b16 %v1874
        %v6837 = vunpack.c.l.b16 %v1875
        %v6838 = vunpack.c.h.b16 %v1875
        %v6839 = vunpack.c.l.b16 %v1876
        %v6840 = vunpack.c.h.b16 %v1876
        %v6841 = vunpack.c.l.b16 %v1877
        %v6842 = vunpack.c.h.b16 %v1877
        %v6843 = vunpack.c.l.b16 %v1878
        %v6844 = vunpack.c.h.b16 %v1878
        %v6845 = vunpack.c.l.b16 %v1879
        %v6846 = vunpack.c.h.b16 %v1879
        %v6847 = vunpack.c.l.b16 %v1880
        %v6848 = vunpack.c.h.b16 %v1880
        %v6849 = vunpack.c.l.b16 %v1881
        %v6850 = vunpack.c.h.b16 %v1881
        %v6851 = vunpack.c.l.b16 %v1882
        %v6852 = vunpack.c.h.b16 %v1882
        %v6853 = vunpack.c.l.b16 %v1883
        %v6854 = vunpack.c.h.b16 %v1883
        %v6855 = vunpack.c.l.b16 %v1884
        %v6856 = vunpack.c.h.b16 %v1884
        %v6857 = vpack.c.b16 %v3725, %v3721
        %v6858 = vpack.c.b16 %v3726, %v3722
        %v6859 = vpack.c.b16 %v3727, %v3723
        %v6860 = vpack.c.b16 %v3728, %v3724
        %v6861 = vpack.c.b16 %v3733, %v3729
        %v6862 = vpack.c.b16 %v3734, %v3730
        %v6863 = vpack.c.b16 %v3735, %v3731
        %v6864 = vpack.c.b16 %v3736, %v3732
        %v6865 = vpack.c.b16 %v3741, %v3737
        %v6866 = vpack.c.b16 %v3742, %v3738
        %v6867 = vpack.c.b16 %v3743, %v3739
        %v6868 = vpack.c.b16 %v3744, %v3740
        %v6869 = vpack.c.b16 %v3749, %v3745
        %v6870 = vpack.c.b16 %v3750, %v3746
        %v6871 = vpack.c.b16 %v3751, %v3747
        %v6872 = vpack.c.b16 %v3752, %v3748
        %v6873 = vpack.c.b16 %v3757, %v3753
        %v6874 = vpack.c.b16 %v3758, %v3754
        %v6875 = vpack.c.b16 %v3759, %v3755
        %v6876 = vpack.c.b16 %v3760, %v3756
        %v6877 = vpack.c.b16 %v3765, %v3761
        %v6878 = vpack.c.b16 %v3766, %v3762
        %v6879 = vpack.c.b16 %v3767, %v3763
        %v6880 = vpack.c.b16 %v3768, %v3764
        %v6881 = vpack.c.b16 %v3773, %v3769
        %v6882 = vpack.c.b16 %v3774, %v3770
        %v6883 = vpack.c.b16 %v3775, %v3771
        %v6884 = vpack.c.b16 %v3776, %v3772
        %v6885 = vpack.c.b16 %v3781, %v3777
        %v6886 = vpack.c.b16 %v3782, %v3778
        %v6887 = vpack.c.b16 %v3783, %v3779
        %v6888 = vpack.c.b16 %v3784, %v3780
        %v6889 = vpack.c.b16 %v3789, %v3785
        %v6890 = vpack.c.b16 %v3790, %v3786
        %v6891 = vpack.c.b16 %v3791, %v3787
        %v6892 = vpack.c.b16 %v3792, %v3788
        %v6893 = vpack.c.b16 %v3797, %v3793
        %v6894 = vpack.c.b16 %v3798, %v3794
        %v6895 = vpack.c.b16 %v3799, %v3795
        %v6896 = vpack.c.b16 %v3800, %v3796
        %v6897 = vpack.c.b16 %v3805, %v3801
        %v6898 = vpack.c.b16 %v3806, %v3802
        %v6899 = vpack.c.b16 %v3807, %v3803
        %v6900 = vpack.c.b16 %v3808, %v3804
        %v6901 = vpack.c.b16 %v3813, %v3809
        %v6902 = vpack.c.b16 %v3814, %v3810
        %v6903 = vpack.c.b16 %v3815, %v3811
        %v6904 = vpack.c.b16 %v3816, %v3812
        %v6905 = vpack.c.b16 %v3821, %v3817
        %v6906 = vpack.c.b16 %v3822, %v3818
        %v6907 = vpack.c.b16 %v3823, %v3819
        %v6908 = vpack.c.b16 %v3824, %v3820
        %v6909 = vpack.c.b16 %v3829, %v3825
        %v6910 = vpack.c.b16 %v3830, %v3826
        %v6911 = vpack.c.b16 %v3831, %v3827
        %v6912 = vpack.c.b16 %v3832, %v3828
        %v6913 = vpack.c.b16 %v3837, %v3833
        %v6914 = vpack.c.b16 %v3838, %v3834
        %v6915 = vpack.c.b16 %v3839, %v3835
        %v6916 = vpack.c.b16 %v3840, %v3836
        %v6917 = vpack.c.b16 %v3845, %v3841
        %v6918 = vpack.c.b16 %v3846, %v3842
        %v6919 = vpack.c.b16 %v3847, %v3843
        %v6920 = vpack.c.b16 %v3848, %v3844
        %v6921 = vpack.c.b16 %v3853, %v3849
        %v6922 = vpack.c.b16 %v3854, %v3850
        %v6923 = vpack.c.b16 %v3855, %v3851
        %v6924 = vpack.c.b16 %v3856, %v3852
        %v6925 = vpack.c.b16 %v3861, %v3857
        %v6926 = vpack.c.b16 %v3862, %v3858
        %v6927 = vpack.c.b16 %v3863, %v3859
        %v6928 = vpack.c.b16 %v3864, %v3860
        %v6929 = vpack.c.b16 %v3869, %v3865
        %v6930 = vpack.c.b16 %v3870, %v3866
        %v6931 = vpack.c.b16 %v3871, %v3867
        %v6932 = vpack.c.b16 %v3872, %v3868
        %v6933 = vpack.c.b16 %v3877, %v3873
        %v6934 = vpack.c.b16 %v3878, %v3874
        %v6935 = vpack.c.b16 %v3879, %v3875
        %v6936 = vpack.c.b16 %v3880, %v3876
        %v6937 = vpack.c.b16 %v3885, %v3881
        %v6938 = vpack.c.b16 %v3886, %v3882
        %v6939 = vpack.c.b16 %v3887, %v3883
        %v6940 = vpack.c.b16 %v3888, %v3884
        %v6941 = vpack.c.b16 %v3893, %v3889
        %v6942 = vpack.c.b16 %v3894, %v3890
        %v6943 = vpack.c.b16 %v3895, %v3891
        %v6944 = vpack.c.b16 %v3896, %v3892
        %v6945 = vpack.c.b16 %v3901, %v3897
        %v6946 = vpack.c.b16 %v3902, %v3898
        %v6947 = vpack.c.b16 %v3903, %v3899
        %v6948 = vpack.c.b16 %v3904, %v3900
        %v6949 = vpack.c.b16 %v3909, %v3905
        %v6950 = vpack.c.b16 %v3910, %v3906
        %v6951 = vpack.c.b16 %v3911, %v3907
        %v6952 = vpack.c.b16 %v3912, %v3908
        %v6953 = vpack.c.b16 %v3917, %v3913
        %v6954 = vpack.c.b16 %v3918, %v3914
        %v6955 = vpack.c.b16 %v3919, %v3915
        %v6956 = vpack.c.b16 %v3920, %v3916
        %v6957 = vpack.c.b16 %v3925, %v3921
        %v6958 = vpack.c.b16 %v3926, %v3922
        %v6959 = vpack.c.b16 %v3927, %v3923
        %v6960 = vpack.c.b16 %v3928, %v3924
        %v6961 = vpack.c.b16 %v3933, %v3929
        %v6962 = vpack.c.b16 %v3934, %v3930
        %v6963 = vpack.c.b16 %v3935, %v3931
        %v6964 = vpack.c.b16 %v3936, %v3932
        %v6965 = vpack.c.b16 %v3941, %v3937
        %v6966 = vpack.c.b16 %v3942, %v3938
        %v6967 = vpack.c.b16 %v3943, %v3939
        %v6968 = vpack.c.b16 %v3944, %v3940
        %v6969 = vpack.c.b16 %v3949, %v3945
        %v6970 = vpack.c.b16 %v3950, %v3946
        %v6971 = vpack.c.b16 %v3951, %v3947
        %v6972 = vpack.c.b16 %v3952, %v3948
        %v6973 = vpack.c.b16 %v3957, %v3953
        %v6974 = vpack.c.b16 %v3958, %v3954
        %v6975 = vpack.c.b16 %v3959, %v3955
        %v6976 = vpack.c.b16 %v3960, %v3956
        %v6977 = vpack.c.b16 %v3965, %v3961
        %v6978 = vpack.c.b16 %v3966, %v3962
        %v6979 = vpack.c.b16 %v3967, %v3963
        %v6980 = vpack.c.b16 %v3968, %v3964
        %v6981 = vpack.c.b16 %v3973, %v3969
        %v6982 = vpack.c.b16 %v3974, %v3970
        %v6983 = vpack.c.b16 %v3975, %v3971
        %v6984 = vpack.c.b16 %v3976, %v3972
        %v6985 = vpack.c.b16 %v3981, %v3977
        %v6986 = vpack.c.b16 %v3982, %v3978
        %v6987 = vpack.c.b16 %v3983, %v3979
        %v6988 = vpack.c.b16 %v3984, %v3980
        %v6989 = vpack.c.b16 %v3989, %v3985
        %v6990 = vpack.c.b16 %v3990, %v3986
        %v6991 = vpack.c.b16 %v3991, %v3987
        %v6992 = vpack.c.b16 %v3992, %v3988
        %v6993 = vpack.c.b16 %v3997, %v3993
        %v6994 = vpack.c.b16 %v3998, %v3994
        %v6995 = vpack.c.b16 %v3999, %v3995
        %v6996 = vpack.c.b16 %v4000, %v3996
        %v6997 = vpack.c.b16 %v4005, %v4001
        %v6998 = vpack.c.b16 %v4006, %v4002
        %v6999 = vpack.c.b16 %v4007, %v4003
        %v7000 = vpack.c.b16 %v4008, %v4004
        %v7001 = vpack.c.b16 %v4013, %v4009
        %v7002 = vpack.c.b16 %v4014, %v4010
        %v7003 = vpack.c.b16 %v4015, %v4011
        %v7004 = vpack.c.b16 %v4016, %v4012
        %v7005 = vpack.c.b16 %v4021, %v4017
        %v7006 = vpack.c.b16 %v4022, %v4018
        %v7007 = vpack.c.b16 %v4023, %v4019
        %v7008 = vpack.c.b16 %v4024, %v4020
        %v7009 = vpack.c.b16 %v4029, %v4025
        %v7010 = vpack.c.b16 %v4030, %v4026
        %v7011 = vpack.c.b16 %v4031, %v4027
        %v7012 = vpack.c.b16 %v4032, %v4028
        %v7013 = vpack.c.b16 %v4037, %v4033
        %v7014 = vpack.c.b16 %v4038, %v4034
        %v7015 = vpack.c.b16 %v4039, %v4035
        %v7016 = vpack.c.b16 %v4040, %v4036
        %v7017 = vpack.c.b16 %v4045, %v4041
        %v7018 = vpack.c.b16 %v4046, %v4042
        %v7019 = vpack.c.b16 %v4047, %v4043
        %v7020 = vpack.c.b16 %v4048, %v4044
        %v7021 = vpack.c.b16 %v4053, %v4049
        %v7022 = vpack.c.b16 %v4054, %v4050
        %v7023 = vpack.c.b16 %v4055, %v4051
        %v7024 = vpack.c.b16 %v4056, %v4052
        %v7025 = vpack.c.b16 %v4061, %v4057
        %v7026 = vpack.c.b16 %v4062, %v4058
        %v7027 = vpack.c.b16 %v4063, %v4059
        %v7028 = vpack.c.b16 %v4064, %v4060
        %v7029 = vpack.c.b16 %v4069, %v4065
        %v7030 = vpack.c.b16 %v4070, %v4066
        %v7031 = vpack.c.b16 %v4071, %v4067
        %v7032 = vpack.c.b16 %v4072, %v4068
        %v7033 = vpack.c.b16 %v4077, %v4073
        %v7034 = vpack.c.b16 %v4078, %v4074
        %v7035 = vpack.c.b16 %v4079, %v4075
        %v7036 = vpack.c.b16 %v4080, %v4076
        %v7037 = vpack.c.b16 %v4085, %v4081
        %v7038 = vpack.c.b16 %v4086, %v4082
        %v7039 = vpack.c.b16 %v4087, %v4083
        %v7040 = vpack.c.b16 %v4088, %v4084
        %v7041 = vpack.c.b16 %v4093, %v4089
        %v7042 = vpack.c.b16 %v4094, %v4090
        %v7043 = vpack.c.b16 %v4095, %v4091
        %v7044 = vpack.c.b16 %v4096, %v4092
        %v7045 = vpack.c.b16 %v4101, %v4097
        %v7046 = vpack.c.b16 %v4102, %v4098
        %v7047 = vpack.c.b16 %v4103, %v4099
        %v7048 = vpack.c.b16 %v4104, %v4100
        %v7049 = vpack.c.b16 %v4109, %v4105
        %v7050 = vpack.c.b16 %v4110, %v4106
        %v7051 = vpack.c.b16 %v4111, %v4107
        %v7052 = vpack.c.b16 %v4112, %v4108
        %v7053 = vpack.c.b16 %v4117, %v4113
        %v7054 = vpack.c.b16 %v4118, %v4114
        %v7055 = vpack.c.b16 %v4119, %v4115
        %v7056 = vpack.c.b16 %v4120, %v4116
        %v7057 = vpack.c.b16 %v4125, %v4121
        %v7058 = vpack.c.b16 %v4126, %v4122
        %v7059 = vpack.c.b16 %v4127, %v4123
        %v7060 = vpack.c.b16 %v4128, %v4124
        %v7061 = vpack.c.b16 %v4133, %v4129
        %v7062 = vpack.c.b16 %v4134, %v4130
        %v7063 = vpack.c.b16 %v4135, %v4131
        %v7064 = vpack.c.b16 %v4136, %v4132
        %v7065 = vpack.c.b16 %v4141, %v4137
        %v7066 = vpack.c.b16 %v4142, %v4138
        %v7067 = vpack.c.b16 %v4143, %v4139
        %v7068 = vpack.c.b16 %v4144, %v4140
        %v7069 = vpack.c.b16 %v4149, %v4145
        %v7070 = vpack.c.b16 %v4150, %v4146
        %v7071 = vpack.c.b16 %v4151, %v4147
        %v7072 = vpack.c.b16 %v4152, %v4148
        %v7073 = vpack.c.b16 %v4157, %v4153
        %v7074 = vpack.c.b16 %v4158, %v4154
        %v7075 = vpack.c.b16 %v4159, %v4155
        %v7076 = vpack.c.b16 %v4160, %v4156
        %v7077 = vpack.c.b16 %v4165, %v4161
        %v7078 = vpack.c.b16 %v4166, %v4162
        %v7079 = vpack.c.b16 %v4167, %v4163
        %v7080 = vpack.c.b16 %v4168, %v4164
        %v7081 = vpack.c.b16 %v4173, %v4169
        %v7082 = vpack.c.b16 %v4174, %v4170
        %v7083 = vpack.c.b16 %v4175, %v4171
        %v7084 = vpack.c.b16 %v4176, %v4172
        %v7085 = vpack.c.b16 %v4181, %v4177
        %v7086 = vpack.c.b16 %v4182, %v4178
        %v7087 = vpack.c.b16 %v4183, %v4179
        %v7088 = vpack.c.b16 %v4184, %v4180
        %v7089 = vpack.c.b16 %v4189, %v4185
        %v7090 = vpack.c.b16 %v4190, %v4186
        %v7091 = vpack.c.b16 %v4191, %v4187
        %v7092 = vpack.c.b16 %v4192, %v4188
        %v7093 = vpack.c.b16 %v4197, %v4193
        %v7094 = vpack.c.b16 %v4198, %v4194
        %v7095 = vpack.c.b16 %v4199, %v4195
        %v7096 = vpack.c.b16 %v4200, %v4196
        %v7097 = vpack.c.b16 %v4205, %v4201
        %v7098 = vpack.c.b16 %v4206, %v4202
        %v7099 = vpack.c.b16 %v4207, %v4203
        %v7100 = vpack.c.b16 %v4208, %v4204
        %v7101 = vpack.c.b16 %v4213, %v4209
        %v7102 = vpack.c.b16 %v4214, %v4210
        %v7103 = vpack.c.b16 %v4215, %v4211
        %v7104 = vpack.c.b16 %v4216, %v4212
        %v7105 = vpack.c.b16 %v4221, %v4217
        %v7106 = vpack.c.b16 %v4222, %v4218
        %v7107 = vpack.c.b16 %v4223, %v4219
        %v7108 = vpack.c.b16 %v4224, %v4220
        %v7109 = vpack.c.b16 %v4229, %v4225
        %v7110 = vpack.c.b16 %v4230, %v4226
        %v7111 = vpack.c.b16 %v4231, %v4227
        %v7112 = vpack.c.b16 %v4232, %v4228
        %v7113 = vpack.c.b16 %v4237, %v4233
        %v7114 = vpack.c.b16 %v4238, %v4234
        %v7115 = vpack.c.b16 %v4239, %v4235
        %v7116 = vpack.c.b16 %v4240, %v4236
        %v7117 = vpack.c.b16 %v4245, %v4241
        %v7118 = vpack.c.b16 %v4246, %v4242
        %v7119 = vpack.c.b16 %v4247, %v4243
        %v7120 = vpack.c.b16 %v4248, %v4244
        %v7121 = vpack.c.b16 %v4253, %v4249
        %v7122 = vpack.c.b16 %v4254, %v4250
        %v7123 = vpack.c.b16 %v4255, %v4251
        %v7124 = vpack.c.b16 %v4256, %v4252
        %v7125 = vpack.c.b16 %v4261, %v4257
        %v7126 = vpack.c.b16 %v4262, %v4258
        %v7127 = vpack.c.b16 %v4263, %v4259
        %v7128 = vpack.c.b16 %v4264, %v4260
        %v7129 = vpack.c.b16 %v4269, %v4265
        %v7130 = vpack.c.b16 %v4270, %v4266
        %v7131 = vpack.c.b16 %v4271, %v4267
        %v7132 = vpack.c.b16 %v4272, %v4268
        %v7133 = vpack.c.b16 %v4277, %v4273
        %v7134 = vpack.c.b16 %v4278, %v4274
        %v7135 = vpack.c.b16 %v4279, %v4275
        %v7136 = vpack.c.b16 %v4280, %v4276
        %v7137 = vpack.c.b16 %v4285, %v4281
        %v7138 = vpack.c.b16 %v4286, %v4282
        %v7139 = vpack.c.b16 %v4287, %v4283
        %v7140 = vpack.c.b16 %v4288, %v4284
        %v7141 = vpack.c.b16 %v4293, %v4289
        %v7142 = vpack.c.b16 %v4294, %v4290
        %v7143 = vpack.c.b16 %v4295, %v4291
        %v7144 = vpack.c.b16 %v4296, %v4292
        %v7145 = vpack.c.b16 %v4301, %v4297
        %v7146 = vpack.c.b16 %v4302, %v4298
        %v7147 = vpack.c.b16 %v4303, %v4299
        %v7148 = vpack.c.b16 %v4304, %v4300
        %v7149 = vpack.c.b16 %v4309, %v4305
        %v7150 = vpack.c.b16 %v4310, %v4306
        %v7151 = vpack.c.b16 %v4311, %v4307
        %v7152 = vpack.c.b16 %v4312, %v4308
        %v7153 = vpack.c.b16 %v4317, %v4313
        %v7154 = vpack.c.b16 %v4318, %v4314
        %v7155 = vpack.c.b16 %v4319, %v4315
        %v7156 = vpack.c.b16 %v4320, %v4316
        %v7157 = vpack.c.b16 %v4325, %v4321
        %v7158 = vpack.c.b16 %v4326, %v4322
        %v7159 = vpack.c.b16 %v4327, %v4323
        %v7160 = vpack.c.b16 %v4328, %v4324
        %v7161 = vpack.c.b16 %v4333, %v4329
        %v7162 = vpack.c.b16 %v4334, %v4330
        %v7163 = vpack.c.b16 %v4335, %v4331
        %v7164 = vpack.c.b16 %v4336, %v4332
        %v7165 = vpack.c.b16 %v4341, %v4337
        %v7166 = vpack.c.b16 %v4342, %v4338
        %v7167 = vpack.c.b16 %v4343, %v4339
        %v7168 = vpack.c.b16 %v4344, %v4340
        %v7169 = vpack.c.b16 %v4349, %v4345
        %v7170 = vpack.c.b16 %v4350, %v4346
        %v7171 = vpack.c.b16 %v4351, %v4347
        %v7172 = vpack.c.b16 %v4352, %v4348
        %v7173 = vpack.c.b16 %v4357, %v4353
        %v7174 = vpack.c.b16 %v4358, %v4354
        %v7175 = vpack.c.b16 %v4359, %v4355
        %v7176 = vpack.c.b16 %v4360, %v4356
        %v7177 = vpack.c.b16 %v4365, %v4361
        %v7178 = vpack.c.b16 %v4366, %v4362
        %v7179 = vpack.c.b16 %v4367, %v4363
        %v7180 = vpack.c.b16 %v4368, %v4364
        %v7181 = vpack.c.b16 %v4373, %v4369
        %v7182 = vpack.c.b16 %v4374, %v4370
        %v7183 = vpack.c.b16 %v4375, %v4371
        %v7184 = vpack.c.b16 %v4376, %v4372
        %v7185 = vpack.c.b16 %v4381, %v4377
        %v7186 = vpack.c.b16 %v4382, %v4378
        %v7187 = vpack.c.b16 %v4383, %v4379
        %v7188 = vpack.c.b16 %v4384, %v4380
        %v7189 = vpack.c.b16 %v4389, %v4385
        %v7190 = vpack.c.b16 %v4390, %v4386
        %v7191 = vpack.c.b16 %v4391, %v4387
        %v7192 = vpack.c.b16 %v4392, %v4388
        %v7193 = vpack.c.b16 %v4397, %v4393
        %v7194 = vpack.c.b16 %v4398, %v4394
        %v7195 = vpack.c.b16 %v4399, %v4395
        %v7196 = vpack.c.b16 %v4400, %v4396
        %v7197 = vpack.c.b16 %v4405, %v4401
        %v7198 = vpack.c.b16 %v4406, %v4402
        %v7199 = vpack.c.b16 %v4407, %v4403
        %v7200 = vpack.c.b16 %v4408, %v4404
        %v7201 = vpack.c.b16 %v4413, %v4409
        %v7202 = vpack.c.b16 %v4414, %v4410
        %v7203 = vpack.c.b16 %v4415, %v4411
        %v7204 = vpack.c.b16 %v4416, %v4412
        %v7205 = vpack.c.b16 %v4421, %v4417
        %v7206 = vpack.c.b16 %v4422, %v4418
        %v7207 = vpack.c.b16 %v4423, %v4419
        %v7208 = vpack.c.b16 %v4424, %v4420
        %v7209 = vpack.c.b16 %v4429, %v4425
        %v7210 = vpack.c.b16 %v4430, %v4426
        %v7211 = vpack.c.b16 %v4431, %v4427
        %v7212 = vpack.c.b16 %v4432, %v4428
        %v7213 = vpack.c.b16 %v4437, %v4433
        %v7214 = vpack.c.b16 %v4438, %v4434
        %v7215 = vpack.c.b16 %v4439, %v4435
        %v7216 = vpack.c.b16 %v4440, %v4436
        %v7217 = vpack.c.b16 %v4445, %v4441
        %v7218 = vpack.c.b16 %v4446, %v4442
        %v7219 = vpack.c.b16 %v4447, %v4443
        %v7220 = vpack.c.b16 %v4448, %v4444
        %v7221 = vpack.c.b16 %v4453, %v4449
        %v7222 = vpack.c.b16 %v4454, %v4450
        %v7223 = vpack.c.b16 %v4455, %v4451
        %v7224 = vpack.c.b16 %v4456, %v4452
        %v7225 = vpack.c.b16 %v4461, %v4457
        %v7226 = vpack.c.b16 %v4462, %v4458
        %v7227 = vpack.c.b16 %v4463, %v4459
        %v7228 = vpack.c.b16 %v4464, %v4460
        %v7229 = vpack.c.b16 %v4469, %v4465
        %v7230 = vpack.c.b16 %v4470, %v4466
        %v7231 = vpack.c.b16 %v4471, %v4467
        %v7232 = vpack.c.b16 %v4472, %v4468
        %v7233 = vpack.c.b16 %v4477, %v4473
        %v7234 = vpack.c.b16 %v4478, %v4474
        %v7235 = vpack.c.b16 %v4479, %v4475
        %v7236 = vpack.c.b16 %v4480, %v4476
        %v7237 = vpack.c.b16 %v4485, %v4481
        %v7238 = vpack.c.b16 %v4486, %v4482
        %v7239 = vpack.c.b16 %v4487, %v4483
        %v7240 = vpack.c.b16 %v4488, %v4484
        %v7241 = vpack.c.b16 %v4493, %v4489
        %v7242 = vpack.c.b16 %v4494, %v4490
        %v7243 = vpack.c.b16 %v4495, %v4491
        %v7244 = vpack.c.b16 %v4496, %v4492
        %v7245 = vpack.c.b16 %v4501, %v4497
        %v7246 = vpack.c.b16 %v4502, %v4498
        %v7247 = vpack.c.b16 %v4503, %v4499
        %v7248 = vpack.c.b16 %v4504, %v4500
        %v7249 = vpack.c.b16 %v4509, %v4505
        %v7250 = vpack.c.b16 %v4510, %v4506
        %v7251 = vpack.c.b16 %v4511, %v4507
        %v7252 = vpack.c.b16 %v4512, %v4508
        %v7253 = vpack.c.b16 %v4517, %v4513
        %v7254 = vpack.c.b16 %v4518, %v4514
        %v7255 = vpack.c.b16 %v4519, %v4515
        %v7256 = vpack.c.b16 %v4520, %v4516
        %v7257 = vpack.c.b16 %v4525, %v4521
        %v7258 = vpack.c.b16 %v4526, %v4522
        %v7259 = vpack.c.b16 %v4527, %v4523
        %v7260 = vpack.c.b16 %v4528, %v4524
        %v7261 = vpack.c.b16 %v4533, %v4529
        %v7262 = vpack.c.b16 %v4534, %v4530
        %v7263 = vpack.c.b16 %v4535, %v4531
        %v7264 = vpack.c.b16 %v4536, %v4532
        %v7265 = vpack.c.b16 %v4541, %v4537
        %v7266 = vpack.c.b16 %v4542, %v4538
        %v7267 = vpack.c.b16 %v4543, %v4539
        %v7268 = vpack.c.b16 %v4544, %v4540
        %v7269 = vpack.c.b16 %v4549, %v4545
        %v7270 = vpack.c.b16 %v4550, %v4546
        %v7271 = vpack.c.b16 %v4551, %v4547
        %v7272 = vpack.c.b16 %v4552, %v4548
        %v7273 = vpack.c.b16 %v4557, %v4553
        %v7274 = vpack.c.b16 %v4558, %v4554
        %v7275 = vpack.c.b16 %v4559, %v4555
        %v7276 = vpack.c.b16 %v4560, %v4556
        %v7277 = vpack.c.b16 %v4565, %v4561
        %v7278 = vpack.c.b16 %v4566, %v4562
        %v7279 = vpack.c.b16 %v4567, %v4563
        %v7280 = vpack.c.b16 %v4568, %v4564
        %v7281 = vpack.c.b16 %v4573, %v4569
        %v7282 = vpack.c.b16 %v4574, %v4570
        %v7283 = vpack.c.b16 %v4575, %v4571
        %v7284 = vpack.c.b16 %v4576, %v4572
        %v7285 = vpack.c.b16 %v4581, %v4577
        %v7286 = vpack.c.b16 %v4582, %v4578
        %v7287 = vpack.c.b16 %v4583, %v4579
        %v7288 = vpack.c.b16 %v4584, %v4580
        %v7289 = vpack.c.b16 %v4589, %v4585
        %v7290 = vpack.c.b16 %v4590, %v4586
        %v7291 = vpack.c.b16 %v4591, %v4587
        %v7292 = vpack.c.b16 %v4592, %v4588
        %v7293 = vpack.c.b16 %v4597, %v4593
        %v7294 = vpack.c.b16 %v4598, %v4594
        %v7295 = vpack.c.b16 %v4599, %v4595
        %v7296 = vpack.c.b16 %v4600, %v4596
        %v7297 = vpack.c.b16 %v4605, %v4601
        %v7298 = vpack.c.b16 %v4606, %v4602
        %v7299 = vpack.c.b16 %v4607, %v4603
        %v7300 = vpack.c.b16 %v4608, %v4604
        %v7301 = vpack.c.b16 %v4613, %v4609
        %v7302 = vpack.c.b16 %v4614, %v4610
        %v7303 = vpack.c.b16 %v4615, %v4611
        %v7304 = vpack.c.b16 %v4616, %v4612
        %v7305 = vpack.c.b16 %v4621, %v4617
        %v7306 = vpack.c.b16 %v4622, %v4618
        %v7307 = vpack.c.b16 %v4623, %v4619
        %v7308 = vpack.c.b16 %v4624, %v4620
        %v7309 = vpack.c.b16 %v4629, %v4625
        %v7310 = vpack.c.b16 %v4630, %v4626
        %v7311 = vpack.c.b16 %v4631, %v4627
        %v7312 = vpack.c.b16 %v4632, %v4628
        %v7313 = vpack.c.b16 %v4637, %v4633
        %v7314 = vpack.c.b16 %v4638, %v4634
        %v7315 = vpack.c.b16 %v4639, %v4635
        %v7316 = vpack.c.b16 %v4640, %v4636
        %v7317 = vpack.c.b16 %v4645, %v4641
        %v7318 = vpack.c.b16 %v4646, %v4642
        %v7319 = vpack.c.b16 %v4647, %v4643
        %v7320 = vpack.c.b16 %v4648, %v4644
        %v7321 = vpack.c.b16 %v4653, %v4649
        %v7322 = vpack.c.b16 %v4654, %v4650
        %v7323 = vpack.c.b16 %v4655, %v4651
        %v7324 = vpack.c.b16 %v4656, %v4652
        %v7325 = vpack.c.b16 %v4661, %v4657
        %v7326 = vpack.c.b16 %v4662, %v4658
        %v7327 = vpack.c.b16 %v4663, %v4659
        %v7328 = vpack.c.b16 %v4664, %v4660
        %v7329 = vpack.c.b16 %v4669, %v4665
        %v7330 = vpack.c.b16 %v4670, %v4666
        %v7331 = vpack.c.b16 %v4671, %v4667
        %v7332 = vpack.c.b16 %v4672, %v4668
        %v7333 = vpack.c.b16 %v4677, %v4673
        %v7334 = vpack.c.b16 %v4678, %v4674
        %v7335 = vpack.c.b16 %v4679, %v4675
        %v7336 = vpack.c.b16 %v4680, %v4676
        %v7337 = vpack.c.b16 %v4685, %v4681
        %v7338 = vpack.c.b16 %v4686, %v4682
        %v7339 = vpack.c.b16 %v4687, %v4683
        %v7340 = vpack.c.b16 %v4688, %v4684
        %v7341 = vpack.c.b16 %v4693, %v4689
        %v7342 = vpack.c.b16 %v4694, %v4690
        %v7343 = vpack.c.b16 %v4695, %v4691
        %v7344 = vpack.c.b16 %v4696, %v4692
        %v7345 = vpack.c.b16 %v4701, %v4697
        %v7346 = vpack.c.b16 %v4702, %v4698
        %v7347 = vpack.c.b16 %v4703, %v4699
        %v7348 = vpack.c.b16 %v4704, %v4700
        %v7349 = vpack.c.b16 %v4709, %v4705
        %v7350 = vpack.c.b16 %v4710, %v4706
        %v7351 = vpack.c.b16 %v4711, %v4707
        %v7352 = vpack.c.b16 %v4712, %v4708
        %v7353 = vpack.c.b16 %v4717, %v4713
        %v7354 = vpack.c.b16 %v4718, %v4714
        %v7355 = vpack.c.b16 %v4719, %v4715
        %v7356 = vpack.c.b16 %v4720, %v4716
        %v7357 = vpack.c.b16 %v4725, %v4721
        %v7358 = vpack.c.b16 %v4726, %v4722
        %v7359 = vpack.c.b16 %v4727, %v4723
        %v7360 = vpack.c.b16 %v4728, %v4724
        %v7361 = vpack.c.b16 %v4733, %v4729
        %v7362 = vpack.c.b16 %v4734, %v4730
        %v7363 = vpack.c.b16 %v4735, %v4731
        %v7364 = vpack.c.b16 %v4736, %v4732
        %v7365 = vpack.c.b16 %v4741, %v4737
        %v7366 = vpack.c.b16 %v4742, %v4738
        %v7367 = vpack.c.b16 %v4743, %v4739
        %v7368 = vpack.c.b16 %v4744, %v4740
        %v7369 = vpack.c.b16 %v4749, %v4745
        %v7370 = vpack.c.b16 %v4750, %v4746
        %v7371 = vpack.c.b16 %v4751, %v4747
        %v7372 = vpack.c.b16 %v4752, %v4748
        %v7373 = vpack.c.b16 %v4757, %v4753
        %v7374 = vpack.c.b16 %v4758, %v4754
        %v7375 = vpack.c.b16 %v4759, %v4755
        %v7376 = vpack.c.b16 %v4760, %v4756
        %v7377 = vpack.c.b16 %v4765, %v4761
        %v7378 = vpack.c.b16 %v4766, %v4762
        %v7379 = vpack.c.b16 %v4767, %v4763
        %v7380 = vpack.c.b16 %v4768, %v4764
        %v7381 = vpack.c.b16 %v4773, %v4769
        %v7382 = vpack.c.b16 %v4774, %v4770
        %v7383 = vpack.c.b16 %v4775, %v4771
        %v7384 = vpack.c.b16 %v4776, %v4772
        %v7385 = vpack.c.b16 %v4781, %v4777
        %v7386 = vpack.c.b16 %v4782, %v4778
        %v7387 = vpack.c.b16 %v4783, %v4779
        %v7388 = vpack.c.b16 %v4784, %v4780
        %v7389 = vpack.c.b16 %v4789, %v4785
        %v7390 = vpack.c.b16 %v4790, %v4786
        %v7391 = vpack.c.b16 %v4791, %v4787
        %v7392 = vpack.c.b16 %v4792, %v4788
        %v7393 = vpack.c.b16 %v4797, %v4793
        %v7394 = vpack.c.b16 %v4798, %v4794
        %v7395 = vpack.c.b16 %v4799, %v4795
        %v7396 = vpack.c.b16 %v4800, %v4796
        %v7397 = vpack.c.b16 %v4805, %v4801
        %v7398 = vpack.c.b16 %v4806, %v4802
        %v7399 = vpack.c.b16 %v4807, %v4803
        %v7400 = vpack.c.b16 %v4808, %v4804
        %v7401 = vpack.c.b16 %v4813, %v4809
        %v7402 = vpack.c.b16 %v4814, %v4810
        %v7403 = vpack.c.b16 %v4815, %v4811
        %v7404 = vpack.c.b16 %v4816, %v4812
        %v7405 = vpack.c.b16 %v4821, %v4817
        %v7406 = vpack.c.b16 %v4822, %v4818
        %v7407 = vpack.c.b16 %v4823, %v4819
        %v7408 = vpack.c.b16 %v4824, %v4820
        %v7409 = vpack.c.b16 %v4829, %v4825
        %v7410 = vpack.c.b16 %v4830, %v4826
        %v7411 = vpack.c.b16 %v4831, %v4827
        %v7412 = vpack.c.b16 %v4832, %v4828
        %v7413 = vpack.c.b16 %v4837, %v4833
        %v7414 = vpack.c.b16 %v4838, %v4834
        %v7415 = vpack.c.b16 %v4839, %v4835
        %v7416 = vpack.c.b16 %v4840, %v4836
        %v7417 = vpack.c.b16 %v4845, %v4841
        %v7418 = vpack.c.b16 %v4846, %v4842
        %v7419 = vpack.c.b16 %v4847, %v4843
        %v7420 = vpack.c.b16 %v4848, %v4844
        %v7421 = vpack.c.b16 %v4853, %v4849
        %v7422 = vpack.c.b16 %v4854, %v4850
        %v7423 = vpack.c.b16 %v4855, %v4851
        %v7424 = vpack.c.b16 %v4856, %v4852
        %v7425 = vpack.c.b16 %v4861, %v4857
        %v7426 = vpack.c.b16 %v4862, %v4858
        %v7427 = vpack.c.b16 %v4863, %v4859
        %v7428 = vpack.c.b16 %v4864, %v4860
        %v7429 = vpack.c.b16 %v4869, %v4865
        %v7430 = vpack.c.b16 %v4870, %v4866
        %v7431 = vpack.c.b16 %v4871, %v4867
        %v7432 = vpack.c.b16 %v4872, %v4868
        %v7433 = vpack.c.b16 %v4877, %v4873
        %v7434 = vpack.c.b16 %v4878, %v4874
        %v7435 = vpack.c.b16 %v4879, %v4875
        %v7436 = vpack.c.b16 %v4880, %v4876
        %v7437 = vpack.c.b16 %v4885, %v4881
        %v7438 = vpack.c.b16 %v4886, %v4882
        %v7439 = vpack.c.b16 %v4887, %v4883
        %v7440 = vpack.c.b16 %v4888, %v4884
        %v7441 = vpack.c.b16 %v4893, %v4889
        %v7442 = vpack.c.b16 %v4894, %v4890
        %v7443 = vpack.c.b16 %v4895, %v4891
        %v7444 = vpack.c.b16 %v4896, %v4892
        %v7445 = vpack.c.b16 %v4901, %v4897
        %v7446 = vpack.c.b16 %v4902, %v4898
        %v7447 = vpack.c.b16 %v4903, %v4899
        %v7448 = vpack.c.b16 %v4904, %v4900
        %v7449 = vpack.c.b16 %v4909, %v4905
        %v7450 = vpack.c.b16 %v4910, %v4906
        %v7451 = vpack.c.b16 %v4911, %v4907
        %v7452 = vpack.c.b16 %v4912, %v4908
        %v7453 = vpack.c.b16 %v4917, %v4913
        %v7454 = vpack.c.b16 %v4918, %v4914
        %v7455 = vpack.c.b16 %v4919, %v4915
        %v7456 = vpack.c.b16 %v4920, %v4916
        %v7457 = vpack.c.b16 %v4925, %v4921
        %v7458 = vpack.c.b16 %v4926, %v4922
        %v7459 = vpack.c.b16 %v4927, %v4923
        %v7460 = vpack.c.b16 %v4928, %v4924
        %v7461 = vpack.c.b16 %v4933, %v4929
        %v7462 = vpack.c.b16 %v4934, %v4930
        %v7463 = vpack.c.b16 %v4935, %v4931
        %v7464 = vpack.c.b16 %v4936, %v4932
        %v7465 = vpack.c.b16 %v4941, %v4937
        %v7466 = vpack.c.b16 %v4942, %v4938
        %v7467 = vpack.c.b16 %v4943, %v4939
        %v7468 = vpack.c.b16 %v4944, %v4940
        %v7469 = vpack.c.b16 %v4949, %v4945
        %v7470 = vpack.c.b16 %v4950, %v4946
        %v7471 = vpack.c.b16 %v4951, %v4947
        %v7472 = vpack.c.b16 %v4952, %v4948
        %v7473 = vpack.c.b16 %v4957, %v4953
        %v7474 = vpack.c.b16 %v4958, %v4954
        %v7475 = vpack.c.b16 %v4959, %v4955
        %v7476 = vpack.c.b16 %v4960, %v4956
        %v7477 = vpack.c.b16 %v4965, %v4961
        %v7478 = vpack.c.b16 %v4966, %v4962
        %v7479 = vpack.c.b16 %v4967, %v4963
        %v7480 = vpack.c.b16 %v4968, %v4964
        %v7481 = vpack.c.b16 %v4973, %v4969
        %v7482 = vpack.c.b16 %v4974, %v4970
        %v7483 = vpack.c.b16 %v4975, %v4971
        %v7484 = vpack.c.b16 %v4976, %v4972
        %v7485 = vpack.c.b16 %v4981, %v4977
        %v7486 = vpack.c.b16 %v4982, %v4978
        %v7487 = vpack.c.b16 %v4983, %v4979
        %v7488 = vpack.c.b16 %v4984, %v4980
        %v7489 = vpack.c.b16 %v4989, %v4985
        %v7490 = vpack.c.b16 %v4990, %v4986
        %v7491 = vpack.c.b16 %v4991, %v4987
        %v7492 = vpack.c.b16 %v4992, %v4988
        %v7493 = vpack.c.b16 %v4997, %v4993
        %v7494 = vpack.c.b16 %v4998, %v4994
        %v7495 = vpack.c.b16 %v4999, %v4995
        %v7496 = vpack.c.b16 %v5000, %v4996
        %v7497 = vpack.c.b16 %v5005, %v5001
        %v7498 = vpack.c.b16 %v5006, %v5002
        %v7499 = vpack.c.b16 %v5007, %v5003
        %v7500 = vpack.c.b16 %v5008, %v5004
        %v7501 = vpack.c.b16 %v5013, %v5009
        %v7502 = vpack.c.b16 %v5014, %v5010
        %v7503 = vpack.c.b16 %v5015, %v5011
        %v7504 = vpack.c.b16 %v5016, %v5012
        %v7505 = vpack.c.b16 %v5021, %v5017
        %v7506 = vpack.c.b16 %v5022, %v5018
        %v7507 = vpack.c.b16 %v5023, %v5019
        %v7508 = vpack.c.b16 %v5024, %v5020
        %v7509 = vpack.c.b16 %v5029, %v5025
        %v7510 = vpack.c.b16 %v5030, %v5026
        %v7511 = vpack.c.b16 %v5031, %v5027
        %v7512 = vpack.c.b16 %v5032, %v5028
        %v7513 = vpack.c.b16 %v5037, %v5033
        %v7514 = vpack.c.b16 %v5038, %v5034
        %v7515 = vpack.c.b16 %v5039, %v5035
        %v7516 = vpack.c.b16 %v5040, %v5036
        %v7517 = vpack.c.b16 %v5045, %v5041
        %v7518 = vpack.c.b16 %v5046, %v5042
        %v7519 = vpack.c.b16 %v5047, %v5043
        %v7520 = vpack.c.b16 %v5048, %v5044
        %v7521 = vpack.c.b16 %v5053, %v5049
        %v7522 = vpack.c.b16 %v5054, %v5050
        %v7523 = vpack.c.b16 %v5055, %v5051
        %v7524 = vpack.c.b16 %v5056, %v5052
        %v7525 = vpack.c.b16 %v5061, %v5057
        %v7526 = vpack.c.b16 %v5062, %v5058
        %v7527 = vpack.c.b16 %v5063, %v5059
        %v7528 = vpack.c.b16 %v5064, %v5060
        %v7529 = vpack.c.b16 %v5069, %v5065
        %v7530 = vpack.c.b16 %v5070, %v5066
        %v7531 = vpack.c.b16 %v5071, %v5067
        %v7532 = vpack.c.b16 %v5072, %v5068
        %v7533 = vpack.c.b16 %v5077, %v5073
        %v7534 = vpack.c.b16 %v5078, %v5074
        %v7535 = vpack.c.b16 %v5079, %v5075
        %v7536 = vpack.c.b16 %v5080, %v5076
        %v7537 = vpack.c.b16 %v5085, %v5081
        %v7538 = vpack.c.b16 %v5086, %v5082
        %v7539 = vpack.c.b16 %v5087, %v5083
        %v7540 = vpack.c.b16 %v5088, %v5084
        %v7541 = vpack.c.b16 %v5093, %v5089
        %v7542 = vpack.c.b16 %v5094, %v5090
        %v7543 = vpack.c.b16 %v5095, %v5091
        %v7544 = vpack.c.b16 %v5096, %v5092
        %v7545 = vpack.c.b16 %v5101, %v5097
        %v7546 = vpack.c.b16 %v5102, %v5098
        %v7547 = vpack.c.b16 %v5103, %v5099
        %v7548 = vpack.c.b16 %v5104, %v5100
        %v7549 = vpack.c.b16 %v5109, %v5105
        %v7550 = vpack.c.b16 %v5110, %v5106
        %v7551 = vpack.c.b16 %v5111, %v5107
        %v7552 = vpack.c.b16 %v5112, %v5108
        %v7553 = vpack.c.b16 %v5117, %v5113
        %v7554 = vpack.c.b16 %v5118, %v5114
        %v7555 = vpack.c.b16 %v5119, %v5115
        %v7556 = vpack.c.b16 %v5120, %v5116
        %v7557 = vpack.c.b16 %v5125, %v5121
        %v7558 = vpack.c.b16 %v5126, %v5122
        %v7559 = vpack.c.b16 %v5127, %v5123
        %v7560 = vpack.c.b16 %v5128, %v5124
        %v7561 = vpack.c.b16 %v5133, %v5129
        %v7562 = vpack.c.b16 %v5134, %v5130
        %v7563 = vpack.c.b16 %v5135, %v5131
        %v7564 = vpack.c.b16 %v5136, %v5132
        %v7565 = vpack.c.b16 %v5141, %v5137
        %v7566 = vpack.c.b16 %v5142, %v5138
        %v7567 = vpack.c.b16 %v5143, %v5139
        %v7568 = vpack.c.b16 %v5144, %v5140
        %v7569 = vpack.c.b16 %v5149, %v5145
        %v7570 = vpack.c.b16 %v5150, %v5146
        %v7571 = vpack.c.b16 %v5151, %v5147
        %v7572 = vpack.c.b16 %v5152, %v5148
        %v7573 = vpack.c.b16 %v5157, %v5153
        %v7574 = vpack.c.b16 %v5158, %v5154
        %v7575 = vpack.c.b16 %v5159, %v5155
        %v7576 = vpack.c.b16 %v5160, %v5156
        %v7577 = vpack.c.b16 %v5165, %v5161
        %v7578 = vpack.c.b16 %v5166, %v5162
        %v7579 = vpack.c.b16 %v5167, %v5163
        %v7580 = vpack.c.b16 %v5168, %v5164
        %v7581 = vpack.c.b16 %v5173, %v5169
        %v7582 = vpack.c.b16 %v5174, %v5170
        %v7583 = vpack.c.b16 %v5175, %v5171
        %v7584 = vpack.c.b16 %v5176, %v5172
        %v7585 = vpack.c.b16 %v5181, %v5177
        %v7586 = vpack.c.b16 %v5182, %v5178
        %v7587 = vpack.c.b16 %v5183, %v5179
        %v7588 = vpack.c.b16 %v5184, %v5180
        %v7589 = vpack.c.b16 %v5189, %v5185
        %v7590 = vpack.c.b16 %v5190, %v5186
        %v7591 = vpack.c.b16 %v5191, %v5187
        %v7592 = vpack.c.b16 %v5192, %v5188
        %v7593 = vpack.c.b16 %v5197, %v5193
        %v7594 = vpack.c.b16 %v5198, %v5194
        %v7595 = vpack.c.b16 %v5199, %v5195
        %v7596 = vpack.c.b16 %v5200, %v5196
        %v7597 = vpack.c.b16 %v5205, %v5201
        %v7598 = vpack.c.b16 %v5206, %v5202
        %v7599 = vpack.c.b16 %v5207, %v5203
        %v7600 = vpack.c.b16 %v5208, %v5204
        %v7601 = vpack.c.b16 %v5213, %v5209
        %v7602 = vpack.c.b16 %v5214, %v5210
        %v7603 = vpack.c.b16 %v5215, %v5211
        %v7604 = vpack.c.b16 %v5216, %v5212
        %v7605 = vpack.c.b16 %v5221, %v5217
        %v7606 = vpack.c.b16 %v5222, %v5218
        %v7607 = vpack.c.b16 %v5223, %v5219
        %v7608 = vpack.c.b16 %v5224, %v5220
        %v7609 = vpack.c.b16 %v5229, %v5225
        %v7610 = vpack.c.b16 %v5230, %v5226
        %v7611 = vpack.c.b16 %v5231, %v5227
        %v7612 = vpack.c.b16 %v5232, %v5228
        %v7613 = vpack.c.b16 %v5237, %v5233
        %v7614 = vpack.c.b16 %v5238, %v5234
        %v7615 = vpack.c.b16 %v5239, %v5235
        %v7616 = vpack.c.b16 %v5240, %v5236
        %v7617 = vpack.c.b16 %v5245, %v5241
        %v7618 = vpack.c.b16 %v5246, %v5242
        %v7619 = vpack.c.b16 %v5247, %v5243
        %v7620 = vpack.c.b16 %v5248, %v5244
        %v7621 = vpack.c.b16 %v5253, %v5249
        %v7622 = vpack.c.b16 %v5254, %v5250
        %v7623 = vpack.c.b16 %v5255, %v5251
        %v7624 = vpack.c.b16 %v5256, %v5252
        %v7625 = vpack.c.b16 %v5261, %v5257
        %v7626 = vpack.c.b16 %v5262, %v5258
        %v7627 = vpack.c.b16 %v5263, %v5259
        %v7628 = vpack.c.b16 %v5264, %v5260
        %v7629 = vpack.c.b16 %v5269, %v5265
        %v7630 = vpack.c.b16 %v5270, %v5266
        %v7631 = vpack.c.b16 %v5271, %v5267
        %v7632 = vpack.c.b16 %v5272, %v5268
        %v7633 = vpack.c.b16 %v5277, %v5273
        %v7634 = vpack.c.b16 %v5278, %v5274
        %v7635 = vpack.c.b16 %v5279, %v5275
        %v7636 = vpack.c.b16 %v5280, %v5276
        %v7637 = vpack.c.b16 %v5285, %v5281
        %v7638 = vpack.c.b16 %v5286, %v5282
        %v7639 = vpack.c.b16 %v5287, %v5283
        %v7640 = vpack.c.b16 %v5288, %v5284
        %v7641 = vpack.c.b16 %v5293, %v5289
        %v7642 = vpack.c.b16 %v5294, %v5290
        %v7643 = vpack.c.b16 %v5295, %v5291
        %v7644 = vpack.c.b16 %v5296, %v5292
        %v7645 = vpack.c.b16 %v5301, %v5297
        %v7646 = vpack.c.b16 %v5302, %v5298
        %v7647 = vpack.c.b16 %v5303, %v5299
        %v7648 = vpack.c.b16 %v5304, %v5300
        %v7649 = vpack.c.b16 %v5309, %v5305
        %v7650 = vpack.c.b16 %v5310, %v5306
        %v7651 = vpack.c.b16 %v5311, %v5307
        %v7652 = vpack.c.b16 %v5312, %v5308
        %v7653 = vpack.c.b16 %v5317, %v5313
        %v7654 = vpack.c.b16 %v5318, %v5314
        %v7655 = vpack.c.b16 %v5319, %v5315
        %v7656 = vpack.c.b16 %v5320, %v5316
        %v7657 = vpack.c.b16 %v5325, %v5321
        %v7658 = vpack.c.b16 %v5326, %v5322
        %v7659 = vpack.c.b16 %v5327, %v5323
        %v7660 = vpack.c.b16 %v5328, %v5324
        %v7661 = vpack.c.b16 %v5333, %v5329
        %v7662 = vpack.c.b16 %v5334, %v5330
        %v7663 = vpack.c.b16 %v5335, %v5331
        %v7664 = vpack.c.b16 %v5336, %v5332
        %v7665 = vpack.c.b16 %v5341, %v5337
        %v7666 = vpack.c.b16 %v5342, %v5338
        %v7667 = vpack.c.b16 %v5343, %v5339
        %v7668 = vpack.c.b16 %v5344, %v5340
        %v7669 = vpack.c.b16 %v5349, %v5345
        %v7670 = vpack.c.b16 %v5350, %v5346
        %v7671 = vpack.c.b16 %v5351, %v5347
        %v7672 = vpack.c.b16 %v5352, %v5348
        %v7673 = vpack.c.b16 %v5357, %v5353
        %v7674 = vpack.c.b16 %v5358, %v5354
        %v7675 = vpack.c.b16 %v5359, %v5355
        %v7676 = vpack.c.b16 %v5360, %v5356
        %v7677 = vpack.c.b16 %v5365, %v5361
        %v7678 = vpack.c.b16 %v5366, %v5362
        %v7679 = vpack.c.b16 %v5367, %v5363
        %v7680 = vpack.c.b16 %v5368, %v5364
        %v7681 = vpack.c.b16 %v5373, %v5369
        %v7682 = vpack.c.b16 %v5374, %v5370
        %v7683 = vpack.c.b16 %v5375, %v5371
        %v7684 = vpack.c.b16 %v5376, %v5372
        %v7685 = vpack.c.b16 %v5381, %v5377
        %v7686 = vpack.c.b16 %v5382, %v5378
        %v7687 = vpack.c.b16 %v5383, %v5379
        %v7688 = vpack.c.b16 %v5384, %v5380
        %v7689 = vpack.c.b16 %v5389, %v5385
        %v7690 = vpack.c.b16 %v5390, %v5386
        %v7691 = vpack.c.b16 %v5391, %v5387
        %v7692 = vpack.c.b16 %v5392, %v5388
        %v7693 = vpack.c.b16 %v5397, %v5393
        %v7694 = vpack.c.b16 %v5398, %v5394
        %v7695 = vpack.c.b16 %v5399, %v5395
        %v7696 = vpack.c.b16 %v5400, %v5396
        %v7697 = vpack.c.b16 %v5405, %v5401
        %v7698 = vpack.c.b16 %v5406, %v5402
        %v7699 = vpack.c.b16 %v5407, %v5403
        %v7700 = vpack.c.b16 %v5408, %v5404
        %v7701 = vpack.c.b16 %v5413, %v5409
        %v7702 = vpack.c.b16 %v5414, %v5410
        %v7703 = vpack.c.b16 %v5415, %v5411
        %v7704 = vpack.c.b16 %v5416, %v5412
        %v7705 = vpack.c.b16 %v5421, %v5417
        %v7706 = vpack.c.b16 %v5422, %v5418
        %v7707 = vpack.c.b16 %v5423, %v5419
        %v7708 = vpack.c.b16 %v5424, %v5420
        %v7709 = vpack.c.b16 %v5429, %v5425
        %v7710 = vpack.c.b16 %v5430, %v5426
        %v7711 = vpack.c.b16 %v5431, %v5427
        %v7712 = vpack.c.b16 %v5432, %v5428
        %v7713 = vpack.c.b16 %v5437, %v5433
        %v7714 = vpack.c.b16 %v5438, %v5434
        %v7715 = vpack.c.b16 %v5439, %v5435
        %v7716 = vpack.c.b16 %v5440, %v5436
        %v7717 = vpack.c.b16 %v5445, %v5441
        %v7718 = vpack.c.b16 %v5446, %v5442
        %v7719 = vpack.c.b16 %v5447, %v5443
        %v7720 = vpack.c.b16 %v5448, %v5444
        %v7721 = vpack.c.b16 %v5453, %v5449
        %v7722 = vpack.c.b16 %v5454, %v5450
        %v7723 = vpack.c.b16 %v5455, %v5451
        %v7724 = vpack.c.b16 %v5456, %v5452
        %v7725 = vpack.c.b16 %v5461, %v5457
        %v7726 = vpack.c.b16 %v5462, %v5458
        %v7727 = vpack.c.b16 %v5463, %v5459
        %v7728 = vpack.c.b16 %v5464, %v5460
        %v7729 = vpack.c.b16 %v5469, %v5465
        %v7730 = vpack.c.b16 %v5470, %v5466
        %v7731 = vpack.c.b16 %v5471, %v5467
        %v7732 = vpack.c.b16 %v5472, %v5468
        %v7733 = vpack.c.b16 %v5477, %v5473
        %v7734 = vpack.c.b16 %v5478, %v5474
        %v7735 = vpack.c.b16 %v5479, %v5475
        %v7736 = vpack.c.b16 %v5480, %v5476
        %v7737 = vpack.c.b16 %v5485, %v5481
        %v7738 = vpack.c.b16 %v5486, %v5482
        %v7739 = vpack.c.b16 %v5487, %v5483
        %v7740 = vpack.c.b16 %v5488, %v5484
        %v7741 = vpack.c.b16 %v5493, %v5489
        %v7742 = vpack.c.b16 %v5494, %v5490
        %v7743 = vpack.c.b16 %v5495, %v5491
        %v7744 = vpack.c.b16 %v5496, %v5492
        %v7745 = vpack.c.b16 %v5501, %v5497
        %v7746 = vpack.c.b16 %v5502, %v5498
        %v7747 = vpack.c.b16 %v5503, %v5499
        %v7748 = vpack.c.b16 %v5504, %v5500
        %v7749 = vpack.c.b16 %v5509, %v5505
        %v7750 = vpack.c.b16 %v5510, %v5506
        %v7751 = vpack.c.b16 %v5511, %v5507
        %v7752 = vpack.c.b16 %v5512, %v5508
        %v7753 = vpack.c.b16 %v5517, %v5513
        %v7754 = vpack.c.b16 %v5518, %v5514
        %v7755 = vpack.c.b16 %v5519, %v5515
        %v7756 = vpack.c.b16 %v5520, %v5516
        %v7757 = vpack.c.b16 %v5525, %v5521
        %v7758 = vpack.c.b16 %v5526, %v5522
        %v7759 = vpack.c.b16 %v5527, %v5523
        %v7760 = vpack.c.b16 %v5528, %v5524
        %v7761 = vpack.c.b16 %v5533, %v5529
        %v7762 = vpack.c.b16 %v5534, %v5530
        %v7763 = vpack.c.b16 %v5535, %v5531
        %v7764 = vpack.c.b16 %v5536, %v5532
        %v7765 = vpack.c.b16 %v5541, %v5537
        %v7766 = vpack.c.b16 %v5542, %v5538
        %v7767 = vpack.c.b16 %v5543, %v5539
        %v7768 = vpack.c.b16 %v5544, %v5540
        %v7769 = vpack.c.b16 %v5549, %v5545
        %v7770 = vpack.c.b16 %v5550, %v5546
        %v7771 = vpack.c.b16 %v5551, %v5547
        %v7772 = vpack.c.b16 %v5552, %v5548
        %v7773 = vpack.c.b16 %v5557, %v5553
        %v7774 = vpack.c.b16 %v5558, %v5554
        %v7775 = vpack.c.b16 %v5559, %v5555
        %v7776 = vpack.c.b16 %v5560, %v5556
        %v7777 = vpack.c.b16 %v5565, %v5561
        %v7778 = vpack.c.b16 %v5566, %v5562
        %v7779 = vpack.c.b16 %v5567, %v5563
        %v7780 = vpack.c.b16 %v5568, %v5564
        %v7781 = vpack.c.b16 %v5573, %v5569
        %v7782 = vpack.c.b16 %v5574, %v5570
        %v7783 = vpack.c.b16 %v5575, %v5571
        %v7784 = vpack.c.b16 %v5576, %v5572
        %v7785 = vpack.c.b16 %v5581, %v5577
        %v7786 = vpack.c.b16 %v5582, %v5578
        %v7787 = vpack.c.b16 %v5583, %v5579
        %v7788 = vpack.c.b16 %v5584, %v5580
        %v7789 = vpack.c.b16 %v5589, %v5585
        %v7790 = vpack.c.b16 %v5590, %v5586
        %v7791 = vpack.c.b16 %v5591, %v5587
        %v7792 = vpack.c.b16 %v5592, %v5588
        %v7793 = vpack.c.b16 %v5597, %v5593
        %v7794 = vpack.c.b16 %v5598, %v5594
        %v7795 = vpack.c.b16 %v5599, %v5595
        %v7796 = vpack.c.b16 %v5600, %v5596
        %v7797 = vpack.c.b16 %v5605, %v5601
        %v7798 = vpack.c.b16 %v5606, %v5602
        %v7799 = vpack.c.b16 %v5607, %v5603
        %v7800 = vpack.c.b16 %v5608, %v5604
        %v7801 = vpack.c.b16 %v5613, %v5609
        %v7802 = vpack.c.b16 %v5614, %v5610
        %v7803 = vpack.c.b16 %v5615, %v5611
        %v7804 = vpack.c.b16 %v5616, %v5612
        %v7805 = vpack.c.b16 %v5621, %v5617
        %v7806 = vpack.c.b16 %v5622, %v5618
        %v7807 = vpack.c.b16 %v5623, %v5619
        %v7808 = vpack.c.b16 %v5624, %v5620
        %v7809 = vpack.c.b16 %v5629, %v5625
        %v7810 = vpack.c.b16 %v5630, %v5626
        %v7811 = vpack.c.b16 %v5631, %v5627
        %v7812 = vpack.c.b16 %v5632, %v5628
        %v7813 = vpack.c.b16 %v5637, %v5633
        %v7814 = vpack.c.b16 %v5638, %v5634
        %v7815 = vpack.c.b16 %v5639, %v5635
        %v7816 = vpack.c.b16 %v5640, %v5636
        %v7817 = vpack.c.b16 %v5645, %v5641
        %v7818 = vpack.c.b16 %v5646, %v5642
        %v7819 = vpack.c.b16 %v5647, %v5643
        %v7820 = vpack.c.b16 %v5648, %v5644
        %v7821 = vpack.c.b16 %v5653, %v5649
        %v7822 = vpack.c.b16 %v5654, %v5650
        %v7823 = vpack.c.b16 %v5655, %v5651
        %v7824 = vpack.c.b16 %v5656, %v5652
        %v7825 = vpack.c.b16 %v5661, %v5657
        %v7826 = vpack.c.b16 %v5662, %v5658
        %v7827 = vpack.c.b16 %v5663, %v5659
        %v7828 = vpack.c.b16 %v5664, %v5660
        %v7829 = vpack.c.b16 %v5669, %v5665
        %v7830 = vpack.c.b16 %v5670, %v5666
        %v7831 = vpack.c.b16 %v5671, %v5667
        %v7832 = vpack.c.b16 %v5672, %v5668
        %v7833 = vpack.c.b16 %v5677, %v5673
        %v7834 = vpack.c.b16 %v5678, %v5674
        %v7835 = vpack.c.b16 %v5679, %v5675
        %v7836 = vpack.c.b16 %v5680, %v5676
        %v7837 = vpack.c.b16 %v5685, %v5681
        %v7838 = vpack.c.b16 %v5686, %v5682
        %v7839 = vpack.c.b16 %v5687, %v5683
        %v7840 = vpack.c.b16 %v5688, %v5684
        %v7841 = vpack.c.b16 %v5693, %v5689
        %v7842 = vpack.c.b16 %v5694, %v5690
        %v7843 = vpack.c.b16 %v5695, %v5691
        %v7844 = vpack.c.b16 %v5696, %v5692
        %v7845 = vpack.c.b16 %v5701, %v5697
        %v7846 = vpack.c.b16 %v5702, %v5698
        %v7847 = vpack.c.b16 %v5703, %v5699
        %v7848 = vpack.c.b16 %v5704, %v5700
        %v7849 = vpack.c.b16 %v5709, %v5705
        %v7850 = vpack.c.b16 %v5710, %v5706
        %v7851 = vpack.c.b16 %v5711, %v5707
        %v7852 = vpack.c.b16 %v5712, %v5708
        %v7853 = vpack.c.b16 %v5717, %v5713
        %v7854 = vpack.c.b16 %v5718, %v5714
        %v7855 = vpack.c.b16 %v5719, %v5715
        %v7856 = vpack.c.b16 %v5720, %v5716
        %v7857 = vpack.c.b16 %v5725, %v5721
        %v7858 = vpack.c.b16 %v5726, %v5722
        %v7859 = vpack.c.b16 %v5727, %v5723
        %v7860 = vpack.c.b16 %v5728, %v5724
        %v7861 = vpack.c.b16 %v5733, %v5729
        %v7862 = vpack.c.b16 %v5734, %v5730
        %v7863 = vpack.c.b16 %v5735, %v5731
        %v7864 = vpack.c.b16 %v5736, %v5732
        %v7865 = vpack.c.b16 %v5741, %v5737
        %v7866 = vpack.c.b16 %v5742, %v5738
        %v7867 = vpack.c.b16 %v5743, %v5739
        %v7868 = vpack.c.b16 %v5744, %v5740
        %v7869 = vpack.c.b16 %v5749, %v5745
        %v7870 = vpack.c.b16 %v5750, %v5746
        %v7871 = vpack.c.b16 %v5751, %v5747
        %v7872 = vpack.c.b16 %v5752, %v5748
        %v7873 = vpack.c.b16 %v5757, %v5753
        %v7874 = vpack.c.b16 %v5758, %v5754
        %v7875 = vpack.c.b16 %v5759, %v5755
        %v7876 = vpack.c.b16 %v5760, %v5756
        %v7877 = vpack.c.b16 %v5765, %v5761
        %v7878 = vpack.c.b16 %v5766, %v5762
        %v7879 = vpack.c.b16 %v5767, %v5763
        %v7880 = vpack.c.b16 %v5768, %v5764
        %v7881 = vpack.c.b16 %v5773, %v5769
        %v7882 = vpack.c.b16 %v5774, %v5770
        %v7883 = vpack.c.b16 %v5775, %v5771
        %v7884 = vpack.c.b16 %v5776, %v5772
        %v7885 = vpack.c.b16 %v5781, %v5777
        %v7886 = vpack.c.b16 %v5782, %v5778
        %v7887 = vpack.c.b16 %v5783, %v5779
        %v7888 = vpack.c.b16 %v5784, %v5780
        %v7889 = vpack.c.b16 %v5789, %v5785
        %v7890 = vpack.c.b16 %v5790, %v5786
        %v7891 = vpack.c.b16 %v5791, %v5787
        %v7892 = vpack.c.b16 %v5792, %v5788
        %v7893 = vpack.c.b16 %v5797, %v5793
        %v7894 = vpack.c.b16 %v5798, %v5794
        %v7895 = vpack.c.b16 %v5799, %v5795
        %v7896 = vpack.c.b16 %v5800, %v5796
        %v7897 = vpack.c.b16 %v5805, %v5801
        %v7898 = vpack.c.b16 %v5806, %v5802
        %v7899 = vpack.c.b16 %v5807, %v5803
        %v7900 = vpack.c.b16 %v5808, %v5804
        %v7901 = vpack.c.b16 %v5813, %v5809
        %v7902 = vpack.c.b16 %v5814, %v5810
        %v7903 = vpack.c.b16 %v5815, %v5811
        %v7904 = vpack.c.b16 %v5816, %v5812
        %v7905 = vpack.c.b16 %v5821, %v5817
        %v7906 = vpack.c.b16 %v5822, %v5818
        %v7907 = vpack.c.b16 %v5823, %v5819
        %v7908 = vpack.c.b16 %v5824, %v5820
        %v7909 = vpack.c.b16 %v5829, %v5825
        %v7910 = vpack.c.b16 %v5830, %v5826
        %v7911 = vpack.c.b16 %v5831, %v5827
        %v7912 = vpack.c.b16 %v5832, %v5828
        %v7913 = vpack.c.b16 %v5837, %v5833
        %v7914 = vpack.c.b16 %v5838, %v5834
        %v7915 = vpack.c.b16 %v5839, %v5835
        %v7916 = vpack.c.b16 %v5840, %v5836
        %v7917 = vpack.c.b16 %v5845, %v5841
        %v7918 = vpack.c.b16 %v5846, %v5842
        %v7919 = vpack.c.b16 %v5847, %v5843
        %v7920 = vpack.c.b16 %v5848, %v5844
        %v7921 = vpack.c.b16 %v5853, %v5849
        %v7922 = vpack.c.b16 %v5854, %v5850
        %v7923 = vpack.c.b16 %v5855, %v5851
        %v7924 = vpack.c.b16 %v5856, %v5852
        %v7925 = vpack.c.b16 %v5861, %v5857
        %v7926 = vpack.c.b16 %v5862, %v5858
        %v7927 = vpack.c.b16 %v5863, %v5859
        %v7928 = vpack.c.b16 %v5864, %v5860
        %v7929 = vpack.c.b16 %v5869, %v5865
        %v7930 = vpack.c.b16 %v5870, %v5866
        %v7931 = vpack.c.b16 %v5871, %v5867
        %v7932 = vpack.c.b16 %v5872, %v5868
        %v7933 = vpack.c.b16 %v5877, %v5873
        %v7934 = vpack.c.b16 %v5878, %v5874
        %v7935 = vpack.c.b16 %v5879, %v5875
        %v7936 = vpack.c.b16 %v5880, %v5876
        %v7937 = vpack.c.b16 %v5885, %v5881
        %v7938 = vpack.c.b16 %v5886, %v5882
        %v7939 = vpack.c.b16 %v5887, %v5883
        %v7940 = vpack.c.b16 %v5888, %v5884
        %v7941 = vpack.c.b16 %v5893, %v5889
        %v7942 = vpack.c.b16 %v5894, %v5890
        %v7943 = vpack.c.b16 %v5895, %v5891
        %v7944 = vpack.c.b16 %v5896, %v5892
        %v7945 = vpack.c.b16 %v5901, %v5897
        %v7946 = vpack.c.b16 %v5902, %v5898
        %v7947 = vpack.c.b16 %v5903, %v5899
        %v7948 = vpack.c.b16 %v5904, %v5900
        %v7949 = vpack.c.b16 %v5909, %v5905
        %v7950 = vpack.c.b16 %v5910, %v5906
        %v7951 = vpack.c.b16 %v5911, %v5907
        %v7952 = vpack.c.b16 %v5912, %v5908
        %v7953 = vpack.c.b16 %v5917, %v5913
        %v7954 = vpack.c.b16 %v5918, %v5914
        %v7955 = vpack.c.b16 %v5919, %v5915
        %v7956 = vpack.c.b16 %v5920, %v5916
        %v7957 = vpack.c.b16 %v5925, %v5921
        %v7958 = vpack.c.b16 %v5926, %v5922
        %v7959 = vpack.c.b16 %v5927, %v5923
        %v7960 = vpack.c.b16 %v5928, %v5924
        %v7961 = vpack.c.b16 %v5933, %v5929
        %v7962 = vpack.c.b16 %v5934, %v5930
        %v7963 = vpack.c.b16 %v5935, %v5931
        %v7964 = vpack.c.b16 %v5936, %v5932
        %v7965 = vpack.c.b16 %v5941, %v5937
        %v7966 = vpack.c.b16 %v5942, %v5938
        %v7967 = vpack.c.b16 %v5943, %v5939
        %v7968 = vpack.c.b16 %v5944, %v5940
        %v7969 = vpack.c.b16 %v5949, %v5945
        %v7970 = vpack.c.b16 %v5950, %v5946
        %v7971 = vpack.c.b16 %v5951, %v5947
        %v7972 = vpack.c.b16 %v5952, %v5948
        %v7973 = vpack.c.b16 %v5957, %v5953
        %v7974 = vpack.c.b16 %v5958, %v5954
        %v7975 = vpack.c.b16 %v5959, %v5955
        %v7976 = vpack.c.b16 %v5960, %v5956
        %v7977 = vpack.c.b16 %v5965, %v5961
        %v7978 = vpack.c.b16 %v5966, %v5962
        %v7979 = vpack.c.b16 %v5967, %v5963
        %v7980 = vpack.c.b16 %v5968, %v5964
        %v7981 = vpack.c.b16 %v5973, %v5969
        %v7982 = vpack.c.b16 %v5974, %v5970
        %v7983 = vpack.c.b16 %v5975, %v5971
        %v7984 = vpack.c.b16 %v5976, %v5972
        %v7985 = vpack.c.b16 %v5981, %v5977
        %v7986 = vpack.c.b16 %v5982, %v5978
        %v7987 = vpack.c.b16 %v5983, %v5979
        %v7988 = vpack.c.b16 %v5984, %v5980
        %v7989 = vpack.c.b16 %v5989, %v5985
        %v7990 = vpack.c.b16 %v5990, %v5986
        %v7991 = vpack.c.b16 %v5991, %v5987
        %v7992 = vpack.c.b16 %v5992, %v5988
        %v7993 = vpack.c.b16 %v5997, %v5993
        %v7994 = vpack.c.b16 %v5998, %v5994
        %v7995 = vpack.c.b16 %v5999, %v5995
        %v7996 = vpack.c.b16 %v6000, %v5996
        %v7997 = vpack.c.b16 %v6005, %v6001
        %v7998 = vpack.c.b16 %v6006, %v6002
        %v7999 = vpack.c.b16 %v6007, %v6003
        %v8000 = vpack.c.b16 %v6008, %v6004
        %v8001 = vpack.c.b16 %v6013, %v6009
        %v8002 = vpack.c.b16 %v6014, %v6010
        %v8003 = vpack.c.b16 %v6015, %v6011
        %v8004 = vpack.c.b16 %v6016, %v6012
        %v8005 = vpack.c.b16 %v6021, %v6017
        %v8006 = vpack.c.b16 %v6022, %v6018
        %v8007 = vpack.c.b16 %v6023, %v6019
        %v8008 = vpack.c.b16 %v6024, %v6020
        %v8009 = vpack.c.b16 %v6029, %v6025
        %v8010 = vpack.c.b16 %v6030, %v6026
        %v8011 = vpack.c.b16 %v6031, %v6027
        %v8012 = vpack.c.b16 %v6032, %v6028
        %v8013 = vpack.c.b16 %v6037, %v6033
        %v8014 = vpack.c.b16 %v6038, %v6034
        %v8015 = vpack.c.b16 %v6039, %v6035
        %v8016 = vpack.c.b16 %v6040, %v6036
        %v8017 = vpack.c.b16 %v6045, %v6041
        %v8018 = vpack.c.b16 %v6046, %v6042
        %v8019 = vpack.c.b16 %v6047, %v6043
        %v8020 = vpack.c.b16 %v6048, %v6044
        %v8021 = vpack.c.b16 %v6053, %v6049
        %v8022 = vpack.c.b16 %v6054, %v6050
        %v8023 = vpack.c.b16 %v6055, %v6051
        %v8024 = vpack.c.b16 %v6056, %v6052
        %v8025 = vpack.c.b16 %v6061, %v6057
        %v8026 = vpack.c.b16 %v6062, %v6058
        %v8027 = vpack.c.b16 %v6063, %v6059
        %v8028 = vpack.c.b16 %v6064, %v6060
        %v8029 = vpack.c.b16 %v6069, %v6065
        %v8030 = vpack.c.b16 %v6070, %v6066
        %v8031 = vpack.c.b16 %v6071, %v6067
        %v8032 = vpack.c.b16 %v6072, %v6068
        %v8033 = vpack.c.b16 %v6077, %v6073
        %v8034 = vpack.c.b16 %v6078, %v6074
        %v8035 = vpack.c.b16 %v6079, %v6075
        %v8036 = vpack.c.b16 %v6080, %v6076
        %v8037 = vpack.c.b16 %v6085, %v6081
        %v8038 = vpack.c.b16 %v6086, %v6082
        %v8039 = vpack.c.b16 %v6087, %v6083
        %v8040 = vpack.c.b16 %v6088, %v6084
        %v8041 = vpack.c.b16 %v6093, %v6089
        %v8042 = vpack.c.b16 %v6094, %v6090
        %v8043 = vpack.c.b16 %v6095, %v6091
        %v8044 = vpack.c.b16 %v6096, %v6092
        %v8045 = vpack.c.b16 %v6101, %v6097
        %v8046 = vpack.c.b16 %v6102, %v6098
        %v8047 = vpack.c.b16 %v6103, %v6099
        %v8048 = vpack.c.b16 %v6104, %v6100
        %v8049 = vpack.c.b16 %v6109, %v6105
        %v8050 = vpack.c.b16 %v6110, %v6106
        %v8051 = vpack.c.b16 %v6111, %v6107
        %v8052 = vpack.c.b16 %v6112, %v6108
        %v8053 = vpack.c.b16 %v6117, %v6113
        %v8054 = vpack.c.b16 %v6118, %v6114
        %v8055 = vpack.c.b16 %v6119, %v6115
        %v8056 = vpack.c.b16 %v6120, %v6116
        %v8057 = vpack.c.b16 %v6125, %v6121
        %v8058 = vpack.c.b16 %v6126, %v6122
        %v8059 = vpack.c.b16 %v6127, %v6123
        %v8060 = vpack.c.b16 %v6128, %v6124
        %v8061 = vpack.c.b16 %v6133, %v6129
        %v8062 = vpack.c.b16 %v6134, %v6130
        %v8063 = vpack.c.b16 %v6135, %v6131
        %v8064 = vpack.c.b16 %v6136, %v6132
        %v8065 = vpack.c.b16 %v6141, %v6137
        %v8066 = vpack.c.b16 %v6142, %v6138
        %v8067 = vpack.c.b16 %v6143, %v6139
        %v8068 = vpack.c.b16 %v6144, %v6140
        %v8069 = vpack.c.b16 %v6149, %v6145
        %v8070 = vpack.c.b16 %v6150, %v6146
        %v8071 = vpack.c.b16 %v6151, %v6147
        %v8072 = vpack.c.b16 %v6152, %v6148
        %v8073 = vpack.c.b16 %v6157, %v6153
        %v8074 = vpack.c.b16 %v6158, %v6154
        %v8075 = vpack.c.b16 %v6159, %v6155
        %v8076 = vpack.c.b16 %v6160, %v6156
        %v8077 = vpack.c.b16 %v6165, %v6161
        %v8078 = vpack.c.b16 %v6166, %v6162
        %v8079 = vpack.c.b16 %v6167, %v6163
        %v8080 = vpack.c.b16 %v6168, %v6164
        %v8081 = vpack.c.b16 %v6173, %v6169
        %v8082 = vpack.c.b16 %v6174, %v6170
        %v8083 = vpack.c.b16 %v6175, %v6171
        %v8084 = vpack.c.b16 %v6176, %v6172
        %v8085 = vpack.c.b16 %v6181, %v6177
        %v8086 = vpack.c.b16 %v6182, %v6178
        %v8087 = vpack.c.b16 %v6183, %v6179
        %v8088 = vpack.c.b16 %v6184, %v6180
        %v8089 = vpack.c.b16 %v6189, %v6185
        %v8090 = vpack.c.b16 %v6190, %v6186
        %v8091 = vpack.c.b16 %v6191, %v6187
        %v8092 = vpack.c.b16 %v6192, %v6188
        %v8093 = vpack.c.b16 %v6197, %v6193
        %v8094 = vpack.c.b16 %v6198, %v6194
        %v8095 = vpack.c.b16 %v6199, %v6195
        %v8096 = vpack.c.b16 %v6200, %v6196
        %v8097 = vpack.c.b16 %v6205, %v6201
        %v8098 = vpack.c.b16 %v6206, %v6202
        %v8099 = vpack.c.b16 %v6207, %v6203
        %v8100 = vpack.c.b16 %v6208, %v6204
        %v8101 = vpack.c.b16 %v6213, %v6209
        %v8102 = vpack.c.b16 %v6214, %v6210
        %v8103 = vpack.c.b16 %v6215, %v6211
        %v8104 = vpack.c.b16 %v6216, %v6212
        %v8105 = vpack.c.b16 %v6221, %v6217
        %v8106 = vpack.c.b16 %v6222, %v6218
        %v8107 = vpack.c.b16 %v6223, %v6219
        %v8108 = vpack.c.b16 %v6224, %v6220
        %v8109 = vpack.c.b16 %v6229, %v6225
        %v8110 = vpack.c.b16 %v6230, %v6226
        %v8111 = vpack.c.b16 %v6231, %v6227
        %v8112 = vpack.c.b16 %v6232, %v6228
        %v8113 = vpack.c.b16 %v6237, %v6233
        %v8114 = vpack.c.b16 %v6238, %v6234
        %v8115 = vpack.c.b16 %v6239, %v6235
        %v8116 = vpack.c.b16 %v6240, %v6236
        %v8117 = vpack.c.b16 %v6245, %v6241
        %v8118 = vpack.c.b16 %v6246, %v6242
        %v8119 = vpack.c.b16 %v6247, %v6243
        %v8120 = vpack.c.b16 %v6248, %v6244
        %v8121 = vpack.c.b16 %v6253, %v6249
        %v8122 = vpack.c.b16 %v6254, %v6250
        %v8123 = vpack.c.b16 %v6255, %v6251
        %v8124 = vpack.c.b16 %v6256, %v6252
        %v8125 = vpack.c.b16 %v6261, %v6257
        %v8126 = vpack.c.b16 %v6262, %v6258
        %v8127 = vpack.c.b16 %v6263, %v6259
        %v8128 = vpack.c.b16 %v6264, %v6260
        %v8129 = vpack.c.b16 %v6269, %v6265
        %v8130 = vpack.c.b16 %v6270, %v6266
        %v8131 = vpack.c.b16 %v6271, %v6267
        %v8132 = vpack.c.b16 %v6272, %v6268
        %v8133 = vpack.c.b16 %v6277, %v6273
        %v8134 = vpack.c.b16 %v6278, %v6274
        %v8135 = vpack.c.b16 %v6279, %v6275
        %v8136 = vpack.c.b16 %v6280, %v6276
        %v8137 = vpack.c.b16 %v6285, %v6281
        %v8138 = vpack.c.b16 %v6286, %v6282
        %v8139 = vpack.c.b16 %v6287, %v6283
        %v8140 = vpack.c.b16 %v6288, %v6284
        %v8141 = vpack.c.b16 %v6293, %v6289
        %v8142 = vpack.c.b16 %v6294, %v6290
        %v8143 = vpack.c.b16 %v6295, %v6291
        %v8144 = vpack.c.b16 %v6296, %v6292
        %v8145 = vpack.c.b16 %v6301, %v6297
        %v8146 = vpack.c.b16 %v6302, %v6298
        %v8147 = vpack.c.b16 %v6303, %v6299
        %v8148 = vpack.c.b16 %v6304, %v6300
        %v8149 = vpack.c.b16 %v6309, %v6305
        %v8150 = vpack.c.b16 %v6310, %v6306
        %v8151 = vpack.c.b16 %v6311, %v6307
        %v8152 = vpack.c.b16 %v6312, %v6308
        %v8153 = vpack.c.b16 %v6317, %v6313
        %v8154 = vpack.c.b16 %v6318, %v6314
        %v8155 = vpack.c.b16 %v6319, %v6315
        %v8156 = vpack.c.b16 %v6320, %v6316
        %v8157 = vpack.c.b16 %v6325, %v6321
        %v8158 = vpack.c.b16 %v6326, %v6322
        %v8159 = vpack.c.b16 %v6327, %v6323
        %v8160 = vpack.c.b16 %v6328, %v6324
        %v8161 = vpack.c.b16 %v6333, %v6329
        %v8162 = vpack.c.b16 %v6334, %v6330
        %v8163 = vpack.c.b16 %v6335, %v6331
        %v8164 = vpack.c.b16 %v6336, %v6332
        %v8165 = vpack.c.b16 %v6341, %v6337
        %v8166 = vpack.c.b16 %v6342, %v6338
        %v8167 = vpack.c.b16 %v6343, %v6339
        %v8168 = vpack.c.b16 %v6344, %v6340
        %v8169 = vpack.c.b16 %v6349, %v6345
        %v8170 = vpack.c.b16 %v6350, %v6346
        %v8171 = vpack.c.b16 %v6351, %v6347
        %v8172 = vpack.c.b16 %v6352, %v6348
        %v8173 = vpack.c.b16 %v6357, %v6353
        %v8174 = vpack.c.b16 %v6358, %v6354
        %v8175 = vpack.c.b16 %v6359, %v6355
        %v8176 = vpack.c.b16 %v6360, %v6356
        %v8177 = vpack.c.b16 %v6365, %v6361
        %v8178 = vpack.c.b16 %v6366, %v6362
        %v8179 = vpack.c.b16 %v6367, %v6363
        %v8180 = vpack.c.b16 %v6368, %v6364
        %v8181 = vpack.c.b16 %v6373, %v6369
        %v8182 = vpack.c.b16 %v6374, %v6370
        %v8183 = vpack.c.b16 %v6375, %v6371
        %v8184 = vpack.c.b16 %v6376, %v6372
        %v8185 = vpack.c.b16 %v6381, %v6377
        %v8186 = vpack.c.b16 %v6382, %v6378
        %v8187 = vpack.c.b16 %v6383, %v6379
        %v8188 = vpack.c.b16 %v6384, %v6380
        %v8189 = vpack.c.b16 %v6389, %v6385
        %v8190 = vpack.c.b16 %v6390, %v6386
        %v8191 = vpack.c.b16 %v6391, %v6387
        %v8192 = vpack.c.b16 %v6392, %v6388
        %v8193 = vpack.c.b16 %v6397, %v6393
        %v8194 = vpack.c.b16 %v6398, %v6394
        %v8195 = vpack.c.b16 %v6399, %v6395
        %v8196 = vpack.c.b16 %v6400, %v6396
        %v8197 = vpack.c.b16 %v6405, %v6401
        %v8198 = vpack.c.b16 %v6406, %v6402
        %v8199 = vpack.c.b16 %v6407, %v6403
        %v8200 = vpack.c.b16 %v6408, %v6404
        %v8201 = vpack.c.b16 %v6413, %v6409
        %v8202 = vpack.c.b16 %v6414, %v6410
        %v8203 = vpack.c.b16 %v6415, %v6411
        %v8204 = vpack.c.b16 %v6416, %v6412
        %v8205 = vpack.c.b16 %v6421, %v6417
        %v8206 = vpack.c.b16 %v6422, %v6418
        %v8207 = vpack.c.b16 %v6423, %v6419
        %v8208 = vpack.c.b16 %v6424, %v6420
        %v8209 = vpack.c.b16 %v6429, %v6425
        %v8210 = vpack.c.b16 %v6430, %v6426
        %v8211 = vpack.c.b16 %v6431, %v6427
        %v8212 = vpack.c.b16 %v6432, %v6428
        %v8213 = vpack.c.b16 %v6437, %v6433
        %v8214 = vpack.c.b16 %v6438, %v6434
        %v8215 = vpack.c.b16 %v6439, %v6435
        %v8216 = vpack.c.b16 %v6440, %v6436
        %v8217 = vpack.c.b16 %v6445, %v6441
        %v8218 = vpack.c.b16 %v6446, %v6442
        %v8219 = vpack.c.b16 %v6447, %v6443
        %v8220 = vpack.c.b16 %v6448, %v6444
        %v8221 = vpack.c.b16 %v6453, %v6449
        %v8222 = vpack.c.b16 %v6454, %v6450
        %v8223 = vpack.c.b16 %v6455, %v6451
        %v8224 = vpack.c.b16 %v6456, %v6452
        %v8225 = vpack.c.b16 %v6461, %v6457
        %v8226 = vpack.c.b16 %v6462, %v6458
        %v8227 = vpack.c.b16 %v6463, %v6459
        %v8228 = vpack.c.b16 %v6464, %v6460
        %v8229 = vpack.c.b16 %v6469, %v6465
        %v8230 = vpack.c.b16 %v6470, %v6466
        %v8231 = vpack.c.b16 %v6471, %v6467
        %v8232 = vpack.c.b16 %v6472, %v6468
        %v8233 = vpack.c.b16 %v6477, %v6473
        %v8234 = vpack.c.b16 %v6478, %v6474
        %v8235 = vpack.c.b16 %v6479, %v6475
        %v8236 = vpack.c.b16 %v6480, %v6476
        %v8237 = vpack.c.b16 %v6485, %v6481
        %v8238 = vpack.c.b16 %v6486, %v6482
        %v8239 = vpack.c.b16 %v6487, %v6483
        %v8240 = vpack.c.b16 %v6488, %v6484
        %v8241 = vpack.c.b16 %v6493, %v6489
        %v8242 = vpack.c.b16 %v6494, %v6490
        %v8243 = vpack.c.b16 %v6495, %v6491
        %v8244 = vpack.c.b16 %v6496, %v6492
        %v8245 = vpack.c.b16 %v6501, %v6497
        %v8246 = vpack.c.b16 %v6502, %v6498
        %v8247 = vpack.c.b16 %v6503, %v6499
        %v8248 = vpack.c.b16 %v6504, %v6500
        %v8249 = vpack.c.b16 %v6509, %v6505
        %v8250 = vpack.c.b16 %v6510, %v6506
        %v8251 = vpack.c.b16 %v6511, %v6507
        %v8252 = vpack.c.b16 %v6512, %v6508
        %v8253 = vpack.c.b16 %v6517, %v6513
        %v8254 = vpack.c.b16 %v6518, %v6514
        %v8255 = vpack.c.b16 %v6519, %v6515
        %v8256 = vpack.c.b16 %v6520, %v6516
        %v8257 = vpack.c.b16 %v6525, %v6521
        %v8258 = vpack.c.b16 %v6526, %v6522
        %v8259 = vpack.c.b16 %v6527, %v6523
        %v8260 = vpack.c.b16 %v6528, %v6524
        %v8261 = vpack.c.b16 %v6533, %v6529
        %v8262 = vpack.c.b16 %v6534, %v6530
        %v8263 = vpack.c.b16 %v6535, %v6531
        %v8264 = vpack.c.b16 %v6536, %v6532
        %v8265 = vpack.c.b16 %v6541, %v6537
        %v8266 = vpack.c.b16 %v6542, %v6538
        %v8267 = vpack.c.b16 %v6543, %v6539
        %v8268 = vpack.c.b16 %v6544, %v6540
        %v8269 = vpack.c.b16 %v6549, %v6545
        %v8270 = vpack.c.b16 %v6550, %v6546
        %v8271 = vpack.c.b16 %v6551, %v6547
        %v8272 = vpack.c.b16 %v6552, %v6548
        %v8273 = vpack.c.b16 %v6557, %v6553
        %v8274 = vpack.c.b16 %v6558, %v6554
        %v8275 = vpack.c.b16 %v6559, %v6555
        %v8276 = vpack.c.b16 %v6560, %v6556
        %v8277 = vpack.c.b16 %v6565, %v6561
        %v8278 = vpack.c.b16 %v6566, %v6562
        %v8279 = vpack.c.b16 %v6567, %v6563
        %v8280 = vpack.c.b16 %v6568, %v6564
        %v8281 = vpack.c.b16 %v6573, %v6569
        %v8282 = vpack.c.b16 %v6574, %v6570
        %v8283 = vpack.c.b16 %v6575, %v6571
        %v8284 = vpack.c.b16 %v6576, %v6572
        %v8285 = vpack.c.b16 %v6581, %v6577
        %v8286 = vpack.c.b16 %v6582, %v6578
        %v8287 = vpack.c.b16 %v6583, %v6579
        %v8288 = vpack.c.b16 %v6584, %v6580
        %v8289 = vpack.c.b16 %v6589, %v6585
        %v8290 = vpack.c.b16 %v6590, %v6586
        %v8291 = vpack.c.b16 %v6591, %v6587
        %v8292 = vpack.c.b16 %v6592, %v6588
        %v8293 = vpack.c.b16 %v6597, %v6593
        %v8294 = vpack.c.b16 %v6598, %v6594
        %v8295 = vpack.c.b16 %v6599, %v6595
        %v8296 = vpack.c.b16 %v6600, %v6596
        %v8297 = vpack.c.b16 %v6605, %v6601
        %v8298 = vpack.c.b16 %v6606, %v6602
        %v8299 = vpack.c.b16 %v6607, %v6603
        %v8300 = vpack.c.b16 %v6608, %v6604
        %v8301 = vpack.c.b16 %v6613, %v6609
        %v8302 = vpack.c.b16 %v6614, %v6610
        %v8303 = vpack.c.b16 %v6615, %v6611
        %v8304 = vpack.c.b16 %v6616, %v6612
        %v8305 = vpack.c.b16 %v6621, %v6617
        %v8306 = vpack.c.b16 %v6622, %v6618
        %v8307 = vpack.c.b16 %v6623, %v6619
        %v8308 = vpack.c.b16 %v6624, %v6620
        %v8309 = vpack.c.b16 %v6629, %v6625
        %v8310 = vpack.c.b16 %v6630, %v6626
        %v8311 = vpack.c.b16 %v6631, %v6627
        %v8312 = vpack.c.b16 %v6632, %v6628
        %v8313 = vpack.c.b16 %v6637, %v6633
        %v8314 = vpack.c.b16 %v6638, %v6634
        %v8315 = vpack.c.b16 %v6639, %v6635
        %v8316 = vpack.c.b16 %v6640, %v6636
        %v8317 = vpack.c.b16 %v6645, %v6641
        %v8318 = vpack.c.b16 %v6646, %v6642
        %v8319 = vpack.c.b16 %v6647, %v6643
        %v8320 = vpack.c.b16 %v6648, %v6644
        %v8321 = vpack.c.b16 %v6653, %v6649
        %v8322 = vpack.c.b16 %v6654, %v6650
        %v8323 = vpack.c.b16 %v6655, %v6651
        %v8324 = vpack.c.b16 %v6656, %v6652
        %v8325 = vpack.c.b16 %v6661, %v6657
        %v8326 = vpack.c.b16 %v6662, %v6658
        %v8327 = vpack.c.b16 %v6663, %v6659
        %v8328 = vpack.c.b16 %v6664, %v6660
        %v8329 = vpack.c.b16 %v6669, %v6665
        %v8330 = vpack.c.b16 %v6670, %v6666
        %v8331 = vpack.c.b16 %v6671, %v6667
        %v8332 = vpack.c.b16 %v6672, %v6668
        %v8333 = vpack.c.b16 %v6677, %v6673
        %v8334 = vpack.c.b16 %v6678, %v6674
        %v8335 = vpack.c.b16 %v6679, %v6675
        %v8336 = vpack.c.b16 %v6680, %v6676
        %v8337 = vpack.c.b16 %v6685, %v6681
        %v8338 = vpack.c.b16 %v6686, %v6682
        %v8339 = vpack.c.b16 %v6687, %v6683
        %v8340 = vpack.c.b16 %v6688, %v6684
        %v8341 = vpack.c.b16 %v6693, %v6689
        %v8342 = vpack.c.b16 %v6694, %v6690
        %v8343 = vpack.c.b16 %v6695, %v6691
        %v8344 = vpack.c.b16 %v6696, %v6692
        %v8345 = vpack.c.b16 %v6701, %v6697
        %v8346 = vpack.c.b16 %v6702, %v6698
        %v8347 = vpack.c.b16 %v6703, %v6699
        %v8348 = vpack.c.b16 %v6704, %v6700
        %v8349 = vpack.c.b16 %v6709, %v6705
        %v8350 = vpack.c.b16 %v6710, %v6706
        %v8351 = vpack.c.b16 %v6711, %v6707
        %v8352 = vpack.c.b16 %v6712, %v6708
        %v8353 = vpack.c.b16 %v6717, %v6713
        %v8354 = vpack.c.b16 %v6718, %v6714
        %v8355 = vpack.c.b16 %v6719, %v6715
        %v8356 = vpack.c.b16 %v6720, %v6716
        %v8357 = vpack.c.b16 %v6725, %v6721
        %v8358 = vpack.c.b16 %v6726, %v6722
        %v8359 = vpack.c.b16 %v6727, %v6723
        %v8360 = vpack.c.b16 %v6728, %v6724
        %v8361 = vpack.c.b16 %v6733, %v6729
        %v8362 = vpack.c.b16 %v6734, %v6730
        %v8363 = vpack.c.b16 %v6735, %v6731
        %v8364 = vpack.c.b16 %v6736, %v6732
        %v8365 = vpack.c.b16 %v6741, %v6737
        %v8366 = vpack.c.b16 %v6742, %v6738
        %v8367 = vpack.c.b16 %v6743, %v6739
        %v8368 = vpack.c.b16 %v6744, %v6740
        %v8369 = vpack.c.b16 %v6749, %v6745
        %v8370 = vpack.c.b16 %v6750, %v6746
        %v8371 = vpack.c.b16 %v6751, %v6747
        %v8372 = vpack.c.b16 %v6752, %v6748
        %v8373 = vpack.c.b16 %v6757, %v6753
        %v8374 = vpack.c.b16 %v6758, %v6754
        %v8375 = vpack.c.b16 %v6759, %v6755
        %v8376 = vpack.c.b16 %v6760, %v6756
        %v8377 = vpack.c.b16 %v6765, %v6761
        %v8378 = vpack.c.b16 %v6766, %v6762
        %v8379 = vpack.c.b16 %v6767, %v6763
        %v8380 = vpack.c.b16 %v6768, %v6764
        %v8381 = vpack.c.b16 %v6773, %v6769
        %v8382 = vpack.c.b16 %v6774, %v6770
        %v8383 = vpack.c.b16 %v6775, %v6771
        %v8384 = vpack.c.b16 %v6776, %v6772
        %v8385 = vpack.c.b16 %v6781, %v6777
        %v8386 = vpack.c.b16 %v6782, %v6778
        %v8387 = vpack.c.b16 %v6783, %v6779
        %v8388 = vpack.c.b16 %v6784, %v6780
        %v8389 = vpack.c.b16 %v6789, %v6785
        %v8390 = vpack.c.b16 %v6790, %v6786
        %v8391 = vpack.c.b16 %v6791, %v6787
        %v8392 = vpack.c.b16 %v6792, %v6788
        %v8393 = vpack.c.b16 %v6797, %v6793
        %v8394 = vpack.c.b16 %v6798, %v6794
        %v8395 = vpack.c.b16 %v6799, %v6795
        %v8396 = vpack.c.b16 %v6800, %v6796
        %v8397 = vpack.c.b16 %v6805, %v6801
        %v8398 = vpack.c.b16 %v6806, %v6802
        %v8399 = vpack.c.b16 %v6807, %v6803
        %v8400 = vpack.c.b16 %v6808, %v6804
        %v8401 = vpack.c.b16 %v6813, %v6809
        %v8402 = vpack.c.b16 %v6814, %v6810
        %v8403 = vpack.c.b16 %v6815, %v6811
        %v8404 = vpack.c.b16 %v6816, %v6812
        %v8405 = vpack.c.b16 %v6821, %v6817
        %v8406 = vpack.c.b16 %v6822, %v6818
        %v8407 = vpack.c.b16 %v6823, %v6819
        %v8408 = vpack.c.b16 %v6824, %v6820
        %v8409 = vpack.c.b16 %v6829, %v6825
        %v8410 = vpack.c.b16 %v6830, %v6826
        %v8411 = vpack.c.b16 %v6831, %v6827
        %v8412 = vpack.c.b16 %v6832, %v6828
        %v8413 = vpack.c.b16 %v6837, %v6833
        %v8414 = vpack.c.b16 %v6838, %v6834
        %v8415 = vpack.c.b16 %v6839, %v6835
        %v8416 = vpack.c.b16 %v6840, %v6836
        %v8417 = vpack.c.b16 %v6845, %v6841
        %v8418 = vpack.c.b16 %v6846, %v6842
        %v8419 = vpack.c.b16 %v6847, %v6843
        %v8420 = vpack.c.b16 %v6848, %v6844
        %v8421 = vpack.c.b16 %v6853, %v6849
        %v8422 = vpack.c.b16 %v6854, %v6850
        %v8423 = vpack.c.b16 %v6855, %v6851
        %v8424 = vpack.c.b16 %v6856, %v6852
        %9993 = vmatprep.subr.bf16.mxu0 %v6886
        %9994 = vmatpush1.bf16.msra.mxu0 %v6885
        %9995 = vmatprep.subr.bf16.mxu0 %v6882
        %9996 = vmatpush1.bf16.msra.mxu0 %v6881
        %9997 = vmatprep.subr.bf16.mxu0 %v6878
        %9998 = vmatpush1.bf16.msra.mxu0 %v6877
        %9999 = vmatprep.subr.bf16.mxu0 %v6874
        %10000 = vmatpush1.bf16.msra.mxu0 %v6873
        %10001 = vmatprep.subr.bf16.mxu0 %v6870
        %10002 = vmatpush1.bf16.msra.mxu0 %v6869
        %10003 = vmatprep.subr.bf16.mxu0 %v6866
        %10004 = vmatpush1.bf16.msra.mxu0 %v6865
        %10005 = vmatprep.subr.bf16.mxu0 %v6862
        %10006 = vmatpush1.bf16.msra.mxu0 %v6861
        %10007 = vmatprep.subr.bf16.mxu0 %v6858
        %10008 = vmatpush1.bf16.msra.mxu0 %v6857
        %10009 = vmatprep.subr.bf16.mxu0 %v6918
        %10010 = vmatpush2.bf16.msra.mxu0 %v6917
        %10011 = vmatprep.subr.bf16.mxu0 %v6914
        %10012 = vmatpush2.bf16.msra.mxu0 %v6913
        %10013 = vmatprep.subr.bf16.mxu0 %v6910
        %10014 = vmatpush2.bf16.msra.mxu0 %v6909
        %10015 = vmatprep.subr.bf16.mxu0 %v6906
        %10016 = vmatpush2.bf16.msra.mxu0 %v6905
        %10017 = vmatprep.subr.bf16.mxu0 %v6902
        %10018 = vmatpush2.bf16.msra.mxu0 %v6901
        %10019 = vmatprep.subr.bf16.mxu0 %v6898
        %10020 = vmatpush2.bf16.msra.mxu0 %v6897
        %10021 = vmatprep.subr.bf16.mxu0 %v6894
        %10022 = vmatpush2.bf16.msra.mxu0 %v6893
        %10023 = vmatprep.subr.bf16.mxu0 %v6890
        %10024 = vmatpush2.bf16.msra.mxu0 %v6889
        %10025 = vmatprep.mubr.bf16.mxu0 %v2056
        %10026 = vmatmul.mubr.bf16.gmra.mxu0 %v2055
        %v10027 = vpop.f32.mrf.mxu0
        %v10028 = vadd.f32 %v1890, %v10027
        %v10029 = vpop.f32.mrf.mxu0
        %v10030 = vadd.f32 %v1894, %v10029
        %v10031 = vpop.f32.mrf.mxu0
        %v10032 = vadd.f32 %v1890, %v10031
        %v10033 = vpop.f32.mrf.mxu0
        %v10034 = vadd.f32 %v1894, %v10033
        %10035 = vdwg.mxu0
        %10036 = vmatprep.subr.bf16.mxu0 %v6950
        %10037 = vmatpush1.bf16.msra.mxu0 %v6949
        %10038 = vmatprep.subr.bf16.mxu0 %v6946
        %10039 = vmatpush1.bf16.msra.mxu0 %v6945
        %10040 = vmatprep.subr.bf16.mxu0 %v6942
        %10041 = vmatpush1.bf16.msra.mxu0 %v6941
        %10042 = vmatprep.subr.bf16.mxu0 %v6938
        %10043 = vmatpush1.bf16.msra.mxu0 %v6937
        %10044 = vmatprep.subr.bf16.mxu0 %v6934
        %10045 = vmatpush1.bf16.msra.mxu0 %v6933
        %10046 = vmatprep.subr.bf16.mxu0 %v6930
        %10047 = vmatpush1.bf16.msra.mxu0 %v6929
        %10048 = vmatprep.subr.bf16.mxu0 %v6926
        %10049 = vmatpush1.bf16.msra.mxu0 %v6925
        %10050 = vmatprep.subr.bf16.mxu0 %v6922
        %10051 = vmatpush1.bf16.msra.mxu0 %v6921
        %10052 = vmatprep.subr.bf16.mxu0 %v6982
        %10053 = vmatpush2.bf16.msra.mxu0 %v6981
        %10054 = vmatprep.subr.bf16.mxu0 %v6978
        %10055 = vmatpush2.bf16.msra.mxu0 %v6977
        %10056 = vmatprep.subr.bf16.mxu0 %v6974
        %10057 = vmatpush2.bf16.msra.mxu0 %v6973
        %10058 = vmatprep.subr.bf16.mxu0 %v6970
        %10059 = vmatpush2.bf16.msra.mxu0 %v6969
        %10060 = vmatprep.subr.bf16.mxu0 %v6966
        %10061 = vmatpush2.bf16.msra.mxu0 %v6965
        %10062 = vmatprep.subr.bf16.mxu0 %v6962
        %10063 = vmatpush2.bf16.msra.mxu0 %v6961
        %10064 = vmatprep.subr.bf16.mxu0 %v6958
        %10065 = vmatpush2.bf16.msra.mxu0 %v6957
        %10066 = vmatprep.subr.bf16.mxu0 %v6954
        %10067 = vmatpush2.bf16.msra.mxu0 %v6953
        %10068 = vmatprep.mubr.bf16.mxu0 %v2058
        %10069 = vmatmul.mubr.bf16.gmra.mxu0 %v2057
        %v10070 = vpop.f32.mrf.mxu0
        %v10071 = vadd.f32 %v10028, %v10070
        %v10072 = vpop.f32.mrf.mxu0
        %v10073 = vadd.f32 %v10030, %v10072
        %v10074 = vpop.f32.mrf.mxu0
        %v10075 = vadd.f32 %v10032, %v10074
        %v10076 = vpop.f32.mrf.mxu0
        %v10077 = vadd.f32 %v10034, %v10076
        %10078 = vdwg.mxu0
        %10079 = vmatprep.subr.bf16.mxu0 %v7014
        %10080 = vmatpush1.bf16.msra.mxu0 %v7013
        %10081 = vmatprep.subr.bf16.mxu0 %v7010
        %10082 = vmatpush1.bf16.msra.mxu0 %v7009
        %10083 = vmatprep.subr.bf16.mxu0 %v7006
        %10084 = vmatpush1.bf16.msra.mxu0 %v7005
        %10085 = vmatprep.subr.bf16.mxu0 %v7002
        %10086 = vmatpush1.bf16.msra.mxu0 %v7001
        %10087 = vmatprep.subr.bf16.mxu0 %v6998
        %10088 = vmatpush1.bf16.msra.mxu0 %v6997
        %10089 = vmatprep.subr.bf16.mxu0 %v6994
        %10090 = vmatpush1.bf16.msra.mxu0 %v6993
        %10091 = vmatprep.subr.bf16.mxu0 %v6990
        %10092 = vmatpush1.bf16.msra.mxu0 %v6989
        %10093 = vmatprep.subr.bf16.mxu0 %v6986
        %10094 = vmatpush1.bf16.msra.mxu0 %v6985
        %10095 = vmatprep.subr.bf16.mxu0 %v7046
        %10096 = vmatpush2.bf16.msra.mxu0 %v7045
        %10097 = vmatprep.subr.bf16.mxu0 %v7042
        %10098 = vmatpush2.bf16.msra.mxu0 %v7041
        %10099 = vmatprep.subr.bf16.mxu0 %v7038
        %10100 = vmatpush2.bf16.msra.mxu0 %v7037
        %10101 = vmatprep.subr.bf16.mxu0 %v7034
        %10102 = vmatpush2.bf16.msra.mxu0 %v7033
        %10103 = vmatprep.subr.bf16.mxu0 %v7030
        %10104 = vmatpush2.bf16.msra.mxu0 %v7029
        %10105 = vmatprep.subr.bf16.mxu0 %v7026
        %10106 = vmatpush2.bf16.msra.mxu0 %v7025
        %10107 = vmatprep.subr.bf16.mxu0 %v7022
        %10108 = vmatpush2.bf16.msra.mxu0 %v7021
        %10109 = vmatprep.subr.bf16.mxu0 %v7018
        %10110 = vmatpush2.bf16.msra.mxu0 %v7017
        %10111 = vmatprep.mubr.bf16.mxu0 %v2060
        %10112 = vmatmul.mubr.bf16.gmra.mxu0 %v2059
        %v10113 = vpop.f32.mrf.mxu0
        %v10114 = vadd.f32 %v10071, %v10113
        %v10115 = vpop.f32.mrf.mxu0
        %v10116 = vadd.f32 %v10073, %v10115
        %v10117 = vpop.f32.mrf.mxu0
        %v10118 = vadd.f32 %v10075, %v10117
        %v10119 = vpop.f32.mrf.mxu0
        %v10120 = vadd.f32 %v10077, %v10119
        %10121 = vdwg.mxu0
        %10122 = vmatprep.subr.bf16.mxu0 %v7078
        %10123 = vmatpush1.bf16.msra.mxu0 %v7077
        %10124 = vmatprep.subr.bf16.mxu0 %v7074
        %10125 = vmatpush1.bf16.msra.mxu0 %v7073
        %10126 = vmatprep.subr.bf16.mxu0 %v7070
        %10127 = vmatpush1.bf16.msra.mxu0 %v7069
        %10128 = vmatprep.subr.bf16.mxu0 %v7066
        %10129 = vmatpush1.bf16.msra.mxu0 %v7065
        %10130 = vmatprep.subr.bf16.mxu0 %v7062
        %10131 = vmatpush1.bf16.msra.mxu0 %v7061
        %10132 = vmatprep.subr.bf16.mxu0 %v7058
        %10133 = vmatpush1.bf16.msra.mxu0 %v7057
        %10134 = vmatprep.subr.bf16.mxu0 %v7054
        %10135 = vmatpush1.bf16.msra.mxu0 %v7053
        %10136 = vmatprep.subr.bf16.mxu0 %v7050
        %10137 = vmatpush1.bf16.msra.mxu0 %v7049
        %10138 = vmatprep.subr.bf16.mxu0 %v7110
        %10139 = vmatpush2.bf16.msra.mxu0 %v7109
        %10140 = vmatprep.subr.bf16.mxu0 %v7106
        %10141 = vmatpush2.bf16.msra.mxu0 %v7105
        %10142 = vmatprep.subr.bf16.mxu0 %v7102
        %10143 = vmatpush2.bf16.msra.mxu0 %v7101
        %10144 = vmatprep.subr.bf16.mxu0 %v7098
        %10145 = vmatpush2.bf16.msra.mxu0 %v7097
        %10146 = vmatprep.subr.bf16.mxu0 %v7094
        %10147 = vmatpush2.bf16.msra.mxu0 %v7093
        %10148 = vmatprep.subr.bf16.mxu0 %v7090
        %10149 = vmatpush2.bf16.msra.mxu0 %v7089
        %10150 = vmatprep.subr.bf16.mxu0 %v7086
        %10151 = vmatpush2.bf16.msra.mxu0 %v7085
        %10152 = vmatprep.subr.bf16.mxu0 %v7082
        %10153 = vmatpush2.bf16.msra.mxu0 %v7081
        %10154 = vmatprep.mubr.bf16.mxu0 %v2062
        %10155 = vmatmul.mubr.bf16.gmra.mxu0 %v2061
        %v10156 = vpop.f32.mrf.mxu0
        %v10157 = vadd.f32 %v10114, %v10156
        %v10158 = vpop.f32.mrf.mxu0
        %v10159 = vadd.f32 %v10116, %v10158
        %v10160 = vpop.f32.mrf.mxu0
        %v10161 = vadd.f32 %v10118, %v10160
        %v10162 = vpop.f32.mrf.mxu0
        %v10163 = vadd.f32 %v10120, %v10162
        %10164 = vdwg.mxu0
        %10165 = vmatprep.subr.bf16.mxu0 %v7142
        %10166 = vmatpush1.bf16.msra.mxu0 %v7141
        %10167 = vmatprep.subr.bf16.mxu0 %v7138
        %10168 = vmatpush1.bf16.msra.mxu0 %v7137
        %10169 = vmatprep.subr.bf16.mxu0 %v7134
        %10170 = vmatpush1.bf16.msra.mxu0 %v7133
        %10171 = vmatprep.subr.bf16.mxu0 %v7130
        %10172 = vmatpush1.bf16.msra.mxu0 %v7129
        %10173 = vmatprep.subr.bf16.mxu0 %v7126
        %10174 = vmatpush1.bf16.msra.mxu0 %v7125
        %10175 = vmatprep.subr.bf16.mxu0 %v7122
        %10176 = vmatpush1.bf16.msra.mxu0 %v7121
        %10177 = vmatprep.subr.bf16.mxu0 %v7118
        %10178 = vmatpush1.bf16.msra.mxu0 %v7117
        %10179 = vmatprep.subr.bf16.mxu0 %v7114
        %10180 = vmatpush1.bf16.msra.mxu0 %v7113
        %10181 = vmatprep.subr.bf16.mxu0 %v7174
        %10182 = vmatpush2.bf16.msra.mxu0 %v7173
        %10183 = vmatprep.subr.bf16.mxu0 %v7170
        %10184 = vmatpush2.bf16.msra.mxu0 %v7169
        %10185 = vmatprep.subr.bf16.mxu0 %v7166
        %10186 = vmatpush2.bf16.msra.mxu0 %v7165
        %10187 = vmatprep.subr.bf16.mxu0 %v7162
        %10188 = vmatpush2.bf16.msra.mxu0 %v7161
        %10189 = vmatprep.subr.bf16.mxu0 %v7158
        %10190 = vmatpush2.bf16.msra.mxu0 %v7157
        %10191 = vmatprep.subr.bf16.mxu0 %v7154
        %10192 = vmatpush2.bf16.msra.mxu0 %v7153
        %10193 = vmatprep.subr.bf16.mxu0 %v7150
        %10194 = vmatpush2.bf16.msra.mxu0 %v7149
        %10195 = vmatprep.subr.bf16.mxu0 %v7146
        %10196 = vmatpush2.bf16.msra.mxu0 %v7145
        %10197 = vmatprep.mubr.bf16.mxu0 %v2064
        %10198 = vmatmul.mubr.bf16.gmra.mxu0 %v2063
        %v10199 = vpop.f32.mrf.mxu0
        %v10200 = vadd.f32 %v10157, %v10199
        %v10201 = vpop.f32.mrf.mxu0
        %v10202 = vadd.f32 %v10159, %v10201
        %v10203 = vpop.f32.mrf.mxu0
        %v10204 = vadd.f32 %v10161, %v10203
        %v10205 = vpop.f32.mrf.mxu0
        %v10206 = vadd.f32 %v10163, %v10205
        %10207 = vdwg.mxu0
        %10208 = vmatprep.subr.bf16.mxu0 %v7206
        %10209 = vmatpush1.bf16.msra.mxu0 %v7205
        %10210 = vmatprep.subr.bf16.mxu0 %v7202
        %10211 = vmatpush1.bf16.msra.mxu0 %v7201
        %10212 = vmatprep.subr.bf16.mxu0 %v7198
        %10213 = vmatpush1.bf16.msra.mxu0 %v7197
        %10214 = vmatprep.subr.bf16.mxu0 %v7194
        %10215 = vmatpush1.bf16.msra.mxu0 %v7193
        %10216 = vmatprep.subr.bf16.mxu0 %v7190
        %10217 = vmatpush1.bf16.msra.mxu0 %v7189
        %10218 = vmatprep.subr.bf16.mxu0 %v7186
        %10219 = vmatpush1.bf16.msra.mxu0 %v7185
        %10220 = vmatprep.subr.bf16.mxu0 %v7182
        %10221 = vmatpush1.bf16.msra.mxu0 %v7181
        %10222 = vmatprep.subr.bf16.mxu0 %v7178
        %10223 = vmatpush1.bf16.msra.mxu0 %v7177
        %10224 = vmatprep.subr.bf16.mxu0 %v7238
        %10225 = vmatpush2.bf16.msra.mxu0 %v7237
        %10226 = vmatprep.subr.bf16.mxu0 %v7234
        %10227 = vmatpush2.bf16.msra.mxu0 %v7233
        %10228 = vmatprep.subr.bf16.mxu0 %v7230
        %10229 = vmatpush2.bf16.msra.mxu0 %v7229
        %10230 = vmatprep.subr.bf16.mxu0 %v7226
        %10231 = vmatpush2.bf16.msra.mxu0 %v7225
        %10232 = vmatprep.subr.bf16.mxu0 %v7222
        %10233 = vmatpush2.bf16.msra.mxu0 %v7221
        %10234 = vmatprep.subr.bf16.mxu0 %v7218
        %10235 = vmatpush2.bf16.msra.mxu0 %v7217
        %10236 = vmatprep.subr.bf16.mxu0 %v7214
        %10237 = vmatpush2.bf16.msra.mxu0 %v7213
        %10238 = vmatprep.subr.bf16.mxu0 %v7210
        %10239 = vmatpush2.bf16.msra.mxu0 %v7209
        %10240 = vmatprep.mubr.bf16.mxu0 %v2066
        %10241 = vmatmul.mubr.bf16.gmra.mxu0 %v2065
        %v10242 = vpop.f32.mrf.mxu0
        %v10243 = vadd.f32 %v10200, %v10242
        %v10244 = vpop.f32.mrf.mxu0
        %v10245 = vadd.f32 %v10202, %v10244
        %v10246 = vpop.f32.mrf.mxu0
        %v10247 = vadd.f32 %v10204, %v10246
        %v10248 = vpop.f32.mrf.mxu0
        %v10249 = vadd.f32 %v10206, %v10248
        %10250 = vdwg.mxu0
        %10251 = vmatprep.subr.bf16.mxu0 %v7270
        %10252 = vmatpush1.bf16.msra.mxu0 %v7269
        %10253 = vmatprep.subr.bf16.mxu0 %v7266
        %10254 = vmatpush1.bf16.msra.mxu0 %v7265
        %10255 = vmatprep.subr.bf16.mxu0 %v7262
        %10256 = vmatpush1.bf16.msra.mxu0 %v7261
        %10257 = vmatprep.subr.bf16.mxu0 %v7258
        %10258 = vmatpush1.bf16.msra.mxu0 %v7257
        %10259 = vmatprep.subr.bf16.mxu0 %v7254
        %10260 = vmatpush1.bf16.msra.mxu0 %v7253
        %10261 = vmatprep.subr.bf16.mxu0 %v7250
        %10262 = vmatpush1.bf16.msra.mxu0 %v7249
        %10263 = vmatprep.subr.bf16.mxu0 %v7246
        %10264 = vmatpush1.bf16.msra.mxu0 %v7245
        %10265 = vmatprep.subr.bf16.mxu0 %v7242
        %10266 = vmatpush1.bf16.msra.mxu0 %v7241
        %10267 = vmatprep.subr.bf16.mxu0 %v7302
        %10268 = vmatpush2.bf16.msra.mxu0 %v7301
        %10269 = vmatprep.subr.bf16.mxu0 %v7298
        %10270 = vmatpush2.bf16.msra.mxu0 %v7297
        %10271 = vmatprep.subr.bf16.mxu0 %v7294
        %10272 = vmatpush2.bf16.msra.mxu0 %v7293
        %10273 = vmatprep.subr.bf16.mxu0 %v7290
        %10274 = vmatpush2.bf16.msra.mxu0 %v7289
        %10275 = vmatprep.subr.bf16.mxu0 %v7286
        %10276 = vmatpush2.bf16.msra.mxu0 %v7285
        %10277 = vmatprep.subr.bf16.mxu0 %v7282
        %10278 = vmatpush2.bf16.msra.mxu0 %v7281
        %10279 = vmatprep.subr.bf16.mxu0 %v7278
        %10280 = vmatpush2.bf16.msra.mxu0 %v7277
        %10281 = vmatprep.subr.bf16.mxu0 %v7274
        %10282 = vmatpush2.bf16.msra.mxu0 %v7273
        %10283 = vmatprep.mubr.bf16.mxu0 %v2068
        %10284 = vmatmul.mubr.bf16.gmra.mxu0 %v2067
        %v10285 = vpop.f32.mrf.mxu0
        %v10286 = vadd.f32 %v10243, %v10285
        %v10287 = vpop.f32.mrf.mxu0
        %v10288 = vadd.f32 %v10245, %v10287
        %v10289 = vpop.f32.mrf.mxu0
        %v10290 = vadd.f32 %v10247, %v10289
        %v10291 = vpop.f32.mrf.mxu0
        %v10292 = vadd.f32 %v10249, %v10291
        %10293 = vdwg.mxu0
        %10294 = vmatprep.subr.bf16.mxu0 %v7334
        %10295 = vmatpush1.bf16.msra.mxu0 %v7333
        %10296 = vmatprep.subr.bf16.mxu0 %v7330
        %10297 = vmatpush1.bf16.msra.mxu0 %v7329
        %10298 = vmatprep.subr.bf16.mxu0 %v7326
        %10299 = vmatpush1.bf16.msra.mxu0 %v7325
        %10300 = vmatprep.subr.bf16.mxu0 %v7322
        %10301 = vmatpush1.bf16.msra.mxu0 %v7321
        %10302 = vmatprep.subr.bf16.mxu0 %v7318
        %10303 = vmatpush1.bf16.msra.mxu0 %v7317
        %10304 = vmatprep.subr.bf16.mxu0 %v7314
        %10305 = vmatpush1.bf16.msra.mxu0 %v7313
        %10306 = vmatprep.subr.bf16.mxu0 %v7310
        %10307 = vmatpush1.bf16.msra.mxu0 %v7309
        %10308 = vmatprep.subr.bf16.mxu0 %v7306
        %10309 = vmatpush1.bf16.msra.mxu0 %v7305
        %10310 = vmatprep.subr.bf16.mxu0 %v7366
        %10311 = vmatpush2.bf16.msra.mxu0 %v7365
        %10312 = vmatprep.subr.bf16.mxu0 %v7362
        %10313 = vmatpush2.bf16.msra.mxu0 %v7361
        %10314 = vmatprep.subr.bf16.mxu0 %v7358
        %10315 = vmatpush2.bf16.msra.mxu0 %v7357
        %10316 = vmatprep.subr.bf16.mxu0 %v7354
        %10317 = vmatpush2.bf16.msra.mxu0 %v7353
        %10318 = vmatprep.subr.bf16.mxu0 %v7350
        %10319 = vmatpush2.bf16.msra.mxu0 %v7349
        %10320 = vmatprep.subr.bf16.mxu0 %v7346
        %10321 = vmatpush2.bf16.msra.mxu0 %v7345
        %10322 = vmatprep.subr.bf16.mxu0 %v7342
        %10323 = vmatpush2.bf16.msra.mxu0 %v7341
        %10324 = vmatprep.subr.bf16.mxu0 %v7338
        %10325 = vmatpush2.bf16.msra.mxu0 %v7337
        %10326 = vmatprep.mubr.bf16.mxu0 %v2070
        %10327 = vmatmul.mubr.bf16.gmra.mxu0 %v2069
        %v10328 = vpop.f32.mrf.mxu0
        %v10329 = vadd.f32 %v10286, %v10328
        %v10330 = vpop.f32.mrf.mxu0
        %v10331 = vadd.f32 %v10288, %v10330
        %v10332 = vpop.f32.mrf.mxu0
        %v10333 = vadd.f32 %v10290, %v10332
        %v10334 = vpop.f32.mrf.mxu0
        %v10335 = vadd.f32 %v10292, %v10334
        %10336 = vdwg.mxu0
        %10337 = vmatprep.subr.bf16.mxu0 %v7398
        %10338 = vmatpush1.bf16.msra.mxu0 %v7397
        %10339 = vmatprep.subr.bf16.mxu0 %v7394
        %10340 = vmatpush1.bf16.msra.mxu0 %v7393
        %10341 = vmatprep.subr.bf16.mxu0 %v7390
        %10342 = vmatpush1.bf16.msra.mxu0 %v7389
        %10343 = vmatprep.subr.bf16.mxu0 %v7386
        %10344 = vmatpush1.bf16.msra.mxu0 %v7385
        %10345 = vmatprep.subr.bf16.mxu0 %v7382
        %10346 = vmatpush1.bf16.msra.mxu0 %v7381
        %10347 = vmatprep.subr.bf16.mxu0 %v7378
        %10348 = vmatpush1.bf16.msra.mxu0 %v7377
        %10349 = vmatprep.subr.bf16.mxu0 %v7374
        %10350 = vmatpush1.bf16.msra.mxu0 %v7373
        %10351 = vmatprep.subr.bf16.mxu0 %v7370
        %10352 = vmatpush1.bf16.msra.mxu0 %v7369
        %10353 = vmatprep.subr.bf16.mxu0 %v7430
        %10354 = vmatpush2.bf16.msra.mxu0 %v7429
        %10355 = vmatprep.subr.bf16.mxu0 %v7426
        %10356 = vmatpush2.bf16.msra.mxu0 %v7425
        %10357 = vmatprep.subr.bf16.mxu0 %v7422
        %10358 = vmatpush2.bf16.msra.mxu0 %v7421
        %10359 = vmatprep.subr.bf16.mxu0 %v7418
        %10360 = vmatpush2.bf16.msra.mxu0 %v7417
        %10361 = vmatprep.subr.bf16.mxu0 %v7414
        %10362 = vmatpush2.bf16.msra.mxu0 %v7413
        %10363 = vmatprep.subr.bf16.mxu0 %v7410
        %10364 = vmatpush2.bf16.msra.mxu0 %v7409
        %10365 = vmatprep.subr.bf16.mxu0 %v7406
        %10366 = vmatpush2.bf16.msra.mxu0 %v7405
        %10367 = vmatprep.subr.bf16.mxu0 %v7402
        %10368 = vmatpush2.bf16.msra.mxu0 %v7401
        %10369 = vmatprep.mubr.bf16.mxu0 %v2072
        %10370 = vmatmul.mubr.bf16.gmra.mxu0 %v2071
        %v10371 = vpop.f32.mrf.mxu0
        %v10372 = vadd.f32 %v10329, %v10371
        %v10373 = vpop.f32.mrf.mxu0
        %v10374 = vadd.f32 %v10331, %v10373
        %v10375 = vpop.f32.mrf.mxu0
        %v10376 = vadd.f32 %v10333, %v10375
        %v10377 = vpop.f32.mrf.mxu0
        %v10378 = vadd.f32 %v10335, %v10377
        %10379 = vdwg.mxu0
        %10380 = vmatprep.subr.bf16.mxu0 %v7462
        %10381 = vmatpush1.bf16.msra.mxu0 %v7461
        %10382 = vmatprep.subr.bf16.mxu0 %v7458
        %10383 = vmatpush1.bf16.msra.mxu0 %v7457
        %10384 = vmatprep.subr.bf16.mxu0 %v7454
        %10385 = vmatpush1.bf16.msra.mxu0 %v7453
        %10386 = vmatprep.subr.bf16.mxu0 %v7450
        %10387 = vmatpush1.bf16.msra.mxu0 %v7449
        %10388 = vmatprep.subr.bf16.mxu0 %v7446
        %10389 = vmatpush1.bf16.msra.mxu0 %v7445
        %10390 = vmatprep.subr.bf16.mxu0 %v7442
        %10391 = vmatpush1.bf16.msra.mxu0 %v7441
        %10392 = vmatprep.subr.bf16.mxu0 %v7438
        %10393 = vmatpush1.bf16.msra.mxu0 %v7437
        %10394 = vmatprep.subr.bf16.mxu0 %v7434
        %10395 = vmatpush1.bf16.msra.mxu0 %v7433
        %10396 = vmatprep.subr.bf16.mxu0 %v7494
        %10397 = vmatpush2.bf16.msra.mxu0 %v7493
        %10398 = vmatprep.subr.bf16.mxu0 %v7490
        %10399 = vmatpush2.bf16.msra.mxu0 %v7489
        %10400 = vmatprep.subr.bf16.mxu0 %v7486
        %10401 = vmatpush2.bf16.msra.mxu0 %v7485
        %10402 = vmatprep.subr.bf16.mxu0 %v7482
        %10403 = vmatpush2.bf16.msra.mxu0 %v7481
        %10404 = vmatprep.subr.bf16.mxu0 %v7478
        %10405 = vmatpush2.bf16.msra.mxu0 %v7477
        %10406 = vmatprep.subr.bf16.mxu0 %v7474
        %10407 = vmatpush2.bf16.msra.mxu0 %v7473
        %10408 = vmatprep.subr.bf16.mxu0 %v7470
        %10409 = vmatpush2.bf16.msra.mxu0 %v7469
        %10410 = vmatprep.subr.bf16.mxu0 %v7466
        %10411 = vmatpush2.bf16.msra.mxu0 %v7465
        %10412 = vmatprep.mubr.bf16.mxu0 %v2074
        %10413 = vmatmul.mubr.bf16.gmra.mxu0 %v2073
        %v10414 = vpop.f32.mrf.mxu0
        %v10415 = vadd.f32 %v10372, %v10414
        %v10416 = vpop.f32.mrf.mxu0
        %v10417 = vadd.f32 %v10374, %v10416
        %v10418 = vpop.f32.mrf.mxu0
        %v10419 = vadd.f32 %v10376, %v10418
        %v10420 = vpop.f32.mrf.mxu0
        %v10421 = vadd.f32 %v10378, %v10420
        %10422 = vdwg.mxu0
        %10423 = vmatprep.subr.bf16.mxu0 %v7526
        %10424 = vmatpush1.bf16.msra.mxu0 %v7525
        %10425 = vmatprep.subr.bf16.mxu0 %v7522
        %10426 = vmatpush1.bf16.msra.mxu0 %v7521
        %10427 = vmatprep.subr.bf16.mxu0 %v7518
        %10428 = vmatpush1.bf16.msra.mxu0 %v7517
        %10429 = vmatprep.subr.bf16.mxu0 %v7514
        %10430 = vmatpush1.bf16.msra.mxu0 %v7513
        %10431 = vmatprep.subr.bf16.mxu0 %v7510
        %10432 = vmatpush1.bf16.msra.mxu0 %v7509
        %10433 = vmatprep.subr.bf16.mxu0 %v7506
        %10434 = vmatpush1.bf16.msra.mxu0 %v7505
        %10435 = vmatprep.subr.bf16.mxu0 %v7502
        %10436 = vmatpush1.bf16.msra.mxu0 %v7501
        %10437 = vmatprep.subr.bf16.mxu0 %v7498
        %10438 = vmatpush1.bf16.msra.mxu0 %v7497
        %10439 = vmatprep.subr.bf16.mxu0 %v7558
        %10440 = vmatpush2.bf16.msra.mxu0 %v7557
        %10441 = vmatprep.subr.bf16.mxu0 %v7554
        %10442 = vmatpush2.bf16.msra.mxu0 %v7553
        %10443 = vmatprep.subr.bf16.mxu0 %v7550
        %10444 = vmatpush2.bf16.msra.mxu0 %v7549
        %10445 = vmatprep.subr.bf16.mxu0 %v7546
        %10446 = vmatpush2.bf16.msra.mxu0 %v7545
        %10447 = vmatprep.subr.bf16.mxu0 %v7542
        %10448 = vmatpush2.bf16.msra.mxu0 %v7541
        %10449 = vmatprep.subr.bf16.mxu0 %v7538
        %10450 = vmatpush2.bf16.msra.mxu0 %v7537
        %10451 = vmatprep.subr.bf16.mxu0 %v7534
        %10452 = vmatpush2.bf16.msra.mxu0 %v7533
        %10453 = vmatprep.subr.bf16.mxu0 %v7530
        %10454 = vmatpush2.bf16.msra.mxu0 %v7529
        %10455 = vmatprep.mubr.bf16.mxu0 %v2076
        %10456 = vmatmul.mubr.bf16.gmra.mxu0 %v2075
        %v10457 = vpop.f32.mrf.mxu0
        %v10458 = vadd.f32 %v10415, %v10457
        %v10459 = vpop.f32.mrf.mxu0
        %v10460 = vadd.f32 %v10417, %v10459
        %v10461 = vpop.f32.mrf.mxu0
        %v10462 = vadd.f32 %v10419, %v10461
        %v10463 = vpop.f32.mrf.mxu0
        %v10464 = vadd.f32 %v10421, %v10463
        %10465 = vdwg.mxu0
        %10466 = vmatprep.subr.bf16.mxu0 %v7590
        %10467 = vmatpush1.bf16.msra.mxu0 %v7589
        %10468 = vmatprep.subr.bf16.mxu0 %v7586
        %10469 = vmatpush1.bf16.msra.mxu0 %v7585
        %10470 = vmatprep.subr.bf16.mxu0 %v7582
        %10471 = vmatpush1.bf16.msra.mxu0 %v7581
        %10472 = vmatprep.subr.bf16.mxu0 %v7578
        %10473 = vmatpush1.bf16.msra.mxu0 %v7577
        %10474 = vmatprep.subr.bf16.mxu0 %v7574
        %10475 = vmatpush1.bf16.msra.mxu0 %v7573
        %10476 = vmatprep.subr.bf16.mxu0 %v7570
        %10477 = vmatpush1.bf16.msra.mxu0 %v7569
        %10478 = vmatprep.subr.bf16.mxu0 %v7566
        %10479 = vmatpush1.bf16.msra.mxu0 %v7565
        %10480 = vmatprep.subr.bf16.mxu0 %v7562
        %10481 = vmatpush1.bf16.msra.mxu0 %v7561
        %10482 = vmatprep.subr.bf16.mxu0 %v7622
        %10483 = vmatpush2.bf16.msra.mxu0 %v7621
        %10484 = vmatprep.subr.bf16.mxu0 %v7618
        %10485 = vmatpush2.bf16.msra.mxu0 %v7617
        %10486 = vmatprep.subr.bf16.mxu0 %v7614
        %10487 = vmatpush2.bf16.msra.mxu0 %v7613
        %10488 = vmatprep.subr.bf16.mxu0 %v7610
        %10489 = vmatpush2.bf16.msra.mxu0 %v7609
        %10490 = vmatprep.subr.bf16.mxu0 %v7606
        %10491 = vmatpush2.bf16.msra.mxu0 %v7605
        %10492 = vmatprep.subr.bf16.mxu0 %v7602
        %10493 = vmatpush2.bf16.msra.mxu0 %v7601
        %10494 = vmatprep.subr.bf16.mxu0 %v7598
        %10495 = vmatpush2.bf16.msra.mxu0 %v7597
        %10496 = vmatprep.subr.bf16.mxu0 %v7594
        %10497 = vmatpush2.bf16.msra.mxu0 %v7593
        %10498 = vmatprep.mubr.bf16.mxu0 %v2078
        %10499 = vmatmul.mubr.bf16.gmra.mxu0 %v2077
        %v10500 = vpop.f32.mrf.mxu0
        %v10501 = vadd.f32 %v10458, %v10500
        %v10502 = vpop.f32.mrf.mxu0
        %v10503 = vadd.f32 %v10460, %v10502
        %v10504 = vpop.f32.mrf.mxu0
        %v10505 = vadd.f32 %v10462, %v10504
        %v10506 = vpop.f32.mrf.mxu0
        %v10507 = vadd.f32 %v10464, %v10506
        %10508 = vdwg.mxu0
        %10509 = vmatprep.subr.bf16.mxu0 %v7654
        %10510 = vmatpush1.bf16.msra.mxu0 %v7653
        %10511 = vmatprep.subr.bf16.mxu0 %v7650
        %10512 = vmatpush1.bf16.msra.mxu0 %v7649
        %10513 = vmatprep.subr.bf16.mxu0 %v7646
        %10514 = vmatpush1.bf16.msra.mxu0 %v7645
        %10515 = vmatprep.subr.bf16.mxu0 %v7642
        %10516 = vmatpush1.bf16.msra.mxu0 %v7641
        %10517 = vmatprep.subr.bf16.mxu0 %v7638
        %10518 = vmatpush1.bf16.msra.mxu0 %v7637
        %10519 = vmatprep.subr.bf16.mxu0 %v7634
        %10520 = vmatpush1.bf16.msra.mxu0 %v7633
        %10521 = vmatprep.subr.bf16.mxu0 %v7630
        %10522 = vmatpush1.bf16.msra.mxu0 %v7629
        %10523 = vmatprep.subr.bf16.mxu0 %v7626
        %10524 = vmatpush1.bf16.msra.mxu0 %v7625
        %10525 = vmatprep.subr.bf16.mxu0 %v7686
        %10526 = vmatpush2.bf16.msra.mxu0 %v7685
        %10527 = vmatprep.subr.bf16.mxu0 %v7682
        %10528 = vmatpush2.bf16.msra.mxu0 %v7681
        %10529 = vmatprep.subr.bf16.mxu0 %v7678
        %10530 = vmatpush2.bf16.msra.mxu0 %v7677
        %10531 = vmatprep.subr.bf16.mxu0 %v7674
        %10532 = vmatpush2.bf16.msra.mxu0 %v7673
        %10533 = vmatprep.subr.bf16.mxu0 %v7670
        %10534 = vmatpush2.bf16.msra.mxu0 %v7669
        %10535 = vmatprep.subr.bf16.mxu0 %v7666
        %10536 = vmatpush2.bf16.msra.mxu0 %v7665
        %10537 = vmatprep.subr.bf16.mxu0 %v7662
        %10538 = vmatpush2.bf16.msra.mxu0 %v7661
        %10539 = vmatprep.subr.bf16.mxu0 %v7658
        %10540 = vmatpush2.bf16.msra.mxu0 %v7657
        %10541 = vmatprep.mubr.bf16.mxu0 %v2080
        %10542 = vmatmul.mubr.bf16.gmra.mxu0 %v2079
        %v10543 = vpop.f32.mrf.mxu0
        %v10544 = vadd.f32 %v10501, %v10543
        %v10545 = vpop.f32.mrf.mxu0
        %v10546 = vadd.f32 %v10503, %v10545
        %v10547 = vpop.f32.mrf.mxu0
        %v10548 = vadd.f32 %v10505, %v10547
        %v10549 = vpop.f32.mrf.mxu0
        %v10550 = vadd.f32 %v10507, %v10549
        %10551 = vdwg.mxu0
        %10552 = vmatprep.subr.bf16.mxu0 %v7718
        %10553 = vmatpush1.bf16.msra.mxu0 %v7717
        %10554 = vmatprep.subr.bf16.mxu0 %v7714
        %10555 = vmatpush1.bf16.msra.mxu0 %v7713
        %10556 = vmatprep.subr.bf16.mxu0 %v7710
        %10557 = vmatpush1.bf16.msra.mxu0 %v7709
        %10558 = vmatprep.subr.bf16.mxu0 %v7706
        %10559 = vmatpush1.bf16.msra.mxu0 %v7705
        %10560 = vmatprep.subr.bf16.mxu0 %v7702
        %10561 = vmatpush1.bf16.msra.mxu0 %v7701
        %10562 = vmatprep.subr.bf16.mxu0 %v7698
        %10563 = vmatpush1.bf16.msra.mxu0 %v7697
        %10564 = vmatprep.subr.bf16.mxu0 %v7694
        %10565 = vmatpush1.bf16.msra.mxu0 %v7693
        %10566 = vmatprep.subr.bf16.mxu0 %v7690
        %10567 = vmatpush1.bf16.msra.mxu0 %v7689
        %10568 = vmatprep.subr.bf16.mxu0 %v7750
        %10569 = vmatpush2.bf16.msra.mxu0 %v7749
        %10570 = vmatprep.subr.bf16.mxu0 %v7746
        %10571 = vmatpush2.bf16.msra.mxu0 %v7745
        %10572 = vmatprep.subr.bf16.mxu0 %v7742
        %10573 = vmatpush2.bf16.msra.mxu0 %v7741
        %10574 = vmatprep.subr.bf16.mxu0 %v7738
        %10575 = vmatpush2.bf16.msra.mxu0 %v7737
        %10576 = vmatprep.subr.bf16.mxu0 %v7734
        %10577 = vmatpush2.bf16.msra.mxu0 %v7733
        %10578 = vmatprep.subr.bf16.mxu0 %v7730
        %10579 = vmatpush2.bf16.msra.mxu0 %v7729
        %10580 = vmatprep.subr.bf16.mxu0 %v7726
        %10581 = vmatpush2.bf16.msra.mxu0 %v7725
        %10582 = vmatprep.subr.bf16.mxu0 %v7722
        %10583 = vmatpush2.bf16.msra.mxu0 %v7721
        %10584 = vmatprep.mubr.bf16.mxu0 %v2082
        %10585 = vmatmul.mubr.bf16.gmra.mxu0 %v2081
        %v10586 = vpop.f32.mrf.mxu0
        %v10587 = vadd.f32 %v10544, %v10586
        %v10588 = vpop.f32.mrf.mxu0
        %v10589 = vadd.f32 %v10546, %v10588
        %v10590 = vpop.f32.mrf.mxu0
        %v10591 = vadd.f32 %v10548, %v10590
        %v10592 = vpop.f32.mrf.mxu0
        %v10593 = vadd.f32 %v10550, %v10592
        %10594 = vdwg.mxu0
        %10595 = vmatprep.subr.bf16.mxu0 %v7782
        %10596 = vmatpush1.bf16.msra.mxu0 %v7781
        %10597 = vmatprep.subr.bf16.mxu0 %v7778
        %10598 = vmatpush1.bf16.msra.mxu0 %v7777
        %10599 = vmatprep.subr.bf16.mxu0 %v7774
        %10600 = vmatpush1.bf16.msra.mxu0 %v7773
        %10601 = vmatprep.subr.bf16.mxu0 %v7770
        %10602 = vmatpush1.bf16.msra.mxu0 %v7769
        %10603 = vmatprep.subr.bf16.mxu0 %v7766
        %10604 = vmatpush1.bf16.msra.mxu0 %v7765
        %10605 = vmatprep.subr.bf16.mxu0 %v7762
        %10606 = vmatpush1.bf16.msra.mxu0 %v7761
        %10607 = vmatprep.subr.bf16.mxu0 %v7758
        %10608 = vmatpush1.bf16.msra.mxu0 %v7757
        %10609 = vmatprep.subr.bf16.mxu0 %v7754
        %10610 = vmatpush1.bf16.msra.mxu0 %v7753
        %10611 = vmatprep.subr.bf16.mxu0 %v7814
        %10612 = vmatpush2.bf16.msra.mxu0 %v7813
        %10613 = vmatprep.subr.bf16.mxu0 %v7810
        %10614 = vmatpush2.bf16.msra.mxu0 %v7809
        %10615 = vmatprep.subr.bf16.mxu0 %v7806
        %10616 = vmatpush2.bf16.msra.mxu0 %v7805
        %10617 = vmatprep.subr.bf16.mxu0 %v7802
        %10618 = vmatpush2.bf16.msra.mxu0 %v7801
        %10619 = vmatprep.subr.bf16.mxu0 %v7798
        %10620 = vmatpush2.bf16.msra.mxu0 %v7797
        %10621 = vmatprep.subr.bf16.mxu0 %v7794
        %10622 = vmatpush2.bf16.msra.mxu0 %v7793
        %10623 = vmatprep.subr.bf16.mxu0 %v7790
        %10624 = vmatpush2.bf16.msra.mxu0 %v7789
        %10625 = vmatprep.subr.bf16.mxu0 %v7786
        %10626 = vmatpush2.bf16.msra.mxu0 %v7785
        %10627 = vmatprep.mubr.bf16.mxu0 %v2084
        %10628 = vmatmul.mubr.bf16.gmra.mxu0 %v2083
        %v10629 = vpop.f32.mrf.mxu0
        %v10630 = vadd.f32 %v10587, %v10629
        %v10631 = vpop.f32.mrf.mxu0
        %v10632 = vadd.f32 %v10589, %v10631
        %v10633 = vpop.f32.mrf.mxu0
        %v10634 = vadd.f32 %v10591, %v10633
        %v10635 = vpop.f32.mrf.mxu0
        %v10636 = vadd.f32 %v10593, %v10635
        %10637 = vdwg.mxu0
        %10638 = vmatprep.subr.bf16.mxu0 %v7846
        %10639 = vmatpush1.bf16.msra.mxu0 %v7845
        %10640 = vmatprep.subr.bf16.mxu0 %v7842
        %10641 = vmatpush1.bf16.msra.mxu0 %v7841
        %10642 = vmatprep.subr.bf16.mxu0 %v7838
        %10643 = vmatpush1.bf16.msra.mxu0 %v7837
        %10644 = vmatprep.subr.bf16.mxu0 %v7834
        %10645 = vmatpush1.bf16.msra.mxu0 %v7833
        %10646 = vmatprep.subr.bf16.mxu0 %v7830
        %10647 = vmatpush1.bf16.msra.mxu0 %v7829
        %10648 = vmatprep.subr.bf16.mxu0 %v7826
        %10649 = vmatpush1.bf16.msra.mxu0 %v7825
        %10650 = vmatprep.subr.bf16.mxu0 %v7822
        %10651 = vmatpush1.bf16.msra.mxu0 %v7821
        %10652 = vmatprep.subr.bf16.mxu0 %v7818
        %10653 = vmatpush1.bf16.msra.mxu0 %v7817
        %10654 = vmatprep.subr.bf16.mxu0 %v7878
        %10655 = vmatpush2.bf16.msra.mxu0 %v7877
        %10656 = vmatprep.subr.bf16.mxu0 %v7874
        %10657 = vmatpush2.bf16.msra.mxu0 %v7873
        %10658 = vmatprep.subr.bf16.mxu0 %v7870
        %10659 = vmatpush2.bf16.msra.mxu0 %v7869
        %10660 = vmatprep.subr.bf16.mxu0 %v7866
        %10661 = vmatpush2.bf16.msra.mxu0 %v7865
        %10662 = vmatprep.subr.bf16.mxu0 %v7862
        %10663 = vmatpush2.bf16.msra.mxu0 %v7861
        %10664 = vmatprep.subr.bf16.mxu0 %v7858
        %10665 = vmatpush2.bf16.msra.mxu0 %v7857
        %10666 = vmatprep.subr.bf16.mxu0 %v7854
        %10667 = vmatpush2.bf16.msra.mxu0 %v7853
        %10668 = vmatprep.subr.bf16.mxu0 %v7850
        %10669 = vmatpush2.bf16.msra.mxu0 %v7849
        %10670 = vmatprep.mubr.bf16.mxu0 %v2086
        %10671 = vmatmul.mubr.bf16.gmra.mxu0 %v2085
        %v10672 = vpop.f32.mrf.mxu0
        %v10673 = vadd.f32 %v10630, %v10672
        %v10674 = vpop.f32.mrf.mxu0
        %v10675 = vadd.f32 %v10632, %v10674
        %v10676 = vpop.f32.mrf.mxu0
        %v10677 = vadd.f32 %v10634, %v10676
        %v10678 = vpop.f32.mrf.mxu0
        %v10679 = vadd.f32 %v10636, %v10678
        %10680 = vdwg.mxu0
        %10681 = vmatprep.subr.bf16.mxu0 %v7910
        %10682 = vmatpush1.bf16.msra.mxu0 %v7909
        %10683 = vmatprep.subr.bf16.mxu0 %v7906
        %10684 = vmatpush1.bf16.msra.mxu0 %v7905
        %10685 = vmatprep.subr.bf16.mxu0 %v7902
        %10686 = vmatpush1.bf16.msra.mxu0 %v7901
        %10687 = vmatprep.subr.bf16.mxu0 %v7898
        %10688 = vmatpush1.bf16.msra.mxu0 %v7897
        %10689 = vmatprep.subr.bf16.mxu0 %v7894
        %10690 = vmatpush1.bf16.msra.mxu0 %v7893
        %10691 = vmatprep.subr.bf16.mxu0 %v7890
        %10692 = vmatpush1.bf16.msra.mxu0 %v7889
        %10693 = vmatprep.subr.bf16.mxu0 %v7886
        %10694 = vmatpush1.bf16.msra.mxu0 %v7885
        %10695 = vmatprep.subr.bf16.mxu0 %v7882
        %10696 = vmatpush1.bf16.msra.mxu0 %v7881
        %10697 = vmatprep.subr.bf16.mxu0 %v7942
        %10698 = vmatpush2.bf16.msra.mxu0 %v7941
        %10699 = vmatprep.subr.bf16.mxu0 %v7938
        %10700 = vmatpush2.bf16.msra.mxu0 %v7937
        %10701 = vmatprep.subr.bf16.mxu0 %v7934
        %10702 = vmatpush2.bf16.msra.mxu0 %v7933
        %10703 = vmatprep.subr.bf16.mxu0 %v7930
        %10704 = vmatpush2.bf16.msra.mxu0 %v7929
        %10705 = vmatprep.subr.bf16.mxu0 %v7926
        %10706 = vmatpush2.bf16.msra.mxu0 %v7925
        %10707 = vmatprep.subr.bf16.mxu0 %v7922
        %10708 = vmatpush2.bf16.msra.mxu0 %v7921
        %10709 = vmatprep.subr.bf16.mxu0 %v7918
        %10710 = vmatpush2.bf16.msra.mxu0 %v7917
        %10711 = vmatprep.subr.bf16.mxu0 %v7914
        %10712 = vmatpush2.bf16.msra.mxu0 %v7913
        %10713 = vmatprep.mubr.bf16.mxu0 %v2088
        %10714 = vmatmul.mubr.bf16.gmra.mxu0 %v2087
        %v10715 = vpop.f32.mrf.mxu0
        %v10716 = vadd.f32 %v10673, %v10715
        %v10717 = vpop.f32.mrf.mxu0
        %v10718 = vadd.f32 %v10675, %v10717
        %v10719 = vpop.f32.mrf.mxu0
        %v10720 = vadd.f32 %v10677, %v10719
        %v10721 = vpop.f32.mrf.mxu0
        %v10722 = vadd.f32 %v10679, %v10721
        %10723 = vdwg.mxu0
        %10724 = vmatprep.subr.bf16.mxu0 %v7974
        %10725 = vmatpush1.bf16.msra.mxu0 %v7973
        %10726 = vmatprep.subr.bf16.mxu0 %v7970
        %10727 = vmatpush1.bf16.msra.mxu0 %v7969
        %10728 = vmatprep.subr.bf16.mxu0 %v7966
        %10729 = vmatpush1.bf16.msra.mxu0 %v7965
        %10730 = vmatprep.subr.bf16.mxu0 %v7962
        %10731 = vmatpush1.bf16.msra.mxu0 %v7961
        %10732 = vmatprep.subr.bf16.mxu0 %v7958
        %10733 = vmatpush1.bf16.msra.mxu0 %v7957
        %10734 = vmatprep.subr.bf16.mxu0 %v7954
        %10735 = vmatpush1.bf16.msra.mxu0 %v7953
        %10736 = vmatprep.subr.bf16.mxu0 %v7950
        %10737 = vmatpush1.bf16.msra.mxu0 %v7949
        %10738 = vmatprep.subr.bf16.mxu0 %v7946
        %10739 = vmatpush1.bf16.msra.mxu0 %v7945
        %10740 = vmatprep.subr.bf16.mxu0 %v8006
        %10741 = vmatpush2.bf16.msra.mxu0 %v8005
        %10742 = vmatprep.subr.bf16.mxu0 %v8002
        %10743 = vmatpush2.bf16.msra.mxu0 %v8001
        %10744 = vmatprep.subr.bf16.mxu0 %v7998
        %10745 = vmatpush2.bf16.msra.mxu0 %v7997
        %10746 = vmatprep.subr.bf16.mxu0 %v7994
        %10747 = vmatpush2.bf16.msra.mxu0 %v7993
        %10748 = vmatprep.subr.bf16.mxu0 %v7990
        %10749 = vmatpush2.bf16.msra.mxu0 %v7989
        %10750 = vmatprep.subr.bf16.mxu0 %v7986
        %10751 = vmatpush2.bf16.msra.mxu0 %v7985
        %10752 = vmatprep.subr.bf16.mxu0 %v7982
        %10753 = vmatpush2.bf16.msra.mxu0 %v7981
        %10754 = vmatprep.subr.bf16.mxu0 %v7978
        %10755 = vmatpush2.bf16.msra.mxu0 %v7977
        %10756 = vmatprep.mubr.bf16.mxu0 %v2090
        %10757 = vmatmul.mubr.bf16.gmra.mxu0 %v2089
        %v10758 = vpop.f32.mrf.mxu0
        %v10759 = vadd.f32 %v10716, %v10758
        %v10760 = vpop.f32.mrf.mxu0
        %v10761 = vadd.f32 %v10718, %v10760
        %v10762 = vpop.f32.mrf.mxu0
        %v10763 = vadd.f32 %v10720, %v10762
        %v10764 = vpop.f32.mrf.mxu0
        %v10765 = vadd.f32 %v10722, %v10764
        %10766 = vdwg.mxu0
        %10767 = vmatprep.subr.bf16.mxu0 %v8038
        %10768 = vmatpush1.bf16.msra.mxu0 %v8037
        %10769 = vmatprep.subr.bf16.mxu0 %v8034
        %10770 = vmatpush1.bf16.msra.mxu0 %v8033
        %10771 = vmatprep.subr.bf16.mxu0 %v8030
        %10772 = vmatpush1.bf16.msra.mxu0 %v8029
        %10773 = vmatprep.subr.bf16.mxu0 %v8026
        %10774 = vmatpush1.bf16.msra.mxu0 %v8025
        %10775 = vmatprep.subr.bf16.mxu0 %v8022
        %10776 = vmatpush1.bf16.msra.mxu0 %v8021
        %10777 = vmatprep.subr.bf16.mxu0 %v8018
        %10778 = vmatpush1.bf16.msra.mxu0 %v8017
        %10779 = vmatprep.subr.bf16.mxu0 %v8014
        %10780 = vmatpush1.bf16.msra.mxu0 %v8013
        %10781 = vmatprep.subr.bf16.mxu0 %v8010
        %10782 = vmatpush1.bf16.msra.mxu0 %v8009
        %10783 = vmatprep.subr.bf16.mxu0 %v8070
        %10784 = vmatpush2.bf16.msra.mxu0 %v8069
        %10785 = vmatprep.subr.bf16.mxu0 %v8066
        %10786 = vmatpush2.bf16.msra.mxu0 %v8065
        %10787 = vmatprep.subr.bf16.mxu0 %v8062
        %10788 = vmatpush2.bf16.msra.mxu0 %v8061
        %10789 = vmatprep.subr.bf16.mxu0 %v8058
        %10790 = vmatpush2.bf16.msra.mxu0 %v8057
        %10791 = vmatprep.subr.bf16.mxu0 %v8054
        %10792 = vmatpush2.bf16.msra.mxu0 %v8053
        %10793 = vmatprep.subr.bf16.mxu0 %v8050
        %10794 = vmatpush2.bf16.msra.mxu0 %v8049
        %10795 = vmatprep.subr.bf16.mxu0 %v8046
        %10796 = vmatpush2.bf16.msra.mxu0 %v8045
        %10797 = vmatprep.subr.bf16.mxu0 %v8042
        %10798 = vmatpush2.bf16.msra.mxu0 %v8041
        %10799 = vmatprep.mubr.bf16.mxu0 %v2092
        %10800 = vmatmul.mubr.bf16.gmra.mxu0 %v2091
        %v10801 = vpop.f32.mrf.mxu0
        %v10802 = vadd.f32 %v10759, %v10801
        %v10803 = vpop.f32.mrf.mxu0
        %v10804 = vadd.f32 %v10761, %v10803
        %v10805 = vpop.f32.mrf.mxu0
        %v10806 = vadd.f32 %v10763, %v10805
        %v10807 = vpop.f32.mrf.mxu0
        %v10808 = vadd.f32 %v10765, %v10807
        %10809 = vdwg.mxu0
        %10810 = vmatprep.subr.bf16.mxu0 %v8102
        %10811 = vmatpush1.bf16.msra.mxu0 %v8101
        %10812 = vmatprep.subr.bf16.mxu0 %v8098
        %10813 = vmatpush1.bf16.msra.mxu0 %v8097
        %10814 = vmatprep.subr.bf16.mxu0 %v8094
        %10815 = vmatpush1.bf16.msra.mxu0 %v8093
        %10816 = vmatprep.subr.bf16.mxu0 %v8090
        %10817 = vmatpush1.bf16.msra.mxu0 %v8089
        %10818 = vmatprep.subr.bf16.mxu0 %v8086
        %10819 = vmatpush1.bf16.msra.mxu0 %v8085
        %10820 = vmatprep.subr.bf16.mxu0 %v8082
        %10821 = vmatpush1.bf16.msra.mxu0 %v8081
        %10822 = vmatprep.subr.bf16.mxu0 %v8078
        %10823 = vmatpush1.bf16.msra.mxu0 %v8077
        %10824 = vmatprep.subr.bf16.mxu0 %v8074
        %10825 = vmatpush1.bf16.msra.mxu0 %v8073
        %10826 = vmatprep.subr.bf16.mxu0 %v8134
        %10827 = vmatpush2.bf16.msra.mxu0 %v8133
        %10828 = vmatprep.subr.bf16.mxu0 %v8130
        %10829 = vmatpush2.bf16.msra.mxu0 %v8129
        %10830 = vmatprep.subr.bf16.mxu0 %v8126
        %10831 = vmatpush2.bf16.msra.mxu0 %v8125
        %10832 = vmatprep.subr.bf16.mxu0 %v8122
        %10833 = vmatpush2.bf16.msra.mxu0 %v8121
        %10834 = vmatprep.subr.bf16.mxu0 %v8118
        %10835 = vmatpush2.bf16.msra.mxu0 %v8117
        %10836 = vmatprep.subr.bf16.mxu0 %v8114
        %10837 = vmatpush2.bf16.msra.mxu0 %v8113
        %10838 = vmatprep.subr.bf16.mxu0 %v8110
        %10839 = vmatpush2.bf16.msra.mxu0 %v8109
        %10840 = vmatprep.subr.bf16.mxu0 %v8106
        %10841 = vmatpush2.bf16.msra.mxu0 %v8105
        %10842 = vmatprep.mubr.bf16.mxu0 %v2094
        %10843 = vmatmul.mubr.bf16.gmra.mxu0 %v2093
        %v10844 = vpop.f32.mrf.mxu0
        %v10845 = vadd.f32 %v10802, %v10844
        %v10846 = vpop.f32.mrf.mxu0
        %v10847 = vadd.f32 %v10804, %v10846
        %v10848 = vpop.f32.mrf.mxu0
        %v10849 = vadd.f32 %v10806, %v10848
        %v10850 = vpop.f32.mrf.mxu0
        %v10851 = vadd.f32 %v10808, %v10850
        %10852 = vdwg.mxu0
        %10853 = vmatprep.subr.bf16.mxu0 %v8166
        %10854 = vmatpush1.bf16.msra.mxu0 %v8165
        %10855 = vmatprep.subr.bf16.mxu0 %v8162
        %10856 = vmatpush1.bf16.msra.mxu0 %v8161
        %10857 = vmatprep.subr.bf16.mxu0 %v8158
        %10858 = vmatpush1.bf16.msra.mxu0 %v8157
        %10859 = vmatprep.subr.bf16.mxu0 %v8154
        %10860 = vmatpush1.bf16.msra.mxu0 %v8153
        %10861 = vmatprep.subr.bf16.mxu0 %v8150
        %10862 = vmatpush1.bf16.msra.mxu0 %v8149
        %10863 = vmatprep.subr.bf16.mxu0 %v8146
        %10864 = vmatpush1.bf16.msra.mxu0 %v8145
        %10865 = vmatprep.subr.bf16.mxu0 %v8142
        %10866 = vmatpush1.bf16.msra.mxu0 %v8141
        %10867 = vmatprep.subr.bf16.mxu0 %v8138
        %10868 = vmatpush1.bf16.msra.mxu0 %v8137
        %10869 = vmatprep.subr.bf16.mxu0 %v8198
        %10870 = vmatpush2.bf16.msra.mxu0 %v8197
        %10871 = vmatprep.subr.bf16.mxu0 %v8194
        %10872 = vmatpush2.bf16.msra.mxu0 %v8193
        %10873 = vmatprep.subr.bf16.mxu0 %v8190
        %10874 = vmatpush2.bf16.msra.mxu0 %v8189
        %10875 = vmatprep.subr.bf16.mxu0 %v8186
        %10876 = vmatpush2.bf16.msra.mxu0 %v8185
        %10877 = vmatprep.subr.bf16.mxu0 %v8182
        %10878 = vmatpush2.bf16.msra.mxu0 %v8181
        %10879 = vmatprep.subr.bf16.mxu0 %v8178
        %10880 = vmatpush2.bf16.msra.mxu0 %v8177
        %10881 = vmatprep.subr.bf16.mxu0 %v8174
        %10882 = vmatpush2.bf16.msra.mxu0 %v8173
        %10883 = vmatprep.subr.bf16.mxu0 %v8170
        %10884 = vmatpush2.bf16.msra.mxu0 %v8169
        %10885 = vmatprep.mubr.bf16.mxu0 %v2096
        %10886 = vmatmul.mubr.bf16.gmra.mxu0 %v2095
        %v10887 = vpop.f32.mrf.mxu0
        %v10888 = vadd.f32 %v10845, %v10887
        %v10889 = vpop.f32.mrf.mxu0
        %v10890 = vadd.f32 %v10847, %v10889
        %v10891 = vpop.f32.mrf.mxu0
        %v10892 = vadd.f32 %v10849, %v10891
        %v10893 = vpop.f32.mrf.mxu0
        %v10894 = vadd.f32 %v10851, %v10893
        %10895 = vdwg.mxu0
        %10896 = vmatprep.subr.bf16.mxu0 %v8230
        %10897 = vmatpush1.bf16.msra.mxu0 %v8229
        %10898 = vmatprep.subr.bf16.mxu0 %v8226
        %10899 = vmatpush1.bf16.msra.mxu0 %v8225
        %10900 = vmatprep.subr.bf16.mxu0 %v8222
        %10901 = vmatpush1.bf16.msra.mxu0 %v8221
        %10902 = vmatprep.subr.bf16.mxu0 %v8218
        %10903 = vmatpush1.bf16.msra.mxu0 %v8217
        %10904 = vmatprep.subr.bf16.mxu0 %v8214
        %10905 = vmatpush1.bf16.msra.mxu0 %v8213
        %10906 = vmatprep.subr.bf16.mxu0 %v8210
        %10907 = vmatpush1.bf16.msra.mxu0 %v8209
        %10908 = vmatprep.subr.bf16.mxu0 %v8206
        %10909 = vmatpush1.bf16.msra.mxu0 %v8205
        %10910 = vmatprep.subr.bf16.mxu0 %v8202
        %10911 = vmatpush1.bf16.msra.mxu0 %v8201
        %10912 = vmatprep.subr.bf16.mxu0 %v8262
        %10913 = vmatpush2.bf16.msra.mxu0 %v8261
        %10914 = vmatprep.subr.bf16.mxu0 %v8258
        %10915 = vmatpush2.bf16.msra.mxu0 %v8257
        %10916 = vmatprep.subr.bf16.mxu0 %v8254
        %10917 = vmatpush2.bf16.msra.mxu0 %v8253
        %10918 = vmatprep.subr.bf16.mxu0 %v8250
        %10919 = vmatpush2.bf16.msra.mxu0 %v8249
        %10920 = vmatprep.subr.bf16.mxu0 %v8246
        %10921 = vmatpush2.bf16.msra.mxu0 %v8245
        %10922 = vmatprep.subr.bf16.mxu0 %v8242
        %10923 = vmatpush2.bf16.msra.mxu0 %v8241
        %10924 = vmatprep.subr.bf16.mxu0 %v8238
        %10925 = vmatpush2.bf16.msra.mxu0 %v8237
        %10926 = vmatprep.subr.bf16.mxu0 %v8234
        %10927 = vmatpush2.bf16.msra.mxu0 %v8233
        %10928 = vmatprep.mubr.bf16.mxu0 %v2098
        %10929 = vmatmul.mubr.bf16.gmra.mxu0 %v2097
        %v10930 = vpop.f32.mrf.mxu0
        %v10931 = vadd.f32 %v10888, %v10930
        %v10932 = vpop.f32.mrf.mxu0
        %v10933 = vadd.f32 %v10890, %v10932
        %v10934 = vpop.f32.mrf.mxu0
        %v10935 = vadd.f32 %v10892, %v10934
        %v10936 = vpop.f32.mrf.mxu0
        %v10937 = vadd.f32 %v10894, %v10936
        %10938 = vdwg.mxu0
        %10939 = vmatprep.subr.bf16.mxu0 %v8294
        %10940 = vmatpush1.bf16.msra.mxu0 %v8293
        %10941 = vmatprep.subr.bf16.mxu0 %v8290
        %10942 = vmatpush1.bf16.msra.mxu0 %v8289
        %10943 = vmatprep.subr.bf16.mxu0 %v8286
        %10944 = vmatpush1.bf16.msra.mxu0 %v8285
        %10945 = vmatprep.subr.bf16.mxu0 %v8282
        %10946 = vmatpush1.bf16.msra.mxu0 %v8281
        %10947 = vmatprep.subr.bf16.mxu0 %v8278
        %10948 = vmatpush1.bf16.msra.mxu0 %v8277
        %10949 = vmatprep.subr.bf16.mxu0 %v8274
        %10950 = vmatpush1.bf16.msra.mxu0 %v8273
        %10951 = vmatprep.subr.bf16.mxu0 %v8270
        %10952 = vmatpush1.bf16.msra.mxu0 %v8269
        %10953 = vmatprep.subr.bf16.mxu0 %v8266
        %10954 = vmatpush1.bf16.msra.mxu0 %v8265
        %10955 = vmatprep.subr.bf16.mxu0 %v8326
        %10956 = vmatpush2.bf16.msra.mxu0 %v8325
        %10957 = vmatprep.subr.bf16.mxu0 %v8322
        %10958 = vmatpush2.bf16.msra.mxu0 %v8321
        %10959 = vmatprep.subr.bf16.mxu0 %v8318
        %10960 = vmatpush2.bf16.msra.mxu0 %v8317
        %10961 = vmatprep.subr.bf16.mxu0 %v8314
        %10962 = vmatpush2.bf16.msra.mxu0 %v8313
        %10963 = vmatprep.subr.bf16.mxu0 %v8310
        %10964 = vmatpush2.bf16.msra.mxu0 %v8309
        %10965 = vmatprep.subr.bf16.mxu0 %v8306
        %10966 = vmatpush2.bf16.msra.mxu0 %v8305
        %10967 = vmatprep.subr.bf16.mxu0 %v8302
        %10968 = vmatpush2.bf16.msra.mxu0 %v8301
        %10969 = vmatprep.subr.bf16.mxu0 %v8298
        %10970 = vmatpush2.bf16.msra.mxu0 %v8297
        %10971 = vmatprep.mubr.bf16.mxu0 %v2100
        %10972 = vmatmul.mubr.bf16.gmra.mxu0 %v2099
        %v10973 = vpop.f32.mrf.mxu0
        %v10974 = vadd.f32 %v10931, %v10973
        %v10975 = vpop.f32.mrf.mxu0
        %v10976 = vadd.f32 %v10933, %v10975
        %v10977 = vpop.f32.mrf.mxu0
        %v10978 = vadd.f32 %v10935, %v10977
        %v10979 = vpop.f32.mrf.mxu0
        %v10980 = vadd.f32 %v10937, %v10979
        %10981 = vdwg.mxu0
        %10982 = vmatprep.subr.bf16.mxu0 %v8358
        %10983 = vmatpush1.bf16.msra.mxu0 %v8357
        %10984 = vmatprep.subr.bf16.mxu0 %v8354
        %10985 = vmatpush1.bf16.msra.mxu0 %v8353
        %10986 = vmatprep.subr.bf16.mxu0 %v8350
        %10987 = vmatpush1.bf16.msra.mxu0 %v8349
        %10988 = vmatprep.subr.bf16.mxu0 %v8346
        %10989 = vmatpush1.bf16.msra.mxu0 %v8345
        %10990 = vmatprep.subr.bf16.mxu0 %v8342
        %10991 = vmatpush1.bf16.msra.mxu0 %v8341
        %10992 = vmatprep.subr.bf16.mxu0 %v8338
        %10993 = vmatpush1.bf16.msra.mxu0 %v8337
        %10994 = vmatprep.subr.bf16.mxu0 %v8334
        %10995 = vmatpush1.bf16.msra.mxu0 %v8333
        %10996 = vmatprep.subr.bf16.mxu0 %v8330
        %10997 = vmatpush1.bf16.msra.mxu0 %v8329
        %10998 = vmatprep.subr.bf16.mxu0 %v8390
        %10999 = vmatpush2.bf16.msra.mxu0 %v8389
        %11000 = vmatprep.subr.bf16.mxu0 %v8386
        %11001 = vmatpush2.bf16.msra.mxu0 %v8385
        %11002 = vmatprep.subr.bf16.mxu0 %v8382
        %11003 = vmatpush2.bf16.msra.mxu0 %v8381
        %11004 = vmatprep.subr.bf16.mxu0 %v8378
        %11005 = vmatpush2.bf16.msra.mxu0 %v8377
        %11006 = vmatprep.subr.bf16.mxu0 %v8374
        %11007 = vmatpush2.bf16.msra.mxu0 %v8373
        %11008 = vmatprep.subr.bf16.mxu0 %v8370
        %11009 = vmatpush2.bf16.msra.mxu0 %v8369
        %11010 = vmatprep.subr.bf16.mxu0 %v8366
        %11011 = vmatpush2.bf16.msra.mxu0 %v8365
        %11012 = vmatprep.subr.bf16.mxu0 %v8362
        %11013 = vmatpush2.bf16.msra.mxu0 %v8361
        %11014 = vmatprep.mubr.bf16.mxu0 %v2102
        %11015 = vmatmul.mubr.bf16.gmra.mxu0 %v2101
        %v11016 = vpop.f32.mrf.mxu0
        %v11017 = vadd.f32 %v10974, %v11016
        %v11018 = vpop.f32.mrf.mxu0
        %v11019 = vadd.f32 %v10976, %v11018
        %v11020 = vpop.f32.mrf.mxu0
        %v11021 = vadd.f32 %v10978, %v11020
        %v11022 = vpop.f32.mrf.mxu0
        %v11023 = vadd.f32 %v10980, %v11022
        %11024 = vdwg.mxu0
        %11025 = vmatprep.subr.bf16.mxu0 %v8422
        %11026 = vmatpush1.bf16.msra.mxu0 %v8421
        %11027 = vmatprep.subr.bf16.mxu0 %v8418
        %11028 = vmatpush1.bf16.msra.mxu0 %v8417
        %11029 = vmatprep.subr.bf16.mxu0 %v8414
        %11030 = vmatpush1.bf16.msra.mxu0 %v8413
        %11031 = vmatprep.subr.bf16.mxu0 %v8410
        %11032 = vmatpush1.bf16.msra.mxu0 %v8409
        %11033 = vmatprep.subr.bf16.mxu0 %v8406
        %11034 = vmatpush1.bf16.msra.mxu0 %v8405
        %11035 = vmatprep.subr.bf16.mxu0 %v8402
        %11036 = vmatpush1.bf16.msra.mxu0 %v8401
        %11037 = vmatprep.subr.bf16.mxu0 %v8398
        %11038 = vmatpush1.bf16.msra.mxu0 %v8397
        %11039 = vmatprep.subr.bf16.mxu0 %v8394
        %11040 = vmatpush1.bf16.msra.mxu0 %v8393
        %11041 = vmatprep.subr.bf16.mxu0 0
        %11042 = vmatpush2.bf16.msra.mxu0 0
        %11043 = vmatprep.subr.bf16.mxu0 0
        %11044 = vmatpush2.bf16.msra.mxu0 0
        %11045 = vmatprep.subr.bf16.mxu0 0
        %11046 = vmatpush2.bf16.msra.mxu0 0
        %11047 = vmatprep.subr.bf16.mxu0 0
        %11048 = vmatpush2.bf16.msra.mxu0 0
        %11049 = vmatprep.subr.bf16.mxu0 0
        %11050 = vmatpush2.bf16.msra.mxu0 0
        %11051 = vmatprep.subr.bf16.mxu0 0
        %11052 = vmatpush2.bf16.msra.mxu0 0
        %11053 = vmatprep.subr.bf16.mxu0 0
        %11054 = vmatpush2.bf16.msra.mxu0 0
        %11055 = vmatprep.subr.bf16.mxu0 0
        %11056 = vmatpush2.bf16.msra.mxu0 0
        %11057 = vmatprep.mubr.bf16.mxu0 0
        %11058 = vmatmul.mubr.bf16.gmra.mxu0 %v2103
        %v11059 = vpop.f32.mrf.mxu0
        %v11060 = vadd.f32 %v11017, %v11059
        %v11061 = vpop.f32.mrf.mxu0
        %v11062 = vadd.f32 %v11019, %v11061
        %v11063 = vpop.f32.mrf.mxu0
        %v11064 = vadd.f32 %v11021, %v11063
        %v11065 = vpop.f32.mrf.mxu0
        %v11066 = vadd.f32 %v11023, %v11065
        %11067 = vdwg.mxu0
        %11068 = vmatprep.subr.bf16.mxu0 %v6888
        %11069 = vmatpush1.bf16.msra.mxu0 %v6887
        %11070 = vmatprep.subr.bf16.mxu0 %v6884
        %11071 = vmatpush1.bf16.msra.mxu0 %v6883
        %11072 = vmatprep.subr.bf16.mxu0 %v6880
        %11073 = vmatpush1.bf16.msra.mxu0 %v6879
        %11074 = vmatprep.subr.bf16.mxu0 %v6876
        %11075 = vmatpush1.bf16.msra.mxu0 %v6875
        %11076 = vmatprep.subr.bf16.mxu0 %v6872
        %11077 = vmatpush1.bf16.msra.mxu0 %v6871
        %11078 = vmatprep.subr.bf16.mxu0 %v6868
        %11079 = vmatpush1.bf16.msra.mxu0 %v6867
        %11080 = vmatprep.subr.bf16.mxu0 %v6864
        %11081 = vmatpush1.bf16.msra.mxu0 %v6863
        %11082 = vmatprep.subr.bf16.mxu0 %v6860
        %11083 = vmatpush1.bf16.msra.mxu0 %v6859
        %11084 = vmatprep.subr.bf16.mxu0 %v6920
        %11085 = vmatpush2.bf16.msra.mxu0 %v6919
        %11086 = vmatprep.subr.bf16.mxu0 %v6916
        %11087 = vmatpush2.bf16.msra.mxu0 %v6915
        %11088 = vmatprep.subr.bf16.mxu0 %v6912
        %11089 = vmatpush2.bf16.msra.mxu0 %v6911
        %11090 = vmatprep.subr.bf16.mxu0 %v6908
        %11091 = vmatpush2.bf16.msra.mxu0 %v6907
        %11092 = vmatprep.subr.bf16.mxu0 %v6904
        %11093 = vmatpush2.bf16.msra.mxu0 %v6903
        %11094 = vmatprep.subr.bf16.mxu0 %v6900
        %11095 = vmatpush2.bf16.msra.mxu0 %v6899
        %11096 = vmatprep.subr.bf16.mxu0 %v6896
        %11097 = vmatpush2.bf16.msra.mxu0 %v6895
        %11098 = vmatprep.subr.bf16.mxu0 %v6892
        %11099 = vmatpush2.bf16.msra.mxu0 %v6891
        %11100 = vmatprep.mubr.bf16.mxu0 %v2056
        %11101 = vmatmul.mubr.bf16.gmra.mxu0 %v2055
        %v11102 = vpop.f32.mrf.mxu0
        %v11103 = vadd.f32 %v1898, %v11102
        %v11104 = vpop.f32.mrf.mxu0
        %v11105 = vadd.f32 %v1902, %v11104
        %v11106 = vpop.f32.mrf.mxu0
        %v11107 = vadd.f32 %v1898, %v11106
        %v11108 = vpop.f32.mrf.mxu0
        %v11109 = vadd.f32 %v1902, %v11108
        %11110 = vdwg.mxu0
        %11111 = vmatprep.subr.bf16.mxu0 %v6952
        %11112 = vmatpush1.bf16.msra.mxu0 %v6951
        %11113 = vmatprep.subr.bf16.mxu0 %v6948
        %11114 = vmatpush1.bf16.msra.mxu0 %v6947
        %11115 = vmatprep.subr.bf16.mxu0 %v6944
        %11116 = vmatpush1.bf16.msra.mxu0 %v6943
        %11117 = vmatprep.subr.bf16.mxu0 %v6940
        %11118 = vmatpush1.bf16.msra.mxu0 %v6939
        %11119 = vmatprep.subr.bf16.mxu0 %v6936
        %11120 = vmatpush1.bf16.msra.mxu0 %v6935
        %11121 = vmatprep.subr.bf16.mxu0 %v6932
        %11122 = vmatpush1.bf16.msra.mxu0 %v6931
        %11123 = vmatprep.subr.bf16.mxu0 %v6928
        %11124 = vmatpush1.bf16.msra.mxu0 %v6927
        %11125 = vmatprep.subr.bf16.mxu0 %v6924
        %11126 = vmatpush1.bf16.msra.mxu0 %v6923
        %11127 = vmatprep.subr.bf16.mxu0 %v6984
        %11128 = vmatpush2.bf16.msra.mxu0 %v6983
        %11129 = vmatprep.subr.bf16.mxu0 %v6980
        %11130 = vmatpush2.bf16.msra.mxu0 %v6979
        %11131 = vmatprep.subr.bf16.mxu0 %v6976
        %11132 = vmatpush2.bf16.msra.mxu0 %v6975
        %11133 = vmatprep.subr.bf16.mxu0 %v6972
        %11134 = vmatpush2.bf16.msra.mxu0 %v6971
        %11135 = vmatprep.subr.bf16.mxu0 %v6968
        %11136 = vmatpush2.bf16.msra.mxu0 %v6967
        %11137 = vmatprep.subr.bf16.mxu0 %v6964
        %11138 = vmatpush2.bf16.msra.mxu0 %v6963
        %11139 = vmatprep.subr.bf16.mxu0 %v6960
        %11140 = vmatpush2.bf16.msra.mxu0 %v6959
        %11141 = vmatprep.subr.bf16.mxu0 %v6956
        %11142 = vmatpush2.bf16.msra.mxu0 %v6955
        %11143 = vmatprep.mubr.bf16.mxu0 %v2058
        %11144 = vmatmul.mubr.bf16.gmra.mxu0 %v2057
        %v11145 = vpop.f32.mrf.mxu0
        %v11146 = vadd.f32 %v11103, %v11145
        %v11147 = vpop.f32.mrf.mxu0
        %v11148 = vadd.f32 %v11105, %v11147
        %v11149 = vpop.f32.mrf.mxu0
        %v11150 = vadd.f32 %v11107, %v11149
        %v11151 = vpop.f32.mrf.mxu0
        %v11152 = vadd.f32 %v11109, %v11151
        %11153 = vdwg.mxu0
        %11154 = vmatprep.subr.bf16.mxu0 %v7016
        %11155 = vmatpush1.bf16.msra.mxu0 %v7015
        %11156 = vmatprep.subr.bf16.mxu0 %v7012
        %11157 = vmatpush1.bf16.msra.mxu0 %v7011
        %11158 = vmatprep.subr.bf16.mxu0 %v7008
        %11159 = vmatpush1.bf16.msra.mxu0 %v7007
        %11160 = vmatprep.subr.bf16.mxu0 %v7004
        %11161 = vmatpush1.bf16.msra.mxu0 %v7003
        %11162 = vmatprep.subr.bf16.mxu0 %v7000
        %11163 = vmatpush1.bf16.msra.mxu0 %v6999
        %11164 = vmatprep.subr.bf16.mxu0 %v6996
        %11165 = vmatpush1.bf16.msra.mxu0 %v6995
        %11166 = vmatprep.subr.bf16.mxu0 %v6992
        %11167 = vmatpush1.bf16.msra.mxu0 %v6991
        %11168 = vmatprep.subr.bf16.mxu0 %v6988
        %11169 = vmatpush1.bf16.msra.mxu0 %v6987
        %11170 = vmatprep.subr.bf16.mxu0 %v7048
        %11171 = vmatpush2.bf16.msra.mxu0 %v7047
        %11172 = vmatprep.subr.bf16.mxu0 %v7044
        %11173 = vmatpush2.bf16.msra.mxu0 %v7043
        %11174 = vmatprep.subr.bf16.mxu0 %v7040
        %11175 = vmatpush2.bf16.msra.mxu0 %v7039
        %11176 = vmatprep.subr.bf16.mxu0 %v7036
        %11177 = vmatpush2.bf16.msra.mxu0 %v7035
        %11178 = vmatprep.subr.bf16.mxu0 %v7032
        %11179 = vmatpush2.bf16.msra.mxu0 %v7031
        %11180 = vmatprep.subr.bf16.mxu0 %v7028
        %11181 = vmatpush2.bf16.msra.mxu0 %v7027
        %11182 = vmatprep.subr.bf16.mxu0 %v7024
        %11183 = vmatpush2.bf16.msra.mxu0 %v7023
        %11184 = vmatprep.subr.bf16.mxu0 %v7020
        %11185 = vmatpush2.bf16.msra.mxu0 %v7019
        %11186 = vmatprep.mubr.bf16.mxu0 %v2060
        %11187 = vmatmul.mubr.bf16.gmra.mxu0 %v2059
        %v11188 = vpop.f32.mrf.mxu0
        %v11189 = vadd.f32 %v11146, %v11188
        %v11190 = vpop.f32.mrf.mxu0
        %v11191 = vadd.f32 %v11148, %v11190
        %v11192 = vpop.f32.mrf.mxu0
        %v11193 = vadd.f32 %v11150, %v11192
        %v11194 = vpop.f32.mrf.mxu0
        %v11195 = vadd.f32 %v11152, %v11194
        %11196 = vdwg.mxu0
        %11197 = vmatprep.subr.bf16.mxu0 %v7080
        %11198 = vmatpush1.bf16.msra.mxu0 %v7079
        %11199 = vmatprep.subr.bf16.mxu0 %v7076
        %11200 = vmatpush1.bf16.msra.mxu0 %v7075
        %11201 = vmatprep.subr.bf16.mxu0 %v7072
        %11202 = vmatpush1.bf16.msra.mxu0 %v7071
        %11203 = vmatprep.subr.bf16.mxu0 %v7068
        %11204 = vmatpush1.bf16.msra.mxu0 %v7067
        %11205 = vmatprep.subr.bf16.mxu0 %v7064
        %11206 = vmatpush1.bf16.msra.mxu0 %v7063
        %11207 = vmatprep.subr.bf16.mxu0 %v7060
        %11208 = vmatpush1.bf16.msra.mxu0 %v7059
        %11209 = vmatprep.subr.bf16.mxu0 %v7056
        %11210 = vmatpush1.bf16.msra.mxu0 %v7055
        %11211 = vmatprep.subr.bf16.mxu0 %v7052
        %11212 = vmatpush1.bf16.msra.mxu0 %v7051
        %11213 = vmatprep.subr.bf16.mxu0 %v7112
        %11214 = vmatpush2.bf16.msra.mxu0 %v7111
        %11215 = vmatprep.subr.bf16.mxu0 %v7108
        %11216 = vmatpush2.bf16.msra.mxu0 %v7107
        %11217 = vmatprep.subr.bf16.mxu0 %v7104
        %11218 = vmatpush2.bf16.msra.mxu0 %v7103
        %11219 = vmatprep.subr.bf16.mxu0 %v7100
        %11220 = vmatpush2.bf16.msra.mxu0 %v7099
        %11221 = vmatprep.subr.bf16.mxu0 %v7096
        %11222 = vmatpush2.bf16.msra.mxu0 %v7095
        %11223 = vmatprep.subr.bf16.mxu0 %v7092
        %11224 = vmatpush2.bf16.msra.mxu0 %v7091
        %11225 = vmatprep.subr.bf16.mxu0 %v7088
        %11226 = vmatpush2.bf16.msra.mxu0 %v7087
        %11227 = vmatprep.subr.bf16.mxu0 %v7084
        %11228 = vmatpush2.bf16.msra.mxu0 %v7083
        %11229 = vmatprep.mubr.bf16.mxu0 %v2062
        %11230 = vmatmul.mubr.bf16.gmra.mxu0 %v2061
        %v11231 = vpop.f32.mrf.mxu0
        %v11232 = vadd.f32 %v11189, %v11231
        %v11233 = vpop.f32.mrf.mxu0
        %v11234 = vadd.f32 %v11191, %v11233
        %v11235 = vpop.f32.mrf.mxu0
        %v11236 = vadd.f32 %v11193, %v11235
        %v11237 = vpop.f32.mrf.mxu0
        %v11238 = vadd.f32 %v11195, %v11237
        %11239 = vdwg.mxu0
        %11240 = vmatprep.subr.bf16.mxu0 %v7144
        %11241 = vmatpush1.bf16.msra.mxu0 %v7143
        %11242 = vmatprep.subr.bf16.mxu0 %v7140
        %11243 = vmatpush1.bf16.msra.mxu0 %v7139
        %11244 = vmatprep.subr.bf16.mxu0 %v7136
        %11245 = vmatpush1.bf16.msra.mxu0 %v7135
        %11246 = vmatprep.subr.bf16.mxu0 %v7132
        %11247 = vmatpush1.bf16.msra.mxu0 %v7131
        %11248 = vmatprep.subr.bf16.mxu0 %v7128
        %11249 = vmatpush1.bf16.msra.mxu0 %v7127
        %11250 = vmatprep.subr.bf16.mxu0 %v7124
        %11251 = vmatpush1.bf16.msra.mxu0 %v7123
        %11252 = vmatprep.subr.bf16.mxu0 %v7120
        %11253 = vmatpush1.bf16.msra.mxu0 %v7119
        %11254 = vmatprep.subr.bf16.mxu0 %v7116
        %11255 = vmatpush1.bf16.msra.mxu0 %v7115
        %11256 = vmatprep.subr.bf16.mxu0 %v7176
        %11257 = vmatpush2.bf16.msra.mxu0 %v7175
        %11258 = vmatprep.subr.bf16.mxu0 %v7172
        %11259 = vmatpush2.bf16.msra.mxu0 %v7171
        %11260 = vmatprep.subr.bf16.mxu0 %v7168
        %11261 = vmatpush2.bf16.msra.mxu0 %v7167
        %11262 = vmatprep.subr.bf16.mxu0 %v7164
        %11263 = vmatpush2.bf16.msra.mxu0 %v7163
        %11264 = vmatprep.subr.bf16.mxu0 %v7160
        %11265 = vmatpush2.bf16.msra.mxu0 %v7159
        %11266 = vmatprep.subr.bf16.mxu0 %v7156
        %11267 = vmatpush2.bf16.msra.mxu0 %v7155
        %11268 = vmatprep.subr.bf16.mxu0 %v7152
        %11269 = vmatpush2.bf16.msra.mxu0 %v7151
        %11270 = vmatprep.subr.bf16.mxu0 %v7148
        %11271 = vmatpush2.bf16.msra.mxu0 %v7147
        %11272 = vmatprep.mubr.bf16.mxu0 %v2064
        %11273 = vmatmul.mubr.bf16.gmra.mxu0 %v2063
        %v11274 = vpop.f32.mrf.mxu0
        %v11275 = vadd.f32 %v11232, %v11274
        %v11276 = vpop.f32.mrf.mxu0
        %v11277 = vadd.f32 %v11234, %v11276
        %v11278 = vpop.f32.mrf.mxu0
        %v11279 = vadd.f32 %v11236, %v11278
        %v11280 = vpop.f32.mrf.mxu0
        %v11281 = vadd.f32 %v11238, %v11280
        %11282 = vdwg.mxu0
        %11283 = vmatprep.subr.bf16.mxu0 %v7208
        %11284 = vmatpush1.bf16.msra.mxu0 %v7207
        %11285 = vmatprep.subr.bf16.mxu0 %v7204
        %11286 = vmatpush1.bf16.msra.mxu0 %v7203
        %11287 = vmatprep.subr.bf16.mxu0 %v7200
        %11288 = vmatpush1.bf16.msra.mxu0 %v7199
        %11289 = vmatprep.subr.bf16.mxu0 %v7196
        %11290 = vmatpush1.bf16.msra.mxu0 %v7195
        %11291 = vmatprep.subr.bf16.mxu0 %v7192
        %11292 = vmatpush1.bf16.msra.mxu0 %v7191
        %11293 = vmatprep.subr.bf16.mxu0 %v7188
        %11294 = vmatpush1.bf16.msra.mxu0 %v7187
        %11295 = vmatprep.subr.bf16.mxu0 %v7184
        %11296 = vmatpush1.bf16.msra.mxu0 %v7183
        %11297 = vmatprep.subr.bf16.mxu0 %v7180
        %11298 = vmatpush1.bf16.msra.mxu0 %v7179
        %11299 = vmatprep.subr.bf16.mxu0 %v7240
        %11300 = vmatpush2.bf16.msra.mxu0 %v7239
        %11301 = vmatprep.subr.bf16.mxu0 %v7236
        %11302 = vmatpush2.bf16.msra.mxu0 %v7235
        %11303 = vmatprep.subr.bf16.mxu0 %v7232
        %11304 = vmatpush2.bf16.msra.mxu0 %v7231
        %11305 = vmatprep.subr.bf16.mxu0 %v7228
        %11306 = vmatpush2.bf16.msra.mxu0 %v7227
        %11307 = vmatprep.subr.bf16.mxu0 %v7224
        %11308 = vmatpush2.bf16.msra.mxu0 %v7223
        %11309 = vmatprep.subr.bf16.mxu0 %v7220
        %11310 = vmatpush2.bf16.msra.mxu0 %v7219
        %11311 = vmatprep.subr.bf16.mxu0 %v7216
        %11312 = vmatpush2.bf16.msra.mxu0 %v7215
        %11313 = vmatprep.subr.bf16.mxu0 %v7212
        %11314 = vmatpush2.bf16.msra.mxu0 %v7211
        %11315 = vmatprep.mubr.bf16.mxu0 %v2066
        %11316 = vmatmul.mubr.bf16.gmra.mxu0 %v2065
        %v11317 = vpop.f32.mrf.mxu0
        %v11318 = vadd.f32 %v11275, %v11317
        %v11319 = vpop.f32.mrf.mxu0
        %v11320 = vadd.f32 %v11277, %v11319
        %v11321 = vpop.f32.mrf.mxu0
        %v11322 = vadd.f32 %v11279, %v11321
        %v11323 = vpop.f32.mrf.mxu0
        %v11324 = vadd.f32 %v11281, %v11323
        %11325 = vdwg.mxu0
        %11326 = vmatprep.subr.bf16.mxu0 %v7272
        %11327 = vmatpush1.bf16.msra.mxu0 %v7271
        %11328 = vmatprep.subr.bf16.mxu0 %v7268
        %11329 = vmatpush1.bf16.msra.mxu0 %v7267
        %11330 = vmatprep.subr.bf16.mxu0 %v7264
        %11331 = vmatpush1.bf16.msra.mxu0 %v7263
        %11332 = vmatprep.subr.bf16.mxu0 %v7260
        %11333 = vmatpush1.bf16.msra.mxu0 %v7259
        %11334 = vmatprep.subr.bf16.mxu0 %v7256
        %11335 = vmatpush1.bf16.msra.mxu0 %v7255
        %11336 = vmatprep.subr.bf16.mxu0 %v7252
        %11337 = vmatpush1.bf16.msra.mxu0 %v7251
        %11338 = vmatprep.subr.bf16.mxu0 %v7248
        %11339 = vmatpush1.bf16.msra.mxu0 %v7247
        %11340 = vmatprep.subr.bf16.mxu0 %v7244
        %11341 = vmatpush1.bf16.msra.mxu0 %v7243
        %11342 = vmatprep.subr.bf16.mxu0 %v7304
        %11343 = vmatpush2.bf16.msra.mxu0 %v7303
        %11344 = vmatprep.subr.bf16.mxu0 %v7300
        %11345 = vmatpush2.bf16.msra.mxu0 %v7299
        %11346 = vmatprep.subr.bf16.mxu0 %v7296
        %11347 = vmatpush2.bf16.msra.mxu0 %v7295
        %11348 = vmatprep.subr.bf16.mxu0 %v7292
        %11349 = vmatpush2.bf16.msra.mxu0 %v7291
        %11350 = vmatprep.subr.bf16.mxu0 %v7288
        %11351 = vmatpush2.bf16.msra.mxu0 %v7287
        %11352 = vmatprep.subr.bf16.mxu0 %v7284
        %11353 = vmatpush2.bf16.msra.mxu0 %v7283
        %11354 = vmatprep.subr.bf16.mxu0 %v7280
        %11355 = vmatpush2.bf16.msra.mxu0 %v7279
        %11356 = vmatprep.subr.bf16.mxu0 %v7276
        %11357 = vmatpush2.bf16.msra.mxu0 %v7275
        %11358 = vmatprep.mubr.bf16.mxu0 %v2068
        %11359 = vmatmul.mubr.bf16.gmra.mxu0 %v2067
        %v11360 = vpop.f32.mrf.mxu0
        %v11361 = vadd.f32 %v11318, %v11360
        %v11362 = vpop.f32.mrf.mxu0
        %v11363 = vadd.f32 %v11320, %v11362
        %v11364 = vpop.f32.mrf.mxu0
        %v11365 = vadd.f32 %v11322, %v11364
        %v11366 = vpop.f32.mrf.mxu0
        %v11367 = vadd.f32 %v11324, %v11366
        %11368 = vdwg.mxu0
        %11369 = vmatprep.subr.bf16.mxu0 %v7336
        %11370 = vmatpush1.bf16.msra.mxu0 %v7335
        %11371 = vmatprep.subr.bf16.mxu0 %v7332
        %11372 = vmatpush1.bf16.msra.mxu0 %v7331
        %11373 = vmatprep.subr.bf16.mxu0 %v7328
        %11374 = vmatpush1.bf16.msra.mxu0 %v7327
        %11375 = vmatprep.subr.bf16.mxu0 %v7324
        %11376 = vmatpush1.bf16.msra.mxu0 %v7323
        %11377 = vmatprep.subr.bf16.mxu0 %v7320
        %11378 = vmatpush1.bf16.msra.mxu0 %v7319
        %11379 = vmatprep.subr.bf16.mxu0 %v7316
        %11380 = vmatpush1.bf16.msra.mxu0 %v7315
        %11381 = vmatprep.subr.bf16.mxu0 %v7312
        %11382 = vmatpush1.bf16.msra.mxu0 %v7311
        %11383 = vmatprep.subr.bf16.mxu0 %v7308
        %11384 = vmatpush1.bf16.msra.mxu0 %v7307
        %11385 = vmatprep.subr.bf16.mxu0 %v7368
        %11386 = vmatpush2.bf16.msra.mxu0 %v7367
        %11387 = vmatprep.subr.bf16.mxu0 %v7364
        %11388 = vmatpush2.bf16.msra.mxu0 %v7363
        %11389 = vmatprep.subr.bf16.mxu0 %v7360
        %11390 = vmatpush2.bf16.msra.mxu0 %v7359
        %11391 = vmatprep.subr.bf16.mxu0 %v7356
        %11392 = vmatpush2.bf16.msra.mxu0 %v7355
        %11393 = vmatprep.subr.bf16.mxu0 %v7352
        %11394 = vmatpush2.bf16.msra.mxu0 %v7351
        %11395 = vmatprep.subr.bf16.mxu0 %v7348
        %11396 = vmatpush2.bf16.msra.mxu0 %v7347
        %11397 = vmatprep.subr.bf16.mxu0 %v7344
        %11398 = vmatpush2.bf16.msra.mxu0 %v7343
        %11399 = vmatprep.subr.bf16.mxu0 %v7340
        %11400 = vmatpush2.bf16.msra.mxu0 %v7339
        %11401 = vmatprep.mubr.bf16.mxu0 %v2070
        %11402 = vmatmul.mubr.bf16.gmra.mxu0 %v2069
        %v11403 = vpop.f32.mrf.mxu0
        %v11404 = vadd.f32 %v11361, %v11403
        %v11405 = vpop.f32.mrf.mxu0
        %v11406 = vadd.f32 %v11363, %v11405
        %v11407 = vpop.f32.mrf.mxu0
        %v11408 = vadd.f32 %v11365, %v11407
        %v11409 = vpop.f32.mrf.mxu0
        %v11410 = vadd.f32 %v11367, %v11409
        %11411 = vdwg.mxu0
        %11412 = vmatprep.subr.bf16.mxu0 %v7400
        %11413 = vmatpush1.bf16.msra.mxu0 %v7399
        %11414 = vmatprep.subr.bf16.mxu0 %v7396
        %11415 = vmatpush1.bf16.msra.mxu0 %v7395
        %11416 = vmatprep.subr.bf16.mxu0 %v7392
        %11417 = vmatpush1.bf16.msra.mxu0 %v7391
        %11418 = vmatprep.subr.bf16.mxu0 %v7388
        %11419 = vmatpush1.bf16.msra.mxu0 %v7387
        %11420 = vmatprep.subr.bf16.mxu0 %v7384
        %11421 = vmatpush1.bf16.msra.mxu0 %v7383
        %11422 = vmatprep.subr.bf16.mxu0 %v7380
        %11423 = vmatpush1.bf16.msra.mxu0 %v7379
        %11424 = vmatprep.subr.bf16.mxu0 %v7376
        %11425 = vmatpush1.bf16.msra.mxu0 %v7375
        %11426 = vmatprep.subr.bf16.mxu0 %v7372
        %11427 = vmatpush1.bf16.msra.mxu0 %v7371
        %11428 = vmatprep.subr.bf16.mxu0 %v7432
        %11429 = vmatpush2.bf16.msra.mxu0 %v7431
        %11430 = vmatprep.subr.bf16.mxu0 %v7428
        %11431 = vmatpush2.bf16.msra.mxu0 %v7427
        %11432 = vmatprep.subr.bf16.mxu0 %v7424
        %11433 = vmatpush2.bf16.msra.mxu0 %v7423
        %11434 = vmatprep.subr.bf16.mxu0 %v7420
        %11435 = vmatpush2.bf16.msra.mxu0 %v7419
        %11436 = vmatprep.subr.bf16.mxu0 %v7416
        %11437 = vmatpush2.bf16.msra.mxu0 %v7415
        %11438 = vmatprep.subr.bf16.mxu0 %v7412
        %11439 = vmatpush2.bf16.msra.mxu0 %v7411
        %11440 = vmatprep.subr.bf16.mxu0 %v7408
        %11441 = vmatpush2.bf16.msra.mxu0 %v7407
        %11442 = vmatprep.subr.bf16.mxu0 %v7404
        %11443 = vmatpush2.bf16.msra.mxu0 %v7403
        %11444 = vmatprep.mubr.bf16.mxu0 %v2072
        %11445 = vmatmul.mubr.bf16.gmra.mxu0 %v2071
        %v11446 = vpop.f32.mrf.mxu0
        %v11447 = vadd.f32 %v11404, %v11446
        %v11448 = vpop.f32.mrf.mxu0
        %v11449 = vadd.f32 %v11406, %v11448
        %v11450 = vpop.f32.mrf.mxu0
        %v11451 = vadd.f32 %v11408, %v11450
        %v11452 = vpop.f32.mrf.mxu0
        %v11453 = vadd.f32 %v11410, %v11452
        %11454 = vdwg.mxu0
        %11455 = vmatprep.subr.bf16.mxu0 %v7464
        %11456 = vmatpush1.bf16.msra.mxu0 %v7463
        %11457 = vmatprep.subr.bf16.mxu0 %v7460
        %11458 = vmatpush1.bf16.msra.mxu0 %v7459
        %11459 = vmatprep.subr.bf16.mxu0 %v7456
        %11460 = vmatpush1.bf16.msra.mxu0 %v7455
        %11461 = vmatprep.subr.bf16.mxu0 %v7452
        %11462 = vmatpush1.bf16.msra.mxu0 %v7451
        %11463 = vmatprep.subr.bf16.mxu0 %v7448
        %11464 = vmatpush1.bf16.msra.mxu0 %v7447
        %11465 = vmatprep.subr.bf16.mxu0 %v7444
        %11466 = vmatpush1.bf16.msra.mxu0 %v7443
        %11467 = vmatprep.subr.bf16.mxu0 %v7440
        %11468 = vmatpush1.bf16.msra.mxu0 %v7439
        %11469 = vmatprep.subr.bf16.mxu0 %v7436
        %11470 = vmatpush1.bf16.msra.mxu0 %v7435
        %11471 = vmatprep.subr.bf16.mxu0 %v7496
        %11472 = vmatpush2.bf16.msra.mxu0 %v7495
        %11473 = vmatprep.subr.bf16.mxu0 %v7492
        %11474 = vmatpush2.bf16.msra.mxu0 %v7491
        %11475 = vmatprep.subr.bf16.mxu0 %v7488
        %11476 = vmatpush2.bf16.msra.mxu0 %v7487
        %11477 = vmatprep.subr.bf16.mxu0 %v7484
        %11478 = vmatpush2.bf16.msra.mxu0 %v7483
        %11479 = vmatprep.subr.bf16.mxu0 %v7480
        %11480 = vmatpush2.bf16.msra.mxu0 %v7479
        %11481 = vmatprep.subr.bf16.mxu0 %v7476
        %11482 = vmatpush2.bf16.msra.mxu0 %v7475
        %11483 = vmatprep.subr.bf16.mxu0 %v7472
        %11484 = vmatpush2.bf16.msra.mxu0 %v7471
        %11485 = vmatprep.subr.bf16.mxu0 %v7468
        %11486 = vmatpush2.bf16.msra.mxu0 %v7467
        %11487 = vmatprep.mubr.bf16.mxu0 %v2074
        %11488 = vmatmul.mubr.bf16.gmra.mxu0 %v2073
        %v11489 = vpop.f32.mrf.mxu0
        %v11490 = vadd.f32 %v11447, %v11489
        %v11491 = vpop.f32.mrf.mxu0
        %v11492 = vadd.f32 %v11449, %v11491
        %v11493 = vpop.f32.mrf.mxu0
        %v11494 = vadd.f32 %v11451, %v11493
        %v11495 = vpop.f32.mrf.mxu0
        %v11496 = vadd.f32 %v11453, %v11495
        %11497 = vdwg.mxu0
        %11498 = vmatprep.subr.bf16.mxu0 %v7528
        %11499 = vmatpush1.bf16.msra.mxu0 %v7527
        %11500 = vmatprep.subr.bf16.mxu0 %v7524
        %11501 = vmatpush1.bf16.msra.mxu0 %v7523
        %11502 = vmatprep.subr.bf16.mxu0 %v7520
        %11503 = vmatpush1.bf16.msra.mxu0 %v7519
        %11504 = vmatprep.subr.bf16.mxu0 %v7516
        %11505 = vmatpush1.bf16.msra.mxu0 %v7515
        %11506 = vmatprep.subr.bf16.mxu0 %v7512
        %11507 = vmatpush1.bf16.msra.mxu0 %v7511
        %11508 = vmatprep.subr.bf16.mxu0 %v7508
        %11509 = vmatpush1.bf16.msra.mxu0 %v7507
        %11510 = vmatprep.subr.bf16.mxu0 %v7504
        %11511 = vmatpush1.bf16.msra.mxu0 %v7503
        %11512 = vmatprep.subr.bf16.mxu0 %v7500
        %11513 = vmatpush1.bf16.msra.mxu0 %v7499
        %11514 = vmatprep.subr.bf16.mxu0 %v7560
        %11515 = vmatpush2.bf16.msra.mxu0 %v7559
        %11516 = vmatprep.subr.bf16.mxu0 %v7556
        %11517 = vmatpush2.bf16.msra.mxu0 %v7555
        %11518 = vmatprep.subr.bf16.mxu0 %v7552
        %11519 = vmatpush2.bf16.msra.mxu0 %v7551
        %11520 = vmatprep.subr.bf16.mxu0 %v7548
        %11521 = vmatpush2.bf16.msra.mxu0 %v7547
        %11522 = vmatprep.subr.bf16.mxu0 %v7544
        %11523 = vmatpush2.bf16.msra.mxu0 %v7543
        %11524 = vmatprep.subr.bf16.mxu0 %v7540
        %11525 = vmatpush2.bf16.msra.mxu0 %v7539
        %11526 = vmatprep.subr.bf16.mxu0 %v7536
        %11527 = vmatpush2.bf16.msra.mxu0 %v7535
        %11528 = vmatprep.subr.bf16.mxu0 %v7532
        %11529 = vmatpush2.bf16.msra.mxu0 %v7531
        %11530 = vmatprep.mubr.bf16.mxu0 %v2076
        %11531 = vmatmul.mubr.bf16.gmra.mxu0 %v2075
        %v11532 = vpop.f32.mrf.mxu0
        %v11533 = vadd.f32 %v11490, %v11532
        %v11534 = vpop.f32.mrf.mxu0
        %v11535 = vadd.f32 %v11492, %v11534
        %v11536 = vpop.f32.mrf.mxu0
        %v11537 = vadd.f32 %v11494, %v11536
        %v11538 = vpop.f32.mrf.mxu0
        %v11539 = vadd.f32 %v11496, %v11538
        %11540 = vdwg.mxu0
        %11541 = vmatprep.subr.bf16.mxu0 %v7592
        %11542 = vmatpush1.bf16.msra.mxu0 %v7591
        %11543 = vmatprep.subr.bf16.mxu0 %v7588
        %11544 = vmatpush1.bf16.msra.mxu0 %v7587
        %11545 = vmatprep.subr.bf16.mxu0 %v7584
        %11546 = vmatpush1.bf16.msra.mxu0 %v7583
        %11547 = vmatprep.subr.bf16.mxu0 %v7580
        %11548 = vmatpush1.bf16.msra.mxu0 %v7579
        %11549 = vmatprep.subr.bf16.mxu0 %v7576
        %11550 = vmatpush1.bf16.msra.mxu0 %v7575
        %11551 = vmatprep.subr.bf16.mxu0 %v7572
        %11552 = vmatpush1.bf16.msra.mxu0 %v7571
        %11553 = vmatprep.subr.bf16.mxu0 %v7568
        %11554 = vmatpush1.bf16.msra.mxu0 %v7567
        %11555 = vmatprep.subr.bf16.mxu0 %v7564
        %11556 = vmatpush1.bf16.msra.mxu0 %v7563
        %11557 = vmatprep.subr.bf16.mxu0 %v7624
        %11558 = vmatpush2.bf16.msra.mxu0 %v7623
        %11559 = vmatprep.subr.bf16.mxu0 %v7620
        %11560 = vmatpush2.bf16.msra.mxu0 %v7619
        %11561 = vmatprep.subr.bf16.mxu0 %v7616
        %11562 = vmatpush2.bf16.msra.mxu0 %v7615
        %11563 = vmatprep.subr.bf16.mxu0 %v7612
        %11564 = vmatpush2.bf16.msra.mxu0 %v7611
        %11565 = vmatprep.subr.bf16.mxu0 %v7608
        %11566 = vmatpush2.bf16.msra.mxu0 %v7607
        %11567 = vmatprep.subr.bf16.mxu0 %v7604
        %11568 = vmatpush2.bf16.msra.mxu0 %v7603
        %11569 = vmatprep.subr.bf16.mxu0 %v7600
        %11570 = vmatpush2.bf16.msra.mxu0 %v7599
        %11571 = vmatprep.subr.bf16.mxu0 %v7596
        %11572 = vmatpush2.bf16.msra.mxu0 %v7595
        %11573 = vmatprep.mubr.bf16.mxu0 %v2078
        %11574 = vmatmul.mubr.bf16.gmra.mxu0 %v2077
        %v11575 = vpop.f32.mrf.mxu0
        %v11576 = vadd.f32 %v11533, %v11575
        %v11577 = vpop.f32.mrf.mxu0
        %v11578 = vadd.f32 %v11535, %v11577
        %v11579 = vpop.f32.mrf.mxu0
        %v11580 = vadd.f32 %v11537, %v11579
        %v11581 = vpop.f32.mrf.mxu0
        %v11582 = vadd.f32 %v11539, %v11581
        %11583 = vdwg.mxu0
        %11584 = vmatprep.subr.bf16.mxu0 %v7656
        %11585 = vmatpush1.bf16.msra.mxu0 %v7655
        %11586 = vmatprep.subr.bf16.mxu0 %v7652
        %11587 = vmatpush1.bf16.msra.mxu0 %v7651
        %11588 = vmatprep.subr.bf16.mxu0 %v7648
        %11589 = vmatpush1.bf16.msra.mxu0 %v7647
        %11590 = vmatprep.subr.bf16.mxu0 %v7644
        %11591 = vmatpush1.bf16.msra.mxu0 %v7643
        %11592 = vmatprep.subr.bf16.mxu0 %v7640
        %11593 = vmatpush1.bf16.msra.mxu0 %v7639
        %11594 = vmatprep.subr.bf16.mxu0 %v7636
        %11595 = vmatpush1.bf16.msra.mxu0 %v7635
        %11596 = vmatprep.subr.bf16.mxu0 %v7632
        %11597 = vmatpush1.bf16.msra.mxu0 %v7631
        %11598 = vmatprep.subr.bf16.mxu0 %v7628
        %11599 = vmatpush1.bf16.msra.mxu0 %v7627
        %11600 = vmatprep.subr.bf16.mxu0 %v7688
        %11601 = vmatpush2.bf16.msra.mxu0 %v7687
        %11602 = vmatprep.subr.bf16.mxu0 %v7684
        %11603 = vmatpush2.bf16.msra.mxu0 %v7683
        %11604 = vmatprep.subr.bf16.mxu0 %v7680
        %11605 = vmatpush2.bf16.msra.mxu0 %v7679
        %11606 = vmatprep.subr.bf16.mxu0 %v7676
        %11607 = vmatpush2.bf16.msra.mxu0 %v7675
        %11608 = vmatprep.subr.bf16.mxu0 %v7672
        %11609 = vmatpush2.bf16.msra.mxu0 %v7671
        %11610 = vmatprep.subr.bf16.mxu0 %v7668
        %11611 = vmatpush2.bf16.msra.mxu0 %v7667
        %11612 = vmatprep.subr.bf16.mxu0 %v7664
        %11613 = vmatpush2.bf16.msra.mxu0 %v7663
        %11614 = vmatprep.subr.bf16.mxu0 %v7660
        %11615 = vmatpush2.bf16.msra.mxu0 %v7659
        %11616 = vmatprep.mubr.bf16.mxu0 %v2080
        %11617 = vmatmul.mubr.bf16.gmra.mxu0 %v2079
        %v11618 = vpop.f32.mrf.mxu0
        %v11619 = vadd.f32 %v11576, %v11618
        %v11620 = vpop.f32.mrf.mxu0
        %v11621 = vadd.f32 %v11578, %v11620
        %v11622 = vpop.f32.mrf.mxu0
        %v11623 = vadd.f32 %v11580, %v11622
        %v11624 = vpop.f32.mrf.mxu0
        %v11625 = vadd.f32 %v11582, %v11624
        %11626 = vdwg.mxu0
        %11627 = vmatprep.subr.bf16.mxu0 %v7720
        %11628 = vmatpush1.bf16.msra.mxu0 %v7719
        %11629 = vmatprep.subr.bf16.mxu0 %v7716
        %11630 = vmatpush1.bf16.msra.mxu0 %v7715
        %11631 = vmatprep.subr.bf16.mxu0 %v7712
        %11632 = vmatpush1.bf16.msra.mxu0 %v7711
        %11633 = vmatprep.subr.bf16.mxu0 %v7708
        %11634 = vmatpush1.bf16.msra.mxu0 %v7707
        %11635 = vmatprep.subr.bf16.mxu0 %v7704
        %11636 = vmatpush1.bf16.msra.mxu0 %v7703
        %11637 = vmatprep.subr.bf16.mxu0 %v7700
        %11638 = vmatpush1.bf16.msra.mxu0 %v7699
        %11639 = vmatprep.subr.bf16.mxu0 %v7696
        %11640 = vmatpush1.bf16.msra.mxu0 %v7695
        %11641 = vmatprep.subr.bf16.mxu0 %v7692
        %11642 = vmatpush1.bf16.msra.mxu0 %v7691
        %11643 = vmatprep.subr.bf16.mxu0 %v7752
        %11644 = vmatpush2.bf16.msra.mxu0 %v7751
        %11645 = vmatprep.subr.bf16.mxu0 %v7748
        %11646 = vmatpush2.bf16.msra.mxu0 %v7747
        %11647 = vmatprep.subr.bf16.mxu0 %v7744
        %11648 = vmatpush2.bf16.msra.mxu0 %v7743
        %11649 = vmatprep.subr.bf16.mxu0 %v7740
        %11650 = vmatpush2.bf16.msra.mxu0 %v7739
        %11651 = vmatprep.subr.bf16.mxu0 %v7736
        %11652 = vmatpush2.bf16.msra.mxu0 %v7735
        %11653 = vmatprep.subr.bf16.mxu0 %v7732
        %11654 = vmatpush2.bf16.msra.mxu0 %v7731
        %11655 = vmatprep.subr.bf16.mxu0 %v7728
        %11656 = vmatpush2.bf16.msra.mxu0 %v7727
        %11657 = vmatprep.subr.bf16.mxu0 %v7724
        %11658 = vmatpush2.bf16.msra.mxu0 %v7723
        %11659 = vmatprep.mubr.bf16.mxu0 %v2082
        %11660 = vmatmul.mubr.bf16.gmra.mxu0 %v2081
        %v11661 = vpop.f32.mrf.mxu0
        %v11662 = vadd.f32 %v11619, %v11661
        %v11663 = vpop.f32.mrf.mxu0
        %v11664 = vadd.f32 %v11621, %v11663
        %v11665 = vpop.f32.mrf.mxu0
        %v11666 = vadd.f32 %v11623, %v11665
        %v11667 = vpop.f32.mrf.mxu0
        %v11668 = vadd.f32 %v11625, %v11667
        %11669 = vdwg.mxu0
        %11670 = vmatprep.subr.bf16.mxu0 %v7784
        %11671 = vmatpush1.bf16.msra.mxu0 %v7783
        %11672 = vmatprep.subr.bf16.mxu0 %v7780
        %11673 = vmatpush1.bf16.msra.mxu0 %v7779
        %11674 = vmatprep.subr.bf16.mxu0 %v7776
        %11675 = vmatpush1.bf16.msra.mxu0 %v7775
        %11676 = vmatprep.subr.bf16.mxu0 %v7772
        %11677 = vmatpush1.bf16.msra.mxu0 %v7771
        %11678 = vmatprep.subr.bf16.mxu0 %v7768
        %11679 = vmatpush1.bf16.msra.mxu0 %v7767
        %11680 = vmatprep.subr.bf16.mxu0 %v7764
        %11681 = vmatpush1.bf16.msra.mxu0 %v7763
        %11682 = vmatprep.subr.bf16.mxu0 %v7760
        %11683 = vmatpush1.bf16.msra.mxu0 %v7759
        %11684 = vmatprep.subr.bf16.mxu0 %v7756
        %11685 = vmatpush1.bf16.msra.mxu0 %v7755
        %11686 = vmatprep.subr.bf16.mxu0 %v7816
        %11687 = vmatpush2.bf16.msra.mxu0 %v7815
        %11688 = vmatprep.subr.bf16.mxu0 %v7812
        %11689 = vmatpush2.bf16.msra.mxu0 %v7811
        %11690 = vmatprep.subr.bf16.mxu0 %v7808
        %11691 = vmatpush2.bf16.msra.mxu0 %v7807
        %11692 = vmatprep.subr.bf16.mxu0 %v7804
        %11693 = vmatpush2.bf16.msra.mxu0 %v7803
        %11694 = vmatprep.subr.bf16.mxu0 %v7800
        %11695 = vmatpush2.bf16.msra.mxu0 %v7799
        %11696 = vmatprep.subr.bf16.mxu0 %v7796
        %11697 = vmatpush2.bf16.msra.mxu0 %v7795
        %11698 = vmatprep.subr.bf16.mxu0 %v7792
        %11699 = vmatpush2.bf16.msra.mxu0 %v7791
        %11700 = vmatprep.subr.bf16.mxu0 %v7788
        %11701 = vmatpush2.bf16.msra.mxu0 %v7787
        %11702 = vmatprep.mubr.bf16.mxu0 %v2084
        %11703 = vmatmul.mubr.bf16.gmra.mxu0 %v2083
        %v11704 = vpop.f32.mrf.mxu0
        %v11705 = vadd.f32 %v11662, %v11704
        %v11706 = vpop.f32.mrf.mxu0
        %v11707 = vadd.f32 %v11664, %v11706
        %v11708 = vpop.f32.mrf.mxu0
        %v11709 = vadd.f32 %v11666, %v11708
        %v11710 = vpop.f32.mrf.mxu0
        %v11711 = vadd.f32 %v11668, %v11710
        %11712 = vdwg.mxu0
        %11713 = vmatprep.subr.bf16.mxu0 %v7848
        %11714 = vmatpush1.bf16.msra.mxu0 %v7847
        %11715 = vmatprep.subr.bf16.mxu0 %v7844
        %11716 = vmatpush1.bf16.msra.mxu0 %v7843
        %11717 = vmatprep.subr.bf16.mxu0 %v7840
        %11718 = vmatpush1.bf16.msra.mxu0 %v7839
        %11719 = vmatprep.subr.bf16.mxu0 %v7836
        %11720 = vmatpush1.bf16.msra.mxu0 %v7835
        %11721 = vmatprep.subr.bf16.mxu0 %v7832
        %11722 = vmatpush1.bf16.msra.mxu0 %v7831
        %11723 = vmatprep.subr.bf16.mxu0 %v7828
        %11724 = vmatpush1.bf16.msra.mxu0 %v7827
        %11725 = vmatprep.subr.bf16.mxu0 %v7824
        %11726 = vmatpush1.bf16.msra.mxu0 %v7823
        %11727 = vmatprep.subr.bf16.mxu0 %v7820
        %11728 = vmatpush1.bf16.msra.mxu0 %v7819
        %11729 = vmatprep.subr.bf16.mxu0 %v7880
        %11730 = vmatpush2.bf16.msra.mxu0 %v7879
        %11731 = vmatprep.subr.bf16.mxu0 %v7876
        %11732 = vmatpush2.bf16.msra.mxu0 %v7875
        %11733 = vmatprep.subr.bf16.mxu0 %v7872
        %11734 = vmatpush2.bf16.msra.mxu0 %v7871
        %11735 = vmatprep.subr.bf16.mxu0 %v7868
        %11736 = vmatpush2.bf16.msra.mxu0 %v7867
        %11737 = vmatprep.subr.bf16.mxu0 %v7864
        %11738 = vmatpush2.bf16.msra.mxu0 %v7863
        %11739 = vmatprep.subr.bf16.mxu0 %v7860
        %11740 = vmatpush2.bf16.msra.mxu0 %v7859
        %11741 = vmatprep.subr.bf16.mxu0 %v7856
        %11742 = vmatpush2.bf16.msra.mxu0 %v7855
        %11743 = vmatprep.subr.bf16.mxu0 %v7852
        %11744 = vmatpush2.bf16.msra.mxu0 %v7851
        %11745 = vmatprep.mubr.bf16.mxu0 %v2086
        %11746 = vmatmul.mubr.bf16.gmra.mxu0 %v2085
        %v11747 = vpop.f32.mrf.mxu0
        %v11748 = vadd.f32 %v11705, %v11747
        %v11749 = vpop.f32.mrf.mxu0
        %v11750 = vadd.f32 %v11707, %v11749
        %v11751 = vpop.f32.mrf.mxu0
        %v11752 = vadd.f32 %v11709, %v11751
        %v11753 = vpop.f32.mrf.mxu0
        %v11754 = vadd.f32 %v11711, %v11753
        %11755 = vdwg.mxu0
        %11756 = vmatprep.subr.bf16.mxu0 %v7912
        %11757 = vmatpush1.bf16.msra.mxu0 %v7911
        %11758 = vmatprep.subr.bf16.mxu0 %v7908
        %11759 = vmatpush1.bf16.msra.mxu0 %v7907
        %11760 = vmatprep.subr.bf16.mxu0 %v7904
        %11761 = vmatpush1.bf16.msra.mxu0 %v7903
        %11762 = vmatprep.subr.bf16.mxu0 %v7900
        %11763 = vmatpush1.bf16.msra.mxu0 %v7899
        %11764 = vmatprep.subr.bf16.mxu0 %v7896
        %11765 = vmatpush1.bf16.msra.mxu0 %v7895
        %11766 = vmatprep.subr.bf16.mxu0 %v7892
        %11767 = vmatpush1.bf16.msra.mxu0 %v7891
        %11768 = vmatprep.subr.bf16.mxu0 %v7888
        %11769 = vmatpush1.bf16.msra.mxu0 %v7887
        %11770 = vmatprep.subr.bf16.mxu0 %v7884
        %11771 = vmatpush1.bf16.msra.mxu0 %v7883
        %11772 = vmatprep.subr.bf16.mxu0 %v7944
        %11773 = vmatpush2.bf16.msra.mxu0 %v7943
        %11774 = vmatprep.subr.bf16.mxu0 %v7940
        %11775 = vmatpush2.bf16.msra.mxu0 %v7939
        %11776 = vmatprep.subr.bf16.mxu0 %v7936
        %11777 = vmatpush2.bf16.msra.mxu0 %v7935
        %11778 = vmatprep.subr.bf16.mxu0 %v7932
        %11779 = vmatpush2.bf16.msra.mxu0 %v7931
        %11780 = vmatprep.subr.bf16.mxu0 %v7928
        %11781 = vmatpush2.bf16.msra.mxu0 %v7927
        %11782 = vmatprep.subr.bf16.mxu0 %v7924
        %11783 = vmatpush2.bf16.msra.mxu0 %v7923
        %11784 = vmatprep.subr.bf16.mxu0 %v7920
        %11785 = vmatpush2.bf16.msra.mxu0 %v7919
        %11786 = vmatprep.subr.bf16.mxu0 %v7916
        %11787 = vmatpush2.bf16.msra.mxu0 %v7915
        %11788 = vmatprep.mubr.bf16.mxu0 %v2088
        %11789 = vmatmul.mubr.bf16.gmra.mxu0 %v2087
        %v11790 = vpop.f32.mrf.mxu0
        %v11791 = vadd.f32 %v11748, %v11790
        %v11792 = vpop.f32.mrf.mxu0
        %v11793 = vadd.f32 %v11750, %v11792
        %v11794 = vpop.f32.mrf.mxu0
        %v11795 = vadd.f32 %v11752, %v11794
        %v11796 = vpop.f32.mrf.mxu0
        %v11797 = vadd.f32 %v11754, %v11796
        %11798 = vdwg.mxu0
        %11799 = vmatprep.subr.bf16.mxu0 %v7976
        %11800 = vmatpush1.bf16.msra.mxu0 %v7975
        %11801 = vmatprep.subr.bf16.mxu0 %v7972
        %11802 = vmatpush1.bf16.msra.mxu0 %v7971
        %11803 = vmatprep.subr.bf16.mxu0 %v7968
        %11804 = vmatpush1.bf16.msra.mxu0 %v7967
        %11805 = vmatprep.subr.bf16.mxu0 %v7964
        %11806 = vmatpush1.bf16.msra.mxu0 %v7963
        %11807 = vmatprep.subr.bf16.mxu0 %v7960
        %11808 = vmatpush1.bf16.msra.mxu0 %v7959
        %11809 = vmatprep.subr.bf16.mxu0 %v7956
        %11810 = vmatpush1.bf16.msra.mxu0 %v7955
        %11811 = vmatprep.subr.bf16.mxu0 %v7952
        %11812 = vmatpush1.bf16.msra.mxu0 %v7951
        %11813 = vmatprep.subr.bf16.mxu0 %v7948
        %11814 = vmatpush1.bf16.msra.mxu0 %v7947
        %11815 = vmatprep.subr.bf16.mxu0 %v8008
        %11816 = vmatpush2.bf16.msra.mxu0 %v8007
        %11817 = vmatprep.subr.bf16.mxu0 %v8004
        %11818 = vmatpush2.bf16.msra.mxu0 %v8003
        %11819 = vmatprep.subr.bf16.mxu0 %v8000
        %11820 = vmatpush2.bf16.msra.mxu0 %v7999
        %11821 = vmatprep.subr.bf16.mxu0 %v7996
        %11822 = vmatpush2.bf16.msra.mxu0 %v7995
        %11823 = vmatprep.subr.bf16.mxu0 %v7992
        %11824 = vmatpush2.bf16.msra.mxu0 %v7991
        %11825 = vmatprep.subr.bf16.mxu0 %v7988
        %11826 = vmatpush2.bf16.msra.mxu0 %v7987
        %11827 = vmatprep.subr.bf16.mxu0 %v7984
        %11828 = vmatpush2.bf16.msra.mxu0 %v7983
        %11829 = vmatprep.subr.bf16.mxu0 %v7980
        %11830 = vmatpush2.bf16.msra.mxu0 %v7979
        %11831 = vmatprep.mubr.bf16.mxu0 %v2090
        %11832 = vmatmul.mubr.bf16.gmra.mxu0 %v2089
        %v11833 = vpop.f32.mrf.mxu0
        %v11834 = vadd.f32 %v11791, %v11833
        %v11835 = vpop.f32.mrf.mxu0
        %v11836 = vadd.f32 %v11793, %v11835
        %v11837 = vpop.f32.mrf.mxu0
        %v11838 = vadd.f32 %v11795, %v11837
        %v11839 = vpop.f32.mrf.mxu0
        %v11840 = vadd.f32 %v11797, %v11839
        %11841 = vdwg.mxu0
        %11842 = vmatprep.subr.bf16.mxu0 %v8040
        %11843 = vmatpush1.bf16.msra.mxu0 %v8039
        %11844 = vmatprep.subr.bf16.mxu0 %v8036
        %11845 = vmatpush1.bf16.msra.mxu0 %v8035
        %11846 = vmatprep.subr.bf16.mxu0 %v8032
        %11847 = vmatpush1.bf16.msra.mxu0 %v8031
        %11848 = vmatprep.subr.bf16.mxu0 %v8028
        %11849 = vmatpush1.bf16.msra.mxu0 %v8027
        %11850 = vmatprep.subr.bf16.mxu0 %v8024
        %11851 = vmatpush1.bf16.msra.mxu0 %v8023
        %11852 = vmatprep.subr.bf16.mxu0 %v8020
        %11853 = vmatpush1.bf16.msra.mxu0 %v8019
        %11854 = vmatprep.subr.bf16.mxu0 %v8016
        %11855 = vmatpush1.bf16.msra.mxu0 %v8015
        %11856 = vmatprep.subr.bf16.mxu0 %v8012
        %11857 = vmatpush1.bf16.msra.mxu0 %v8011
        %11858 = vmatprep.subr.bf16.mxu0 %v8072
        %11859 = vmatpush2.bf16.msra.mxu0 %v8071
        %11860 = vmatprep.subr.bf16.mxu0 %v8068
        %11861 = vmatpush2.bf16.msra.mxu0 %v8067
        %11862 = vmatprep.subr.bf16.mxu0 %v8064
        %11863 = vmatpush2.bf16.msra.mxu0 %v8063
        %11864 = vmatprep.subr.bf16.mxu0 %v8060
        %11865 = vmatpush2.bf16.msra.mxu0 %v8059
        %11866 = vmatprep.subr.bf16.mxu0 %v8056
        %11867 = vmatpush2.bf16.msra.mxu0 %v8055
        %11868 = vmatprep.subr.bf16.mxu0 %v8052
        %11869 = vmatpush2.bf16.msra.mxu0 %v8051
        %11870 = vmatprep.subr.bf16.mxu0 %v8048
        %11871 = vmatpush2.bf16.msra.mxu0 %v8047
        %11872 = vmatprep.subr.bf16.mxu0 %v8044
        %11873 = vmatpush2.bf16.msra.mxu0 %v8043
        %11874 = vmatprep.mubr.bf16.mxu0 %v2092
        %11875 = vmatmul.mubr.bf16.gmra.mxu0 %v2091
        %v11876 = vpop.f32.mrf.mxu0
        %v11877 = vadd.f32 %v11834, %v11876
        %v11878 = vpop.f32.mrf.mxu0
        %v11879 = vadd.f32 %v11836, %v11878
        %v11880 = vpop.f32.mrf.mxu0
        %v11881 = vadd.f32 %v11838, %v11880
        %v11882 = vpop.f32.mrf.mxu0
        %v11883 = vadd.f32 %v11840, %v11882
        %11884 = vdwg.mxu0
        %11885 = vmatprep.subr.bf16.mxu0 %v8104
        %11886 = vmatpush1.bf16.msra.mxu0 %v8103
        %11887 = vmatprep.subr.bf16.mxu0 %v8100
        %11888 = vmatpush1.bf16.msra.mxu0 %v8099
        %11889 = vmatprep.subr.bf16.mxu0 %v8096
        %11890 = vmatpush1.bf16.msra.mxu0 %v8095
        %11891 = vmatprep.subr.bf16.mxu0 %v8092
        %11892 = vmatpush1.bf16.msra.mxu0 %v8091
        %11893 = vmatprep.subr.bf16.mxu0 %v8088
        %11894 = vmatpush1.bf16.msra.mxu0 %v8087
        %11895 = vmatprep.subr.bf16.mxu0 %v8084
        %11896 = vmatpush1.bf16.msra.mxu0 %v8083
        %11897 = vmatprep.subr.bf16.mxu0 %v8080
        %11898 = vmatpush1.bf16.msra.mxu0 %v8079
        %11899 = vmatprep.subr.bf16.mxu0 %v8076
        %11900 = vmatpush1.bf16.msra.mxu0 %v8075
        %11901 = vmatprep.subr.bf16.mxu0 %v8136
        %11902 = vmatpush2.bf16.msra.mxu0 %v8135
        %11903 = vmatprep.subr.bf16.mxu0 %v8132
        %11904 = vmatpush2.bf16.msra.mxu0 %v8131
        %11905 = vmatprep.subr.bf16.mxu0 %v8128
        %11906 = vmatpush2.bf16.msra.mxu0 %v8127
        %11907 = vmatprep.subr.bf16.mxu0 %v8124
        %11908 = vmatpush2.bf16.msra.mxu0 %v8123
        %11909 = vmatprep.subr.bf16.mxu0 %v8120
        %11910 = vmatpush2.bf16.msra.mxu0 %v8119
        %11911 = vmatprep.subr.bf16.mxu0 %v8116
        %11912 = vmatpush2.bf16.msra.mxu0 %v8115
        %11913 = vmatprep.subr.bf16.mxu0 %v8112
        %11914 = vmatpush2.bf16.msra.mxu0 %v8111
        %11915 = vmatprep.subr.bf16.mxu0 %v8108
        %11916 = vmatpush2.bf16.msra.mxu0 %v8107
        %11917 = vmatprep.mubr.bf16.mxu0 %v2094
        %11918 = vmatmul.mubr.bf16.gmra.mxu0 %v2093
        %v11919 = vpop.f32.mrf.mxu0
        %v11920 = vadd.f32 %v11877, %v11919
        %v11921 = vpop.f32.mrf.mxu0
        %v11922 = vadd.f32 %v11879, %v11921
        %v11923 = vpop.f32.mrf.mxu0
        %v11924 = vadd.f32 %v11881, %v11923
        %v11925 = vpop.f32.mrf.mxu0
        %v11926 = vadd.f32 %v11883, %v11925
        %11927 = vdwg.mxu0
        %11928 = vmatprep.subr.bf16.mxu0 %v8168
        %11929 = vmatpush1.bf16.msra.mxu0 %v8167
        %11930 = vmatprep.subr.bf16.mxu0 %v8164
        %11931 = vmatpush1.bf16.msra.mxu0 %v8163
        %11932 = vmatprep.subr.bf16.mxu0 %v8160
        %11933 = vmatpush1.bf16.msra.mxu0 %v8159
        %11934 = vmatprep.subr.bf16.mxu0 %v8156
        %11935 = vmatpush1.bf16.msra.mxu0 %v8155
        %11936 = vmatprep.subr.bf16.mxu0 %v8152
        %11937 = vmatpush1.bf16.msra.mxu0 %v8151
        %11938 = vmatprep.subr.bf16.mxu0 %v8148
        %11939 = vmatpush1.bf16.msra.mxu0 %v8147
        %11940 = vmatprep.subr.bf16.mxu0 %v8144
        %11941 = vmatpush1.bf16.msra.mxu0 %v8143
        %11942 = vmatprep.subr.bf16.mxu0 %v8140
        %11943 = vmatpush1.bf16.msra.mxu0 %v8139
        %11944 = vmatprep.subr.bf16.mxu0 %v8200
        %11945 = vmatpush2.bf16.msra.mxu0 %v8199
        %11946 = vmatprep.subr.bf16.mxu0 %v8196
        %11947 = vmatpush2.bf16.msra.mxu0 %v8195
        %11948 = vmatprep.subr.bf16.mxu0 %v8192
        %11949 = vmatpush2.bf16.msra.mxu0 %v8191
        %11950 = vmatprep.subr.bf16.mxu0 %v8188
        %11951 = vmatpush2.bf16.msra.mxu0 %v8187
        %11952 = vmatprep.subr.bf16.mxu0 %v8184
        %11953 = vmatpush2.bf16.msra.mxu0 %v8183
        %11954 = vmatprep.subr.bf16.mxu0 %v8180
        %11955 = vmatpush2.bf16.msra.mxu0 %v8179
        %11956 = vmatprep.subr.bf16.mxu0 %v8176
        %11957 = vmatpush2.bf16.msra.mxu0 %v8175
        %11958 = vmatprep.subr.bf16.mxu0 %v8172
        %11959 = vmatpush2.bf16.msra.mxu0 %v8171
        %11960 = vmatprep.mubr.bf16.mxu0 %v2096
        %11961 = vmatmul.mubr.bf16.gmra.mxu0 %v2095
        %v11962 = vpop.f32.mrf.mxu0
        %v11963 = vadd.f32 %v11920, %v11962
        %v11964 = vpop.f32.mrf.mxu0
        %v11965 = vadd.f32 %v11922, %v11964
        %v11966 = vpop.f32.mrf.mxu0
        %v11967 = vadd.f32 %v11924, %v11966
        %v11968 = vpop.f32.mrf.mxu0
        %v11969 = vadd.f32 %v11926, %v11968
        %11970 = vdwg.mxu0
        %11971 = vmatprep.subr.bf16.mxu0 %v8232
        %11972 = vmatpush1.bf16.msra.mxu0 %v8231
        %11973 = vmatprep.subr.bf16.mxu0 %v8228
        %11974 = vmatpush1.bf16.msra.mxu0 %v8227
        %11975 = vmatprep.subr.bf16.mxu0 %v8224
        %11976 = vmatpush1.bf16.msra.mxu0 %v8223
        %11977 = vmatprep.subr.bf16.mxu0 %v8220
        %11978 = vmatpush1.bf16.msra.mxu0 %v8219
        %11979 = vmatprep.subr.bf16.mxu0 %v8216
        %11980 = vmatpush1.bf16.msra.mxu0 %v8215
        %11981 = vmatprep.subr.bf16.mxu0 %v8212
        %11982 = vmatpush1.bf16.msra.mxu0 %v8211
        %11983 = vmatprep.subr.bf16.mxu0 %v8208
        %11984 = vmatpush1.bf16.msra.mxu0 %v8207
        %11985 = vmatprep.subr.bf16.mxu0 %v8204
        %11986 = vmatpush1.bf16.msra.mxu0 %v8203
        %11987 = vmatprep.subr.bf16.mxu0 %v8264
        %11988 = vmatpush2.bf16.msra.mxu0 %v8263
        %11989 = vmatprep.subr.bf16.mxu0 %v8260
        %11990 = vmatpush2.bf16.msra.mxu0 %v8259
        %11991 = vmatprep.subr.bf16.mxu0 %v8256
        %11992 = vmatpush2.bf16.msra.mxu0 %v8255
        %11993 = vmatprep.subr.bf16.mxu0 %v8252
        %11994 = vmatpush2.bf16.msra.mxu0 %v8251
        %11995 = vmatprep.subr.bf16.mxu0 %v8248
        %11996 = vmatpush2.bf16.msra.mxu0 %v8247
        %11997 = vmatprep.subr.bf16.mxu0 %v8244
        %11998 = vmatpush2.bf16.msra.mxu0 %v8243
        %11999 = vmatprep.subr.bf16.mxu0 %v8240
        %12000 = vmatpush2.bf16.msra.mxu0 %v8239
        %12001 = vmatprep.subr.bf16.mxu0 %v8236
        %12002 = vmatpush2.bf16.msra.mxu0 %v8235
        %12003 = vmatprep.mubr.bf16.mxu0 %v2098
        %12004 = vmatmul.mubr.bf16.gmra.mxu0 %v2097
        %v12005 = vpop.f32.mrf.mxu0
        %v12006 = vadd.f32 %v11963, %v12005
        %v12007 = vpop.f32.mrf.mxu0
        %v12008 = vadd.f32 %v11965, %v12007
        %v12009 = vpop.f32.mrf.mxu0
        %v12010 = vadd.f32 %v11967, %v12009
        %v12011 = vpop.f32.mrf.mxu0
        %v12012 = vadd.f32 %v11969, %v12011
        %12013 = vdwg.mxu0
        %12014 = vmatprep.subr.bf16.mxu0 %v8296
        %12015 = vmatpush1.bf16.msra.mxu0 %v8295
        %12016 = vmatprep.subr.bf16.mxu0 %v8292
        %12017 = vmatpush1.bf16.msra.mxu0 %v8291
        %12018 = vmatprep.subr.bf16.mxu0 %v8288
        %12019 = vmatpush1.bf16.msra.mxu0 %v8287
        %12020 = vmatprep.subr.bf16.mxu0 %v8284
        %12021 = vmatpush1.bf16.msra.mxu0 %v8283
        %12022 = vmatprep.subr.bf16.mxu0 %v8280
        %12023 = vmatpush1.bf16.msra.mxu0 %v8279
        %12024 = vmatprep.subr.bf16.mxu0 %v8276
        %12025 = vmatpush1.bf16.msra.mxu0 %v8275
        %12026 = vmatprep.subr.bf16.mxu0 %v8272
        %12027 = vmatpush1.bf16.msra.mxu0 %v8271
        %12028 = vmatprep.subr.bf16.mxu0 %v8268
        %12029 = vmatpush1.bf16.msra.mxu0 %v8267
        %12030 = vmatprep.subr.bf16.mxu0 %v8328
        %12031 = vmatpush2.bf16.msra.mxu0 %v8327
        %12032 = vmatprep.subr.bf16.mxu0 %v8324
        %12033 = vmatpush2.bf16.msra.mxu0 %v8323
        %12034 = vmatprep.subr.bf16.mxu0 %v8320
        %12035 = vmatpush2.bf16.msra.mxu0 %v8319
        %12036 = vmatprep.subr.bf16.mxu0 %v8316
        %12037 = vmatpush2.bf16.msra.mxu0 %v8315
        %12038 = vmatprep.subr.bf16.mxu0 %v8312
        %12039 = vmatpush2.bf16.msra.mxu0 %v8311
        %12040 = vmatprep.subr.bf16.mxu0 %v8308
        %12041 = vmatpush2.bf16.msra.mxu0 %v8307
        %12042 = vmatprep.subr.bf16.mxu0 %v8304
        %12043 = vmatpush2.bf16.msra.mxu0 %v8303
        %12044 = vmatprep.subr.bf16.mxu0 %v8300
        %12045 = vmatpush2.bf16.msra.mxu0 %v8299
        %12046 = vmatprep.mubr.bf16.mxu0 %v2100
        %12047 = vmatmul.mubr.bf16.gmra.mxu0 %v2099
        %v12048 = vpop.f32.mrf.mxu0
        %v12049 = vadd.f32 %v12006, %v12048
        %v12050 = vpop.f32.mrf.mxu0
        %v12051 = vadd.f32 %v12008, %v12050
        %v12052 = vpop.f32.mrf.mxu0
        %v12053 = vadd.f32 %v12010, %v12052
        %v12054 = vpop.f32.mrf.mxu0
        %v12055 = vadd.f32 %v12012, %v12054
        %12056 = vdwg.mxu0
        %12057 = vmatprep.subr.bf16.mxu0 %v8360
        %12058 = vmatpush1.bf16.msra.mxu0 %v8359
        %12059 = vmatprep.subr.bf16.mxu0 %v8356
        %12060 = vmatpush1.bf16.msra.mxu0 %v8355
        %12061 = vmatprep.subr.bf16.mxu0 %v8352
        %12062 = vmatpush1.bf16.msra.mxu0 %v8351
        %12063 = vmatprep.subr.bf16.mxu0 %v8348
        %12064 = vmatpush1.bf16.msra.mxu0 %v8347
        %12065 = vmatprep.subr.bf16.mxu0 %v8344
        %12066 = vmatpush1.bf16.msra.mxu0 %v8343
        %12067 = vmatprep.subr.bf16.mxu0 %v8340
        %12068 = vmatpush1.bf16.msra.mxu0 %v8339
        %12069 = vmatprep.subr.bf16.mxu0 %v8336
        %12070 = vmatpush1.bf16.msra.mxu0 %v8335
        %12071 = vmatprep.subr.bf16.mxu0 %v8332
        %12072 = vmatpush1.bf16.msra.mxu0 %v8331
        %12073 = vmatprep.subr.bf16.mxu0 %v8392
        %12074 = vmatpush2.bf16.msra.mxu0 %v8391
        %12075 = vmatprep.subr.bf16.mxu0 %v8388
        %12076 = vmatpush2.bf16.msra.mxu0 %v8387
        %12077 = vmatprep.subr.bf16.mxu0 %v8384
        %12078 = vmatpush2.bf16.msra.mxu0 %v8383
        %12079 = vmatprep.subr.bf16.mxu0 %v8380
        %12080 = vmatpush2.bf16.msra.mxu0 %v8379
        %12081 = vmatprep.subr.bf16.mxu0 %v8376
        %12082 = vmatpush2.bf16.msra.mxu0 %v8375
        %12083 = vmatprep.subr.bf16.mxu0 %v8372
        %12084 = vmatpush2.bf16.msra.mxu0 %v8371
        %12085 = vmatprep.subr.bf16.mxu0 %v8368
        %12086 = vmatpush2.bf16.msra.mxu0 %v8367
        %12087 = vmatprep.subr.bf16.mxu0 %v8364
        %12088 = vmatpush2.bf16.msra.mxu0 %v8363
        %12089 = vmatprep.mubr.bf16.mxu0 %v2102
        %12090 = vmatmul.mubr.bf16.gmra.mxu0 %v2101
        %v12091 = vpop.f32.mrf.mxu0
        %v12092 = vadd.f32 %v12049, %v12091
        %v12093 = vpop.f32.mrf.mxu0
        %v12094 = vadd.f32 %v12051, %v12093
        %v12095 = vpop.f32.mrf.mxu0
        %v12096 = vadd.f32 %v12053, %v12095
        %v12097 = vpop.f32.mrf.mxu0
        %v12098 = vadd.f32 %v12055, %v12097
        %12099 = vdwg.mxu0
        %12100 = vmatprep.subr.bf16.mxu0 %v8424
        %12101 = vmatpush1.bf16.msra.mxu0 %v8423
        %12102 = vmatprep.subr.bf16.mxu0 %v8420
        %12103 = vmatpush1.bf16.msra.mxu0 %v8419
        %12104 = vmatprep.subr.bf16.mxu0 %v8416
        %12105 = vmatpush1.bf16.msra.mxu0 %v8415
        %12106 = vmatprep.subr.bf16.mxu0 %v8412
        %12107 = vmatpush1.bf16.msra.mxu0 %v8411
        %12108 = vmatprep.subr.bf16.mxu0 %v8408
        %12109 = vmatpush1.bf16.msra.mxu0 %v8407
        %12110 = vmatprep.subr.bf16.mxu0 %v8404
        %12111 = vmatpush1.bf16.msra.mxu0 %v8403
        %12112 = vmatprep.subr.bf16.mxu0 %v8400
        %12113 = vmatpush1.bf16.msra.mxu0 %v8399
        %12114 = vmatprep.subr.bf16.mxu0 %v8396
        %12115 = vmatpush1.bf16.msra.mxu0 %v8395
        %12116 = vmatprep.subr.bf16.mxu0 0
        %12117 = vmatpush2.bf16.msra.mxu0 0
        %12118 = vmatprep.subr.bf16.mxu0 0
        %12119 = vmatpush2.bf16.msra.mxu0 0
        %12120 = vmatprep.subr.bf16.mxu0 0
        %12121 = vmatpush2.bf16.msra.mxu0 0
        %12122 = vmatprep.subr.bf16.mxu0 0
        %12123 = vmatpush2.bf16.msra.mxu0 0
        %12124 = vmatprep.subr.bf16.mxu0 0
        %12125 = vmatpush2.bf16.msra.mxu0 0
        %12126 = vmatprep.subr.bf16.mxu0 0
        %12127 = vmatpush2.bf16.msra.mxu0 0
        %12128 = vmatprep.subr.bf16.mxu0 0
        %12129 = vmatpush2.bf16.msra.mxu0 0
        %12130 = vmatprep.subr.bf16.mxu0 0
        %12131 = vmatpush2.bf16.msra.mxu0 0
        %12132 = vmatprep.mubr.bf16.mxu0 0
        %12133 = vmatmul.mubr.bf16.gmra.mxu0 %v2103
        %v12134 = vpop.f32.mrf.mxu0
        %v12135 = vadd.f32 %v12092, %v12134
        %v12136 = vpop.f32.mrf.mxu0
        %v12137 = vadd.f32 %v12094, %v12136
        %v12138 = vpop.f32.mrf.mxu0
        %v12139 = vadd.f32 %v12096, %v12138
        %v12140 = vpop.f32.mrf.mxu0
        %v12141 = vadd.f32 %v12098, %v12140
        %12142 = vdwg.mxu0
        %v12143 = vmul.f32 %v11060, 0.1
        %v12144 = vmul.f32 %v11062, 0.1
        %v12145 = vmul.f32 %v12135, 0.1
        %v12146 = vmul.f32 %v12137, 0.1
        %v12147 = vmul.f32 %v11064, 0.1
        %v12148 = vmul.f32 %v11066, 0.1
        %v12149 = vmul.f32 %v12139, 0.1
        %v12150 = vmul.f32 %v12141, 0.1
        %v12151 = vmax.f32 %v11060, %v12143
        %v12152 = vmax.f32 %v11062, %v12144
        %v12153 = vmax.f32 %v12135, %v12145
        %v12154 = vmax.f32 %v12137, %v12146
        %v12155 = vmax.f32 %v11064, %v12147
        %v12156 = vmax.f32 %v11066, %v12148
        %v12157 = vmax.f32 %v12139, %v12149
        %v12158 = vmax.f32 %v12141, %v12150
        %12159 = vst [vmem:[%s254] sm:$0xff] %v12151
        %12160 = vst [vmem:[%s254 + $0x8] sm:$0xff] %v12152
        %12161 = vst [vmem:[%s254 + $0x10] sm:$0xff] %v12153
        %12162 = vst [vmem:[%s254 + $0x18] sm:$0xff] %v12154
        %12163 = vst [vmem:[%s254 + $0x20] sm:$0xff] %v12155
        %12164 = vst [vmem:[%s254 + $0x28] sm:$0xff] %v12156
        %12165 = vst [vmem:[%s254 + $0x30] sm:$0xff] %v12157
        %12166 = vst [vmem:[%s254 + $0x38] sm:$0xff] %v12158
        %s12167 = sand.u32 %s120, 1
        %s12168 = sand.u32 %s120, 1
        %s12169 = smul.addr %s12168, 64
        %s12170 = scalar_lea.vmem [#allocation6], %s12169
        // Predicated region
        $region41: #{discriminator_forward.5} parent=31 // pred_check
          %p12171 = pneg %p130
        $region42: #{discriminator_forward.5} parent=31 // pred_check_branch
          %12173 = sbr.rel (%p12171) target = $region44
        $region43: #{discriminator_forward.5} parent=31 // pred_region
          %s12174 = smul.u32 2, %s24
          %s12175 = smul.u32 4, %s25
          %s12176 = smul.addr %s12174, 8
          %s12177 = sadd.s32 %s12175, %s12176
          %s12178 = smul.addr %s12177, 8
          %s12179 = scalar_lea.vmem %s3, %s12178
          // Predicated region
          $region45: #{discriminator_forward.5} parent=43 // pred_check
            _
          $region46: #{discriminator_forward.5} parent=43 // pred_check_branch
            %12181 = sbr.rel (0) target = $region48
          $region47: #{discriminator_forward.5} parent=43 // pred_region
            // Predicated region
            $region49: #{discriminator_forward.5} parent=47 // pred_check
              _
            $region50: #{discriminator_forward.5} parent=47 // pred_check_branch
              %12183 = sbr.rel (0) target = $region52
            $region51: #{discriminator_forward.5} parent=47 // pred_region
              loop: start=0, step=1, limit=1
              $region53: #{discriminator_forward.5} parent=51 // loop_pre_header
                _
              $region54: #{discriminator_forward.5} parent=51 // loop_header
                %s12185 = sphi 0, %s12189
                %p12186 = scmp.ge.s32.totalorder %s12185, 1
                %s12190 = sphi %s12170, %s12170
                %s12191 = sphi %s12179, %s12179
              $region55: #{discriminator_forward.5} parent=51 // loop_header_branch
                %12188 = sbr.rel (%p12186) target = $region59
              $region56: #{discriminator_forward.5} parent=51 // loop_body
                %v12192 = vld [vmem:[%s12190] sm:$0xff]
                %12193 = vst [vmem:[%s12191] sm:$0xff] %v12192
                %v12194 = vld [vmem:[%s12190 + $0x8] sm:$0xff]
                %12195 = vst [vmem:[%s12191 + $0x8] sm:$0xff] %v12194
                %v12196 = vld [vmem:[%s12190 + $0x10] sm:$0xff]
                %12197 = vst [vmem:[%s12191 + $0x10] sm:$0xff] %v12196
                %v12198 = vld [vmem:[%s12190 + $0x18] sm:$0xff]
                %12199 = vst [vmem:[%s12191 + $0x18] sm:$0xff] %v12198
                %v12200 = vld [vmem:[%s12190 + $0x20] sm:$0xff]
                %12201 = vst [vmem:[%s12191 + $0x40] sm:$0xff] %v12200
                %v12202 = vld [vmem:[%s12190 + $0x28] sm:$0xff]
                %12203 = vst [vmem:[%s12191 + $0x48] sm:$0xff] %v12202
                %v12204 = vld [vmem:[%s12190 + $0x30] sm:$0xff]
                %12205 = vst [vmem:[%s12191 + $0x50] sm:$0xff] %v12204
                %v12206 = vld [vmem:[%s12190 + $0x38] sm:$0xff]
                %12207 = vst [vmem:[%s12191 + $0x58] sm:$0xff] %v12206
              $region57: #{discriminator_forward.5} parent=51 // loop_footer
                %s12189 = sadd.s32 1, %s12185
              $region58: #{discriminator_forward.5} parent=51 // loop_footer_branch
                %12184 = sbr.rel target = $region54
              $region59: #{discriminator_forward.5} parent=51 // loop_exit
                _
            $region52: #{discriminator_forward.5} parent=47 // pred_fallthru
              _
            // Predicated region
            $region60: #{discriminator_forward.5} parent=47 // pred_check
              _
            $region61: #{discriminator_forward.5} parent=47 // pred_check_branch
              %12209 = sbr.rel target = $region63
            $region62: #{discriminator_forward.5} parent=47 // pred_region
              _
            $region63: #{discriminator_forward.5} parent=47 // pred_fallthru
              _
          $region48: #{discriminator_forward.5} parent=43 // pred_fallthru
            _
          %12210 = vnop
        $region44: #{discriminator_forward.5} parent=31 // pred_fallthru
          _
      $region32: #{discriminator_forward.5} parent=5 // pred_fallthru
        _
      %p12211 = scmp.le.s32.totalorder 2, %s15
      // Predicated region
      $region64: #{discriminator_forward.5} parent=5 // pred_check
        %p12212 = pneg %p12211
      $region65: #{discriminator_forward.5} parent=5 // pred_check_branch
        %12214 = sbr.rel (%p12212) target = $region67
      $region66: #{discriminator_forward.5} parent=5 // pred_region
        %s12215 = ssub.s32 %s15, 2
        // Predicated region
        $region68: #{discriminator_forward.5} parent=66 // pred_check
          %p12216 = pneg %p136
        $region69: #{discriminator_forward.5} parent=66 // pred_check_branch
          %12218 = sbr.rel (%p12216) target = $region71
        $region70: #{discriminator_forward.5} parent=66 // pred_region
          %s12219 = sand.u32 %s121, 1
          %s12220 = sand.u32 %s121, 1
          %s12221 = smul.addr %s12220, 64
          %s12222 = scalar_lea.vmem [#allocation6], %s12221
        $region71: #{discriminator_forward.5} parent=66 // pred_fallthru
          _
      $region67: #{discriminator_forward.5} parent=5 // pred_fallthru
        _
    $region6: #{discriminator_forward.5} parent=1 // loop_footer
      %s19 = sadd.s32 1, %s15
    $region7: #{discriminator_forward.5} parent=1 // loop_footer_branch
      %14 = sbr.rel target = $region3
    $region8: #{discriminator_forward.5} parent=1 // loop_exit
      _
    %12223 = vsyncpa [#allocation3], 1
    %s12224 = scalar_lea.sflag [#allocation3], 1
    %12225 = vsyncpa %s12224, 1
    %12226 = vsyncpa [#allocation5], 1
    %s12227 = scalar_lea.sflag [#allocation5], 1
    %12228 = vsyncpa %s12227, 1

</llo_original>
